<compile_context>
chip_gen: v7x
topology: tpu7x:2x2x1
jax: 0.10.0
libtpu: 0.0.40
codegen_flags: <defaults>
</compile_context>

<pallas_src>
import functools

import jax
import jax.numpy as jnp
from jax import lax
from jax.experimental import pallas as pl
from jax.experimental.pallas import tpu as pltpu

ACT_DTYPE = jnp.bfloat16     # matmul / storage dtype
LN_EPS = 1e-5
NEG_INF = -1e30


def _round_up(x, m):
    return ((x + m - 1) // m) * m


# ----------------------------------------------------------------------------
# Generic linear kernel: M-tiled, K-tiled (f32 accumulator), bf16 MXU inputs
# ----------------------------------------------------------------------------
def _linear_kernel(x_ref, w_ref, b_ref, o_ref, acc_ref, *, activation):
    k = pl.program_id(1)

    @pl.when(k == 0)
    def _():
        acc_ref[...] = jnp.zeros_like(acc_ref)

    acc_ref[...] += jnp.dot(x_ref[...], w_ref[...],
                            preferred_element_type=jnp.float32)

    @pl.when(k == pl.num_programs(1) - 1)
    def _():
        y = acc_ref[...] + b_ref[...]
        if activation == "relu":
            y = jnp.maximum(y, 0.0)
        o_ref[...] = y.astype(o_ref.dtype)


def pallas_linear(x, w, b, activation=None, out_dtype=ACT_DTYPE):
    """x: (M, K) @ w: (K, N) + b: (N,). bf16 MXU inputs, f32 accumulation."""
    M, K = x.shape
    Kw, N = w.shape
    assert K == Kw

    tm = _round_up(M, 8) if M <= 512 else 512
    M_pad = _round_up(M, tm)
    if K > 2048:                       # K-tiling for big contractions (v7x VMEM)
        tk = 2048
        K_pad = _round_up(K, tk)
    else:
        tk = K
        K_pad = K

    x = x.astype(ACT_DTYPE)
    w = w.astype(ACT_DTYPE)
    if M_pad != M or K_pad != K:
        x = jnp.pad(x, ((0, M_pad - M), (0, K_pad - K)))
    if K_pad != K:
        w = jnp.pad(w, ((0, K_pad - K), (0, 0)))
    b2 = b.reshape(1, N).astype(jnp.float32)

    kern = functools.partial(_linear_kernel, activation=activation)
    out = pl.pallas_call(
        kern,
        out_shape=jax.ShapeDtypeStruct((M_pad, N), out_dtype),
        grid=(M_pad // tm, K_pad // tk),
        in_specs=[
            pl.BlockSpec((tm, tk), lambda i, k: (i, k)),
            pl.BlockSpec((tk, N), lambda i, k: (k, 0)),
            pl.BlockSpec((1, N), lambda i, k: (0, 0)),
        ],
        out_specs=pl.BlockSpec((tm, N), lambda i, k: (i, 0)),
        scratch_shapes=[pltpu.VMEM((tm, N), jnp.float32)],
        compiler_params=pltpu.CompilerParams(
            dimension_semantics=("parallel", "arbitrary"),
            vmem_limit_bytes=32 * 1024 * 1024),
    )(x, w, b2)
    return out[:M] if M_pad != M else out


# ----------------------------------------------------------------------------
# Attention kernel: all heads of one batch element per grid step
# ----------------------------------------------------------------------------
def _attn_kernel(q_ref, k_ref, v_ref, o_ref, *, causal):
    q = q_ref[...]            # (H, Sq, Dh) bf16, scale already folded into Wq
    k = k_ref[...]            # (H, Sk, Dh)
    v = v_ref[...]
    s = jnp.einsum("bqd,bkd->bqk", q, k, preferred_element_type=jnp.float32)
    if causal:
        Sq, Sk = s.shape[-2], s.shape[-1]
        row = lax.broadcasted_iota(jnp.int32, (Sq, Sk), 0)
        col = lax.broadcasted_iota(jnp.int32, (Sq, Sk), 1)
        s = jnp.where((col > row)[None, :, :], NEG_INF, s)
    m = jnp.max(s, axis=-1, keepdims=True)
    p = jnp.exp(s - m)
    denom = jnp.sum(p, axis=-1, keepdims=True)
    p = p * pl.reciprocal(denom, approx=True)
    o = jnp.einsum("bqk,bkd->bqd", p.astype(v.dtype), v,
                   preferred_element_type=jnp.float32)
    o_ref[...] = o.astype(o_ref.dtype)


def pallas_attention(q, k, v, num_heads, causal):
    """q: (B*H, Sq, Dh), k/v: (B*H, Sk, Dh) -> (B*H, Sq, Dh)."""
    BH, Sq, Dh = q.shape
    Sk = k.shape[1]
    B = BH // num_heads
    kern = functools.partial(_attn_kernel, causal=causal)
    return pl.pallas_call(
        kern,
        out_shape=jax.ShapeDtypeStruct((BH, Sq, Dh), ACT_DTYPE),
        grid=(B,),
        in_specs=[
            pl.BlockSpec((num_heads, Sq, Dh), lambda b: (b, 0, 0)),
            pl.BlockSpec((num_heads, Sk, Dh), lambda b: (b, 0, 0)),
            pl.BlockSpec((num_heads, Sk, Dh), lambda b: (b, 0, 0)),
        ],
        out_specs=pl.BlockSpec((num_heads, Sq, Dh), lambda b: (b, 0, 0)),
        compiler_params=pltpu.CompilerParams(dimension_semantics=("parallel",)),
    )(q.astype(ACT_DTYPE), k.astype(ACT_DTYPE), v.astype(ACT_DTYPE))


# ----------------------------------------------------------------------------
# Fused out-projection + residual + LayerNorm (+ optional next Q projection)
# ----------------------------------------------------------------------------
def _proj_add_ln_body(a_ref, r_ref, w_ref, b_ref, g_ref, bb_ref):
    y = jnp.dot(a_ref[...], w_ref[...], preferred_element_type=jnp.float32)
    y = y + b_ref[...] + r_ref[...].astype(jnp.float32)
    mu = jnp.mean(y, axis=-1, keepdims=True)
    var = jnp.mean((y - mu) ** 2, axis=-1, keepdims=True)
    yn = (y - mu) * lax.rsqrt(var + LN_EPS)
    return yn * g_ref[...] + bb_ref[...]


def _proj_add_ln_kernel(a_ref, r_ref, w_ref, b_ref, g_ref, bb_ref, o_ref):
    ln = _proj_add_ln_body(a_ref, r_ref, w_ref, b_ref, g_ref, bb_ref)
    o_ref[...] = ln.astype(o_ref.dtype)


def _proj_add_ln_next_kernel(a_ref, r_ref, w_ref, b_ref, g_ref, bb_ref,
                             wn_ref, bn_ref, o_ref, q_ref):
    ln = _proj_add_ln_body(a_ref, r_ref, w_ref, b_ref, g_ref, bb_ref)
    o_ref[...] = ln.astype(o_ref.dtype)
    qn = jnp.dot(ln.astype(ACT_DTYPE), wn_ref[...],
                 preferred_element_type=jnp.float32) + bn_ref[...]
    q_ref[...] = qn.astype(q_ref.dtype)


def pallas_proj_add_ln(attn_out, resid, w, b, gamma, beta,
                       w_next=None, b_next=None):
    M, E = attn_out.shape
    tm = _round_up(M, 8) if M <= 256 else 256
    M_pad = _round_up(M, tm)
    a = attn_out.astype(ACT_DTYPE)
    r = resid.astype(ACT_DTYPE)
    if M_pad != M:
        a = jnp.pad(a, ((0, M_pad - M), (0, 0)))
        r = jnp.pad(r, ((0, M_pad - M), (0, 0)))
    base_in = [a, r, w.astype(ACT_DTYPE),
               b.reshape(1, E).astype(jnp.float32),
               gamma.reshape(1, E).astype(jnp.float32),
               beta.reshape(1, E).astype(jnp.float32)]
    base_specs = [
        pl.BlockSpec((tm, E), lambda i: (i, 0)),
        pl.BlockSpec((tm, E), lambda i: (i, 0)),
        pl.BlockSpec((E, E), lambda i: (0, 0)),
        pl.BlockSpec((1, E), lambda i: (0, 0)),
        pl.BlockSpec((1, E), lambda i: (0, 0)),
        pl.BlockSpec((1, E), lambda i: (0, 0)),
    ]
    cp = pltpu.CompilerParams(dimension_semantics=("parallel",))
    if w_next is None:
        out = pl.pallas_call(
            _proj_add_ln_kernel,
            out_shape=jax.ShapeDtypeStruct((M_pad, E), ACT_DTYPE),
            grid=(M_pad // tm,),
            in_specs=base_specs,
            out_specs=pl.BlockSpec((tm, E), lambda i: (i, 0)),
            compiler_params=cp,
        )(*base_in)
        return out[:M] if M_pad != M else out

    out, nxt = pl.pallas_call(
        _proj_add_ln_next_kernel,
        out_shape=(jax.ShapeDtypeStruct((M_pad, E), ACT_DTYPE),
                   jax.ShapeDtypeStruct((M_pad, E), ACT_DTYPE)),
        grid=(M_pad // tm,),
        in_specs=base_specs + [pl.BlockSpec((E, E), lambda i: (0, 0)),
                               pl.BlockSpec((1, E), lambda i: (0, 0))],
        out_specs=(pl.BlockSpec((tm, E), lambda i: (i, 0)),
                   pl.BlockSpec((tm, E), lambda i: (i, 0))),
        compiler_params=cp,
    )(*base_in, w_next.astype(ACT_DTYPE), b_next.reshape(1, E).astype(jnp.float32))
    if M_pad != M:
        return out[:M], nxt[:M]
    return out, nxt


# ----------------------------------------------------------------------------
# Fused FFN (ff1 + ReLU + ff2) + residual + LayerNorm (+ optional fused head)
# ----------------------------------------------------------------------------
def _ffn_ln_body(x_ref, w1_ref, b1_ref, w2_ref, b2_ref, g_ref, bb_ref):
    x = x_ref[...]
    h = jnp.dot(x, w1_ref[...], preferred_element_type=jnp.float32) + b1_ref[...]
    h = jnp.maximum(h, 0.0).astype(x.dtype)          # ReLU in f32, bf16 for MXU
    y = jnp.dot(h, w2_ref[...], preferred_element_type=jnp.float32) + b2_ref[...]
    y = y + x.astype(jnp.float32)
    mu = jnp.mean(y, axis=-1, keepdims=True)
    var = jnp.mean((y - mu) ** 2, axis=-1, keepdims=True)
    yn = (y - mu) * lax.rsqrt(var + LN_EPS)
    return yn * g_ref[...] + bb_ref[...]


def _ffn_ln_kernel(x_ref, w1_ref, b1_ref, w2_ref, b2_ref, g_ref, bb_ref, o_ref):
    ln = _ffn_ln_body(x_ref, w1_ref, b1_ref, w2_ref, b2_ref, g_ref, bb_ref)
    o_ref[...] = ln.astype(o_ref.dtype)


def _ffn_ln_head_kernel(x_ref, w1_ref, b1_ref, w2_ref, b2_ref, g_ref, bb_ref,
                        wh_ref, bh_ref, o_ref, h_ref):
    ln = _ffn_ln_body(x_ref, w1_ref, b1_ref, w2_ref, b2_ref, g_ref, bb_ref)
    o_ref[...] = ln.astype(o_ref.dtype)
    logits = jnp.dot(ln.astype(ACT_DTYPE), wh_ref[...],
                     preferred_element_type=jnp.float32) + bh_ref[...]
    h_ref[...] = logits          # lane-dense f32 head output


def pallas_ffn_ln(x2d, w1, b1, w2, b2, gamma, beta, w_head=None, b_head=None):
    M, E = x2d.shape
    F = w1.shape[1]
    tm = _round_up(M, 8) if M <= 256 else 256
    M_pad = _round_up(M, tm)
    x = x2d.astype(ACT_DTYPE)
    if M_pad != M:
        x = jnp.pad(x, ((0, M_pad - M), (0, 0)))
    base_in = [x, w1.astype(ACT_DTYPE), b1.reshape(1, F).astype(jnp.float32),
               w2.astype(ACT_DTYPE), b2.reshape(1, E).astype(jnp.float32),
               gamma.reshape(1, E).astype(jnp.float32),
               beta.reshape(1, E).astype(jnp.float32)]
    base_specs = [
        pl.BlockSpec((tm, E), lambda i: (i, 0)),
        pl.BlockSpec((E, F), lambda i: (0, 0)),
        pl.BlockSpec((1, F), lambda i: (0, 0)),
        pl.BlockSpec((F, E), lambda i: (0, 0)),
        pl.BlockSpec((1, E), lambda i: (0, 0)),
        pl.BlockSpec((1, E), lambda i: (0, 0)),
        pl.BlockSpec((1, E), lambda i: (0, 0)),
    ]
    cp = pltpu.CompilerParams(dimension_semantics=("parallel",))
    if w_head is None:
        out = pl.pallas_call(
            _ffn_ln_kernel,
            out_shape=jax.ShapeDtypeStruct((M_pad, E), ACT_DTYPE),
            grid=(M_pad // tm,),
            in_specs=base_specs,
            out_specs=pl.BlockSpec((tm, E), lambda i: (i, 0)),
            compiler_params=cp,
        )(*base_in)
        return out[:M] if M_pad != M else out

    Nh = w_head.shape[1]
    out, head = pl.pallas_call(
        _ffn_ln_head_kernel,
        out_shape=(jax.ShapeDtypeStruct((M_pad, E), ACT_DTYPE),
                   jax.ShapeDtypeStruct((M_pad, Nh), jnp.float32)),
        grid=(M_pad // tm,),
        in_specs=base_specs + [pl.BlockSpec((E, Nh), lambda i: (0, 0)),
                               pl.BlockSpec((1, Nh), lambda i: (0, 0))],
        out_specs=(pl.BlockSpec((tm, E), lambda i: (i, 0)),
                   pl.BlockSpec((tm, Nh), lambda i: (i, 0))),
        compiler_params=cp,
    )(*base_in, w_head.astype(ACT_DTYPE), b_head.reshape(1, Nh).astype(jnp.float32))
    if M_pad != M:
        return out[:M], head[:M]
    return out, head


# ----------------------------------------------------------------------------
# Patch embedding: Embedding -> STConv3d -> patchify projection -> + pos emb
# ----------------------------------------------------------------------------
def projection_conv(x, w2d, b, kt, hp, wp):
    """Non-overlapping Conv3d (kernel == stride) as a single Pallas matmul."""
    B, T, H, W, Cin = x.shape
    Do = (T - kt) // kt + 1
    nh, nw = H // hp, W // wp
    xc = x[:, :Do * kt, :nh * hp, :nw * wp, :]
    xc = xc.reshape(B, Do, kt, nh, hp, nw, wp, Cin)
    xc = xc.transpose(0, 1, 3, 5, 2, 4, 6, 7)         # (B,Do,nh,nw,kt,hp,wp,Cin)
    K = kt * hp * wp * Cin
    Cout = w2d.shape[1]
    out = pallas_linear(xc.reshape(-1, K), w2d, b)
    return out.reshape(B, Do * nh * nw, Cout)          # flatten(2).transpose(1,2)


def lucc_patch_embedding(maps, p, proj_kt, patch_size):
    # maps: (B, T, H, W) int32 class indices
    emb = jnp.take(p["embedding"], maps, axis=0).astype(ACT_DTYPE)  # (B,T,H,W,E)
    T = maps.shape[1]
    if T == 2:
        cw, cb = p["stconv2_w"], p["stconv2_b"]
    else:
        cw, cb = p["stconv3_w"], p["stconv3_b"]
    conv = lax.conv_general_dilated(
        emb, cw,
        window_strides=(1, 1, 1),
        padding=((1, 1), (1, 1), (1, 1)),
        dimension_numbers=("NDHWC", "DHWIO", "NDHWC"),
        preferred_element_type=jnp.float32,
    )
    conv = (conv + cb).astype(ACT_DTYPE)
    x = projection_conv(conv, p["proj_w"], p["proj_b"], proj_kt,
                        patch_size[0], patch_size[1])
    return (x + p["pos_emb"]).astype(ACT_DTYPE)


# ----------------------------------------------------------------------------
# Transformer decoder (post-norm, ReLU, eval-mode dropout)
# ----------------------------------------------------------------------------
def _split_heads(x, B, S, num_heads, Dh):
    return x.reshape(B, S, num_heads, Dh).transpose(0, 2, 1, 3).reshape(
        B * num_heads, S, Dh)


def _merge_heads(o, B, S, num_heads, Dh):
    return o.reshape(B, num_heads, S, Dh).transpose(0, 2, 1, 3).reshape(
        B * S, num_heads * Dh)


def decoder_layer(x, kv_l, p, num_heads, head_w=None, head_b=None):
    """One post-norm decoder layer. kv_l: (B, Sk, 2, E) precomputed cross K/V."""
    B, S, E = x.shape
    Sk = kv_l.shape[1]
    Dh = E // num_heads
    x2d = x.reshape(-1, E)

    # ---- self-attention block (causal) ----
    qkv = pallas_linear(x2d, p["self_attn"]["w_qkv"], p["self_attn"]["b_qkv"])
    qkv = qkv.reshape(B, S, 3, E)
    q = _split_heads(qkv[:, :, 0, :], B, S, num_heads, Dh)
    k = _split_heads(qkv[:, :, 1, :], B, S, num_heads, Dh)
    v = _split_heads(qkv[:, :, 2, :], B, S, num_heads, Dh)
    o = pallas_attention(q, k, v, num_heads, causal=True)
    a = _merge_heads(o, B, S, num_heads, Dh)
    # out-proj + residual + LN1, with the cross-attention Q projection fused in
    x1, q_cross = pallas_proj_add_ln(
        a, x2d, p["self_attn"]["w_o"], p["self_attn"]["b_o"],
        p["ln1_g"], p["ln1_b"],
        w_next=p["cross_attn"]["w_q"], b_next=p["cross_attn"]["b_q"])

    # ---- cross-attention block (K/V precomputed for all layers) ----
    q = _split_heads(q_cross.reshape(B, S, E), B, S, num_heads, Dh)
    k = _split_heads(kv_l[:, :, 0, :], B, Sk, num_heads, Dh)
    v = _split_heads(kv_l[:, :, 1, :], B, Sk, num_heads, Dh)
    o = pallas_attention(q, k, v, num_heads, causal=False)
    a = _merge_heads(o, B, S, num_heads, Dh)
    x2 = pallas_proj_add_ln(a, x1, p["cross_attn"]["w_o"], p["cross_attn"]["b_o"],
                            p["ln2_g"], p["ln2_b"])

    # ---- FFN + residual + LN3 (optionally fused with classifier/deconv head) ----
    res = pallas_ffn_ln(x2, p["ff1_w"], p["ff1_b"], p["ff2_w"], p["ff2_b"],
                        p["ln3_g"], p["ln3_b"], w_head=head_w, b_head=head_b)
    if head_w is None:
        return res.reshape(B, S, E), None
    out, head = res
    return out.reshape(B, S, E), head


def landtrans_forward(x_maps, y_maps, params, cfg):
    """Returns logits of shape (B, num_classes, pred_len, H, W)."""
    B, T, H, W = x_maps.shape
    E = cfg["embed_dim"]
    # As in the PyTorch reference: decoder(tgt=x_embedded, memory=y_embedded,
    # tgt_mask=causal(size of y sequence)).
    tgt = lucc_patch_embedding(x_maps, params["input_embed"],
                               cfg["input_size"][0], cfg["patch_size"])
    mem = lucc_patch_embedding(y_maps, params["target_embed"],
                               cfg["target_size"][0], cfg["patch_size"])
    Sk = mem.shape[1]
    L = len(params["decoder_layers"])

    # All layers' cross-attention K/V from the fixed memory in ONE lane-dense matmul.
    kv_all = pallas_linear(mem.reshape(-1, E),
                           params["cross_kv_w"], params["cross_kv_b"])
    kv_all = kv_all.reshape(B, Sk, L, 2, E)

    out = tgt
    head_out = None
    for l, lp in enumerate(params["decoder_layers"]):
        is_last = (l == L - 1)
        out, head_out = decoder_layer(
            out, kv_all[:, :, l], lp, cfg["num_heads"],
            head_w=params["head_w"] if is_last else None,
            head_b=params["head_b"] if is_last else None)

    Hp, Wp = cfg["patch_size"]
    nh, nw = H // Hp, W // Wp
    C, pred_len = cfg["num_classes"], cfg["pred_len"]

    # head_out: (B*nh*nw, C*pred_len*Hp*Wp) f32 from the fused last-layer kernel.
    dec = head_out.reshape(B, nh, nw, C, pred_len, Hp, Wp)
    dec = dec.transpose(0, 3, 4, 1, 5, 2, 6).reshape(B, C, pred_len, nh * Hp, nw * Wp)
    return dec


# ----------------------------------------------------------------------------
# Parameter init (synthetic, torch-like layout) + algebraic fusion / casting
# ----------------------------------------------------------------------------
def init_params(key, cfg):
    E, C, F = cfg["embed_dim"], cfg["num_classes"], cfg["dim_feedforward"]
    Hp, Wp = cfg["patch_size"]
    keys = iter(jax.random.split(key, 128))

    def nrm(shape, s=0.05):
        return (s * jax.random.normal(next(keys), shape)).astype(jnp.float32)

    def zeros(shape):
        return jnp.zeros(shape, jnp.float32)

    def patch_embed_params(input_size):
        kt = input_size[0]
        nh, nw = input_size[1] // Hp, input_size[2] // Wp
        return dict(
            embedding=nrm((C, E)),
            stconv3_w=nrm((3, 3, 3, E, E)), stconv3_b=zeros((E,)),
            stconv2_w=nrm((2, 3, 3, E, E)), stconv2_b=zeros((E,)),
            proj_w=nrm((kt, Hp, Wp, E, E)), proj_b=zeros((E,)),
            pos_emb=nrm((1, nh * nw, E), 0.02),
        )

    def attn_params():
        return dict(wq=nrm((E, E)), bq=zeros((E,)), wk=nrm((E, E)), bk=zeros((E,)),
                    wv=nrm((E, E)), bv=zeros((E,)), wo=nrm((E, E)), bo=zeros((E,)))

    def dec_layer_params():
        return dict(self_attn=attn_params(), cross_attn=attn_params(),
                    ln1_g=jnp.ones((E,), jnp.float32), ln1_b=zeros((E,)),
                    ln2_g=jnp.ones((E,), jnp.float32), ln2_b=zeros((E,)),
                    ff1_w=nrm((E, F)), ff1_b=zeros((F,)),
                    ff2_w=nrm((F, E)), ff2_b=zeros((E,)),
                    ln3_g=jnp.ones((E,), jnp.float32), ln3_b=zeros((E,)))

    return dict(
        input_embed=patch_embed_params(cfg["input_size"]),
        target_embed=patch_embed_params(cfg["target_size"]),
        decoder_layers=[dec_layer_params() for _ in range(cfg["num_layers"])],
        cls_w=nrm((E, C)), cls_b=zeros((C,)),
        dec_w=nrm((C, C, cfg["pred_len"], Hp, Wp)), dec_b=zeros((C,)),
    )


def prepare_params(raw, cfg):
    """Fold scale into Wq, fuse QKV, batch cross-KV across layers,
    fuse classifier+deconv head, cast to bf16."""
    E, C = cfg["embed_dim"], cfg["num_classes"]
    Hp, Wp = cfg["patch_size"]
    pred_len = cfg["pred_len"]
    Dh = E // cfg["num_heads"]
    scale = 1.0 / (Dh ** 0.5)
    bf = lambda a: a.astype(ACT_DTYPE)
    f32 = lambda a: a.astype(jnp.float32)

    def prep_embed(pe):
        return dict(
            embedding=bf(pe["embedding"]),
            stconv3_w=bf(pe["stconv3_w"]), stconv3_b=f32(pe["stconv3_b"]),
            stconv2_w=bf(pe["stconv2_w"]), stconv2_b=f32(pe["stconv2_b"]),
            proj_w=bf(pe["proj_w"].reshape(-1, E)), proj_b=f32(pe["proj_b"]),
            pos_emb=bf(pe["pos_emb"]),
        )

    def prep_self(a):
        w_qkv = jnp.concatenate([a["wq"] * scale, a["wk"], a["wv"]], axis=1)
        b_qkv = jnp.concatenate([a["bq"] * scale, a["bk"], a["bv"]])
        return dict(w_qkv=bf(w_qkv), b_qkv=f32(b_qkv),
                    w_o=bf(a["wo"]), b_o=f32(a["bo"]))

    def prep_cross(a):
        return dict(w_q=bf(a["wq"] * scale), b_q=f32(a["bq"] * scale),
                    w_o=bf(a["wo"]), b_o=f32(a["bo"]))

    def prep_layer(lp):
        return dict(
            self_attn=prep_self(lp["self_attn"]),
            cross_attn=prep_cross(lp["cross_attn"]),
            ln1_g=f32(lp["ln1_g"]), ln1_b=f32(lp["ln1_b"]),
            ln2_g=f32(lp["ln2_g"]), ln2_b=f32(lp["ln2_b"]),
            ff1_w=bf(lp["ff1_w"]), ff1_b=f32(lp["ff1_b"]),
            ff2_w=bf(lp["ff2_w"]), ff2_b=f32(lp["ff2_b"]),
            ln3_g=f32(lp["ln3_g"]), ln3_b=f32(lp["ln3_b"]),
        )

    # All layers' cross-attention K/V projections -> one lane-dense matmul.
    cross_kv_w = jnp.concatenate(
        [jnp.concatenate([lp["cross_attn"]["wk"], lp["cross_attn"]["wv"]], axis=1)
         for lp in raw["decoder_layers"]], axis=1)                    # (E, L*2E)
    cross_kv_b = jnp.concatenate(
        [jnp.concatenate([lp["cross_attn"]["bk"], lp["cross_attn"]["bv"]])
         for lp in raw["decoder_layers"]])                            # (L*2E,)

    # classifier (1x1 conv) o deconv (stride==kernel) == one linear map
    dec_w2d = raw["dec_w"].reshape(C, C * pred_len * Hp * Wp)
    head_w = raw["cls_w"] @ dec_w2d                                   # (E, C*pred*Hp*Wp)
    head_b = raw["cls_b"] @ dec_w2d + jnp.broadcast_to(
        raw["dec_b"][:, None], (C, pred_len * Hp * Wp)).reshape(-1)

    return dict(
        input_embed=prep_embed(raw["input_embed"]),
        target_embed=prep_embed(raw["target_embed"]),
        decoder_layers=[prep_layer(lp) for lp in raw["decoder_layers"]],
        cross_kv_w=bf(cross_kv_w), cross_kv_b=f32(cross_kv_b),
        head_w=bf(head_w), head_b=f32(head_b),
    )


# ----------------------------------------------------------------------------
if __name__ == "__main__":
    cfg = dict(
        seq_len=4, pred_len=2, patch_size=(8, 8),
        input_size=(4, 16, 16), target_size=(2, 16, 16),
        num_classes=5, embed_dim=32, num_heads=4,
        num_layers=2, dim_feedforward=64,
    )
    B = 2

    key = jax.random.PRNGKey(0)
    kp, kx, ky = jax.random.split(key, 3)
    params = prepare_params(init_params(kp, cfg), cfg)

    x_maps = jax.random.randint(kx, (B, cfg["seq_len"], 16, 16), 0,
                                cfg["num_classes"], dtype=jnp.int32)
    y_maps = jax.random.randint(ky, (B, cfg["pred_len"], 16, 16), 0,
                                cfg["num_classes"], dtype=jnp.int32)

    fwd = jax.jit(functools.partial(landtrans_forward, cfg=cfg))
    logits = fwd(x_maps, y_maps, params)
    logits = jax.block_until_ready(logits)

    assert logits.shape == (B, cfg["num_classes"], cfg["pred_len"], 16, 16), logits.shape
    assert logits.dtype == jnp.float32
    print("KERNEL_OK")
</pallas_src>

<mosaic_0001>
module attributes {stable_mosaic.version = 11 : i64} {
  func.func @_linear_kernel(%arg0: i32, %arg1: i32, %arg2: memref<8x2048xbf16, #tpu.memory_space<vmem>>, %arg3: memref<2048x32xbf16, #tpu.memory_space<vmem>>, %arg4: memref<1x32xf32, #tpu.memory_space<vmem>>, %arg5: memref<8x32xbf16, #tpu.memory_space<vmem>>, %arg6: memref<8x32xf32, #tpu.memory_space<vmem>>) attributes {dimension_semantics = [#tpu.dimension_semantics<parallel>, #tpu.dimension_semantics<arbitrary>], iteration_bounds = array<i64: 1, 4>, scalar_prefetch = 0 : i64, scratch_operands = 1 : i64, tpu.core_type = #tpu.core_type<tc>, window_params = [{transform_indices = @transform_0, window_bounds = array<i64: 8, 2048>}, {transform_indices = @transform_1, window_bounds = array<i64: 2048, 32>}, {pipeline_mode = #tpu.pipeline_mode<synchronous>, transform_indices = @transform_2, window_bounds = array<i64: 1, 32>}, {transform_indices = @transform_3, window_bounds = array<i64: 8, 32>}]} {
    %c0_i32 = arith.constant 0 : i32
    %0 = arith.cmpi eq, %arg1, %c0_i32 : i32
    %1 = arith.extui %0 : i1 to i32
    %c0_i32_0 = arith.constant 0 : i32
    %2 = arith.cmpi ne, %1, %c0_i32_0 : i32
    scf.if %2 {
      %cst_9 = arith.constant 0.000000e+00 : f32
      %12 = vector.broadcast %cst_9 : f32 to vector<8x32xf32>
      %c0_10 = arith.constant 0 : index
      %c0_11 = arith.constant 0 : index
      %13 = vector.load %arg6[%c0_10, %c0_11] : memref<8x32xf32, #tpu.memory_space<vmem>>, vector<8x32xf32>
      tpu.vector_store %arg6[%c0_10, %c0_11], %12 {strides = array<i32>} : memref<8x32xf32, #tpu.memory_space<vmem>>, vector<8x32xf32>,
    } else {
    }
    %c0 = arith.constant 0 : index
    %c0_1 = arith.constant 0 : index
    %3 = vector.load %arg6[%c0, %c0_1] : memref<8x32xf32, #tpu.memory_space<vmem>>, vector<8x32xf32>
    %c0_2 = arith.constant 0 : index
    %c0_3 = arith.constant 0 : index
    %4 = vector.load %arg2[%c0_2, %c0_3] : memref<8x2048xbf16, #tpu.memory_space<vmem>>, vector<8x2048xbf16>
    %c0_4 = arith.constant 0 : index
    %c0_5 = arith.constant 0 : index
    %5 = vector.load %arg3[%c0_4, %c0_5] : memref<2048x32xbf16, #tpu.memory_space<vmem>>, vector<2048x32xbf16>
    %cst = arith.constant dense<0.000000e+00> : vector<8x32xf32>
    %6 = tpu.matmul %4, %5, %cst {dimension_numbers = #tpu.dot_dimension_numbers<[1], [0], [0], [1], [0, 0, 1, 1], [], []>} : vector<8x2048xbf16>, vector<2048x32xbf16>, vector<8x32xf32> -> vector<8x32xf32>
    %7 = arith.addf %3, %6 : vector<8x32xf32>
    %c0_6 = arith.constant 0 : index
    %c0_7 = arith.constant 0 : index
    %8 = vector.load %arg6[%c0_6, %c0_7] : memref<8x32xf32, #tpu.memory_space<vmem>>, vector<8x32xf32>
    tpu.vector_store %arg6[%c0_6, %c0_7], %7 {strides = array<i32>} : memref<8x32xf32, #tpu.memory_space<vmem>>, vector<8x32xf32>,
    %c3_i32 = arith.constant 3 : i32
    %9 = arith.cmpi eq, %arg1, %c3_i32 : i32
    %10 = arith.extui %9 : i1 to i32
    %c0_i32_8 = arith.constant 0 : i32
    %11 = arith.cmpi ne, %10, %c0_i32_8 : i32
    scf.if %11 {
      %c0_9 = arith.constant 0 : index
      %c0_10 = arith.constant 0 : index
      %12 = vector.load %arg6[%c0_9, %c0_10] : memref<8x32xf32, #tpu.memory_space<vmem>>, vector<8x32xf32>
      %c0_11 = arith.constant 0 : index
      %c0_12 = arith.constant 0 : index
      %13 = vector.load %arg4[%c0_11, %c0_12] : memref<1x32xf32, #tpu.memory_space<vmem>>, vector<1x32xf32>
      %14 = vector.broadcast %13 : vector<1x32xf32> to vector<8x32xf32>
      %15 = arith.addf %12, %14 : vector<8x32xf32>
      %16 = arith.truncf %15 : vector<8x32xf32> to vector<8x32xbf16>
      %c0_13 = arith.constant 0 : index
      %c0_14 = arith.constant 0 : index
      %17 = vector.load %arg5[%c0_13, %c0_14] : memref<8x32xbf16, #tpu.memory_space<vmem>>, vector<8x32xbf16>
      tpu.vector_store %arg5[%c0_13, %c0_14], %16 {strides = array<i32>} : memref<8x32xbf16, #tpu.memory_space<vmem>>, vector<8x32xbf16>,
    } else {
    }
    return
  }
  func.func @transform_0(%arg0: i32, %arg1: i32) -> (i32, i32) {
    %c0_i32 = arith.constant 0 : i32
    return %arg0, %arg1 : i32, i32
  }
  func.func @transform_1(%arg0: i32, %arg1: i32) -> (i32, i32) {
    %c0_i32 = arith.constant 0 : i32
    %c0_i32_0 = arith.constant 0 : i32
    return %arg1, %c0_i32 : i32, i32
  }
  func.func @transform_2(%arg0: i32, %arg1: i32) -> (i32, i32) {
    %c0_i32 = arith.constant 0 : i32
    %c0_i32_0 = arith.constant 0 : i32
    %c0_i32_1 = arith.constant 0 : i32
    return %c0_i32, %c0_i32_0 : i32, i32
  }
  func.func @transform_3(%arg0: i32, %arg1: i32) -> (i32, i32) {
    %c0_i32 = arith.constant 0 : i32
    %c0_i32_0 = arith.constant 0 : i32
    return %arg0, %c0_i32 : i32, i32
  }
}

module attributes {stable_mosaic.version = 11 : i64} {
  func.func @_linear_kernel(%arg0: i32, %arg1: i32, %arg2: memref<8x32xbf16, #tpu.memory_space<vmem>>, %arg3: memref<32x96xbf16, #tpu.memory_space<vmem>>, %arg4: memref<1x96xf32, #tpu.memory_space<vmem>>, %arg5: memref<8x96xbf16, #tpu.memory_space<vmem>>, %arg6: memref<8x96xf32, #tpu.memory_space<vmem>>) attributes {dimension_semantics = [#tpu.dimension_semantics<parallel>, #tpu.dimension_semantics<arbitrary>], iteration_bounds = array<i64: 1, 1>, scalar_prefetch = 0 : i64, scratch_operands = 1 : i64, tpu.core_type = #tpu.core_type<tc>, window_params = [{transform_indices = @transform_0, window_bounds = array<i64: 8, 32>}, {transform_indices = @transform_1, window_bounds = array<i64: 32, 96>}, {pipeline_mode = #tpu.pipeline_mode<synchronous>, transform_indices = @transform_2, window_bounds = array<i64: 1, 96>}, {transform_indices = @transform_3, window_bounds = array<i64: 8, 96>}]} {
    %c0_i32 = arith.constant 0 : i32
    %0 = arith.cmpi eq, %arg1, %c0_i32 : i32
    %1 = arith.extui %0 : i1 to i32
    %c0_i32_0 = arith.constant 0 : i32
    %2 = arith.cmpi ne, %1, %c0_i32_0 : i32
    scf.if %2 {
      %cst_10 = arith.constant 0.000000e+00 : f32
      %12 = vector.broadcast %cst_10 : f32 to vector<8x96xf32>
      %c0_11 = arith.constant 0 : index
      %c0_12 = arith.constant 0 : index
      %13 = vector.load %arg6[%c0_11, %c0_12] : memref<8x96xf32, #tpu.memory_space<vmem>>, vector<8x96xf32>
      tpu.vector_store %arg6[%c0_11, %c0_12], %12 {strides = array<i32>} : memref<8x96xf32, #tpu.memory_space<vmem>>, vector<8x96xf32>,
    } else {
    }
    %c0 = arith.constant 0 : index
    %c0_1 = arith.constant 0 : index
    %3 = vector.load %arg6[%c0, %c0_1] : memref<8x96xf32, #tpu.memory_space<vmem>>, vector<8x96xf32>
    %c0_2 = arith.constant 0 : index
    %c0_3 = arith.constant 0 : index
    %4 = vector.load %arg2[%c0_2, %c0_3] : memref<8x32xbf16, #tpu.memory_space<vmem>>, vector<8x32xbf16>
    %c0_4 = arith.constant 0 : index
    %c0_5 = arith.constant 0 : index
    %5 = vector.load %arg3[%c0_4, %c0_5] : memref<32x96xbf16, #tpu.memory_space<vmem>>, vector<32x96xbf16>
    %cst = arith.constant dense<0.000000e+00> : vector<8x96xf32>
    %6 = tpu.matmul %4, %5, %cst {dimension_numbers = #tpu.dot_dimension_numbers<[1], [0], [0], [1], [0, 0, 1, 1], [], []>} : vector<8x32xbf16>, vector<32x96xbf16>, vector<8x96xf32> -> vector<8x96xf32>
    %7 = arith.addf %3, %6 : vector<8x96xf32>
    %c0_6 = arith.constant 0 : index
    %c0_7 = arith.constant 0 : index
    %8 = vector.load %arg6[%c0_6, %c0_7] : memref<8x96xf32, #tpu.memory_space<vmem>>, vector<8x96xf32>
    tpu.vector_store %arg6[%c0_6, %c0_7], %7 {strides = array<i32>} : memref<8x96xf32, #tpu.memory_space<vmem>>, vector<8x96xf32>,
    %c0_i32_8 = arith.constant 0 : i32
    %9 = arith.cmpi eq, %arg1, %c0_i32_8 : i32
    %10 = arith.extui %9 : i1 to i32
    %c0_i32_9 = arith.constant 0 : i32
    %11 = arith.cmpi ne, %10, %c0_i32_9 : i32
    scf.if %11 {
      %c0_10 = arith.constant 0 : index
      %c0_11 = arith.constant 0 : index
      %12 = vector.load %arg6[%c0_10, %c0_11] : memref<8x96xf32, #tpu.memory_space<vmem>>, vector<8x96xf32>
      %c0_12 = arith.constant 0 : index
      %c0_13 = arith.constant 0 : index
      %13 = vector.load %arg4[%c0_12, %c0_13] : memref<1x96xf32, #tpu.memory_space<vmem>>, vector<1x96xf32>
      %14 = vector.broadcast %13 : vector<1x96xf32> to vector<8x96xf32>
      %15 = arith.addf %12, %14 : vector<8x96xf32>
      %16 = arith.truncf %15 : vector<8x96xf32> to vector<8x96xbf16>
      %c0_14 = arith.constant 0 : index
      %c0_15 = arith.constant 0 : index
      %17 = vector.load %arg5[%c0_14, %c0_15] : memref<8x96xbf16, #tpu.memory_space<vmem>>, vector<8x96xbf16>
      tpu.vector_store %arg5[%c0_14, %c0_15], %16 {strides = array<i32>} : memref<8x96xbf16, #tpu.memory_space<vmem>>, vector<8x96xbf16>,
    } else {
    }
    return
  }
  func.func @transform_0(%arg0: i32, %arg1: i32) -> (i32, i32) {
    %c0_i32 = arith.constant 0 : i32
    return %arg0, %arg1 : i32, i32
  }
  func.func @transform_1(%arg0: i32, %arg1: i32) -> (i32, i32) {
    %c0_i32 = arith.constant 0 : i32
    %c0_i32_0 = arith.constant 0 : i32
    return %arg1, %c0_i32 : i32, i32
  }
  func.func @transform_2(%arg0: i32, %arg1: i32) -> (i32, i32) {
    %c0_i32 = arith.constant 0 : i32
    %c0_i32_0 = arith.constant 0 : i32
    %c0_i32_1 = arith.constant 0 : i32
    return %c0_i32, %c0_i32_0 : i32, i32
  }
  func.func @transform_3(%arg0: i32, %arg1: i32) -> (i32, i32) {
    %c0_i32 = arith.constant 0 : i32
    %c0_i32_0 = arith.constant 0 : i32
    return %arg0, %c0_i32 : i32, i32
  }
}

module attributes {stable_mosaic.version = 11 : i64} {
  func.func @_attn_kernel(%arg0: i32, %arg1: memref<4x4x8xbf16, #tpu.memory_space<vmem>>, %arg2: memref<4x4x8xbf16, #tpu.memory_space<vmem>>, %arg3: memref<4x4x8xbf16, #tpu.memory_space<vmem>>, %arg4: memref<4x4x8xbf16, #tpu.memory_space<vmem>>) attributes {dimension_semantics = [#tpu.dimension_semantics<parallel>], iteration_bounds = array<i64: 2>, scalar_prefetch = 0 : i64, scratch_operands = 0 : i64, tpu.core_type = #tpu.core_type<tc>, window_params = [{transform_indices = @transform_0, window_bounds = array<i64: 4, 4, 8>}, {transform_indices = @transform_1, window_bounds = array<i64: 4, 4, 8>}, {transform_indices = @transform_2, window_bounds = array<i64: 4, 4, 8>}, {transform_indices = @transform_3, window_bounds = array<i64: 4, 4, 8>}]} {
    %c0 = arith.constant 0 : index
    %c0_0 = arith.constant 0 : index
    %c0_1 = arith.constant 0 : index
    %0 = vector.load %arg1[%c0, %c0_0, %c0_1] : memref<4x4x8xbf16, #tpu.memory_space<vmem>>, vector<4x4x8xbf16>
    %c0_2 = arith.constant 0 : index
    %c0_3 = arith.constant 0 : index
    %c0_4 = arith.constant 0 : index
    %1 = vector.load %arg2[%c0_2, %c0_3, %c0_4] : memref<4x4x8xbf16, #tpu.memory_space<vmem>>, vector<4x4x8xbf16>
    %c0_5 = arith.constant 0 : index
    %c0_6 = arith.constant 0 : index
    %c0_7 = arith.constant 0 : index
    %2 = vector.load %arg3[%c0_5, %c0_6, %c0_7] : memref<4x4x8xbf16, #tpu.memory_space<vmem>>, vector<4x4x8xbf16>
    "tpu.trace_start"() <{level = 10 : i32, message = "bqd,bkd->bqk"}> : () -> ()
    %cst = arith.constant dense<0.000000e+00> : vector<4x4x4xf32>
    %3 = tpu.matmul %0, %1, %cst {dimension_numbers = #tpu.dot_dimension_numbers<[2], [2], [1], [1], [0, 0, 0, 1, 1, 1], [0], [0]>} : vector<4x4x8xbf16>, vector<4x4x8xbf16>, vector<4x4x4xf32> -> vector<4x4x4xf32>
    "tpu.trace_stop"() : () -> ()
    %4 = tpu.iota {dimensions = array<i32: 0>} : vector<4x4xi32>
    %5 = tpu.iota {dimensions = array<i32: 1>} : vector<4x4xi32>
    %6 = arith.cmpi sgt, %5, %4 : vector<4x4xi32>
    %7 = vector.shape_cast %6 : vector<4x4xi1> to vector<1x4x4xi1>
    %cst_8 = arith.constant -1.000000e+30 : f32
    %8 = vector.shape_cast %7 : vector<1x4x4xi1> to vector<1x4x4xi1>
    %9 = vector.broadcast %8 : vector<1x4x4xi1> to vector<4x4x4xi1>
    %10 = vector.broadcast %cst_8 : f32 to vector<4x4x4xf32>
    %11 = arith.select %9, %10, %3 : vector<4x4x4xi1>, vector<4x4x4xf32>
    %cst_9 = arith.constant dense<0xFF800000> : vector<4x4xf32>
    %12 = vector.multi_reduction <maximumf>, %11, %cst_9 [2] : vector<4x4x4xf32> to vector<4x4xf32>
    %13 = vector.shape_cast %12 : vector<4x4xf32> to vector<4x4x1xf32>
    %14 = vector.broadcast %13 : vector<4x4x1xf32> to vector<4x4x4xf32>
    %15 = arith.subf %11, %14 : vector<4x4x4xf32>
    %16 = math.exp %15 : vector<4x4x4xf32>
    %cst_10 = arith.constant dense<0.000000e+00> : vector<4x4xf32>
    %17 = vector.multi_reduction <add>, %16, %cst_10 [2] : vector<4x4x4xf32> to vector<4x4xf32>
    %18 = vector.shape_cast %17 : vector<4x4xf32> to vector<4x4x1xf32>
    %19 = tpu.reciprocal %18 {approx = true} : vector<4x4x1xf32> -> vector<4x4x1xf32>
    %20 = vector.broadcast %19 : vector<4x4x1xf32> to vector<4x4x4xf32>
    %21 = arith.mulf %16, %20 : vector<4x4x4xf32>
    %22 = arith.truncf %21 : vector<4x4x4xf32> to vector<4x4x4xbf16>
    "tpu.trace_start"() <{level = 10 : i32, message = "bqk,bkd->bqd"}> : () -> ()
    %cst_11 = arith.constant dense<0.000000e+00> : vector<4x4x8xf32>
    %23 = tpu.matmul %22, %2, %cst_11 {dimension_numbers = #tpu.dot_dimension_numbers<[2], [1], [1], [2], [0, 0, 0, 1, 1, 2], [0], [0]>} : vector<4x4x4xbf16>, vector<4x4x8xbf16>, vector<4x4x8xf32> -> vector<4x4x8xf32>
    "tpu.trace_stop"() : () -> ()
    %24 = arith.truncf %23 : vector<4x4x8xf32> to vector<4x4x8xbf16>
    %c0_12 = arith.constant 0 : index
    %c0_13 = arith.constant 0 : index
    %c0_14 = arith.constant 0 : index
    %25 = vector.load %arg4[%c0_12, %c0_13, %c0_14] : memref<4x4x8xbf16, #tpu.memory_space<vmem>>, vector<4x4x8xbf16>
    tpu.vector_store %arg4[%c0_12, %c0_13, %c0_14], %24 {strides = array<i32>} : memref<4x4x8xbf16, #tpu.memory_space<vmem>>, vector<4x4x8xbf16>,
    return
  }
  func.func @transform_0(%arg0: i32) -> (i32, i32, i32) {
    %c0_i32 = arith.constant 0 : i32
    %c0_i32_0 = arith.constant 0 : i32
    %c0_i32_1 = arith.constant 0 : i32
    return %arg0, %c0_i32, %c0_i32_0 : i32, i32, i32
  }
  func.func @transform_1(%arg0: i32) -> (i32, i32, i32) {
    %c0_i32 = arith.constant 0 : i32
    %c0_i32_0 = arith.constant 0 : i32
    %c0_i32_1 = arith.constant 0 : i32
    return %arg0, %c0_i32, %c0_i32_0 : i32, i32, i32
  }
  func.func @transform_2(%arg0: i32) -> (i32, i32, i32) {
    %c0_i32 = arith.constant 0 : i32
    %c0_i32_0 = arith.constant 0 : i32
    %c0_i32_1 = arith.constant 0 : i32
    return %arg0, %c0_i32, %c0_i32_0 : i32, i32, i32
  }
  func.func @transform_3(%arg0: i32) -> (i32, i32, i32) {
    %c0_i32 = arith.constant 0 : i32
    %c0_i32_0 = arith.constant 0 : i32
    %c0_i32_1 = arith.constant 0 : i32
    return %arg0, %c0_i32, %c0_i32_0 : i32, i32, i32
  }
}

module attributes {stable_mosaic.version = 11 : i64} {
  func.func @_proj_add_ln_next_kernel(%arg0: i32, %arg1: memref<8x32xbf16, #tpu.memory_space<vmem>>, %arg2: memref<8x32xbf16, #tpu.memory_space<vmem>>, %arg3: memref<32x32xbf16, #tpu.memory_space<vmem>>, %arg4: memref<1x32xf32, #tpu.memory_space<vmem>>, %arg5: memref<1x32xf32, #tpu.memory_space<vmem>>, %arg6: memref<1x32xf32, #tpu.memory_space<vmem>>, %arg7: memref<32x32xbf16, #tpu.memory_space<vmem>>, %arg8: memref<1x32xf32, #tpu.memory_space<vmem>>, %arg9: memref<8x32xbf16, #tpu.memory_space<vmem>>, %arg10: memref<8x32xbf16, #tpu.memory_space<vmem>>) attributes {dimension_semantics = [#tpu.dimension_semantics<parallel>], iteration_bounds = array<i64: 1>, scalar_prefetch = 0 : i64, scratch_operands = 0 : i64, tpu.core_type = #tpu.core_type<tc>, window_params = [{transform_indices = @transform_0, window_bounds = array<i64: 8, 32>}, {transform_indices = @transform_1, window_bounds = array<i64: 8, 32>}, {pipeline_mode = #tpu.pipeline_mode<synchronous>, transform_indices = @transform_2, window_bounds = array<i64: 32, 32>}, {pipeline_mode = #tpu.pipeline_mode<synchronous>, transform_indices = @transform_3, window_bounds = array<i64: 1, 32>}, {pipeline_mode = #tpu.pipeline_mode<synchronous>, transform_indices = @transform_4, window_bounds = array<i64: 1, 32>}, {pipeline_mode = #tpu.pipeline_mode<synchronous>, transform_indices = @transform_5, window_bounds = array<i64: 1, 32>}, {pipeline_mode = #tpu.pipeline_mode<synchronous>, transform_indices = @transform_6, window_bounds = array<i64: 32, 32>}, {pipeline_mode = #tpu.pipeline_mode<synchronous>, transform_indices = @transform_7, window_bounds = array<i64: 1, 32>}, {transform_indices = @transform_8, window_bounds = array<i64: 8, 32>}, {transform_indices = @transform_9, window_bounds = array<i64: 8, 32>}]} {
    %c0 = arith.constant 0 : index
    %c0_0 = arith.constant 0 : index
    %0 = vector.load %arg1[%c0, %c0_0] : memref<8x32xbf16, #tpu.memory_space<vmem>>, vector<8x32xbf16>
    %c0_1 = arith.constant 0 : index
    %c0_2 = arith.constant 0 : index
    %1 = vector.load %arg3[%c0_1, %c0_2] : memref<32x32xbf16, #tpu.memory_space<vmem>>, vector<32x32xbf16>
    %cst = arith.constant dense<0.000000e+00> : vector<8x32xf32>
    %2 = tpu.matmul %0, %1, %cst {dimension_numbers = #tpu.dot_dimension_numbers<[1], [0], [0], [1], [0, 0, 1, 1], [], []>} : vector<8x32xbf16>, vector<32x32xbf16>, vector<8x32xf32> -> vector<8x32xf32>
    %c0_3 = arith.constant 0 : index
    %c0_4 = arith.constant 0 : index
    %3 = vector.load %arg4[%c0_3, %c0_4] : memref<1x32xf32, #tpu.memory_space<vmem>>, vector<1x32xf32>
    %4 = vector.broadcast %3 : vector<1x32xf32> to vector<8x32xf32>
    %5 = arith.addf %2, %4 : vector<8x32xf32>
    %c0_5 = arith.constant 0 : index
    %c0_6 = arith.constant 0 : index
    %6 = vector.load %arg2[%c0_5, %c0_6] : memref<8x32xbf16, #tpu.memory_space<vmem>>, vector<8x32xbf16>
    %7 = arith.extf %6 : vector<8x32xbf16> to vector<8x32xf32>
    %8 = arith.addf %5, %7 : vector<8x32xf32>
    %cst_7 = arith.constant dense<0.000000e+00> : vector<8xf32>
    %9 = vector.multi_reduction <add>, %8, %cst_7 [1] : vector<8x32xf32> to vector<8xf32>
    %10 = vector.shape_cast %9 : vector<8xf32> to vector<8x1xf32>
    %cst_8 = arith.constant 3.200000e+01 : f32
    %11 = vector.broadcast %cst_8 : f32 to vector<8x1xf32>
    %12 = arith.divf %10, %11 : vector<8x1xf32>
    %13 = vector.broadcast %12 : vector<8x1xf32> to vector<8x32xf32>
    %14 = arith.subf %8, %13 : vector<8x32xf32>
    %15 = arith.mulf %14, %14 : vector<8x32xf32>
    %cst_9 = arith.constant dense<0.000000e+00> : vector<8xf32>
    %16 = vector.multi_reduction <add>, %15, %cst_9 [1] : vector<8x32xf32> to vector<8xf32>
    %17 = vector.shape_cast %16 : vector<8xf32> to vector<8x1xf32>
    %cst_10 = arith.constant 3.200000e+01 : f32
    %18 = vector.broadcast %cst_10 : f32 to vector<8x1xf32>
    %19 = arith.divf %17, %18 : vector<8x1xf32>
    %20 = vector.broadcast %12 : vector<8x1xf32> to vector<8x32xf32>
    %21 = arith.subf %8, %20 : vector<8x32xf32>
    %cst_11 = arith.constant 9.99999974E-6 : f32
    %22 = vector.broadcast %cst_11 : f32 to vector<8x1xf32>
    %23 = arith.addf %19, %22 : vector<8x1xf32>
    %24 = math.rsqrt %23 : vector<8x1xf32>
    %25 = vector.broadcast %24 : vector<8x1xf32> to vector<8x32xf32>
    %26 = arith.mulf %21, %25 : vector<8x32xf32>
    %c0_12 = arith.constant 0 : index
    %c0_13 = arith.constant 0 : index
    %27 = vector.load %arg5[%c0_12, %c0_13] : memref<1x32xf32, #tpu.memory_space<vmem>>, vector<1x32xf32>
    %28 = vector.broadcast %27 : vector<1x32xf32> to vector<8x32xf32>
    %29 = arith.mulf %26, %28 : vector<8x32xf32>
    %c0_14 = arith.constant 0 : index
    %c0_15 = arith.constant 0 : index
    %30 = vector.load %arg6[%c0_14, %c0_15] : memref<1x32xf32, #tpu.memory_space<vmem>>, vector<1x32xf32>
    %31 = vector.broadcast %30 : vector<1x32xf32> to vector<8x32xf32>
    %32 = arith.addf %29, %31 : vector<8x32xf32>
    %33 = arith.truncf %32 : vector<8x32xf32> to vector<8x32xbf16>
    %c0_16 = arith.constant 0 : index
    %c0_17 = arith.constant 0 : index
    %34 = vector.load %arg9[%c0_16, %c0_17] : memref<8x32xbf16, #tpu.memory_space<vmem>>, vector<8x32xbf16>
    tpu.vector_store %arg9[%c0_16, %c0_17], %33 {strides = array<i32>} : memref<8x32xbf16, #tpu.memory_space<vmem>>, vector<8x32xbf16>,
    %35 = arith.truncf %32 : vector<8x32xf32> to vector<8x32xbf16>
    %c0_18 = arith.constant 0 : index
    %c0_19 = arith.constant 0 : index
    %36 = vector.load %arg7[%c0_18, %c0_19] : memref<32x32xbf16, #tpu.memory_space<vmem>>, vector<32x32xbf16>
    %cst_20 = arith.constant dense<0.000000e+00> : vector<8x32xf32>
    %37 = tpu.matmul %35, %36, %cst_20 {dimension_numbers = #tpu.dot_dimension_numbers<[1], [0], [0], [1], [0, 0, 1, 1], [], []>} : vector<8x32xbf16>, vector<32x32xbf16>, vector<8x32xf32> -> vector<8x32xf32>
    %c0_21 = arith.constant 0 : index
    %c0_22 = arith.constant 0 : index
    %38 = vector.load %arg8[%c0_21, %c0_22] : memref<1x32xf32, #tpu.memory_space<vmem>>, vector<1x32xf32>
    %39 = vector.broadcast %38 : vector<1x32xf32> to vector<8x32xf32>
    %40 = arith.addf %37, %39 : vector<8x32xf32>
    %41 = arith.truncf %40 : vector<8x32xf32> to vector<8x32xbf16>
    %c0_23 = arith.constant 0 : index
    %c0_24 = arith.constant 0 : index
    %42 = vector.load %arg10[%c0_23, %c0_24] : memref<8x32xbf16, #tpu.memory_space<vmem>>, vector<8x32xbf16>
    tpu.vector_store %arg10[%c0_23, %c0_24], %41 {strides = array<i32>} : memref<8x32xbf16, #tpu.memory_space<vmem>>, vector<8x32xbf16>,
    return
  }
  func.func @transform_0(%arg0: i32) -> (i32, i32) {
    %c0_i32 = arith.constant 0 : i32
    %c0_i32_0 = arith.constant 0 : i32
    return %arg0, %c0_i32 : i32, i32
  }
  func.func @transform_1(%arg0: i32) -> (i32, i32) {
    %c0_i32 = arith.constant 0 : i32
    %c0_i32_0 = arith.constant 0 : i32
    return %arg0, %c0_i32 : i32, i32
  }
  func.func @transform_2(%arg0: i32) -> (i32, i32) {
    %c0_i32 = arith.constant 0 : i32
    %c0_i32_0 = arith.constant 0 : i32
    %c0_i32_1 = arith.constant 0 : i32
    return %c0_i32, %c0_i32_0 : i32, i32
  }
  func.func @transform_3(%arg0: i32) -> (i32, i32) {
    %c0_i32 = arith.constant 0 : i32
    %c0_i32_0 = arith.constant 0 : i32
    %c0_i32_1 = arith.constant 0 : i32
    return %c0_i32, %c0_i32_0 : i32, i32
  }
  func.func @transform_4(%arg0: i32) -> (i32, i32) {
    %c0_i32 = arith.constant 0 : i32
    %c0_i32_0 = arith.constant 0 : i32
    %c0_i32_1 = arith.constant 0 : i32
    return %c0_i32, %c0_i32_0 : i32, i32
  }
  func.func @transform_5(%arg0: i32) -> (i32, i32) {
    %c0_i32 = arith.constant 0 : i32
    %c0_i32_0 = arith.constant 0 : i32
    %c0_i32_1 = arith.constant 0 : i32
    return %c0_i32, %c0_i32_0 : i32, i32
  }
  func.func @transform_6(%arg0: i32) -> (i32, i32) {
    %c0_i32 = arith.constant 0 : i32
    %c0_i32_0 = arith.constant 0 : i32
    %c0_i32_1 = arith.constant 0 : i32
    return %c0_i32, %c0_i32_0 : i32, i32
  }
  func.func @transform_7(%arg0: i32) -> (i32, i32) {
    %c0_i32 = arith.constant 0 : i32
    %c0_i32_0 = arith.constant 0 : i32
    %c0_i32_1 = arith.constant 0 : i32
    return %c0_i32, %c0_i32_0 : i32, i32
  }
  func.func @transform_8(%arg0: i32) -> (i32, i32) {
    %c0_i32 = arith.constant 0 : i32
    %c0_i32_0 = arith.constant 0 : i32
    return %arg0, %c0_i32 : i32, i32
  }
  func.func @transform_9(%arg0: i32) -> (i32, i32) {
    %c0_i32 = arith.constant 0 : i32
    %c0_i32_0 = arith.constant 0 : i32
    return %arg0, %c0_i32 : i32, i32
  }
}

module attributes {stable_mosaic.version = 11 : i64} {
  func.func @_linear_kernel(%arg0: i32, %arg1: i32, %arg2: memref<8x2048xbf16, #tpu.memory_space<vmem>>, %arg3: memref<2048x32xbf16, #tpu.memory_space<vmem>>, %arg4: memref<1x32xf32, #tpu.memory_space<vmem>>, %arg5: memref<8x32xbf16, #tpu.memory_space<vmem>>, %arg6: memref<8x32xf32, #tpu.memory_space<vmem>>) attributes {dimension_semantics = [#tpu.dimension_semantics<parallel>, #tpu.dimension_semantics<arbitrary>], iteration_bounds = array<i64: 1, 2>, scalar_prefetch = 0 : i64, scratch_operands = 1 : i64, tpu.core_type = #tpu.core_type<tc>, window_params = [{transform_indices = @transform_0, window_bounds = array<i64: 8, 2048>}, {transform_indices = @transform_1, window_bounds = array<i64: 2048, 32>}, {pipeline_mode = #tpu.pipeline_mode<synchronous>, transform_indices = @transform_2, window_bounds = array<i64: 1, 32>}, {transform_indices = @transform_3, window_bounds = array<i64: 8, 32>}]} {
    %c0_i32 = arith.constant 0 : i32
    %0 = arith.cmpi eq, %arg1, %c0_i32 : i32
    %1 = arith.extui %0 : i1 to i32
    %c0_i32_0 = arith.constant 0 : i32
    %2 = arith.cmpi ne, %1, %c0_i32_0 : i32
    scf.if %2 {
      %cst_9 = arith.constant 0.000000e+00 : f32
      %12 = vector.broadcast %cst_9 : f32 to vector<8x32xf32>
      %c0_10 = arith.constant 0 : index
      %c0_11 = arith.constant 0 : index
      %13 = vector.load %arg6[%c0_10, %c0_11] : memref<8x32xf32, #tpu.memory_space<vmem>>, vector<8x32xf32>
      tpu.vector_store %arg6[%c0_10, %c0_11], %12 {strides = array<i32>} : memref<8x32xf32, #tpu.memory_space<vmem>>, vector<8x32xf32>,
    } else {
    }
    %c0 = arith.constant 0 : index
    %c0_1 = arith.constant 0 : index
    %3 = vector.load %arg6[%c0, %c0_1] : memref<8x32xf32, #tpu.memory_space<vmem>>, vector<8x32xf32>
    %c0_2 = arith.constant 0 : index
    %c0_3 = arith.constant 0 : index
    %4 = vector.load %arg2[%c0_2, %c0_3] : memref<8x2048xbf16, #tpu.memory_space<vmem>>, vector<8x2048xbf16>
    %c0_4 = arith.constant 0 : index
    %c0_5 = arith.constant 0 : index
    %5 = vector.load %arg3[%c0_4, %c0_5] : memref<2048x32xbf16, #tpu.memory_space<vmem>>, vector<2048x32xbf16>
    %cst = arith.constant dense<0.000000e+00> : vector<8x32xf32>
    %6 = tpu.matmul %4, %5, %cst {dimension_numbers = #tpu.dot_dimension_numbers<[1], [0], [0], [1], [0, 0, 1, 1], [], []>} : vector<8x2048xbf16>, vector<2048x32xbf16>, vector<8x32xf32> -> vector<8x32xf32>
    %7 = arith.addf %3, %6 : vector<8x32xf32>
    %c0_6 = arith.constant 0 : index
    %c0_7 = arith.constant 0 : index
    %8 = vector.load %arg6[%c0_6, %c0_7] : memref<8x32xf32, #tpu.memory_space<vmem>>, vector<8x32xf32>
    tpu.vector_store %arg6[%c0_6, %c0_7], %7 {strides = array<i32>} : memref<8x32xf32, #tpu.memory_space<vmem>>, vector<8x32xf32>,
    %c1_i32 = arith.constant 1 : i32
    %9 = arith.cmpi eq, %arg1, %c1_i32 : i32
    %10 = arith.extui %9 : i1 to i32
    %c0_i32_8 = arith.constant 0 : i32
    %11 = arith.cmpi ne, %10, %c0_i32_8 : i32
    scf.if %11 {
      %c0_9 = arith.constant 0 : index
      %c0_10 = arith.constant 0 : index
      %12 = vector.load %arg6[%c0_9, %c0_10] : memref<8x32xf32, #tpu.memory_space<vmem>>, vector<8x32xf32>
      %c0_11 = arith.constant 0 : index
      %c0_12 = arith.constant 0 : index
      %13 = vector.load %arg4[%c0_11, %c0_12] : memref<1x32xf32, #tpu.memory_space<vmem>>, vector<1x32xf32>
      %14 = vector.broadcast %13 : vector<1x32xf32> to vector<8x32xf32>
      %15 = arith.addf %12, %14 : vector<8x32xf32>
      %16 = arith.truncf %15 : vector<8x32xf32> to vector<8x32xbf16>
      %c0_13 = arith.constant 0 : index
      %c0_14 = arith.constant 0 : index
      %17 = vector.load %arg5[%c0_13, %c0_14] : memref<8x32xbf16, #tpu.memory_space<vmem>>, vector<8x32xbf16>
      tpu.vector_store %arg5[%c0_13, %c0_14], %16 {strides = array<i32>} : memref<8x32xbf16, #tpu.memory_space<vmem>>, vector<8x32xbf16>,
    } else {
    }
    return
  }
  func.func @transform_0(%arg0: i32, %arg1: i32) -> (i32, i32) {
    %c0_i32 = arith.constant 0 : i32
    return %arg0, %arg1 : i32, i32
  }
  func.func @transform_1(%arg0: i32, %arg1: i32) -> (i32, i32) {
    %c0_i32 = arith.constant 0 : i32
    %c0_i32_0 = arith.constant 0 : i32
    return %arg1, %c0_i32 : i32, i32
  }
  func.func @transform_2(%arg0: i32, %arg1: i32) -> (i32, i32) {
    %c0_i32 = arith.constant 0 : i32
    %c0_i32_0 = arith.constant 0 : i32
    %c0_i32_1 = arith.constant 0 : i32
    return %c0_i32, %c0_i32_0 : i32, i32
  }
  func.func @transform_3(%arg0: i32, %arg1: i32) -> (i32, i32) {
    %c0_i32 = arith.constant 0 : i32
    %c0_i32_0 = arith.constant 0 : i32
    return %arg0, %c0_i32 : i32, i32
  }
}

module attributes {stable_mosaic.version = 11 : i64} {
  func.func @_linear_kernel(%arg0: i32, %arg1: i32, %arg2: memref<8x32xbf16, #tpu.memory_space<vmem>>, %arg3: memref<32x128xbf16, #tpu.memory_space<vmem>>, %arg4: memref<1x128xf32, #tpu.memory_space<vmem>>, %arg5: memref<8x128xbf16, #tpu.memory_space<vmem>>, %arg6: memref<8x128xf32, #tpu.memory_space<vmem>>) attributes {dimension_semantics = [#tpu.dimension_semantics<parallel>, #tpu.dimension_semantics<arbitrary>], iteration_bounds = array<i64: 1, 1>, scalar_prefetch = 0 : i64, scratch_operands = 1 : i64, tpu.core_type = #tpu.core_type<tc>, window_params = [{transform_indices = @transform_0, window_bounds = array<i64: 8, 32>}, {transform_indices = @transform_1, window_bounds = array<i64: 32, 128>}, {pipeline_mode = #tpu.pipeline_mode<synchronous>, transform_indices = @transform_2, window_bounds = array<i64: 1, 128>}, {transform_indices = @transform_3, window_bounds = array<i64: 8, 128>}]} {
    %c0_i32 = arith.constant 0 : i32
    %0 = arith.cmpi eq, %arg1, %c0_i32 : i32
    %1 = arith.extui %0 : i1 to i32
    %c0_i32_0 = arith.constant 0 : i32
    %2 = arith.cmpi ne, %1, %c0_i32_0 : i32
    scf.if %2 {
      %cst_10 = arith.constant 0.000000e+00 : f32
      %12 = vector.broadcast %cst_10 : f32 to vector<8x128xf32>
      %c0_11 = arith.constant 0 : index
      %c0_12 = arith.constant 0 : index
      %13 = vector.load %arg6[%c0_11, %c0_12] : memref<8x128xf32, #tpu.memory_space<vmem>>, vector<8x128xf32>
      tpu.vector_store %arg6[%c0_11, %c0_12], %12 {strides = array<i32>} : memref<8x128xf32, #tpu.memory_space<vmem>>, vector<8x128xf32>,
    } else {
    }
    %c0 = arith.constant 0 : index
    %c0_1 = arith.constant 0 : index
    %3 = vector.load %arg6[%c0, %c0_1] : memref<8x128xf32, #tpu.memory_space<vmem>>, vector<8x128xf32>
    %c0_2 = arith.constant 0 : index
    %c0_3 = arith.constant 0 : index
    %4 = vector.load %arg2[%c0_2, %c0_3] : memref<8x32xbf16, #tpu.memory_space<vmem>>, vector<8x32xbf16>
    %c0_4 = arith.constant 0 : index
    %c0_5 = arith.constant 0 : index
    %5 = vector.load %arg3[%c0_4, %c0_5] : memref<32x128xbf16, #tpu.memory_space<vmem>>, vector<32x128xbf16>
    %cst = arith.constant dense<0.000000e+00> : vector<8x128xf32>
    %6 = tpu.matmul %4, %5, %cst {dimension_numbers = #tpu.dot_dimension_numbers<[1], [0], [0], [1], [0, 0, 1, 1], [], []>} : vector<8x32xbf16>, vector<32x128xbf16>, vector<8x128xf32> -> vector<8x128xf32>
    %7 = arith.addf %3, %6 : vector<8x128xf32>
    %c0_6 = arith.constant 0 : index
    %c0_7 = arith.constant 0 : index
    %8 = vector.load %arg6[%c0_6, %c0_7] : memref<8x128xf32, #tpu.memory_space<vmem>>, vector<8x128xf32>
    tpu.vector_store %arg6[%c0_6, %c0_7], %7 {strides = array<i32>} : memref<8x128xf32, #tpu.memory_space<vmem>>, vector<8x128xf32>,
    %c0_i32_8 = arith.constant 0 : i32
    %9 = arith.cmpi eq, %arg1, %c0_i32_8 : i32
    %10 = arith.extui %9 : i1 to i32
    %c0_i32_9 = arith.constant 0 : i32
    %11 = arith.cmpi ne, %10, %c0_i32_9 : i32
    scf.if %11 {
      %c0_10 = arith.constant 0 : index
      %c0_11 = arith.constant 0 : index
      %12 = vector.load %arg6[%c0_10, %c0_11] : memref<8x128xf32, #tpu.memory_space<vmem>>, vector<8x128xf32>
      %c0_12 = arith.constant 0 : index
      %c0_13 = arith.constant 0 : index
      %13 = vector.load %arg4[%c0_12, %c0_13] : memref<1x128xf32, #tpu.memory_space<vmem>>, vector<1x128xf32>
      %14 = vector.broadcast %13 : vector<1x128xf32> to vector<8x128xf32>
      %15 = arith.addf %12, %14 : vector<8x128xf32>
      %16 = arith.truncf %15 : vector<8x128xf32> to vector<8x128xbf16>
      %c0_14 = arith.constant 0 : index
      %c0_15 = arith.constant 0 : index
      %17 = vector.load %arg5[%c0_14, %c0_15] : memref<8x128xbf16, #tpu.memory_space<vmem>>, vector<8x128xbf16>
      tpu.vector_store %arg5[%c0_14, %c0_15], %16 {strides = array<i32>} : memref<8x128xbf16, #tpu.memory_space<vmem>>, vector<8x128xbf16>,
    } else {
    }
    return
  }
  func.func @transform_0(%arg0: i32, %arg1: i32) -> (i32, i32) {
    %c0_i32 = arith.constant 0 : i32
    return %arg0, %arg1 : i32, i32
  }
  func.func @transform_1(%arg0: i32, %arg1: i32) -> (i32, i32) {
    %c0_i32 = arith.constant 0 : i32
    %c0_i32_0 = arith.constant 0 : i32
    return %arg1, %c0_i32 : i32, i32
  }
  func.func @transform_2(%arg0: i32, %arg1: i32) -> (i32, i32) {
    %c0_i32 = arith.constant 0 : i32
    %c0_i32_0 = arith.constant 0 : i32
    %c0_i32_1 = arith.constant 0 : i32
    return %c0_i32, %c0_i32_0 : i32, i32
  }
  func.func @transform_3(%arg0: i32, %arg1: i32) -> (i32, i32) {
    %c0_i32 = arith.constant 0 : i32
    %c0_i32_0 = arith.constant 0 : i32
    return %arg0, %c0_i32 : i32, i32
  }
}

module attributes {stable_mosaic.version = 11 : i64} {
  func.func @_attn_kernel(%arg0: i32, %arg1: memref<4x4x8xbf16, #tpu.memory_space<vmem>>, %arg2: memref<4x4x8xbf16, #tpu.memory_space<vmem>>, %arg3: memref<4x4x8xbf16, #tpu.memory_space<vmem>>, %arg4: memref<4x4x8xbf16, #tpu.memory_space<vmem>>) attributes {dimension_semantics = [#tpu.dimension_semantics<parallel>], iteration_bounds = array<i64: 2>, scalar_prefetch = 0 : i64, scratch_operands = 0 : i64, tpu.core_type = #tpu.core_type<tc>, window_params = [{transform_indices = @transform_0, window_bounds = array<i64: 4, 4, 8>}, {transform_indices = @transform_1, window_bounds = array<i64: 4, 4, 8>}, {transform_indices = @transform_2, window_bounds = array<i64: 4, 4, 8>}, {transform_indices = @transform_3, window_bounds = array<i64: 4, 4, 8>}]} {
    %c0 = arith.constant 0 : index
    %c0_0 = arith.constant 0 : index
    %c0_1 = arith.constant 0 : index
    %0 = vector.load %arg1[%c0, %c0_0, %c0_1] : memref<4x4x8xbf16, #tpu.memory_space<vmem>>, vector<4x4x8xbf16>
    %c0_2 = arith.constant 0 : index
    %c0_3 = arith.constant 0 : index
    %c0_4 = arith.constant 0 : index
    %1 = vector.load %arg2[%c0_2, %c0_3, %c0_4] : memref<4x4x8xbf16, #tpu.memory_space<vmem>>, vector<4x4x8xbf16>
    %c0_5 = arith.constant 0 : index
    %c0_6 = arith.constant 0 : index
    %c0_7 = arith.constant 0 : index
    %2 = vector.load %arg3[%c0_5, %c0_6, %c0_7] : memref<4x4x8xbf16, #tpu.memory_space<vmem>>, vector<4x4x8xbf16>
    "tpu.trace_start"() <{level = 10 : i32, message = "bqd,bkd->bqk"}> : () -> ()
    %cst = arith.constant dense<0.000000e+00> : vector<4x4x4xf32>
    %3 = tpu.matmul %0, %1, %cst {dimension_numbers = #tpu.dot_dimension_numbers<[2], [2], [1], [1], [0, 0, 0, 1, 1, 1], [0], [0]>} : vector<4x4x8xbf16>, vector<4x4x8xbf16>, vector<4x4x4xf32> -> vector<4x4x4xf32>
    "tpu.trace_stop"() : () -> ()
    %cst_8 = arith.constant dense<0xFF800000> : vector<4x4xf32>
    %4 = vector.multi_reduction <maximumf>, %3, %cst_8 [2] : vector<4x4x4xf32> to vector<4x4xf32>
    %5 = vector.shape_cast %4 : vector<4x4xf32> to vector<4x4x1xf32>
    %6 = vector.broadcast %5 : vector<4x4x1xf32> to vector<4x4x4xf32>
    %7 = arith.subf %3, %6 : vector<4x4x4xf32>
    %8 = math.exp %7 : vector<4x4x4xf32>
    %cst_9 = arith.constant dense<0.000000e+00> : vector<4x4xf32>
    %9 = vector.multi_reduction <add>, %8, %cst_9 [2] : vector<4x4x4xf32> to vector<4x4xf32>
    %10 = vector.shape_cast %9 : vector<4x4xf32> to vector<4x4x1xf32>
    %11 = tpu.reciprocal %10 {approx = true} : vector<4x4x1xf32> -> vector<4x4x1xf32>
    %12 = vector.broadcast %11 : vector<4x4x1xf32> to vector<4x4x4xf32>
    %13 = arith.mulf %8, %12 : vector<4x4x4xf32>
    %14 = arith.truncf %13 : vector<4x4x4xf32> to vector<4x4x4xbf16>
    "tpu.trace_start"() <{level = 10 : i32, message = "bqk,bkd->bqd"}> : () -> ()
    %cst_10 = arith.constant dense<0.000000e+00> : vector<4x4x8xf32>
    %15 = tpu.matmul %14, %2, %cst_10 {dimension_numbers = #tpu.dot_dimension_numbers<[2], [1], [1], [2], [0, 0, 0, 1, 1, 2], [0], [0]>} : vector<4x4x4xbf16>, vector<4x4x8xbf16>, vector<4x4x8xf32> -> vector<4x4x8xf32>
    "tpu.trace_stop"() : () -> ()
    %16 = arith.truncf %15 : vector<4x4x8xf32> to vector<4x4x8xbf16>
    %c0_11 = arith.constant 0 : index
    %c0_12 = arith.constant 0 : index
    %c0_13 = arith.constant 0 : index
    %17 = vector.load %arg4[%c0_11, %c0_12, %c0_13] : memref<4x4x8xbf16, #tpu.memory_space<vmem>>, vector<4x4x8xbf16>
    tpu.vector_store %arg4[%c0_11, %c0_12, %c0_13], %16 {strides = array<i32>} : memref<4x4x8xbf16, #tpu.memory_space<vmem>>, vector<4x4x8xbf16>,
    return
  }
  func.func @transform_0(%arg0: i32) -> (i32, i32, i32) {
    %c0_i32 = arith.constant 0 : i32
    %c0_i32_0 = arith.constant 0 : i32
    %c0_i32_1 = arith.constant 0 : i32
    return %arg0, %c0_i32, %c0_i32_0 : i32, i32, i32
  }
  func.func @transform_1(%arg0: i32) -> (i32, i32, i32) {
    %c0_i32 = arith.constant 0 : i32
    %c0_i32_0 = arith.constant 0 : i32
    %c0_i32_1 = arith.constant 0 : i32
    return %arg0, %c0_i32, %c0_i32_0 : i32, i32, i32
  }
  func.func @transform_2(%arg0: i32) -> (i32, i32, i32) {
    %c0_i32 = arith.constant 0 : i32
    %c0_i32_0 = arith.constant 0 : i32
    %c0_i32_1 = arith.constant 0 : i32
    return %arg0, %c0_i32, %c0_i32_0 : i32, i32, i32
  }
  func.func @transform_3(%arg0: i32) -> (i32, i32, i32) {
    %c0_i32 = arith.constant 0 : i32
    %c0_i32_0 = arith.constant 0 : i32
    %c0_i32_1 = arith.constant 0 : i32
    return %arg0, %c0_i32, %c0_i32_0 : i32, i32, i32
  }
}

module attributes {stable_mosaic.version = 11 : i64} {
  func.func @_proj_add_ln_kernel(%arg0: i32, %arg1: memref<8x32xbf16, #tpu.memory_space<vmem>>, %arg2: memref<8x32xbf16, #tpu.memory_space<vmem>>, %arg3: memref<32x32xbf16, #tpu.memory_space<vmem>>, %arg4: memref<1x32xf32, #tpu.memory_space<vmem>>, %arg5: memref<1x32xf32, #tpu.memory_space<vmem>>, %arg6: memref<1x32xf32, #tpu.memory_space<vmem>>, %arg7: memref<8x32xbf16, #tpu.memory_space<vmem>>) attributes {dimension_semantics = [#tpu.dimension_semantics<parallel>], iteration_bounds = array<i64: 1>, scalar_prefetch = 0 : i64, scratch_operands = 0 : i64, tpu.core_type = #tpu.core_type<tc>, window_params = [{transform_indices = @transform_0, window_bounds = array<i64: 8, 32>}, {transform_indices = @transform_1, window_bounds = array<i64: 8, 32>}, {pipeline_mode = #tpu.pipeline_mode<synchronous>, transform_indices = @transform_2, window_bounds = array<i64: 32, 32>}, {pipeline_mode = #tpu.pipeline_mode<synchronous>, transform_indices = @transform_3, window_bounds = array<i64: 1, 32>}, {pipeline_mode = #tpu.pipeline_mode<synchronous>, transform_indices = @transform_4, window_bounds = array<i64: 1, 32>}, {pipeline_mode = #tpu.pipeline_mode<synchronous>, transform_indices = @transform_5, window_bounds = array<i64: 1, 32>}, {transform_indices = @transform_6, window_bounds = array<i64: 8, 32>}]} {
    %c0 = arith.constant 0 : index
    %c0_0 = arith.constant 0 : index
    %0 = vector.load %arg1[%c0, %c0_0] : memref<8x32xbf16, #tpu.memory_space<vmem>>, vector<8x32xbf16>
    %c0_1 = arith.constant 0 : index
    %c0_2 = arith.constant 0 : index
    %1 = vector.load %arg3[%c0_1, %c0_2] : memref<32x32xbf16, #tpu.memory_space<vmem>>, vector<32x32xbf16>
    %cst = arith.constant dense<0.000000e+00> : vector<8x32xf32>
    %2 = tpu.matmul %0, %1, %cst {dimension_numbers = #tpu.dot_dimension_numbers<[1], [0], [0], [1], [0, 0, 1, 1], [], []>} : vector<8x32xbf16>, vector<32x32xbf16>, vector<8x32xf32> -> vector<8x32xf32>
    %c0_3 = arith.constant 0 : index
    %c0_4 = arith.constant 0 : index
    %3 = vector.load %arg4[%c0_3, %c0_4] : memref<1x32xf32, #tpu.memory_space<vmem>>, vector<1x32xf32>
    %4 = vector.broadcast %3 : vector<1x32xf32> to vector<8x32xf32>
    %5 = arith.addf %2, %4 : vector<8x32xf32>
    %c0_5 = arith.constant 0 : index
    %c0_6 = arith.constant 0 : index
    %6 = vector.load %arg2[%c0_5, %c0_6] : memref<8x32xbf16, #tpu.memory_space<vmem>>, vector<8x32xbf16>
    %7 = arith.extf %6 : vector<8x32xbf16> to vector<8x32xf32>
    %8 = arith.addf %5, %7 : vector<8x32xf32>
    %cst_7 = arith.constant dense<0.000000e+00> : vector<8xf32>
    %9 = vector.multi_reduction <add>, %8, %cst_7 [1] : vector<8x32xf32> to vector<8xf32>
    %10 = vector.shape_cast %9 : vector<8xf32> to vector<8x1xf32>
    %cst_8 = arith.constant 3.200000e+01 : f32
    %11 = vector.broadcast %cst_8 : f32 to vector<8x1xf32>
    %12 = arith.divf %10, %11 : vector<8x1xf32>
    %13 = vector.broadcast %12 : vector<8x1xf32> to vector<8x32xf32>
    %14 = arith.subf %8, %13 : vector<8x32xf32>
    %15 = arith.mulf %14, %14 : vector<8x32xf32>
    %cst_9 = arith.constant dense<0.000000e+00> : vector<8xf32>
    %16 = vector.multi_reduction <add>, %15, %cst_9 [1] : vector<8x32xf32> to vector<8xf32>
    %17 = vector.shape_cast %16 : vector<8xf32> to vector<8x1xf32>
    %cst_10 = arith.constant 3.200000e+01 : f32
    %18 = vector.broadcast %cst_10 : f32 to vector<8x1xf32>
    %19 = arith.divf %17, %18 : vector<8x1xf32>
    %20 = vector.broadcast %12 : vector<8x1xf32> to vector<8x32xf32>
    %21 = arith.subf %8, %20 : vector<8x32xf32>
    %cst_11 = arith.constant 9.99999974E-6 : f32
    %22 = vector.broadcast %cst_11 : f32 to vector<8x1xf32>
    %23 = arith.addf %19, %22 : vector<8x1xf32>
    %24 = math.rsqrt %23 : vector<8x1xf32>
    %25 = vector.broadcast %24 : vector<8x1xf32> to vector<8x32xf32>
    %26 = arith.mulf %21, %25 : vector<8x32xf32>
    %c0_12 = arith.constant 0 : index
    %c0_13 = arith.constant 0 : index
    %27 = vector.load %arg5[%c0_12, %c0_13] : memref<1x32xf32, #tpu.memory_space<vmem>>, vector<1x32xf32>
    %28 = vector.broadcast %27 : vector<1x32xf32> to vector<8x32xf32>
    %29 = arith.mulf %26, %28 : vector<8x32xf32>
    %c0_14 = arith.constant 0 : index
    %c0_15 = arith.constant 0 : index
    %30 = vector.load %arg6[%c0_14, %c0_15] : memref<1x32xf32, #tpu.memory_space<vmem>>, vector<1x32xf32>
    %31 = vector.broadcast %30 : vector<1x32xf32> to vector<8x32xf32>
    %32 = arith.addf %29, %31 : vector<8x32xf32>
    %33 = arith.truncf %32 : vector<8x32xf32> to vector<8x32xbf16>
    %c0_16 = arith.constant 0 : index
    %c0_17 = arith.constant 0 : index
    %34 = vector.load %arg7[%c0_16, %c0_17] : memref<8x32xbf16, #tpu.memory_space<vmem>>, vector<8x32xbf16>
    tpu.vector_store %arg7[%c0_16, %c0_17], %33 {strides = array<i32>} : memref<8x32xbf16, #tpu.memory_space<vmem>>, vector<8x32xbf16>,
    return
  }
  func.func @transform_0(%arg0: i32) -> (i32, i32) {
    %c0_i32 = arith.constant 0 : i32
    %c0_i32_0 = arith.constant 0 : i32
    return %arg0, %c0_i32 : i32, i32
  }
  func.func @transform_1(%arg0: i32) -> (i32, i32) {
    %c0_i32 = arith.constant 0 : i32
    %c0_i32_0 = arith.constant 0 : i32
    return %arg0, %c0_i32 : i32, i32
  }
  func.func @transform_2(%arg0: i32) -> (i32, i32) {
    %c0_i32 = arith.constant 0 : i32
    %c0_i32_0 = arith.constant 0 : i32
    %c0_i32_1 = arith.constant 0 : i32
    return %c0_i32, %c0_i32_0 : i32, i32
  }
  func.func @transform_3(%arg0: i32) -> (i32, i32) {
    %c0_i32 = arith.constant 0 : i32
    %c0_i32_0 = arith.constant 0 : i32
    %c0_i32_1 = arith.constant 0 : i32
    return %c0_i32, %c0_i32_0 : i32, i32
  }
  func.func @transform_4(%arg0: i32) -> (i32, i32) {
    %c0_i32 = arith.constant 0 : i32
    %c0_i32_0 = arith.constant 0 : i32
    %c0_i32_1 = arith.constant 0 : i32
    return %c0_i32, %c0_i32_0 : i32, i32
  }
  func.func @transform_5(%arg0: i32) -> (i32, i32) {
    %c0_i32 = arith.constant 0 : i32
    %c0_i32_0 = arith.constant 0 : i32
    %c0_i32_1 = arith.constant 0 : i32
    return %c0_i32, %c0_i32_0 : i32, i32
  }
  func.func @transform_6(%arg0: i32) -> (i32, i32) {
    %c0_i32 = arith.constant 0 : i32
    %c0_i32_0 = arith.constant 0 : i32
    return %arg0, %c0_i32 : i32, i32
  }
}

module attributes {stable_mosaic.version = 11 : i64} {
  func.func @_ffn_ln_kernel(%arg0: i32, %arg1: memref<8x32xbf16, #tpu.memory_space<vmem>>, %arg2: memref<32x64xbf16, #tpu.memory_space<vmem>>, %arg3: memref<1x64xf32, #tpu.memory_space<vmem>>, %arg4: memref<64x32xbf16, #tpu.memory_space<vmem>>, %arg5: memref<1x32xf32, #tpu.memory_space<vmem>>, %arg6: memref<1x32xf32, #tpu.memory_space<vmem>>, %arg7: memref<1x32xf32, #tpu.memory_space<vmem>>, %arg8: memref<8x32xbf16, #tpu.memory_space<vmem>>) attributes {dimension_semantics = [#tpu.dimension_semantics<parallel>], iteration_bounds = array<i64: 1>, scalar_prefetch = 0 : i64, scratch_operands = 0 : i64, tpu.core_type = #tpu.core_type<tc>, window_params = [{transform_indices = @transform_0, window_bounds = array<i64: 8, 32>}, {pipeline_mode = #tpu.pipeline_mode<synchronous>, transform_indices = @transform_1, window_bounds = array<i64: 32, 64>}, {pipeline_mode = #tpu.pipeline_mode<synchronous>, transform_indices = @transform_2, window_bounds = array<i64: 1, 64>}, {pipeline_mode = #tpu.pipeline_mode<synchronous>, transform_indices = @transform_3, window_bounds = array<i64: 64, 32>}, {pipeline_mode = #tpu.pipeline_mode<synchronous>, transform_indices = @transform_4, window_bounds = array<i64: 1, 32>}, {pipeline_mode = #tpu.pipeline_mode<synchronous>, transform_indices = @transform_5, window_bounds = array<i64: 1, 32>}, {pipeline_mode = #tpu.pipeline_mode<synchronous>, transform_indices = @transform_6, window_bounds = array<i64: 1, 32>}, {transform_indices = @transform_7, window_bounds = array<i64: 8, 32>}]} {
    %c0 = arith.constant 0 : index
    %c0_0 = arith.constant 0 : index
    %0 = vector.load %arg1[%c0, %c0_0] : memref<8x32xbf16, #tpu.memory_space<vmem>>, vector<8x32xbf16>
    %c0_1 = arith.constant 0 : index
    %c0_2 = arith.constant 0 : index
    %1 = vector.load %arg2[%c0_1, %c0_2] : memref<32x64xbf16, #tpu.memory_space<vmem>>, vector<32x64xbf16>
    %cst = arith.constant dense<0.000000e+00> : vector<8x64xf32>
    %2 = tpu.matmul %0, %1, %cst {dimension_numbers = #tpu.dot_dimension_numbers<[1], [0], [0], [1], [0, 0, 1, 1], [], []>} : vector<8x32xbf16>, vector<32x64xbf16>, vector<8x64xf32> -> vector<8x64xf32>
    %c0_3 = arith.constant 0 : index
    %c0_4 = arith.constant 0 : index
    %3 = vector.load %arg3[%c0_3, %c0_4] : memref<1x64xf32, #tpu.memory_space<vmem>>, vector<1x64xf32>
    %4 = vector.broadcast %3 : vector<1x64xf32> to vector<8x64xf32>
    %5 = arith.addf %2, %4 : vector<8x64xf32>
    %cst_5 = arith.constant 0.000000e+00 : f32
    %6 = vector.broadcast %cst_5 : f32 to vector<8x64xf32>
    %7 = arith.maximumf %5, %6 : vector<8x64xf32>
    %8 = arith.truncf %7 : vector<8x64xf32> to vector<8x64xbf16>
    %c0_6 = arith.constant 0 : index
    %c0_7 = arith.constant 0 : index
    %9 = vector.load %arg4[%c0_6, %c0_7] : memref<64x32xbf16, #tpu.memory_space<vmem>>, vector<64x32xbf16>
    %cst_8 = arith.constant dense<0.000000e+00> : vector<8x32xf32>
    %10 = tpu.matmul %8, %9, %cst_8 {dimension_numbers = #tpu.dot_dimension_numbers<[1], [0], [0], [1], [0, 0, 1, 1], [], []>} : vector<8x64xbf16>, vector<64x32xbf16>, vector<8x32xf32> -> vector<8x32xf32>
    %c0_9 = arith.constant 0 : index
    %c0_10 = arith.constant 0 : index
    %11 = vector.load %arg5[%c0_9, %c0_10] : memref<1x32xf32, #tpu.memory_space<vmem>>, vector<1x32xf32>
    %12 = vector.broadcast %11 : vector<1x32xf32> to vector<8x32xf32>
    %13 = arith.addf %10, %12 : vector<8x32xf32>
    %14 = arith.extf %0 : vector<8x32xbf16> to vector<8x32xf32>
    %15 = arith.addf %13, %14 : vector<8x32xf32>
    %cst_11 = arith.constant dense<0.000000e+00> : vector<8xf32>
    %16 = vector.multi_reduction <add>, %15, %cst_11 [1] : vector<8x32xf32> to vector<8xf32>
    %17 = vector.shape_cast %16 : vector<8xf32> to vector<8x1xf32>
    %cst_12 = arith.constant 3.200000e+01 : f32
    %18 = vector.broadcast %cst_12 : f32 to vector<8x1xf32>
    %19 = arith.divf %17, %18 : vector<8x1xf32>
    %20 = vector.broadcast %19 : vector<8x1xf32> to vector<8x32xf32>
    %21 = arith.subf %15, %20 : vector<8x32xf32>
    %22 = arith.mulf %21, %21 : vector<8x32xf32>
    %cst_13 = arith.constant dense<0.000000e+00> : vector<8xf32>
    %23 = vector.multi_reduction <add>, %22, %cst_13 [1] : vector<8x32xf32> to vector<8xf32>
    %24 = vector.shape_cast %23 : vector<8xf32> to vector<8x1xf32>
    %cst_14 = arith.constant 3.200000e+01 : f32
    %25 = vector.broadcast %cst_14 : f32 to vector<8x1xf32>
    %26 = arith.divf %24, %25 : vector<8x1xf32>
    %27 = vector.broadcast %19 : vector<8x1xf32> to vector<8x32xf32>
    %28 = arith.subf %15, %27 : vector<8x32xf32>
    %cst_15 = arith.constant 9.99999974E-6 : f32
    %29 = vector.broadcast %cst_15 : f32 to vector<8x1xf32>
    %30 = arith.addf %26, %29 : vector<8x1xf32>
    %31 = math.rsqrt %30 : vector<8x1xf32>
    %32 = vector.broadcast %31 : vector<8x1xf32> to vector<8x32xf32>
    %33 = arith.mulf %28, %32 : vector<8x32xf32>
    %c0_16 = arith.constant 0 : index
    %c0_17 = arith.constant 0 : index
    %34 = vector.load %arg6[%c0_16, %c0_17] : memref<1x32xf32, #tpu.memory_space<vmem>>, vector<1x32xf32>
    %35 = vector.broadcast %34 : vector<1x32xf32> to vector<8x32xf32>
    %36 = arith.mulf %33, %35 : vector<8x32xf32>
    %c0_18 = arith.constant 0 : index
    %c0_19 = arith.constant 0 : index
    %37 = vector.load %arg7[%c0_18, %c0_19] : memref<1x32xf32, #tpu.memory_space<vmem>>, vector<1x32xf32>
    %38 = vector.broadcast %37 : vector<1x32xf32> to vector<8x32xf32>
    %39 = arith.addf %36, %38 : vector<8x32xf32>
    %40 = arith.truncf %39 : vector<8x32xf32> to vector<8x32xbf16>
    %c0_20 = arith.constant 0 : index
    %c0_21 = arith.constant 0 : index
    %41 = vector.load %arg8[%c0_20, %c0_21] : memref<8x32xbf16, #tpu.memory_space<vmem>>, vector<8x32xbf16>
    tpu.vector_store %arg8[%c0_20, %c0_21], %40 {strides = array<i32>} : memref<8x32xbf16, #tpu.memory_space<vmem>>, vector<8x32xbf16>,
    return
  }
  func.func @transform_0(%arg0: i32) -> (i32, i32) {
    %c0_i32 = arith.constant 0 : i32
    %c0_i32_0 = arith.constant 0 : i32
    return %arg0, %c0_i32 : i32, i32
  }
  func.func @transform_1(%arg0: i32) -> (i32, i32) {
    %c0_i32 = arith.constant 0 : i32
    %c0_i32_0 = arith.constant 0 : i32
    %c0_i32_1 = arith.constant 0 : i32
    return %c0_i32, %c0_i32_0 : i32, i32
  }
  func.func @transform_2(%arg0: i32) -> (i32, i32) {
    %c0_i32 = arith.constant 0 : i32
    %c0_i32_0 = arith.constant 0 : i32
    %c0_i32_1 = arith.constant 0 : i32
    return %c0_i32, %c0_i32_0 : i32, i32
  }
  func.func @transform_3(%arg0: i32) -> (i32, i32) {
    %c0_i32 = arith.constant 0 : i32
    %c0_i32_0 = arith.constant 0 : i32
    %c0_i32_1 = arith.constant 0 : i32
    return %c0_i32, %c0_i32_0 : i32, i32
  }
  func.func @transform_4(%arg0: i32) -> (i32, i32) {
    %c0_i32 = arith.constant 0 : i32
    %c0_i32_0 = arith.constant 0 : i32
    %c0_i32_1 = arith.constant 0 : i32
    return %c0_i32, %c0_i32_0 : i32, i32
  }
  func.func @transform_5(%arg0: i32) -> (i32, i32) {
    %c0_i32 = arith.constant 0 : i32
    %c0_i32_0 = arith.constant 0 : i32
    %c0_i32_1 = arith.constant 0 : i32
    return %c0_i32, %c0_i32_0 : i32, i32
  }
  func.func @transform_6(%arg0: i32) -> (i32, i32) {
    %c0_i32 = arith.constant 0 : i32
    %c0_i32_0 = arith.constant 0 : i32
    %c0_i32_1 = arith.constant 0 : i32
    return %c0_i32, %c0_i32_0 : i32, i32
  }
  func.func @transform_7(%arg0: i32) -> (i32, i32) {
    %c0_i32 = arith.constant 0 : i32
    %c0_i32_0 = arith.constant 0 : i32
    return %arg0, %c0_i32 : i32, i32
  }
}

module attributes {stable_mosaic.version = 11 : i64} {
  func.func @_ffn_ln_head_kernel(%arg0: i32, %arg1: memref<8x32xbf16, #tpu.memory_space<vmem>>, %arg2: memref<32x64xbf16, #tpu.memory_space<vmem>>, %arg3: memref<1x64xf32, #tpu.memory_space<vmem>>, %arg4: memref<64x32xbf16, #tpu.memory_space<vmem>>, %arg5: memref<1x32xf32, #tpu.memory_space<vmem>>, %arg6: memref<1x32xf32, #tpu.memory_space<vmem>>, %arg7: memref<1x32xf32, #tpu.memory_space<vmem>>, %arg8: memref<32x640xbf16, #tpu.memory_space<vmem>>, %arg9: memref<1x640xf32, #tpu.memory_space<vmem>>, %arg10: memref<8x32xbf16, #tpu.memory_space<vmem>>, %arg11: memref<8x640xf32, #tpu.memory_space<vmem>>) attributes {dimension_semantics = [#tpu.dimension_semantics<parallel>], iteration_bounds = array<i64: 1>, scalar_prefetch = 0 : i64, scratch_operands = 0 : i64, tpu.core_type = #tpu.core_type<tc>, window_params = [{transform_indices = @transform_0, window_bounds = array<i64: 8, 32>}, {pipeline_mode = #tpu.pipeline_mode<synchronous>, transform_indices = @transform_1, window_bounds = array<i64: 32, 64>}, {pipeline_mode = #tpu.pipeline_mode<synchronous>, transform_indices = @transform_2, window_bounds = array<i64: 1, 64>}, {pipeline_mode = #tpu.pipeline_mode<synchronous>, transform_indices = @transform_3, window_bounds = array<i64: 64, 32>}, {pipeline_mode = #tpu.pipeline_mode<synchronous>, transform_indices = @transform_4, window_bounds = array<i64: 1, 32>}, {pipeline_mode = #tpu.pipeline_mode<synchronous>, transform_indices = @transform_5, window_bounds = array<i64: 1, 32>}, {pipeline_mode = #tpu.pipeline_mode<synchronous>, transform_indices = @transform_6, window_bounds = array<i64: 1, 32>}, {pipeline_mode = #tpu.pipeline_mode<synchronous>, transform_indices = @transform_7, window_bounds = array<i64: 32, 640>}, {pipeline_mode = #tpu.pipeline_mode<synchronous>, transform_indices = @transform_8, window_bounds = array<i64: 1, 640>}, {transform_indices = @transform_9, window_bounds = array<i64: 8, 32>}, {transform_indices = @transform_10, window_bounds = array<i64: 8, 640>}]} {
    %c0 = arith.constant 0 : index
    %c0_0 = arith.constant 0 : index
    %0 = vector.load %arg1[%c0, %c0_0] : memref<8x32xbf16, #tpu.memory_space<vmem>>, vector<8x32xbf16>
    %c0_1 = arith.constant 0 : index
    %c0_2 = arith.constant 0 : index
    %1 = vector.load %arg2[%c0_1, %c0_2] : memref<32x64xbf16, #tpu.memory_space<vmem>>, vector<32x64xbf16>
    %cst = arith.constant dense<0.000000e+00> : vector<8x64xf32>
    %2 = tpu.matmul %0, %1, %cst {dimension_numbers = #tpu.dot_dimension_numbers<[1], [0], [0], [1], [0, 0, 1, 1], [], []>} : vector<8x32xbf16>, vector<32x64xbf16>, vector<8x64xf32> -> vector<8x64xf32>
    %c0_3 = arith.constant 0 : index
    %c0_4 = arith.constant 0 : index
    %3 = vector.load %arg3[%c0_3, %c0_4] : memref<1x64xf32, #tpu.memory_space<vmem>>, vector<1x64xf32>
    %4 = vector.broadcast %3 : vector<1x64xf32> to vector<8x64xf32>
    %5 = arith.addf %2, %4 : vector<8x64xf32>
    %cst_5 = arith.constant 0.000000e+00 : f32
    %6 = vector.broadcast %cst_5 : f32 to vector<8x64xf32>
    %7 = arith.maximumf %5, %6 : vector<8x64xf32>
    %8 = arith.truncf %7 : vector<8x64xf32> to vector<8x64xbf16>
    %c0_6 = arith.constant 0 : index
    %c0_7 = arith.constant 0 : index
    %9 = vector.load %arg4[%c0_6, %c0_7] : memref<64x32xbf16, #tpu.memory_space<vmem>>, vector<64x32xbf16>
    %cst_8 = arith.constant dense<0.000000e+00> : vector<8x32xf32>
    %10 = tpu.matmul %8, %9, %cst_8 {dimension_numbers = #tpu.dot_dimension_numbers<[1], [0], [0], [1], [0, 0, 1, 1], [], []>} : vector<8x64xbf16>, vector<64x32xbf16>, vector<8x32xf32> -> vector<8x32xf32>
    %c0_9 = arith.constant 0 : index
    %c0_10 = arith.constant 0 : index
    %11 = vector.load %arg5[%c0_9, %c0_10] : memref<1x32xf32, #tpu.memory_space<vmem>>, vector<1x32xf32>
    %12 = vector.broadcast %11 : vector<1x32xf32> to vector<8x32xf32>
    %13 = arith.addf %10, %12 : vector<8x32xf32>
    %14 = arith.extf %0 : vector<8x32xbf16> to vector<8x32xf32>
    %15 = arith.addf %13, %14 : vector<8x32xf32>
    %cst_11 = arith.constant dense<0.000000e+00> : vector<8xf32>
    %16 = vector.multi_reduction <add>, %15, %cst_11 [1] : vector<8x32xf32> to vector<8xf32>
    %17 = vector.shape_cast %16 : vector<8xf32> to vector<8x1xf32>
    %cst_12 = arith.constant 3.200000e+01 : f32
    %18 = vector.broadcast %cst_12 : f32 to vector<8x1xf32>
    %19 = arith.divf %17, %18 : vector<8x1xf32>
    %20 = vector.broadcast %19 : vector<8x1xf32> to vector<8x32xf32>
    %21 = arith.subf %15, %20 : vector<8x32xf32>
    %22 = arith.mulf %21, %21 : vector<8x32xf32>
    %cst_13 = arith.constant dense<0.000000e+00> : vector<8xf32>
    %23 = vector.multi_reduction <add>, %22, %cst_13 [1] : vector<8x32xf32> to vector<8xf32>
    %24 = vector.shape_cast %23 : vector<8xf32> to vector<8x1xf32>
    %cst_14 = arith.constant 3.200000e+01 : f32
    %25 = vector.broadcast %cst_14 : f32 to vector<8x1xf32>
    %26 = arith.divf %24, %25 : vector<8x1xf32>
    %27 = vector.broadcast %19 : vector<8x1xf32> to vector<8x32xf32>
    %28 = arith.subf %15, %27 : vector<8x32xf32>
    %cst_15 = arith.constant 9.99999974E-6 : f32
    %29 = vector.broadcast %cst_15 : f32 to vector<8x1xf32>
    %30 = arith.addf %26, %29 : vector<8x1xf32>
    %31 = math.rsqrt %30 : vector<8x1xf32>
    %32 = vector.broadcast %31 : vector<8x1xf32> to vector<8x32xf32>
    %33 = arith.mulf %28, %32 : vector<8x32xf32>
    %c0_16 = arith.constant 0 : index
    %c0_17 = arith.constant 0 : index
    %34 = vector.load %arg6[%c0_16, %c0_17] : memref<1x32xf32, #tpu.memory_space<vmem>>, vector<1x32xf32>
    %35 = vector.broadcast %34 : vector<1x32xf32> to vector<8x32xf32>
    %36 = arith.mulf %33, %35 : vector<8x32xf32>
    %c0_18 = arith.constant 0 : index
    %c0_19 = arith.constant 0 : index
    %37 = vector.load %arg7[%c0_18, %c0_19] : memref<1x32xf32, #tpu.memory_space<vmem>>, vector<1x32xf32>
    %38 = vector.broadcast %37 : vector<1x32xf32> to vector<8x32xf32>
    %39 = arith.addf %36, %38 : vector<8x32xf32>
    %40 = arith.truncf %39 : vector<8x32xf32> to vector<8x32xbf16>
    %c0_20 = arith.constant 0 : index
    %c0_21 = arith.constant 0 : index
    %41 = vector.load %arg10[%c0_20, %c0_21] : memref<8x32xbf16, #tpu.memory_space<vmem>>, vector<8x32xbf16>
    tpu.vector_store %arg10[%c0_20, %c0_21], %40 {strides = array<i32>} : memref<8x32xbf16, #tpu.memory_space<vmem>>, vector<8x32xbf16>,
    %42 = arith.truncf %39 : vector<8x32xf32> to vector<8x32xbf16>
    %c0_22 = arith.constant 0 : index
    %c0_23 = arith.constant 0 : index
    %43 = vector.load %arg8[%c0_22, %c0_23] : memref<32x640xbf16, #tpu.memory_space<vmem>>, vector<32x640xbf16>
    %cst_24 = arith.constant dense<0.000000e+00> : vector<8x640xf32>
    %44 = tpu.matmul %42, %43, %cst_24 {dimension_numbers = #tpu.dot_dimension_numbers<[1], [0], [0], [1], [0, 0, 1, 1], [], []>} : vector<8x32xbf16>, vector<32x640xbf16>, vector<8x640xf32> -> vector<8x640xf32>
    %c0_25 = arith.constant 0 : index
    %c0_26 = arith.constant 0 : index
    %45 = vector.load %arg9[%c0_25, %c0_26] : memref<1x640xf32, #tpu.memory_space<vmem>>, vector<1x640xf32>
    %46 = vector.broadcast %45 : vector<1x640xf32> to vector<8x640xf32>
    %47 = arith.addf %44, %46 : vector<8x640xf32>
    %c0_27 = arith.constant 0 : index
    %c0_28 = arith.constant 0 : index
    %48 = vector.load %arg11[%c0_27, %c0_28] : memref<8x640xf32, #tpu.memory_space<vmem>>, vector<8x640xf32>
    tpu.vector_store %arg11[%c0_27, %c0_28], %47 {strides = array<i32>} : memref<8x640xf32, #tpu.memory_space<vmem>>, vector<8x640xf32>,
    return
  }
  func.func @transform_0(%arg0: i32) -> (i32, i32) {
    %c0_i32 = arith.constant 0 : i32
    %c0_i32_0 = arith.constant 0 : i32
    return %arg0, %c0_i32 : i32, i32
  }
  func.func @transform_1(%arg0: i32) -> (i32, i32) {
    %c0_i32 = arith.constant 0 : i32
    %c0_i32_0 = arith.constant 0 : i32
    %c0_i32_1 = arith.constant 0 : i32
    return %c0_i32, %c0_i32_0 : i32, i32
  }
  func.func @transform_2(%arg0: i32) -> (i32, i32) {
    %c0_i32 = arith.constant 0 : i32
    %c0_i32_0 = arith.constant 0 : i32
    %c0_i32_1 = arith.constant 0 : i32
    return %c0_i32, %c0_i32_0 : i32, i32
  }
  func.func @transform_3(%arg0: i32) -> (i32, i32) {
    %c0_i32 = arith.constant 0 : i32
    %c0_i32_0 = arith.constant 0 : i32
    %c0_i32_1 = arith.constant 0 : i32
    return %c0_i32, %c0_i32_0 : i32, i32
  }
  func.func @transform_4(%arg0: i32) -> (i32, i32) {
    %c0_i32 = arith.constant 0 : i32
    %c0_i32_0 = arith.constant 0 : i32
    %c0_i32_1 = arith.constant 0 : i32
    return %c0_i32, %c0_i32_0 : i32, i32
  }
  func.func @transform_5(%arg0: i32) -> (i32, i32) {
    %c0_i32 = arith.constant 0 : i32
    %c0_i32_0 = arith.constant 0 : i32
    %c0_i32_1 = arith.constant 0 : i32
    return %c0_i32, %c0_i32_0 : i32, i32
  }
  func.func @transform_6(%arg0: i32) -> (i32, i32) {
    %c0_i32 = arith.constant 0 : i32
    %c0_i32_0 = arith.constant 0 : i32
    %c0_i32_1 = arith.constant 0 : i32
    return %c0_i32, %c0_i32_0 : i32, i32
  }
  func.func @transform_7(%arg0: i32) -> (i32, i32) {
    %c0_i32 = arith.constant 0 : i32
    %c0_i32_0 = arith.constant 0 : i32
    %c0_i32_1 = arith.constant 0 : i32
    return %c0_i32, %c0_i32_0 : i32, i32
  }
  func.func @transform_8(%arg0: i32) -> (i32, i32) {
    %c0_i32 = arith.constant 0 : i32
    %c0_i32_0 = arith.constant 0 : i32
    %c0_i32_1 = arith.constant 0 : i32
    return %c0_i32, %c0_i32_0 : i32, i32
  }
  func.func @transform_9(%arg0: i32) -> (i32, i32) {
    %c0_i32 = arith.constant 0 : i32
    %c0_i32_0 = arith.constant 0 : i32
    return %arg0, %c0_i32 : i32, i32
  }
  func.func @transform_10(%arg0: i32) -> (i32, i32) {
    %c0_i32 = arith.constant 0 : i32
    %c0_i32_0 = arith.constant 0 : i32
    return %arg0, %c0_i32 : i32, i32
  }
}

</mosaic_0001>

<llo_original>
// kernel: landtrans_forward.15
$region0: #{landtrans_forward.15}
  #allocation0 [shape = 'u32[]', space=smem, size = 0x4, offset = 0x4, fixed_abs, tag = 'smem constant byte address 0x4 - core index']
  #allocation1 [shape = 'u32[144,128]{1,0:T(1,128)}', space=vmem, size = 0x12000, scoped, tag = 'internal scratch']
  #allocation2 [shape = 'f32[8,32]{1,0:T(8,128)}', space=vmem, size = 0x1000, scoped, tag = 'scratch operand']
  %s0 = inlined_call_operand.vmem [shape: bf16[8,8192], index: 0, kind: input, shape index: {}]
  %s1 = inlined_call_operand.vmem [shape: bf16[8192,32], index: 1, kind: input, shape index: {}]
  %s2 = inlined_call_operand.vmem [shape: f32[1,32], index: 2, kind: input, shape index: {}]
  %s3 = inlined_call_operand.vmem [shape: bf16[8,32], index: 3, kind: output, shape index: {}]
  %s4 = sld [smem:[#allocation0]]
  $region53: #{landtrans_forward.15} parent=0
    _
  %s6 = ssub.s32 1, %s4
  %s7 = scalar_select 0, %s6, %s4
  loop: start=0, step=1, limit=6
  $region2: #{landtrans_forward.15} parent=0 // loop_pre_header
    _
  $region3: #{landtrans_forward.15} parent=0 // loop_header
    %s9 = sphi 0, %s13
    %p10 = scmp.ge.s32.totalorder %s9, 6
    %s16 = sphi 0, %s28
    %s17 = sphi 0, %s24
    %s18 = sphi 0, %s16
    %s19 = sphi 0, %s17
    %s20 = sphi 0, %s18
    %s21 = sphi 0, %s19
    %s33 = sphi 0, %s35
    %s36 = sphi 0, %s33
    %s37 = sphi 0, %s36
    %s53 = sphi 0, %s37
    %s59 = sphi 0, %s61
    %s62 = sphi 0, %s59
    %s63 = sphi 0, %s62
    %s79 = sphi 0, %s63
    %s83 = sphi 0, %s83
    %s85 = sphi 0, %s83
    %s86 = sphi 0, %s85
    %s100 = sphi 0, %s86
    %s106 = sphi 0, %s108
    %s109 = sphi 0, %s106
    %s110 = sphi 0, %s109
    %s126 = sphi 0, %s110
  $region4: #{landtrans_forward.15} parent=0 // loop_header_branch
    %12 = sbr.rel (%p10) target = $region8
  $region5: #{landtrans_forward.15} parent=0 // loop_body
    %s14 = ssub.s32 %s9, 1
    %s15 = ssub.s32 %s9, 2
    %s22 = sadd.s32 1, %s17
    %p23 = scmp.ge.s32.totalorder %s22, 4
    %s24 = scalar_select %p23, 0, %s22
    %s25 = sadd.s32 1, %s16
    %s26 = scalar_select %p23, %s25, %s16
    %p27 = scmp.ge.s32.totalorder %s26, 1
    %s28 = scalar_select %p27, 0, %s26
    %s29 = ssub.s32 %s16, %s28
    %s30 = ssub.s32 %s17, %s24
    %s31 = sor.u32 %s29, %s30
    %p32 = scmp.eq.s32.totalorder %s31, 0
    %s34 = sadd.s32 %s33, 1
    %s35 = scalar_select %p32, %s33, %s34
    %p38 = pneg %p32
    %p39 = scmp.eq.s32.totalorder %s9, 3
    %p40 = por %p38, %p39
    %p41 = scmp.ne.s32.totalorder %s33, %s36
    %p42 = scmp.eq.s32.totalorder %s9, 0
    %p43 = por %p41, %p42
    %p44 = scmp.ne.s32.totalorder %s33, %s36
    %p45 = scmp.eq.s32.totalorder %s14, 3
    %p46 = por %p44, %p45
    %p47 = scmp.ne.s32.totalorder %s36, %s37
    %p48 = scmp.eq.s32.totalorder %s14, 0
    %p49 = por %p47, %p48
    %p50 = scmp.ne.s32.totalorder %s36, %s37
    %p51 = scmp.eq.s32.totalorder %s15, 3
    %p52 = por %p50, %p51
    %p54 = scmp.ne.s32.totalorder %s37, %s53
    %p55 = scmp.eq.s32.totalorder %s15, 0
    %p56 = por %p54, %p55
    %s57 = ssub.s32 %s17, %s24
    %p58 = scmp.eq.s32.totalorder %s57, 0
    %s60 = sadd.s32 %s59, 1
    %s61 = scalar_select %p58, %s59, %s60
    %p64 = pneg %p58
    %p65 = scmp.eq.s32.totalorder %s9, 3
    %p66 = por %p64, %p65
    %p67 = scmp.ne.s32.totalorder %s59, %s62
    %p68 = scmp.eq.s32.totalorder %s9, 0
    %p69 = por %p67, %p68
    %p70 = scmp.ne.s32.totalorder %s59, %s62
    %p71 = scmp.eq.s32.totalorder %s14, 3
    %p72 = por %p70, %p71
    %p73 = scmp.ne.s32.totalorder %s62, %s63
    %p74 = scmp.eq.s32.totalorder %s14, 0
    %p75 = por %p73, %p74
    %p76 = scmp.ne.s32.totalorder %s62, %s63
    %p77 = scmp.eq.s32.totalorder %s15, 3
    %p78 = por %p76, %p77
    %p80 = scmp.ne.s32.totalorder %s63, %s79
    %p81 = scmp.eq.s32.totalorder %s15, 0
    %p82 = por %p80, %p81
    %s84 = sadd.s32 %s83, 1
    %p87 = scmp.eq.s32.totalorder %s9, 3
    %p88 = scmp.ne.s32.totalorder %s83, %s85
    %p89 = scmp.eq.s32.totalorder %s9, 0
    %p90 = por %p88, %p89
    %p91 = scmp.ne.s32.totalorder %s83, %s85
    %p92 = scmp.eq.s32.totalorder %s14, 3
    %p93 = por %p91, %p92
    %p94 = scmp.ne.s32.totalorder %s85, %s86
    %p95 = scmp.eq.s32.totalorder %s14, 0
    %p96 = por %p94, %p95
    %p97 = scmp.ne.s32.totalorder %s85, %s86
    %p98 = scmp.eq.s32.totalorder %s15, 3
    %p99 = por %p97, %p98
    %p101 = scmp.ne.s32.totalorder %s86, %s100
    %p102 = scmp.eq.s32.totalorder %s15, 0
    %p103 = por %p101, %p102
    %s104 = ssub.s32 %s16, %s28
    %p105 = scmp.eq.s32.totalorder %s104, 0
    %s107 = sadd.s32 %s106, 1
    %s108 = scalar_select %p105, %s106, %s107
    %p111 = pneg %p105
    %p112 = scmp.eq.s32.totalorder %s9, 3
    %p113 = por %p111, %p112
    %p114 = scmp.ne.s32.totalorder %s106, %s109
    %p115 = scmp.eq.s32.totalorder %s9, 0
    %p116 = por %p114, %p115
    %p117 = scmp.ne.s32.totalorder %s106, %s109
    %p118 = scmp.eq.s32.totalorder %s14, 3
    %p119 = por %p117, %p118
    %p120 = scmp.ne.s32.totalorder %s109, %s110
    %p121 = scmp.eq.s32.totalorder %s14, 0
    %p122 = por %p120, %p121
    %p123 = scmp.ne.s32.totalorder %s109, %s110
    %p124 = scmp.eq.s32.totalorder %s15, 3
    %p125 = por %p123, %p124
    %p127 = scmp.ne.s32.totalorder %s110, %s126
    %p128 = scmp.eq.s32.totalorder %s15, 0
    %p129 = por %p127, %p128
    %p130 = scmp.le.s32.totalorder 1, %s9
    %p131 = scmp.lt.s32.totalorder %s9, 5
    %p132 = pnand %p130, %p131
    %p133 = pneg %p132
    // Predicated region
    $region9: #{landtrans_forward.15} parent=5 // pred_check
      _
    $region10: #{landtrans_forward.15} parent=5 // pred_check_branch
      %135 = sbr.rel (%p132) target = $region12
    $region11: #{landtrans_forward.15} parent=5 // pred_region
      %s136 = ssub.s32 %s9, 1
      // Predicated region
      $region13: #{landtrans_forward.15} parent=11 // pred_check
        %p137 = pneg %p96
      $region14: #{landtrans_forward.15} parent=11 // pred_check_branch
        %139 = sbr.rel (%p137) target = $region16
      $region15: #{landtrans_forward.15} parent=11 // pred_region
        _
      $region16: #{landtrans_forward.15} parent=11 // pred_fallthru
        _
    $region12: #{landtrans_forward.15} parent=5 // pred_fallthru
      _
    %p140 = scmp.lt.s32.totalorder %s9, 4
    // Predicated region
    $region17: #{landtrans_forward.15} parent=5 // pred_check
      %p141 = pneg %p140
    $region18: #{landtrans_forward.15} parent=5 // pred_check_branch
      %143 = sbr.rel (%p141) target = $region20
    $region19: #{landtrans_forward.15} parent=5 // pred_region
      // Predicated region
      $region21: #{landtrans_forward.15} parent=19 // pred_check
        %p144 = pneg %p43
      $region22: #{landtrans_forward.15} parent=19 // pred_check_branch
        %146 = sbr.rel (%p144) target = $region24
      $region23: #{landtrans_forward.15} parent=19 // pred_region
        %s147 = smul.u32 16, %s17
        %p148 = scmp.lt.s32.totalorder %s16, 0
        %s149 = scalar_select %p148, %s16, 0
        %p150 = scmp.lt.s32.totalorder %s147, 63
        %s151 = scalar_select %p150, %s147, 63
        %s152 = smul.addr %s149, 64
        %s153 = sadd.s32 %s151, %s152
        %s154 = smul.addr %s153, 4
        %s155 = scalar_lea.vmem %s0, %s154
        %s156 = smul.u32 16, %s17
      $region24: #{landtrans_forward.15} parent=19 // pred_fallthru
        _
      // Predicated region
      $region25: #{landtrans_forward.15} parent=19 // pred_check
        %p157 = pneg %p69
      $region26: #{landtrans_forward.15} parent=19 // pred_check_branch
        %159 = sbr.rel (%p157) target = $region28
      $region27: #{landtrans_forward.15} parent=19 // pred_region
        %s160 = smul.u32 256, %s17
        %p161 = scmp.lt.s32.totalorder %s160, 1023
        %s162 = scalar_select %p161, %s160, 1023
        %s163 = smul.addr %s162, 4
        %s164 = scalar_lea.vmem %s1, %s163
        %s165 = smul.u32 256, %s17
      $region28: #{landtrans_forward.15} parent=19 // pred_fallthru
        _
    $region20: #{landtrans_forward.15} parent=5 // pred_fallthru
      _
    %p166 = scmp.le.s32.totalorder 1, %s9
    %p167 = scmp.lt.s32.totalorder %s9, 5
    %p168 = pnand %p166, %p167
    %p169 = pneg %p168
    // Predicated region
    $region29: #{landtrans_forward.15} parent=5 // pred_check
      _
    $region30: #{landtrans_forward.15} parent=5 // pred_check_branch
      %171 = sbr.rel (%p168) target = $region32
    $region31: #{landtrans_forward.15} parent=5 // pred_region
      %s172 = ssub.s32 %s9, 1
      %s173 = smul.u32 16, %s19
      %p174 = scmp.lt.s32.totalorder %s18, 0
      %s175 = scalar_select %p174, %s18, 0
      %p176 = scmp.lt.s32.totalorder %s173, 63
      %s177 = scalar_select %p176, %s173, 63
      %s178 = smul.addr %s175, 64
      %s179 = sadd.s32 %s177, %s178
      %s180 = smul.addr %s179, 4
      %s181 = scalar_lea.vmem %s0, %s180
      %p182 = pneg %p49
      %p183 = pneg %p46
      %s184 = smul.u32 256, %s19
      %p185 = scmp.lt.s32.totalorder %s184, 1023
      %s186 = scalar_select %p185, %s184, 1023
      %s187 = smul.addr %s186, 4
      %s188 = scalar_lea.vmem %s1, %s187
      %p189 = pneg %p75
      %p190 = pneg %p72
      %p191 = pneg %p96
      %p192 = pneg %p93
      %p193 = pneg %p122
      %p194 = pneg %p119
      %p195 = scmp.lt.s32.totalorder %s18, 0
      %s196 = scalar_select %p195, %s18, 0
      %s197 = smul.addr %s196, 4
      %s198 = scalar_lea.vmem %s3, %s197
      %s199 = smul.u32 16, %s19
      %p200 = scmp.lt.s32.totalorder %s18, 0
      %s201 = scalar_select %p200, %s18, 0
      %p202 = scmp.lt.s32.totalorder %s199, 63
      %s203 = scalar_select %p202, %s199, 63
      %s204 = smul.addr %s201, 64
      %s205 = sadd.s32 %s203, %s204
      %s206 = smul.addr %s205, 4
      %s207 = scalar_lea.vmem %s0, %s206
      %s208 = smul.u32 16, %s19
      %s209 = smul.u32 256, %s19
      %p210 = scmp.lt.s32.totalorder %s209, 1023
      %s211 = scalar_select %p210, %s209, 1023
      %s212 = smul.addr %s211, 4
      %s213 = scalar_lea.vmem %s1, %s212
      %s214 = smul.u32 256, %s19
      %p215 = scmp.lt.s32.totalorder %s18, 0
      %s216 = scalar_select %p215, %s18, 0
      %s217 = smul.addr %s216, 4
      %s218 = scalar_lea.vmem %s3, %s217
      %p220 = scmp.eq.s32.totalorder %s19, 0
      // Predicated region
      $region33: #{landtrans_forward.15} parent=31 // pred_check
        %p221 = pneg %p220
      $region34: #{landtrans_forward.15} parent=31 // pred_check_branch
        %223 = sbr.rel (%p221) target = $region36
      $region35: #{landtrans_forward.15} parent=31 // pred_region
        %vm224 = vcmask 261120
        %225 = vst.msk [vmem:[#allocation2] sm:$0xff] %vm224, 0.0
      $region36: #{landtrans_forward.15} parent=31 // pred_fallthru
        _
      %v226 = vld [vmem:[#allocation2] sm:$0xff]
      %v227 = vld [vmem:[%s207] sm:$0xff]
      %v228 = vld [vmem:[%s207 + $0x8] sm:$0xff]
      %v229 = vld [vmem:[%s207 + $0x10] sm:$0xff]
      %v230 = vld [vmem:[%s207 + $0x18] sm:$0xff]
      %v231 = vld [vmem:[%s207 + $0x20] sm:$0xff]
      %v232 = vld [vmem:[%s207 + $0x28] sm:$0xff]
      %v233 = vld [vmem:[%s207 + $0x30] sm:$0xff]
      %v234 = vld [vmem:[%s207 + $0x38] sm:$0xff]
      %v235 = vld [vmem:[%s213] sm:$0xf]
      %v236 = vld [vmem:[%s213 + $0x4] sm:$0xf]
      %v237 = vld [vmem:[%s213 + $0x8] sm:$0xf]
      %v238 = vld [vmem:[%s213 + $0xc] sm:$0xf]
      %v239 = vld [vmem:[%s213 + $0x10] sm:$0xf]
      %v240 = vld [vmem:[%s213 + $0x14] sm:$0xf]
      %v241 = vld [vmem:[%s213 + $0x18] sm:$0xf]
      %v242 = vld [vmem:[%s213 + $0x1c] sm:$0xf]
      %v243 = vld [vmem:[%s213 + $0x20] sm:$0xf]
      %v244 = vld [vmem:[%s213 + $0x24] sm:$0xf]
      %v245 = vld [vmem:[%s213 + $0x28] sm:$0xf]
      %v246 = vld [vmem:[%s213 + $0x2c] sm:$0xf]
      %v247 = vld [vmem:[%s213 + $0x30] sm:$0xf]
      %v248 = vld [vmem:[%s213 + $0x34] sm:$0xf]
      %v249 = vld [vmem:[%s213 + $0x38] sm:$0xf]
      %v250 = vld [vmem:[%s213 + $0x3c] sm:$0xf]
      %v251 = vld [vmem:[%s213 + $0x40] sm:$0xf]
      %v252 = vld [vmem:[%s213 + $0x44] sm:$0xf]
      %v253 = vld [vmem:[%s213 + $0x48] sm:$0xf]
      %v254 = vld [vmem:[%s213 + $0x4c] sm:$0xf]
      %v255 = vld [vmem:[%s213 + $0x50] sm:$0xf]
      %v256 = vld [vmem:[%s213 + $0x54] sm:$0xf]
      %v257 = vld [vmem:[%s213 + $0x58] sm:$0xf]
      %v258 = vld [vmem:[%s213 + $0x5c] sm:$0xf]
      %v259 = vld [vmem:[%s213 + $0x60] sm:$0xf]
      %v260 = vld [vmem:[%s213 + $0x64] sm:$0xf]
      %v261 = vld [vmem:[%s213 + $0x68] sm:$0xf]
      %v262 = vld [vmem:[%s213 + $0x6c] sm:$0xf]
      %v263 = vld [vmem:[%s213 + $0x70] sm:$0xf]
      %v264 = vld [vmem:[%s213 + $0x74] sm:$0xf]
      %v265 = vld [vmem:[%s213 + $0x78] sm:$0xf]
      %v266 = vld [vmem:[%s213 + $0x7c] sm:$0xf]
      %v267 = vld [vmem:[%s213 + $0x80] sm:$0xf]
      %v268 = vld [vmem:[%s213 + $0x84] sm:$0xf]
      %v269 = vld [vmem:[%s213 + $0x88] sm:$0xf]
      %v270 = vld [vmem:[%s213 + $0x8c] sm:$0xf]
      %v271 = vld [vmem:[%s213 + $0x90] sm:$0xf]
      %v272 = vld [vmem:[%s213 + $0x94] sm:$0xf]
      %v273 = vld [vmem:[%s213 + $0x98] sm:$0xf]
      %v274 = vld [vmem:[%s213 + $0x9c] sm:$0xf]
      %v275 = vld [vmem:[%s213 + $0xa0] sm:$0xf]
      %v276 = vld [vmem:[%s213 + $0xa4] sm:$0xf]
      %v277 = vld [vmem:[%s213 + $0xa8] sm:$0xf]
      %v278 = vld [vmem:[%s213 + $0xac] sm:$0xf]
      %v279 = vld [vmem:[%s213 + $0xb0] sm:$0xf]
      %v280 = vld [vmem:[%s213 + $0xb4] sm:$0xf]
      %v281 = vld [vmem:[%s213 + $0xb8] sm:$0xf]
      %v282 = vld [vmem:[%s213 + $0xbc] sm:$0xf]
      %v283 = vld [vmem:[%s213 + $0xc0] sm:$0xf]
      %v284 = vld [vmem:[%s213 + $0xc4] sm:$0xf]
      %v285 = vld [vmem:[%s213 + $0xc8] sm:$0xf]
      %v286 = vld [vmem:[%s213 + $0xcc] sm:$0xf]
      %v287 = vld [vmem:[%s213 + $0xd0] sm:$0xf]
      %v288 = vld [vmem:[%s213 + $0xd4] sm:$0xf]
      %v289 = vld [vmem:[%s213 + $0xd8] sm:$0xf]
      %v290 = vld [vmem:[%s213 + $0xdc] sm:$0xf]
      %v291 = vld [vmem:[%s213 + $0xe0] sm:$0xf]
      %v292 = vld [vmem:[%s213 + $0xe4] sm:$0xf]
      %v293 = vld [vmem:[%s213 + $0xe8] sm:$0xf]
      %v294 = vld [vmem:[%s213 + $0xec] sm:$0xf]
      %v295 = vld [vmem:[%s213 + $0xf0] sm:$0xf]
      %v296 = vld [vmem:[%s213 + $0xf4] sm:$0xf]
      %v297 = vld [vmem:[%s213 + $0xf8] sm:$0xf]
      %v298 = vld [vmem:[%s213 + $0xfc] sm:$0xf]
      %v299 = vld [vmem:[%s213 + $0x100] sm:$0xf]
      %v300 = vld [vmem:[%s213 + $0x104] sm:$0xf]
      %v301 = vld [vmem:[%s213 + $0x108] sm:$0xf]
      %v302 = vld [vmem:[%s213 + $0x10c] sm:$0xf]
      %v303 = vld [vmem:[%s213 + $0x110] sm:$0xf]
      %v304 = vld [vmem:[%s213 + $0x114] sm:$0xf]
      %v305 = vld [vmem:[%s213 + $0x118] sm:$0xf]
      %v306 = vld [vmem:[%s213 + $0x11c] sm:$0xf]
      %v307 = vld [vmem:[%s213 + $0x120] sm:$0xf]
      %v308 = vld [vmem:[%s213 + $0x124] sm:$0xf]
      %v309 = vld [vmem:[%s213 + $0x128] sm:$0xf]
      %v310 = vld [vmem:[%s213 + $0x12c] sm:$0xf]
      %v311 = vld [vmem:[%s213 + $0x130] sm:$0xf]
      %v312 = vld [vmem:[%s213 + $0x134] sm:$0xf]
      %v313 = vld [vmem:[%s213 + $0x138] sm:$0xf]
      %v314 = vld [vmem:[%s213 + $0x13c] sm:$0xf]
      %v315 = vld [vmem:[%s213 + $0x140] sm:$0xf]
      %v316 = vld [vmem:[%s213 + $0x144] sm:$0xf]
      %v317 = vld [vmem:[%s213 + $0x148] sm:$0xf]
      %v318 = vld [vmem:[%s213 + $0x14c] sm:$0xf]
      %v319 = vld [vmem:[%s213 + $0x150] sm:$0xf]
      %v320 = vld [vmem:[%s213 + $0x154] sm:$0xf]
      %v321 = vld [vmem:[%s213 + $0x158] sm:$0xf]
      %v322 = vld [vmem:[%s213 + $0x15c] sm:$0xf]
      %v323 = vld [vmem:[%s213 + $0x160] sm:$0xf]
      %v324 = vld [vmem:[%s213 + $0x164] sm:$0xf]
      %v325 = vld [vmem:[%s213 + $0x168] sm:$0xf]
      %v326 = vld [vmem:[%s213 + $0x16c] sm:$0xf]
      %v327 = vld [vmem:[%s213 + $0x170] sm:$0xf]
      %v328 = vld [vmem:[%s213 + $0x174] sm:$0xf]
      %v329 = vld [vmem:[%s213 + $0x178] sm:$0xf]
      %v330 = vld [vmem:[%s213 + $0x17c] sm:$0xf]
      %v331 = vld [vmem:[%s213 + $0x180] sm:$0xf]
      %v332 = vld [vmem:[%s213 + $0x184] sm:$0xf]
      %v333 = vld [vmem:[%s213 + $0x188] sm:$0xf]
      %v334 = vld [vmem:[%s213 + $0x18c] sm:$0xf]
      %v335 = vld [vmem:[%s213 + $0x190] sm:$0xf]
      %v336 = vld [vmem:[%s213 + $0x194] sm:$0xf]
      %v337 = vld [vmem:[%s213 + $0x198] sm:$0xf]
      %v338 = vld [vmem:[%s213 + $0x19c] sm:$0xf]
      %v339 = vld [vmem:[%s213 + $0x1a0] sm:$0xf]
      %v340 = vld [vmem:[%s213 + $0x1a4] sm:$0xf]
      %v341 = vld [vmem:[%s213 + $0x1a8] sm:$0xf]
      %v342 = vld [vmem:[%s213 + $0x1ac] sm:$0xf]
      %v343 = vld [vmem:[%s213 + $0x1b0] sm:$0xf]
      %v344 = vld [vmem:[%s213 + $0x1b4] sm:$0xf]
      %v345 = vld [vmem:[%s213 + $0x1b8] sm:$0xf]
      %v346 = vld [vmem:[%s213 + $0x1bc] sm:$0xf]
      %v347 = vld [vmem:[%s213 + $0x1c0] sm:$0xf]
      %v348 = vld [vmem:[%s213 + $0x1c4] sm:$0xf]
      %v349 = vld [vmem:[%s213 + $0x1c8] sm:$0xf]
      %v350 = vld [vmem:[%s213 + $0x1cc] sm:$0xf]
      %v351 = vld [vmem:[%s213 + $0x1d0] sm:$0xf]
      %v352 = vld [vmem:[%s213 + $0x1d4] sm:$0xf]
      %v353 = vld [vmem:[%s213 + $0x1d8] sm:$0xf]
      %v354 = vld [vmem:[%s213 + $0x1dc] sm:$0xf]
      %v355 = vld [vmem:[%s213 + $0x1e0] sm:$0xf]
      %v356 = vld [vmem:[%s213 + $0x1e4] sm:$0xf]
      %v357 = vld [vmem:[%s213 + $0x1e8] sm:$0xf]
      %v358 = vld [vmem:[%s213 + $0x1ec] sm:$0xf]
      %v359 = vld [vmem:[%s213 + $0x1f0] sm:$0xf]
      %v360 = vld [vmem:[%s213 + $0x1f4] sm:$0xf]
      %v361 = vld [vmem:[%s213 + $0x1f8] sm:$0xf]
      %v362 = vld [vmem:[%s213 + $0x1fc] sm:$0xf]
      %v363 = vld [vmem:[%s213 + $0x200] sm:$0xf]
      %v364 = vld [vmem:[%s213 + $0x204] sm:$0xf]
      %v365 = vld [vmem:[%s213 + $0x208] sm:$0xf]
      %v366 = vld [vmem:[%s213 + $0x20c] sm:$0xf]
      %v367 = vld [vmem:[%s213 + $0x210] sm:$0xf]
      %v368 = vld [vmem:[%s213 + $0x214] sm:$0xf]
      %v369 = vld [vmem:[%s213 + $0x218] sm:$0xf]
      %v370 = vld [vmem:[%s213 + $0x21c] sm:$0xf]
      %v371 = vld [vmem:[%s213 + $0x220] sm:$0xf]
      %v372 = vld [vmem:[%s213 + $0x224] sm:$0xf]
      %v373 = vld [vmem:[%s213 + $0x228] sm:$0xf]
      %v374 = vld [vmem:[%s213 + $0x22c] sm:$0xf]
      %v375 = vld [vmem:[%s213 + $0x230] sm:$0xf]
      %v376 = vld [vmem:[%s213 + $0x234] sm:$0xf]
      %v377 = vld [vmem:[%s213 + $0x238] sm:$0xf]
      %v378 = vld [vmem:[%s213 + $0x23c] sm:$0xf]
      %v379 = vld [vmem:[%s213 + $0x240] sm:$0xf]
      %v380 = vld [vmem:[%s213 + $0x244] sm:$0xf]
      %v381 = vld [vmem:[%s213 + $0x248] sm:$0xf]
      %v382 = vld [vmem:[%s213 + $0x24c] sm:$0xf]
      %v383 = vld [vmem:[%s213 + $0x250] sm:$0xf]
      %v384 = vld [vmem:[%s213 + $0x254] sm:$0xf]
      %v385 = vld [vmem:[%s213 + $0x258] sm:$0xf]
      %v386 = vld [vmem:[%s213 + $0x25c] sm:$0xf]
      %v387 = vld [vmem:[%s213 + $0x260] sm:$0xf]
      %v388 = vld [vmem:[%s213 + $0x264] sm:$0xf]
      %v389 = vld [vmem:[%s213 + $0x268] sm:$0xf]
      %v390 = vld [vmem:[%s213 + $0x26c] sm:$0xf]
      %v391 = vld [vmem:[%s213 + $0x270] sm:$0xf]
      %v392 = vld [vmem:[%s213 + $0x274] sm:$0xf]
      %v393 = vld [vmem:[%s213 + $0x278] sm:$0xf]
      %v394 = vld [vmem:[%s213 + $0x27c] sm:$0xf]
      %v395 = vld [vmem:[%s213 + $0x280] sm:$0xf]
      %v396 = vld [vmem:[%s213 + $0x284] sm:$0xf]
      %v397 = vld [vmem:[%s213 + $0x288] sm:$0xf]
      %v398 = vld [vmem:[%s213 + $0x28c] sm:$0xf]
      %v399 = vld [vmem:[%s213 + $0x290] sm:$0xf]
      %v400 = vld [vmem:[%s213 + $0x294] sm:$0xf]
      %v401 = vld [vmem:[%s213 + $0x298] sm:$0xf]
      %v402 = vld [vmem:[%s213 + $0x29c] sm:$0xf]
      %v403 = vld [vmem:[%s213 + $0x2a0] sm:$0xf]
      %v404 = vld [vmem:[%s213 + $0x2a4] sm:$0xf]
      %v405 = vld [vmem:[%s213 + $0x2a8] sm:$0xf]
      %v406 = vld [vmem:[%s213 + $0x2ac] sm:$0xf]
      %v407 = vld [vmem:[%s213 + $0x2b0] sm:$0xf]
      %v408 = vld [vmem:[%s213 + $0x2b4] sm:$0xf]
      %v409 = vld [vmem:[%s213 + $0x2b8] sm:$0xf]
      %v410 = vld [vmem:[%s213 + $0x2bc] sm:$0xf]
      %v411 = vld [vmem:[%s213 + $0x2c0] sm:$0xf]
      %v412 = vld [vmem:[%s213 + $0x2c4] sm:$0xf]
      %v413 = vld [vmem:[%s213 + $0x2c8] sm:$0xf]
      %v414 = vld [vmem:[%s213 + $0x2cc] sm:$0xf]
      %v415 = vld [vmem:[%s213 + $0x2d0] sm:$0xf]
      %v416 = vld [vmem:[%s213 + $0x2d4] sm:$0xf]
      %v417 = vld [vmem:[%s213 + $0x2d8] sm:$0xf]
      %v418 = vld [vmem:[%s213 + $0x2dc] sm:$0xf]
      %v419 = vld [vmem:[%s213 + $0x2e0] sm:$0xf]
      %v420 = vld [vmem:[%s213 + $0x2e4] sm:$0xf]
      %v421 = vld [vmem:[%s213 + $0x2e8] sm:$0xf]
      %v422 = vld [vmem:[%s213 + $0x2ec] sm:$0xf]
      %v423 = vld [vmem:[%s213 + $0x2f0] sm:$0xf]
      %v424 = vld [vmem:[%s213 + $0x2f4] sm:$0xf]
      %v425 = vld [vmem:[%s213 + $0x2f8] sm:$0xf]
      %v426 = vld [vmem:[%s213 + $0x2fc] sm:$0xf]
      %v427 = vld [vmem:[%s213 + $0x300] sm:$0xf]
      %v428 = vld [vmem:[%s213 + $0x304] sm:$0xf]
      %v429 = vld [vmem:[%s213 + $0x308] sm:$0xf]
      %v430 = vld [vmem:[%s213 + $0x30c] sm:$0xf]
      %v431 = vld [vmem:[%s213 + $0x310] sm:$0xf]
      %v432 = vld [vmem:[%s213 + $0x314] sm:$0xf]
      %v433 = vld [vmem:[%s213 + $0x318] sm:$0xf]
      %v434 = vld [vmem:[%s213 + $0x31c] sm:$0xf]
      %v435 = vld [vmem:[%s213 + $0x320] sm:$0xf]
      %v436 = vld [vmem:[%s213 + $0x324] sm:$0xf]
      %v437 = vld [vmem:[%s213 + $0x328] sm:$0xf]
      %v438 = vld [vmem:[%s213 + $0x32c] sm:$0xf]
      %v439 = vld [vmem:[%s213 + $0x330] sm:$0xf]
      %v440 = vld [vmem:[%s213 + $0x334] sm:$0xf]
      %v441 = vld [vmem:[%s213 + $0x338] sm:$0xf]
      %v442 = vld [vmem:[%s213 + $0x33c] sm:$0xf]
      %v443 = vld [vmem:[%s213 + $0x340] sm:$0xf]
      %v444 = vld [vmem:[%s213 + $0x344] sm:$0xf]
      %v445 = vld [vmem:[%s213 + $0x348] sm:$0xf]
      %v446 = vld [vmem:[%s213 + $0x34c] sm:$0xf]
      %v447 = vld [vmem:[%s213 + $0x350] sm:$0xf]
      %v448 = vld [vmem:[%s213 + $0x354] sm:$0xf]
      %v449 = vld [vmem:[%s213 + $0x358] sm:$0xf]
      %v450 = vld [vmem:[%s213 + $0x35c] sm:$0xf]
      %v451 = vld [vmem:[%s213 + $0x360] sm:$0xf]
      %v452 = vld [vmem:[%s213 + $0x364] sm:$0xf]
      %v453 = vld [vmem:[%s213 + $0x368] sm:$0xf]
      %v454 = vld [vmem:[%s213 + $0x36c] sm:$0xf]
      %v455 = vld [vmem:[%s213 + $0x370] sm:$0xf]
      %v456 = vld [vmem:[%s213 + $0x374] sm:$0xf]
      %v457 = vld [vmem:[%s213 + $0x378] sm:$0xf]
      %v458 = vld [vmem:[%s213 + $0x37c] sm:$0xf]
      %v459 = vld [vmem:[%s213 + $0x380] sm:$0xf]
      %v460 = vld [vmem:[%s213 + $0x384] sm:$0xf]
      %v461 = vld [vmem:[%s213 + $0x388] sm:$0xf]
      %v462 = vld [vmem:[%s213 + $0x38c] sm:$0xf]
      %v463 = vld [vmem:[%s213 + $0x390] sm:$0xf]
      %v464 = vld [vmem:[%s213 + $0x394] sm:$0xf]
      %v465 = vld [vmem:[%s213 + $0x398] sm:$0xf]
      %v466 = vld [vmem:[%s213 + $0x39c] sm:$0xf]
      %v467 = vld [vmem:[%s213 + $0x3a0] sm:$0xf]
      %v468 = vld [vmem:[%s213 + $0x3a4] sm:$0xf]
      %v469 = vld [vmem:[%s213 + $0x3a8] sm:$0xf]
      %v470 = vld [vmem:[%s213 + $0x3ac] sm:$0xf]
      %v471 = vld [vmem:[%s213 + $0x3b0] sm:$0xf]
      %v472 = vld [vmem:[%s213 + $0x3b4] sm:$0xf]
      %v473 = vld [vmem:[%s213 + $0x3b8] sm:$0xf]
      %v474 = vld [vmem:[%s213 + $0x3bc] sm:$0xf]
      %v475 = vld [vmem:[%s213 + $0x3c0] sm:$0xf]
      %v476 = vld [vmem:[%s213 + $0x3c4] sm:$0xf]
      %v477 = vld [vmem:[%s213 + $0x3c8] sm:$0xf]
      %v478 = vld [vmem:[%s213 + $0x3cc] sm:$0xf]
      %v479 = vld [vmem:[%s213 + $0x3d0] sm:$0xf]
      %v480 = vld [vmem:[%s213 + $0x3d4] sm:$0xf]
      %v481 = vld [vmem:[%s213 + $0x3d8] sm:$0xf]
      %v482 = vld [vmem:[%s213 + $0x3dc] sm:$0xf]
      %v483 = vld [vmem:[%s213 + $0x3e0] sm:$0xf]
      %v484 = vld [vmem:[%s213 + $0x3e4] sm:$0xf]
      %v485 = vld [vmem:[%s213 + $0x3e8] sm:$0xf]
      %v486 = vld [vmem:[%s213 + $0x3ec] sm:$0xf]
      %v487 = vld [vmem:[%s213 + $0x3f0] sm:$0xf]
      %v488 = vld [vmem:[%s213 + $0x3f4] sm:$0xf]
      %v489 = vld [vmem:[%s213 + $0x3f8] sm:$0xf]
      %v490 = vld [vmem:[%s213 + $0x3fc] sm:$0xf]
      %v499 = vunpack.c.l.b16 %v227
      %v500 = vunpack.c.h.b16 %v227
      %v501 = vunpack.c.l.b16 %v228
      %v502 = vunpack.c.h.b16 %v228
      %v503 = vunpack.c.l.b16 %v229
      %v504 = vunpack.c.h.b16 %v229
      %v505 = vunpack.c.l.b16 %v230
      %v506 = vunpack.c.h.b16 %v230
      %v507 = vunpack.c.l.b16 %v231
      %v508 = vunpack.c.h.b16 %v231
      %v509 = vunpack.c.l.b16 %v232
      %v510 = vunpack.c.h.b16 %v232
      %v511 = vunpack.c.l.b16 %v233
      %v512 = vunpack.c.h.b16 %v233
      %v513 = vunpack.c.l.b16 %v234
      %v514 = vunpack.c.h.b16 %v234
      %v515 = vpack.c.b16 %v499, %v499
      %v516 = vpack.c.b16 %v500, %v500
      %v517 = vpack.c.b16 %v501, %v501
      %v518 = vpack.c.b16 %v502, %v502
      %v519 = vpack.c.b16 %v503, %v503
      %v520 = vpack.c.b16 %v504, %v504
      %v521 = vpack.c.b16 %v505, %v505
      %v522 = vpack.c.b16 %v506, %v506
      %v523 = vpack.c.b16 %v507, %v507
      %v524 = vpack.c.b16 %v508, %v508
      %v525 = vpack.c.b16 %v509, %v509
      %v526 = vpack.c.b16 %v510, %v510
      %v527 = vpack.c.b16 %v511, %v511
      %v528 = vpack.c.b16 %v512, %v512
      %v529 = vpack.c.b16 %v513, %v513
      %v530 = vpack.c.b16 %v514, %v514
      %v803 = vunpack.c.l.b16 %v235
      %v804 = vunpack.c.l.b16 %v236
      %v805 = vunpack.c.l.b16 %v237
      %v806 = vunpack.c.l.b16 %v238
      %v807 = vunpack.c.l.b16 %v239
      %v808 = vunpack.c.l.b16 %v240
      %v809 = vunpack.c.l.b16 %v241
      %v810 = vunpack.c.l.b16 %v242
      %v811 = vunpack.c.l.b16 %v243
      %v812 = vunpack.c.l.b16 %v244
      %v813 = vunpack.c.l.b16 %v245
      %v814 = vunpack.c.l.b16 %v246
      %v815 = vunpack.c.l.b16 %v247
      %v816 = vunpack.c.l.b16 %v248
      %v817 = vunpack.c.l.b16 %v249
      %v818 = vunpack.c.l.b16 %v250
      %v819 = vunpack.c.l.b16 %v251
      %v820 = vunpack.c.l.b16 %v252
      %v821 = vunpack.c.l.b16 %v253
      %v822 = vunpack.c.l.b16 %v254
      %v823 = vunpack.c.l.b16 %v255
      %v824 = vunpack.c.l.b16 %v256
      %v825 = vunpack.c.l.b16 %v257
      %v826 = vunpack.c.l.b16 %v258
      %v827 = vunpack.c.l.b16 %v259
      %v828 = vunpack.c.l.b16 %v260
      %v829 = vunpack.c.l.b16 %v261
      %v830 = vunpack.c.l.b16 %v262
      %v831 = vunpack.c.l.b16 %v263
      %v832 = vunpack.c.l.b16 %v264
      %v833 = vunpack.c.l.b16 %v265
      %v834 = vunpack.c.l.b16 %v266
      %v835 = vunpack.c.l.b16 %v267
      %v836 = vunpack.c.l.b16 %v268
      %v837 = vunpack.c.l.b16 %v269
      %v838 = vunpack.c.l.b16 %v270
      %v839 = vunpack.c.l.b16 %v271
      %v840 = vunpack.c.l.b16 %v272
      %v841 = vunpack.c.l.b16 %v273
      %v842 = vunpack.c.l.b16 %v274
      %v843 = vunpack.c.l.b16 %v275
      %v844 = vunpack.c.l.b16 %v276
      %v845 = vunpack.c.l.b16 %v277
      %v846 = vunpack.c.l.b16 %v278
      %v847 = vunpack.c.l.b16 %v279
      %v848 = vunpack.c.l.b16 %v280
      %v849 = vunpack.c.l.b16 %v281
      %v850 = vunpack.c.l.b16 %v282
      %v851 = vunpack.c.l.b16 %v283
      %v852 = vunpack.c.l.b16 %v284
      %v853 = vunpack.c.l.b16 %v285
      %v854 = vunpack.c.l.b16 %v286
      %v855 = vunpack.c.l.b16 %v287
      %v856 = vunpack.c.l.b16 %v288
      %v857 = vunpack.c.l.b16 %v289
      %v858 = vunpack.c.l.b16 %v290
      %v859 = vunpack.c.l.b16 %v291
      %v860 = vunpack.c.l.b16 %v292
      %v861 = vunpack.c.l.b16 %v293
      %v862 = vunpack.c.l.b16 %v294
      %v863 = vunpack.c.l.b16 %v295
      %v864 = vunpack.c.l.b16 %v296
      %v865 = vunpack.c.l.b16 %v297
      %v866 = vunpack.c.l.b16 %v298
      %v867 = vunpack.c.l.b16 %v299
      %v868 = vunpack.c.l.b16 %v300
      %v869 = vunpack.c.l.b16 %v301
      %v870 = vunpack.c.l.b16 %v302
      %v871 = vunpack.c.l.b16 %v303
      %v872 = vunpack.c.l.b16 %v304
      %v873 = vunpack.c.l.b16 %v305
      %v874 = vunpack.c.l.b16 %v306
      %v875 = vunpack.c.l.b16 %v307
      %v876 = vunpack.c.l.b16 %v308
      %v877 = vunpack.c.l.b16 %v309
      %v878 = vunpack.c.l.b16 %v310
      %v879 = vunpack.c.l.b16 %v311
      %v880 = vunpack.c.l.b16 %v312
      %v881 = vunpack.c.l.b16 %v313
      %v882 = vunpack.c.l.b16 %v314
      %v883 = vunpack.c.l.b16 %v315
      %v884 = vunpack.c.l.b16 %v316
      %v885 = vunpack.c.l.b16 %v317
      %v886 = vunpack.c.l.b16 %v318
      %v887 = vunpack.c.l.b16 %v319
      %v888 = vunpack.c.l.b16 %v320
      %v889 = vunpack.c.l.b16 %v321
      %v890 = vunpack.c.l.b16 %v322
      %v891 = vunpack.c.l.b16 %v323
      %v892 = vunpack.c.l.b16 %v324
      %v893 = vunpack.c.l.b16 %v325
      %v894 = vunpack.c.l.b16 %v326
      %v895 = vunpack.c.l.b16 %v327
      %v896 = vunpack.c.l.b16 %v328
      %v897 = vunpack.c.l.b16 %v329
      %v898 = vunpack.c.l.b16 %v330
      %v899 = vunpack.c.l.b16 %v331
      %v900 = vunpack.c.l.b16 %v332
      %v901 = vunpack.c.l.b16 %v333
      %v902 = vunpack.c.l.b16 %v334
      %v903 = vunpack.c.l.b16 %v335
      %v904 = vunpack.c.l.b16 %v336
      %v905 = vunpack.c.l.b16 %v337
      %v906 = vunpack.c.l.b16 %v338
      %v907 = vunpack.c.l.b16 %v339
      %v908 = vunpack.c.l.b16 %v340
      %v909 = vunpack.c.l.b16 %v341
      %v910 = vunpack.c.l.b16 %v342
      %v911 = vunpack.c.l.b16 %v343
      %v912 = vunpack.c.l.b16 %v344
      %v913 = vunpack.c.l.b16 %v345
      %v914 = vunpack.c.l.b16 %v346
      %v915 = vunpack.c.l.b16 %v347
      %v916 = vunpack.c.l.b16 %v348
      %v917 = vunpack.c.l.b16 %v349
      %v918 = vunpack.c.l.b16 %v350
      %v919 = vunpack.c.l.b16 %v351
      %v920 = vunpack.c.l.b16 %v352
      %v921 = vunpack.c.l.b16 %v353
      %v922 = vunpack.c.l.b16 %v354
      %v923 = vunpack.c.l.b16 %v355
      %v924 = vunpack.c.l.b16 %v356
      %v925 = vunpack.c.l.b16 %v357
      %v926 = vunpack.c.l.b16 %v358
      %v927 = vunpack.c.l.b16 %v359
      %v928 = vunpack.c.l.b16 %v360
      %v929 = vunpack.c.l.b16 %v361
      %v930 = vunpack.c.l.b16 %v362
      %v931 = vunpack.c.l.b16 %v363
      %v932 = vunpack.c.l.b16 %v364
      %v933 = vunpack.c.l.b16 %v365
      %v934 = vunpack.c.l.b16 %v366
      %v935 = vunpack.c.l.b16 %v367
      %v936 = vunpack.c.l.b16 %v368
      %v937 = vunpack.c.l.b16 %v369
      %v938 = vunpack.c.l.b16 %v370
      %v939 = vunpack.c.l.b16 %v371
      %v940 = vunpack.c.l.b16 %v372
      %v941 = vunpack.c.l.b16 %v373
      %v942 = vunpack.c.l.b16 %v374
      %v943 = vunpack.c.l.b16 %v375
      %v944 = vunpack.c.l.b16 %v376
      %v945 = vunpack.c.l.b16 %v377
      %v946 = vunpack.c.l.b16 %v378
      %v947 = vunpack.c.l.b16 %v379
      %v948 = vunpack.c.l.b16 %v380
      %v949 = vunpack.c.l.b16 %v381
      %v950 = vunpack.c.l.b16 %v382
      %v951 = vunpack.c.l.b16 %v383
      %v952 = vunpack.c.l.b16 %v384
      %v953 = vunpack.c.l.b16 %v385
      %v954 = vunpack.c.l.b16 %v386
      %v955 = vunpack.c.l.b16 %v387
      %v956 = vunpack.c.l.b16 %v388
      %v957 = vunpack.c.l.b16 %v389
      %v958 = vunpack.c.l.b16 %v390
      %v959 = vunpack.c.l.b16 %v391
      %v960 = vunpack.c.l.b16 %v392
      %v961 = vunpack.c.l.b16 %v393
      %v962 = vunpack.c.l.b16 %v394
      %v963 = vunpack.c.l.b16 %v395
      %v964 = vunpack.c.l.b16 %v396
      %v965 = vunpack.c.l.b16 %v397
      %v966 = vunpack.c.l.b16 %v398
      %v967 = vunpack.c.l.b16 %v399
      %v968 = vunpack.c.l.b16 %v400
      %v969 = vunpack.c.l.b16 %v401
      %v970 = vunpack.c.l.b16 %v402
      %v971 = vunpack.c.l.b16 %v403
      %v972 = vunpack.c.l.b16 %v404
      %v973 = vunpack.c.l.b16 %v405
      %v974 = vunpack.c.l.b16 %v406
      %v975 = vunpack.c.l.b16 %v407
      %v976 = vunpack.c.l.b16 %v408
      %v977 = vunpack.c.l.b16 %v409
      %v978 = vunpack.c.l.b16 %v410
      %v979 = vunpack.c.l.b16 %v411
      %v980 = vunpack.c.l.b16 %v412
      %v981 = vunpack.c.l.b16 %v413
      %v982 = vunpack.c.l.b16 %v414
      %v983 = vunpack.c.l.b16 %v415
      %v984 = vunpack.c.l.b16 %v416
      %v985 = vunpack.c.l.b16 %v417
      %v986 = vunpack.c.l.b16 %v418
      %v987 = vunpack.c.l.b16 %v419
      %v988 = vunpack.c.l.b16 %v420
      %v989 = vunpack.c.l.b16 %v421
      %v990 = vunpack.c.l.b16 %v422
      %v991 = vunpack.c.l.b16 %v423
      %v992 = vunpack.c.l.b16 %v424
      %v993 = vunpack.c.l.b16 %v425
      %v994 = vunpack.c.l.b16 %v426
      %v995 = vunpack.c.l.b16 %v427
      %v996 = vunpack.c.l.b16 %v428
      %v997 = vunpack.c.l.b16 %v429
      %v998 = vunpack.c.l.b16 %v430
      %v999 = vunpack.c.l.b16 %v431
      %v1000 = vunpack.c.l.b16 %v432
      %v1001 = vunpack.c.l.b16 %v433
      %v1002 = vunpack.c.l.b16 %v434
      %v1003 = vunpack.c.l.b16 %v435
      %v1004 = vunpack.c.l.b16 %v436
      %v1005 = vunpack.c.l.b16 %v437
      %v1006 = vunpack.c.l.b16 %v438
      %v1007 = vunpack.c.l.b16 %v439
      %v1008 = vunpack.c.l.b16 %v440
      %v1009 = vunpack.c.l.b16 %v441
      %v1010 = vunpack.c.l.b16 %v442
      %v1011 = vunpack.c.l.b16 %v443
      %v1012 = vunpack.c.l.b16 %v444
      %v1013 = vunpack.c.l.b16 %v445
      %v1014 = vunpack.c.l.b16 %v446
      %v1015 = vunpack.c.l.b16 %v447
      %v1016 = vunpack.c.l.b16 %v448
      %v1017 = vunpack.c.l.b16 %v449
      %v1018 = vunpack.c.l.b16 %v450
      %v1019 = vunpack.c.l.b16 %v451
      %v1020 = vunpack.c.l.b16 %v452
      %v1021 = vunpack.c.l.b16 %v453
      %v1022 = vunpack.c.l.b16 %v454
      %v1023 = vunpack.c.l.b16 %v455
      %v1024 = vunpack.c.l.b16 %v456
      %v1025 = vunpack.c.l.b16 %v457
      %v1026 = vunpack.c.l.b16 %v458
      %v1027 = vunpack.c.l.b16 %v459
      %v1028 = vunpack.c.l.b16 %v460
      %v1029 = vunpack.c.l.b16 %v461
      %v1030 = vunpack.c.l.b16 %v462
      %v1031 = vunpack.c.l.b16 %v463
      %v1032 = vunpack.c.l.b16 %v464
      %v1033 = vunpack.c.l.b16 %v465
      %v1034 = vunpack.c.l.b16 %v466
      %v1035 = vunpack.c.l.b16 %v467
      %v1036 = vunpack.c.l.b16 %v468
      %v1037 = vunpack.c.l.b16 %v469
      %v1038 = vunpack.c.l.b16 %v470
      %v1039 = vunpack.c.l.b16 %v471
      %v1040 = vunpack.c.l.b16 %v472
      %v1041 = vunpack.c.l.b16 %v473
      %v1042 = vunpack.c.l.b16 %v474
      %v1043 = vunpack.c.l.b16 %v475
      %v1044 = vunpack.c.l.b16 %v476
      %v1045 = vunpack.c.l.b16 %v477
      %v1046 = vunpack.c.l.b16 %v478
      %v1047 = vunpack.c.l.b16 %v479
      %v1048 = vunpack.c.l.b16 %v480
      %v1049 = vunpack.c.l.b16 %v481
      %v1050 = vunpack.c.l.b16 %v482
      %v1051 = vunpack.c.l.b16 %v483
      %v1052 = vunpack.c.l.b16 %v484
      %v1053 = vunpack.c.l.b16 %v485
      %v1054 = vunpack.c.l.b16 %v486
      %v1055 = vunpack.c.l.b16 %v487
      %v1056 = vunpack.c.l.b16 %v488
      %v1057 = vunpack.c.l.b16 %v489
      %v1058 = vunpack.c.l.b16 %v490
      %v1059 = vpack.c.b16 %v804, %v803
      %v1060 = vpack.c.b16 %v806, %v805
      %v1061 = vpack.c.b16 %v808, %v807
      %v1062 = vpack.c.b16 %v810, %v809
      %v1063 = vpack.c.b16 %v812, %v811
      %v1064 = vpack.c.b16 %v814, %v813
      %v1065 = vpack.c.b16 %v816, %v815
      %v1066 = vpack.c.b16 %v818, %v817
      %v1067 = vpack.c.b16 %v820, %v819
      %v1068 = vpack.c.b16 %v822, %v821
      %v1069 = vpack.c.b16 %v824, %v823
      %v1070 = vpack.c.b16 %v826, %v825
      %v1071 = vpack.c.b16 %v828, %v827
      %v1072 = vpack.c.b16 %v830, %v829
      %v1073 = vpack.c.b16 %v832, %v831
      %v1074 = vpack.c.b16 %v834, %v833
      %v1075 = vpack.c.b16 %v836, %v835
      %v1076 = vpack.c.b16 %v838, %v837
      %v1077 = vpack.c.b16 %v840, %v839
      %v1078 = vpack.c.b16 %v842, %v841
      %v1079 = vpack.c.b16 %v844, %v843
      %v1080 = vpack.c.b16 %v846, %v845
      %v1081 = vpack.c.b16 %v848, %v847
      %v1082 = vpack.c.b16 %v850, %v849
      %v1083 = vpack.c.b16 %v852, %v851
      %v1084 = vpack.c.b16 %v854, %v853
      %v1085 = vpack.c.b16 %v856, %v855
      %v1086 = vpack.c.b16 %v858, %v857
      %v1087 = vpack.c.b16 %v860, %v859
      %v1088 = vpack.c.b16 %v862, %v861
      %v1089 = vpack.c.b16 %v864, %v863
      %v1090 = vpack.c.b16 %v866, %v865
      %v1091 = vpack.c.b16 %v868, %v867
      %v1092 = vpack.c.b16 %v870, %v869
      %v1093 = vpack.c.b16 %v872, %v871
      %v1094 = vpack.c.b16 %v874, %v873
      %v1095 = vpack.c.b16 %v876, %v875
      %v1096 = vpack.c.b16 %v878, %v877
      %v1097 = vpack.c.b16 %v880, %v879
      %v1098 = vpack.c.b16 %v882, %v881
      %v1099 = vpack.c.b16 %v884, %v883
      %v1100 = vpack.c.b16 %v886, %v885
      %v1101 = vpack.c.b16 %v888, %v887
      %v1102 = vpack.c.b16 %v890, %v889
      %v1103 = vpack.c.b16 %v892, %v891
      %v1104 = vpack.c.b16 %v894, %v893
      %v1105 = vpack.c.b16 %v896, %v895
      %v1106 = vpack.c.b16 %v898, %v897
      %v1107 = vpack.c.b16 %v900, %v899
      %v1108 = vpack.c.b16 %v902, %v901
      %v1109 = vpack.c.b16 %v904, %v903
      %v1110 = vpack.c.b16 %v906, %v905
      %v1111 = vpack.c.b16 %v908, %v907
      %v1112 = vpack.c.b16 %v910, %v909
      %v1113 = vpack.c.b16 %v912, %v911
      %v1114 = vpack.c.b16 %v914, %v913
      %v1115 = vpack.c.b16 %v916, %v915
      %v1116 = vpack.c.b16 %v918, %v917
      %v1117 = vpack.c.b16 %v920, %v919
      %v1118 = vpack.c.b16 %v922, %v921
      %v1119 = vpack.c.b16 %v924, %v923
      %v1120 = vpack.c.b16 %v926, %v925
      %v1121 = vpack.c.b16 %v928, %v927
      %v1122 = vpack.c.b16 %v930, %v929
      %v1123 = vpack.c.b16 %v932, %v931
      %v1124 = vpack.c.b16 %v934, %v933
      %v1125 = vpack.c.b16 %v936, %v935
      %v1126 = vpack.c.b16 %v938, %v937
      %v1127 = vpack.c.b16 %v940, %v939
      %v1128 = vpack.c.b16 %v942, %v941
      %v1129 = vpack.c.b16 %v944, %v943
      %v1130 = vpack.c.b16 %v946, %v945
      %v1131 = vpack.c.b16 %v948, %v947
      %v1132 = vpack.c.b16 %v950, %v949
      %v1133 = vpack.c.b16 %v952, %v951
      %v1134 = vpack.c.b16 %v954, %v953
      %v1135 = vpack.c.b16 %v956, %v955
      %v1136 = vpack.c.b16 %v958, %v957
      %v1137 = vpack.c.b16 %v960, %v959
      %v1138 = vpack.c.b16 %v962, %v961
      %v1139 = vpack.c.b16 %v964, %v963
      %v1140 = vpack.c.b16 %v966, %v965
      %v1141 = vpack.c.b16 %v968, %v967
      %v1142 = vpack.c.b16 %v970, %v969
      %v1143 = vpack.c.b16 %v972, %v971
      %v1144 = vpack.c.b16 %v974, %v973
      %v1145 = vpack.c.b16 %v976, %v975
      %v1146 = vpack.c.b16 %v978, %v977
      %v1147 = vpack.c.b16 %v980, %v979
      %v1148 = vpack.c.b16 %v982, %v981
      %v1149 = vpack.c.b16 %v984, %v983
      %v1150 = vpack.c.b16 %v986, %v985
      %v1151 = vpack.c.b16 %v988, %v987
      %v1152 = vpack.c.b16 %v990, %v989
      %v1153 = vpack.c.b16 %v992, %v991
      %v1154 = vpack.c.b16 %v994, %v993
      %v1155 = vpack.c.b16 %v996, %v995
      %v1156 = vpack.c.b16 %v998, %v997
      %v1157 = vpack.c.b16 %v1000, %v999
      %v1158 = vpack.c.b16 %v1002, %v1001
      %v1159 = vpack.c.b16 %v1004, %v1003
      %v1160 = vpack.c.b16 %v1006, %v1005
      %v1161 = vpack.c.b16 %v1008, %v1007
      %v1162 = vpack.c.b16 %v1010, %v1009
      %v1163 = vpack.c.b16 %v1012, %v1011
      %v1164 = vpack.c.b16 %v1014, %v1013
      %v1165 = vpack.c.b16 %v1016, %v1015
      %v1166 = vpack.c.b16 %v1018, %v1017
      %v1167 = vpack.c.b16 %v1020, %v1019
      %v1168 = vpack.c.b16 %v1022, %v1021
      %v1169 = vpack.c.b16 %v1024, %v1023
      %v1170 = vpack.c.b16 %v1026, %v1025
      %v1171 = vpack.c.b16 %v1028, %v1027
      %v1172 = vpack.c.b16 %v1030, %v1029
      %v1173 = vpack.c.b16 %v1032, %v1031
      %v1174 = vpack.c.b16 %v1034, %v1033
      %v1175 = vpack.c.b16 %v1036, %v1035
      %v1176 = vpack.c.b16 %v1038, %v1037
      %v1177 = vpack.c.b16 %v1040, %v1039
      %v1178 = vpack.c.b16 %v1042, %v1041
      %v1179 = vpack.c.b16 %v1044, %v1043
      %v1180 = vpack.c.b16 %v1046, %v1045
      %v1181 = vpack.c.b16 %v1048, %v1047
      %v1182 = vpack.c.b16 %v1050, %v1049
      %v1183 = vpack.c.b16 %v1052, %v1051
      %v1184 = vpack.c.b16 %v1054, %v1053
      %v1185 = vpack.c.b16 %v1056, %v1055
      %v1186 = vpack.c.b16 %v1058, %v1057
      %1315 = vmatprep.subr.bf16.mxu0 0
      %1316 = vmatpush1.bf16.msra.mxu0 %v1059
      %1317 = vmatprep.subr.bf16.mxu0 0
      %1318 = vmatpush1.bf16.msra.mxu0 %v1060
      %1319 = vmatprep.subr.bf16.mxu0 0
      %1320 = vmatpush1.bf16.msra.mxu0 %v1061
      %1321 = vmatprep.subr.bf16.mxu0 0
      %1322 = vmatpush1.bf16.msra.mxu0 %v1062
      %1323 = vmatprep.subr.bf16.mxu0 0
      %1324 = vmatpush1.bf16.msra.mxu0 %v1063
      %1325 = vmatprep.subr.bf16.mxu0 0
      %1326 = vmatpush1.bf16.msra.mxu0 %v1064
      %1327 = vmatprep.subr.bf16.mxu0 0
      %1328 = vmatpush1.bf16.msra.mxu0 %v1065
      %1329 = vmatprep.subr.bf16.mxu0 0
      %1330 = vmatpush1.bf16.msra.mxu0 %v1066
      %1331 = vmatprep.subr.bf16.mxu0 0
      %1332 = vmatpush1.bf16.msra.mxu0 %v1067
      %1333 = vmatprep.subr.bf16.mxu0 0
      %1334 = vmatpush1.bf16.msra.mxu0 %v1068
      %1335 = vmatprep.subr.bf16.mxu0 0
      %1336 = vmatpush1.bf16.msra.mxu0 %v1069
      %1337 = vmatprep.subr.bf16.mxu0 0
      %1338 = vmatpush1.bf16.msra.mxu0 %v1070
      %1339 = vmatprep.subr.bf16.mxu0 0
      %1340 = vmatpush1.bf16.msra.mxu0 %v1071
      %1341 = vmatprep.subr.bf16.mxu0 0
      %1342 = vmatpush1.bf16.msra.mxu0 %v1072
      %1343 = vmatprep.subr.bf16.mxu0 0
      %1344 = vmatpush1.bf16.msra.mxu0 %v1073
      %1345 = vmatprep.subr.bf16.mxu0 0
      %1346 = vmatpush1.bf16.msra.mxu0 %v1074
      %1347 = vmatprep.mubr.bf16.mxu0 %v516
      %1348 = vmatmul.mubr.bf16.gmra.mrb[0].mxu0 %v515
      %v1349 = vpop.f32.mrb[0].mxu0
      %v1350 = vadd.f32 0.0, %v1349
      %v1351 = vpop.f32.mrb[0].mxu0
      %v1352 = vpop.f32.mrb[0].mxu0
      %v1353 = vpop.f32.mrb[0].mxu0
      %1354 = vdwg.mxu0
      %1355 = vmatprep.subr.bf16.mxu0 0
      %1356 = vmatpush1.bf16.msra.mxu0 %v1075
      %1357 = vmatprep.subr.bf16.mxu0 0
      %1358 = vmatpush1.bf16.msra.mxu0 %v1076
      %1359 = vmatprep.subr.bf16.mxu0 0
      %1360 = vmatpush1.bf16.msra.mxu0 %v1077
      %1361 = vmatprep.subr.bf16.mxu0 0
      %1362 = vmatpush1.bf16.msra.mxu0 %v1078
      %1363 = vmatprep.subr.bf16.mxu0 0
      %1364 = vmatpush1.bf16.msra.mxu0 %v1079
      %1365 = vmatprep.subr.bf16.mxu0 0
      %1366 = vmatpush1.bf16.msra.mxu0 %v1080
      %1367 = vmatprep.subr.bf16.mxu0 0
      %1368 = vmatpush1.bf16.msra.mxu0 %v1081
      %1369 = vmatprep.subr.bf16.mxu0 0
      %1370 = vmatpush1.bf16.msra.mxu0 %v1082
      %1371 = vmatprep.subr.bf16.mxu0 0
      %1372 = vmatpush1.bf16.msra.mxu0 %v1083
      %1373 = vmatprep.subr.bf16.mxu0 0
      %1374 = vmatpush1.bf16.msra.mxu0 %v1084
      %1375 = vmatprep.subr.bf16.mxu0 0
      %1376 = vmatpush1.bf16.msra.mxu0 %v1085
      %1377 = vmatprep.subr.bf16.mxu0 0
      %1378 = vmatpush1.bf16.msra.mxu0 %v1086
      %1379 = vmatprep.subr.bf16.mxu0 0
      %1380 = vmatpush1.bf16.msra.mxu0 %v1087
      %1381 = vmatprep.subr.bf16.mxu0 0
      %1382 = vmatpush1.bf16.msra.mxu0 %v1088
      %1383 = vmatprep.subr.bf16.mxu0 0
      %1384 = vmatpush1.bf16.msra.mxu0 %v1089
      %1385 = vmatprep.subr.bf16.mxu0 0
      %1386 = vmatpush1.bf16.msra.mxu0 %v1090
      %1387 = vmatprep.mubr.bf16.mxu0 %v518
      %1388 = vmatmul.mubr.bf16.gmra.mrb[0].mxu0 %v517
      %v1389 = vpop.f32.mrb[0].mxu0
      %v1390 = vadd.f32 %v1350, %v1389
      %v1391 = vpop.f32.mrb[0].mxu0
      %v1392 = vpop.f32.mrb[0].mxu0
      %v1393 = vpop.f32.mrb[0].mxu0
      %1394 = vdwg.mxu0
      %1395 = vmatprep.subr.bf16.mxu0 0
      %1396 = vmatpush1.bf16.msra.mxu0 %v1091
      %1397 = vmatprep.subr.bf16.mxu0 0
      %1398 = vmatpush1.bf16.msra.mxu0 %v1092
      %1399 = vmatprep.subr.bf16.mxu0 0
      %1400 = vmatpush1.bf16.msra.mxu0 %v1093
      %1401 = vmatprep.subr.bf16.mxu0 0
      %1402 = vmatpush1.bf16.msra.mxu0 %v1094
      %1403 = vmatprep.subr.bf16.mxu0 0
      %1404 = vmatpush1.bf16.msra.mxu0 %v1095
      %1405 = vmatprep.subr.bf16.mxu0 0
      %1406 = vmatpush1.bf16.msra.mxu0 %v1096
      %1407 = vmatprep.subr.bf16.mxu0 0
      %1408 = vmatpush1.bf16.msra.mxu0 %v1097
      %1409 = vmatprep.subr.bf16.mxu0 0
      %1410 = vmatpush1.bf16.msra.mxu0 %v1098
      %1411 = vmatprep.subr.bf16.mxu0 0
      %1412 = vmatpush1.bf16.msra.mxu0 %v1099
      %1413 = vmatprep.subr.bf16.mxu0 0
      %1414 = vmatpush1.bf16.msra.mxu0 %v1100
      %1415 = vmatprep.subr.bf16.mxu0 0
      %1416 = vmatpush1.bf16.msra.mxu0 %v1101
      %1417 = vmatprep.subr.bf16.mxu0 0
      %1418 = vmatpush1.bf16.msra.mxu0 %v1102
      %1419 = vmatprep.subr.bf16.mxu0 0
      %1420 = vmatpush1.bf16.msra.mxu0 %v1103
      %1421 = vmatprep.subr.bf16.mxu0 0
      %1422 = vmatpush1.bf16.msra.mxu0 %v1104
      %1423 = vmatprep.subr.bf16.mxu0 0
      %1424 = vmatpush1.bf16.msra.mxu0 %v1105
      %1425 = vmatprep.subr.bf16.mxu0 0
      %1426 = vmatpush1.bf16.msra.mxu0 %v1106
      %1427 = vmatprep.mubr.bf16.mxu0 %v520
      %1428 = vmatmul.mubr.bf16.gmra.mrb[0].mxu0 %v519
      %v1429 = vpop.f32.mrb[0].mxu0
      %v1430 = vadd.f32 %v1390, %v1429
      %v1431 = vpop.f32.mrb[0].mxu0
      %v1432 = vpop.f32.mrb[0].mxu0
      %v1433 = vpop.f32.mrb[0].mxu0
      %1434 = vdwg.mxu0
      %1435 = vmatprep.subr.bf16.mxu0 0
      %1436 = vmatpush1.bf16.msra.mxu0 %v1107
      %1437 = vmatprep.subr.bf16.mxu0 0
      %1438 = vmatpush1.bf16.msra.mxu0 %v1108
      %1439 = vmatprep.subr.bf16.mxu0 0
      %1440 = vmatpush1.bf16.msra.mxu0 %v1109
      %1441 = vmatprep.subr.bf16.mxu0 0
      %1442 = vmatpush1.bf16.msra.mxu0 %v1110
      %1443 = vmatprep.subr.bf16.mxu0 0
      %1444 = vmatpush1.bf16.msra.mxu0 %v1111
      %1445 = vmatprep.subr.bf16.mxu0 0
      %1446 = vmatpush1.bf16.msra.mxu0 %v1112
      %1447 = vmatprep.subr.bf16.mxu0 0
      %1448 = vmatpush1.bf16.msra.mxu0 %v1113
      %1449 = vmatprep.subr.bf16.mxu0 0
      %1450 = vmatpush1.bf16.msra.mxu0 %v1114
      %1451 = vmatprep.subr.bf16.mxu0 0
      %1452 = vmatpush1.bf16.msra.mxu0 %v1115
      %1453 = vmatprep.subr.bf16.mxu0 0
      %1454 = vmatpush1.bf16.msra.mxu0 %v1116
      %1455 = vmatprep.subr.bf16.mxu0 0
      %1456 = vmatpush1.bf16.msra.mxu0 %v1117
      %1457 = vmatprep.subr.bf16.mxu0 0
      %1458 = vmatpush1.bf16.msra.mxu0 %v1118
      %1459 = vmatprep.subr.bf16.mxu0 0
      %1460 = vmatpush1.bf16.msra.mxu0 %v1119
      %1461 = vmatprep.subr.bf16.mxu0 0
      %1462 = vmatpush1.bf16.msra.mxu0 %v1120
      %1463 = vmatprep.subr.bf16.mxu0 0
      %1464 = vmatpush1.bf16.msra.mxu0 %v1121
      %1465 = vmatprep.subr.bf16.mxu0 0
      %1466 = vmatpush1.bf16.msra.mxu0 %v1122
      %1467 = vmatprep.mubr.bf16.mxu0 %v522
      %1468 = vmatmul.mubr.bf16.gmra.mrb[0].mxu0 %v521
      %v1469 = vpop.f32.mrb[0].mxu0
      %v1470 = vadd.f32 %v1430, %v1469
      %v1471 = vpop.f32.mrb[0].mxu0
      %v1472 = vpop.f32.mrb[0].mxu0
      %v1473 = vpop.f32.mrb[0].mxu0
      %1474 = vdwg.mxu0
      %1475 = vmatprep.subr.bf16.mxu0 0
      %1476 = vmatpush1.bf16.msra.mxu0 %v1123
      %1477 = vmatprep.subr.bf16.mxu0 0
      %1478 = vmatpush1.bf16.msra.mxu0 %v1124
      %1479 = vmatprep.subr.bf16.mxu0 0
      %1480 = vmatpush1.bf16.msra.mxu0 %v1125
      %1481 = vmatprep.subr.bf16.mxu0 0
      %1482 = vmatpush1.bf16.msra.mxu0 %v1126
      %1483 = vmatprep.subr.bf16.mxu0 0
      %1484 = vmatpush1.bf16.msra.mxu0 %v1127
      %1485 = vmatprep.subr.bf16.mxu0 0
      %1486 = vmatpush1.bf16.msra.mxu0 %v1128
      %1487 = vmatprep.subr.bf16.mxu0 0
      %1488 = vmatpush1.bf16.msra.mxu0 %v1129
      %1489 = vmatprep.subr.bf16.mxu0 0
      %1490 = vmatpush1.bf16.msra.mxu0 %v1130
      %1491 = vmatprep.subr.bf16.mxu0 0
      %1492 = vmatpush1.bf16.msra.mxu0 %v1131
      %1493 = vmatprep.subr.bf16.mxu0 0
      %1494 = vmatpush1.bf16.msra.mxu0 %v1132
      %1495 = vmatprep.subr.bf16.mxu0 0
      %1496 = vmatpush1.bf16.msra.mxu0 %v1133
      %1497 = vmatprep.subr.bf16.mxu0 0
      %1498 = vmatpush1.bf16.msra.mxu0 %v1134
      %1499 = vmatprep.subr.bf16.mxu0 0
      %1500 = vmatpush1.bf16.msra.mxu0 %v1135
      %1501 = vmatprep.subr.bf16.mxu0 0
      %1502 = vmatpush1.bf16.msra.mxu0 %v1136
      %1503 = vmatprep.subr.bf16.mxu0 0
      %1504 = vmatpush1.bf16.msra.mxu0 %v1137
      %1505 = vmatprep.subr.bf16.mxu0 0
      %1506 = vmatpush1.bf16.msra.mxu0 %v1138
      %1507 = vmatprep.mubr.bf16.mxu0 %v524
      %1508 = vmatmul.mubr.bf16.gmra.mrb[0].mxu0 %v523
      %v1509 = vpop.f32.mrb[0].mxu0
      %v1510 = vadd.f32 %v1470, %v1509
      %v1511 = vpop.f32.mrb[0].mxu0
      %v1512 = vpop.f32.mrb[0].mxu0
      %v1513 = vpop.f32.mrb[0].mxu0
      %1514 = vdwg.mxu0
      %1515 = vmatprep.subr.bf16.mxu0 0
      %1516 = vmatpush1.bf16.msra.mxu0 %v1139
      %1517 = vmatprep.subr.bf16.mxu0 0
      %1518 = vmatpush1.bf16.msra.mxu0 %v1140
      %1519 = vmatprep.subr.bf16.mxu0 0
      %1520 = vmatpush1.bf16.msra.mxu0 %v1141
      %1521 = vmatprep.subr.bf16.mxu0 0
      %1522 = vmatpush1.bf16.msra.mxu0 %v1142
      %1523 = vmatprep.subr.bf16.mxu0 0
      %1524 = vmatpush1.bf16.msra.mxu0 %v1143
      %1525 = vmatprep.subr.bf16.mxu0 0
      %1526 = vmatpush1.bf16.msra.mxu0 %v1144
      %1527 = vmatprep.subr.bf16.mxu0 0
      %1528 = vmatpush1.bf16.msra.mxu0 %v1145
      %1529 = vmatprep.subr.bf16.mxu0 0
      %1530 = vmatpush1.bf16.msra.mxu0 %v1146
      %1531 = vmatprep.subr.bf16.mxu0 0
      %1532 = vmatpush1.bf16.msra.mxu0 %v1147
      %1533 = vmatprep.subr.bf16.mxu0 0
      %1534 = vmatpush1.bf16.msra.mxu0 %v1148
      %1535 = vmatprep.subr.bf16.mxu0 0
      %1536 = vmatpush1.bf16.msra.mxu0 %v1149
      %1537 = vmatprep.subr.bf16.mxu0 0
      %1538 = vmatpush1.bf16.msra.mxu0 %v1150
      %1539 = vmatprep.subr.bf16.mxu0 0
      %1540 = vmatpush1.bf16.msra.mxu0 %v1151
      %1541 = vmatprep.subr.bf16.mxu0 0
      %1542 = vmatpush1.bf16.msra.mxu0 %v1152
      %1543 = vmatprep.subr.bf16.mxu0 0
      %1544 = vmatpush1.bf16.msra.mxu0 %v1153
      %1545 = vmatprep.subr.bf16.mxu0 0
      %1546 = vmatpush1.bf16.msra.mxu0 %v1154
      %1547 = vmatprep.mubr.bf16.mxu0 %v526
      %1548 = vmatmul.mubr.bf16.gmra.mrb[0].mxu0 %v525
      %v1549 = vpop.f32.mrb[0].mxu0
      %v1550 = vadd.f32 %v1510, %v1549
      %v1551 = vpop.f32.mrb[0].mxu0
      %v1552 = vpop.f32.mrb[0].mxu0
      %v1553 = vpop.f32.mrb[0].mxu0
      %1554 = vdwg.mxu0
      %1555 = vmatprep.subr.bf16.mxu0 0
      %1556 = vmatpush1.bf16.msra.mxu0 %v1155
      %1557 = vmatprep.subr.bf16.mxu0 0
      %1558 = vmatpush1.bf16.msra.mxu0 %v1156
      %1559 = vmatprep.subr.bf16.mxu0 0
      %1560 = vmatpush1.bf16.msra.mxu0 %v1157
      %1561 = vmatprep.subr.bf16.mxu0 0
      %1562 = vmatpush1.bf16.msra.mxu0 %v1158
      %1563 = vmatprep.subr.bf16.mxu0 0
      %1564 = vmatpush1.bf16.msra.mxu0 %v1159
      %1565 = vmatprep.subr.bf16.mxu0 0
      %1566 = vmatpush1.bf16.msra.mxu0 %v1160
      %1567 = vmatprep.subr.bf16.mxu0 0
      %1568 = vmatpush1.bf16.msra.mxu0 %v1161
      %1569 = vmatprep.subr.bf16.mxu0 0
      %1570 = vmatpush1.bf16.msra.mxu0 %v1162
      %1571 = vmatprep.subr.bf16.mxu0 0
      %1572 = vmatpush1.bf16.msra.mxu0 %v1163
      %1573 = vmatprep.subr.bf16.mxu0 0
      %1574 = vmatpush1.bf16.msra.mxu0 %v1164
      %1575 = vmatprep.subr.bf16.mxu0 0
      %1576 = vmatpush1.bf16.msra.mxu0 %v1165
      %1577 = vmatprep.subr.bf16.mxu0 0
      %1578 = vmatpush1.bf16.msra.mxu0 %v1166
      %1579 = vmatprep.subr.bf16.mxu0 0
      %1580 = vmatpush1.bf16.msra.mxu0 %v1167
      %1581 = vmatprep.subr.bf16.mxu0 0
      %1582 = vmatpush1.bf16.msra.mxu0 %v1168
      %1583 = vmatprep.subr.bf16.mxu0 0
      %1584 = vmatpush1.bf16.msra.mxu0 %v1169
      %1585 = vmatprep.subr.bf16.mxu0 0
      %1586 = vmatpush1.bf16.msra.mxu0 %v1170
      %1587 = vmatprep.mubr.bf16.mxu0 %v528
      %1588 = vmatmul.mubr.bf16.gmra.mrb[0].mxu0 %v527
      %v1589 = vpop.f32.mrb[0].mxu0
      %v1590 = vadd.f32 %v1550, %v1589
      %v1591 = vpop.f32.mrb[0].mxu0
      %v1592 = vpop.f32.mrb[0].mxu0
      %v1593 = vpop.f32.mrb[0].mxu0
      %1594 = vdwg.mxu0
      %1595 = vmatprep.subr.bf16.mxu0 0
      %1596 = vmatpush1.bf16.msra.mxu0 %v1171
      %1597 = vmatprep.subr.bf16.mxu0 0
      %1598 = vmatpush1.bf16.msra.mxu0 %v1172
      %1599 = vmatprep.subr.bf16.mxu0 0
      %1600 = vmatpush1.bf16.msra.mxu0 %v1173
      %1601 = vmatprep.subr.bf16.mxu0 0
      %1602 = vmatpush1.bf16.msra.mxu0 %v1174
      %1603 = vmatprep.subr.bf16.mxu0 0
      %1604 = vmatpush1.bf16.msra.mxu0 %v1175
      %1605 = vmatprep.subr.bf16.mxu0 0
      %1606 = vmatpush1.bf16.msra.mxu0 %v1176
      %1607 = vmatprep.subr.bf16.mxu0 0
      %1608 = vmatpush1.bf16.msra.mxu0 %v1177
      %1609 = vmatprep.subr.bf16.mxu0 0
      %1610 = vmatpush1.bf16.msra.mxu0 %v1178
      %1611 = vmatprep.subr.bf16.mxu0 0
      %1612 = vmatpush1.bf16.msra.mxu0 %v1179
      %1613 = vmatprep.subr.bf16.mxu0 0
      %1614 = vmatpush1.bf16.msra.mxu0 %v1180
      %1615 = vmatprep.subr.bf16.mxu0 0
      %1616 = vmatpush1.bf16.msra.mxu0 %v1181
      %1617 = vmatprep.subr.bf16.mxu0 0
      %1618 = vmatpush1.bf16.msra.mxu0 %v1182
      %1619 = vmatprep.subr.bf16.mxu0 0
      %1620 = vmatpush1.bf16.msra.mxu0 %v1183
      %1621 = vmatprep.subr.bf16.mxu0 0
      %1622 = vmatpush1.bf16.msra.mxu0 %v1184
      %1623 = vmatprep.subr.bf16.mxu0 0
      %1624 = vmatpush1.bf16.msra.mxu0 %v1185
      %1625 = vmatprep.subr.bf16.mxu0 0
      %1626 = vmatpush1.bf16.msra.mxu0 %v1186
      %1627 = vmatprep.mubr.bf16.mxu0 %v530
      %1628 = vmatmul.mubr.bf16.gmra.mrb[0].mxu0 %v529
      %v1629 = vpop.f32.mrb[0].mxu0
      %v1630 = vadd.f32 %v1590, %v1629
      %v1631 = vpop.f32.mrb[0].mxu0
      %v1632 = vpop.f32.mrb[0].mxu0
      %v1633 = vpop.f32.mrb[0].mxu0
      %1634 = vdwg.mxu0
      %v1635 = vadd.f32 %v226, %v1630
      %vm1636 = vcmask 261120
      %1637 = vst.msk [vmem:[#allocation2] sm:$0xff] %vm1636, %v1635
      %p1638 = scmp.eq.s32.totalorder %s19, 3
      // Predicated region
      $region37: #{landtrans_forward.15} parent=31 // pred_check
        %p1639 = pneg %p1638
      $region38: #{landtrans_forward.15} parent=31 // pred_check_branch
        %1641 = sbr.rel (%p1639) target = $region40
      $region39: #{landtrans_forward.15} parent=31 // pred_region
        %v1642 = vld [vmem:[#allocation2] sm:$0xff]
        %v1643 = vld [vmem:[%s2] sm:$0x1]
        %v1645 = vlaneseq
        %v1646 = vshrl.u32 %v1645, 7
        %v1647 = vsub.s32 0, %v1646
        %v1648 = vrot.slane %v1643, %v1647
        %v1650 = vadd.f32 %v1642, %v1648
        %v1651 = vpack.c.bf16 %v1650, %v1650
        %vm1652 = vcmask 257024
        %1653 = vst.msk [vmem:[%s218] sm:$0xf] %vm1652, %v1651
      $region40: #{landtrans_forward.15} parent=31 // pred_fallthru
        _
      %p1654 = scmp.lt.s32.totalorder %s18, 0
      %s1655 = scalar_select %p1654, %s18, 0
      %s1656 = smul.addr %s1655, 4
      %s1657 = scalar_lea.vmem %s3, %s1656
      // Predicated region
      $region41: #{landtrans_forward.15} parent=31 // pred_check
        %p1658 = pneg %p119
      $region42: #{landtrans_forward.15} parent=31 // pred_check_branch
        %1660 = sbr.rel (%p1658) target = $region44
      $region43: #{landtrans_forward.15} parent=31 // pred_region
        _
      $region44: #{landtrans_forward.15} parent=31 // pred_fallthru
        _
      // Predicated region
      $region45: #{landtrans_forward.15} parent=31 // pred_check
        %p1661 = pneg %p119
      $region46: #{landtrans_forward.15} parent=31 // pred_check_branch
        %1663 = sbr.rel (%p1661) target = $region48
      $region47: #{landtrans_forward.15} parent=31 // pred_region
        %p1664 = scmp.lt.s32.totalorder %s18, 0
        %s1665 = scalar_select %p1664, %s18, 0
        %s1666 = smul.addr %s1665, 4
        %s1667 = scalar_lea.vmem %s3, %s1666
      $region48: #{landtrans_forward.15} parent=31 // pred_fallthru
        _
    $region32: #{landtrans_forward.15} parent=5 // pred_fallthru
      _
    %p1668 = scmp.le.s32.totalorder 2, %s9
    // Predicated region
    $region49: #{landtrans_forward.15} parent=5 // pred_check
      %p1669 = pneg %p1668
    $region50: #{landtrans_forward.15} parent=5 // pred_check_branch
      %1671 = sbr.rel (%p1669) target = $region52
    $region51: #{landtrans_forward.15} parent=5 // pred_region
      %s1672 = ssub.s32 %s9, 2
    $region52: #{landtrans_forward.15} parent=5 // pred_fallthru
      _
  $region6: #{landtrans_forward.15} parent=0 // loop_footer
    %s13 = sadd.s32 1, %s9
  $region7: #{landtrans_forward.15} parent=0 // loop_footer_branch
    %8 = sbr.rel target = $region3
  $region8: #{landtrans_forward.15} parent=0 // loop_exit
    _

// kernel: landtrans_forward.18
$region0: #{landtrans_forward.18}
  #allocation0 [shape = 'u32[]', space=smem, size = 0x4, offset = 0x4, fixed_abs, tag = 'smem constant byte address 0x4 - core index']
  #allocation1 [shape = 'u32[144,128]{1,0:T(1,128)}', space=vmem, size = 0x12000, scoped, tag = 'internal scratch']
  #allocation2 [shape = 'f32[8,96]{1,0:T(8,128)}', space=vmem, size = 0x1000, scoped, tag = 'scratch operand']
  %s0 = inlined_call_operand.vmem [shape: bf16[8,32], index: 0, kind: input, shape index: {}]
  %s1 = inlined_call_operand.vmem [shape: bf16[32,96], index: 1, kind: input, shape index: {}]
  %s2 = inlined_call_operand.vmem [shape: f32[1,96], index: 2, kind: input, shape index: {}]
  %s3 = inlined_call_operand.vmem [shape: bf16[8,96], index: 3, kind: output, shape index: {}]
  %s4 = sld [smem:[#allocation0]]
  $region30: #{landtrans_forward.18} parent=0
    _
  %s6 = ssub.s32 1, %s4
  %s7 = scalar_select 0, %s6, %s4
  // Predicated region
  $region2: #{landtrans_forward.18} parent=0 // pred_check
    _
  $region3: #{landtrans_forward.18} parent=0 // pred_check_branch
    %9 = sbr.rel (0) target = $region5
  $region4: #{landtrans_forward.18} parent=0 // pred_region
    _
  $region5: #{landtrans_forward.18} parent=0 // pred_fallthru
    _
  // Predicated region
  $region6: #{landtrans_forward.18} parent=0 // pred_check
    _
  $region7: #{landtrans_forward.18} parent=0 // pred_check_branch
    %11 = sbr.rel (0) target = $region9
  $region8: #{landtrans_forward.18} parent=0 // pred_region
    _
  $region9: #{landtrans_forward.18} parent=0 // pred_fallthru
    _
  // Predicated region
  $region10: #{landtrans_forward.18} parent=0 // pred_check
    _
  $region11: #{landtrans_forward.18} parent=0 // pred_check_branch
    %13 = sbr.rel (0) target = $region13
  $region12: #{landtrans_forward.18} parent=0 // pred_region
    _
  $region13: #{landtrans_forward.18} parent=0 // pred_fallthru
    _
  %p15 = scmp.eq.s32.totalorder 0, 0
  // Predicated region
  $region14: #{landtrans_forward.18} parent=0 // pred_check
    %p16 = pneg %p15
  $region15: #{landtrans_forward.18} parent=0 // pred_check_branch
    %18 = sbr.rel (%p16) target = $region17
  $region16: #{landtrans_forward.18} parent=0 // pred_region
    %vm19 = vcmask 785408
    %20 = vst.msk [vmem:[#allocation2] sm:$0xff] %vm19, 0.0
  $region17: #{landtrans_forward.18} parent=0 // pred_fallthru
    _
  %v21 = vld [vmem:[#allocation2] sm:$0xff]
  %v22 = vld [vmem:[%s0] sm:$0xf]
  %v23 = vld [vmem:[%s1] sm:$0xf]
  %v24 = vld [vmem:[%s1 + $0x4] sm:$0xf]
  %v25 = vld [vmem:[%s1 + $0x8] sm:$0xf]
  %v26 = vld [vmem:[%s1 + $0xc] sm:$0xf]
  %v31 = vunpack.c.l.b16 %v23
  %v32 = vunpack.c.l.b16 %v24
  %v33 = vunpack.c.l.b16 %v25
  %v34 = vunpack.c.l.b16 %v26
  %v35 = vpack.c.b16 %v32, %v31
  %v36 = vpack.c.b16 %v34, %v33
  %vm39 = vcmask 261120
  %v41 = vsel %vm39, %v22, 0
  %43 = vmatprep.subr.bf16.mxu0 0
  %44 = vmatpush1.bf16.msra.mxu0 %v35
  %45 = vmatprep.subr.bf16.mxu0 0
  %46 = vmatpush1.bf16.msra.mxu0 %v36
  %47 = vmatprep.subr.bf16.mxu0 0
  %48 = vmatpush1.bf16.msra.mxu0 0
  %49 = vmatprep.subr.bf16.mxu0 0
  %50 = vmatpush1.bf16.msra.mxu0 0
  %51 = vmatprep.subr.bf16.mxu0 0
  %52 = vmatpush1.bf16.msra.mxu0 0
  %53 = vmatprep.subr.bf16.mxu0 0
  %54 = vmatpush1.bf16.msra.mxu0 0
  %55 = vmatprep.subr.bf16.mxu0 0
  %56 = vmatpush1.bf16.msra.mxu0 0
  %57 = vmatprep.subr.bf16.mxu0 0
  %58 = vmatpush1.bf16.msra.mxu0 0
  %59 = vmatprep.subr.bf16.mxu0 0
  %60 = vmatpush1.bf16.msra.mxu0 0
  %61 = vmatprep.subr.bf16.mxu0 0
  %62 = vmatpush1.bf16.msra.mxu0 0
  %63 = vmatprep.subr.bf16.mxu0 0
  %64 = vmatpush1.bf16.msra.mxu0 0
  %65 = vmatprep.subr.bf16.mxu0 0
  %66 = vmatpush1.bf16.msra.mxu0 0
  %67 = vmatprep.subr.bf16.mxu0 0
  %68 = vmatpush1.bf16.msra.mxu0 0
  %69 = vmatprep.subr.bf16.mxu0 0
  %70 = vmatpush1.bf16.msra.mxu0 0
  %71 = vmatprep.subr.bf16.mxu0 0
  %72 = vmatpush1.bf16.msra.mxu0 0
  %73 = vmatprep.subr.bf16.mxu0 0
  %74 = vmatpush1.bf16.msra.mxu0 0
  %75 = vmatprep.mubr.bf16.mxu0 0
  %76 = vmatmul.mubr.bf16.gmra.mrb[0].mxu0 %v41
  %v77 = vpop.f32.mrb[0].mxu0
  %v78 = vadd.f32 0.0, %v77
  %v79 = vpop.f32.mrb[0].mxu0
  %v80 = vpop.f32.mrb[0].mxu0
  %v81 = vpop.f32.mrb[0].mxu0
  %82 = vdwg.mxu0
  %v83 = vadd.f32 %v21, %v78
  %vm84 = vcmask 785408
  %85 = vst.msk [vmem:[#allocation2] sm:$0xff] %vm84, %v83
  // Predicated region
  $region18: #{landtrans_forward.18} parent=0 // pred_check
    %p86 = pneg %p15
  $region19: #{landtrans_forward.18} parent=0 // pred_check_branch
    %88 = sbr.rel (%p86) target = $region21
  $region20: #{landtrans_forward.18} parent=0 // pred_region
    %v89 = vld [vmem:[#allocation2] sm:$0xff]
    %v90 = vld [vmem:[%s2] sm:$0x1]
    %v92 = vlaneseq
    %v93 = vshrl.u32 %v92, 7
    %v94 = vsub.s32 0, %v93
    %v95 = vrot.slane %v90, %v94
    %v97 = vadd.f32 %v89, %v95
    %v98 = vpack.c.bf16 %v97, %v97
    %vm99 = vcmask 781312
    %100 = vst.msk [vmem:[%s3] sm:$0xf] %vm99, %v98
  $region21: #{landtrans_forward.18} parent=0 // pred_fallthru
    _
  // Predicated region
  $region22: #{landtrans_forward.18} parent=0 // pred_check
    _
  $region23: #{landtrans_forward.18} parent=0 // pred_check_branch
    %102 = sbr.rel (0) target = $region25
  $region24: #{landtrans_forward.18} parent=0 // pred_region
    _
  $region25: #{landtrans_forward.18} parent=0 // pred_fallthru
    _
  // Predicated region
  $region26: #{landtrans_forward.18} parent=0 // pred_check
    _
  $region27: #{landtrans_forward.18} parent=0 // pred_check_branch
    %104 = sbr.rel (0) target = $region29
  $region28: #{landtrans_forward.18} parent=0 // pred_region
    _
  $region29: #{landtrans_forward.18} parent=0 // pred_fallthru
    _

// kernel: squeeze.13
$region0: #{squeeze.13}
  %s0 = inlined_call_operand.vmem [shape: bf16[2,4,32], index: 0, kind: input, shape index: {}]
  %s1 = inlined_call_operand.vmem [shape: bf16[2,4,4,8], index: 1, kind: output, shape index: {}]
  $region1: #{squeeze.13} parent=0
    #allocation0 [shape = 'u8[32768]{0}', space=vmem, size = 0x8000, scoped, tag = 'scoped mem for output reshape']
    #allocation1 [shape = 'u8[8192]{0}', space=vmem, size = 0x2000, scoped, tag = 'scoped mem for input reshape']
    %s3 = smul.u32 2, 2
    %s4 = sshllo.u32 0, %s3
    %s5 = scalar_lea.vmem %s0, 2
    %s6 = sshrl.u32 %s4, 1
    %s7 = sor.u32 %s4, %s6
    %s8 = sand.u32 %s7, 85
    %s9 = sshrl.u32 %s8, 1
    %s10 = sor.u32 %s8, %s9
    %s11 = sand.u32 51, %s10
    %s12 = sshrl.u32 %s11, 2
    %s13 = sor.u32 %s11, %s12
    %s14 = sand.u32 15, %s13
    %v15 = vld [vmem:[%s5] sm:%s14]
    %v16 = vunpack.c.l.bf16 %v15
    %v17 = vunpack.c.h.bf16 %v15
    %s18 = scalar_lea.vmem [#allocation1], 8
    %19 = vst [vmem:[%s18] sm:%s4] %v16
    %s20 = sshrl.u32 %s4, 1
    %s21 = sor.u32 %s4, %s20
    %s22 = sand.u32 %s21, 85
    %s23 = sshrl.u32 %s22, 1
    %s24 = sor.u32 %s22, %s23
    %s25 = sand.u32 51, %s24
    %s26 = sshrl.u32 %s25, 2
    %s27 = sor.u32 %s25, %s26
    %s28 = sand.u32 15, %s27
    %v29 = vld [vmem:[%s0] sm:%s28]
    %v30 = vunpack.c.l.bf16 %v29
    %v31 = vunpack.c.h.bf16 %v29
    %32 = vst [vmem:[#allocation1] sm:%s4] %v30
    %v33 = vld [vmem:[#allocation1] sm:$0xf]
    %vm34 = vcmask 64512
    %35 = vst.msk [vmem:[#allocation0] ss:$8 sm:$0xf] %vm34, %v33
    %s36 = scalar_lea.vmem [#allocation1], 8
    %v37 = vld [vmem:[%s36] sm:$0xf]
    %vm38 = vcmask 64512
    %s39 = scalar_lea.vmem [#allocation0], 32
    %40 = vst.msk [vmem:[%s39] ss:$8 sm:$0xf] %vm38, %v37
    %v41 = vld.sshfl [vmem:[#allocation1] sm:$0xff pattern:$0xba983210]
    %42 = vrot.lane.b32.xlu0 %v41, 120
    %v43 = vpop.permute.xlu0 %42
    %vm44 = vcmask 64512
    %s45 = scalar_lea.vmem [#allocation0], 1
    %46 = vst.msk [vmem:[%s45] ss:$8 sm:$0xf] %vm44, %v43
    %s47 = scalar_lea.vmem [#allocation0], 1
    %48 = vst.msk [vmem:[%s47] ss:$8 sm:$0xf0] %vm44, %v43
    %v49 = vld.sshfl [vmem:[#allocation1] sm:$0xff pattern:$0xba983210]
    %50 = vrot.lane.b32.xlu0 %v49, 112
    %v51 = vpop.permute.xlu0 %50
    %vm52 = vcmask 64512
    %s53 = scalar_lea.vmem [#allocation0], 2
    %54 = vst.msk [vmem:[%s53] ss:$8 sm:$0xf] %vm52, %v51
    %s55 = scalar_lea.vmem [#allocation0], 2
    %56 = vst.msk [vmem:[%s55] ss:$8 sm:$0xf0] %vm52, %v51
    %v57 = vld.sshfl [vmem:[#allocation1] sm:$0xff pattern:$0xba983210]
    %58 = vrot.lane.b32.xlu0 %v57, 104
    %v59 = vpop.permute.xlu0 %58
    %vm60 = vcmask 64512
    %s61 = scalar_lea.vmem [#allocation0], 3
    %62 = vst.msk [vmem:[%s61] ss:$8 sm:$0xf] %vm60, %v59
    %s63 = scalar_lea.vmem [#allocation0], 3
    %64 = vst.msk [vmem:[%s63] ss:$8 sm:$0xf0] %vm60, %v59
    %s66 = smul.u32 2, 2
    %s67 = sshllo.u32 0, %s66
    %s68 = sshrl.u32 %s66, 1
    %v69 = vld [vmem:[#allocation0] sm:%s67]
    %v70 = vpack.c.bf16 0.0, %v69
    %s71 = sshllo.u32 0, %s68
    %72 = vst [vmem:[%s1] sm:%s71] %v70
    %s73 = scalar_lea.vmem [#allocation0], 8
    %v74 = vld [vmem:[%s73] sm:%s67]
    %v75 = vpack.c.bf16 0.0, %v74
    %s76 = sshllo.u32 0, %s68
    %s77 = scalar_lea.vmem %s1, 2
    %78 = vst [vmem:[%s77] sm:%s76] %v75
    %s79 = scalar_lea.vmem [#allocation0], 16
    %v80 = vld [vmem:[%s79] sm:%s67]
    %v81 = vpack.c.bf16 0.0, %v80
    %s82 = sshllo.u32 0, %s68
    %s83 = smul.addr 2, 2
    %s84 = scalar_lea.vmem %s1, %s83
    %85 = vst [vmem:[%s84] sm:%s82] %v81
    %s86 = scalar_lea.vmem [#allocation0], 24
    %v87 = vld [vmem:[%s86] sm:%s67]
    %v88 = vpack.c.bf16 0.0, %v87
    %s89 = sshllo.u32 0, %s68
    %s90 = smul.addr 2, 3
    %s91 = scalar_lea.vmem %s1, %s90
    %92 = vst [vmem:[%s91] sm:%s89] %v88
    %s93 = scalar_lea.vmem [#allocation0], 32
    %v94 = vld [vmem:[%s93] sm:%s67]
    %v95 = vpack.c.bf16 0.0, %v94
    %s96 = sshllo.u32 0, %s68
    %s97 = smul.addr 2, 4
    %s98 = scalar_lea.vmem %s1, %s97
    %99 = vst [vmem:[%s98] sm:%s96] %v95
    %s100 = scalar_lea.vmem [#allocation0], 40
    %v101 = vld [vmem:[%s100] sm:%s67]
    %v102 = vpack.c.bf16 0.0, %v101
    %s103 = sshllo.u32 0, %s68
    %s104 = smul.addr 2, 5
    %s105 = scalar_lea.vmem %s1, %s104
    %106 = vst [vmem:[%s105] sm:%s103] %v102
    %s107 = scalar_lea.vmem [#allocation0], 48
    %v108 = vld [vmem:[%s107] sm:%s67]
    %v109 = vpack.c.bf16 0.0, %v108
    %s110 = sshllo.u32 0, %s68
    %s111 = smul.addr 2, 6
    %s112 = scalar_lea.vmem %s1, %s111
    %113 = vst [vmem:[%s112] sm:%s110] %v109
    %s114 = scalar_lea.vmem [#allocation0], 56
    %v115 = vld [vmem:[%s114] sm:%s67]
    %v116 = vpack.c.bf16 0.0, %v115
    %s117 = sshllo.u32 0, %s68
    %s118 = smul.addr 2, 7
    %s119 = scalar_lea.vmem %s1, %s118
    %120 = vst [vmem:[%s119] sm:%s117] %v116

// kernel: landtrans_forward.19
$region0: #{landtrans_forward.19}
  #allocation0 [shape = 'u32[]', space=smem, size = 0x4, offset = 0x4, fixed_abs, tag = 'smem constant byte address 0x4 - core index']
  #allocation1 [shape = 'u32[144,128]{1,0:T(1,128)}', space=vmem, size = 0x12000, scoped, tag = 'internal scratch']
  %s0 = inlined_call_operand.vmem [shape: bf16[8,4,8], index: 0, kind: input, shape index: {}]
  %s1 = inlined_call_operand.vmem [shape: bf16[8,4,8], index: 1, kind: input, shape index: {}]
  %s2 = inlined_call_operand.vmem [shape: bf16[8,4,8], index: 2, kind: input, shape index: {}]
  %s3 = inlined_call_operand.vmem [shape: bf16[8,4,8], index: 3, kind: output, shape index: {}]
  %s4 = sld [smem:[#allocation0]]
  $region45: #{landtrans_forward.19} parent=0
    _
  %s6 = ssub.s32 1, %s4
  %s7 = scalar_select 0, %s6, %s4
  loop: start=0, step=1, limit=4
  $region2: #{landtrans_forward.19} parent=0 // loop_pre_header
    _
  $region3: #{landtrans_forward.19} parent=0 // loop_header
    %s9 = sphi 0, %s13
    %p10 = scmp.ge.s32.totalorder %s9, 4
    %s19 = sphi 0, %s21
    %s22 = sphi 0, %s19
    %s23 = sphi 0, %s22
    %s39 = sphi 0, %s23
    %s45 = sphi 0, %s47
    %s48 = sphi 0, %s45
    %s49 = sphi 0, %s48
    %s65 = sphi 0, %s49
    %s71 = sphi 0, %s73
    %s74 = sphi 0, %s71
    %s75 = sphi 0, %s74
    %s91 = sphi 0, %s75
    %s97 = sphi 0, %s99
    %s100 = sphi 0, %s97
    %s101 = sphi 0, %s100
    %s117 = sphi 0, %s101
  $region4: #{landtrans_forward.19} parent=0 // loop_header_branch
    %12 = sbr.rel (%p10) target = $region8
  $region5: #{landtrans_forward.19} parent=0 // loop_body
    %s14 = ssub.s32 %s9, 1
    %s15 = ssub.s32 %s9, 2
    %s16 = sadd.s32 %s9, 1
    %s17 = ssub.s32 %s9, %s16
    %p18 = scmp.eq.s32.totalorder %s17, 0
    %s20 = sadd.s32 %s19, 1
    %s21 = scalar_select %p18, %s19, %s20
    %p24 = pneg %p18
    %p25 = scmp.eq.s32.totalorder %s9, 1
    %p26 = por %p24, %p25
    %p27 = scmp.ne.s32.totalorder %s19, %s22
    %p28 = scmp.eq.s32.totalorder %s9, 0
    %p29 = por %p27, %p28
    %p30 = scmp.ne.s32.totalorder %s19, %s22
    %p31 = scmp.eq.s32.totalorder %s14, 1
    %p32 = por %p30, %p31
    %p33 = scmp.ne.s32.totalorder %s22, %s23
    %p34 = scmp.eq.s32.totalorder %s14, 0
    %p35 = por %p33, %p34
    %p36 = scmp.ne.s32.totalorder %s22, %s23
    %p37 = scmp.eq.s32.totalorder %s15, 1
    %p38 = por %p36, %p37
    %p40 = scmp.ne.s32.totalorder %s23, %s39
    %p41 = scmp.eq.s32.totalorder %s15, 0
    %p42 = por %p40, %p41
    %s43 = ssub.s32 %s9, %s16
    %p44 = scmp.eq.s32.totalorder %s43, 0
    %s46 = sadd.s32 %s45, 1
    %s47 = scalar_select %p44, %s45, %s46
    %p50 = pneg %p44
    %p51 = scmp.eq.s32.totalorder %s9, 1
    %p52 = por %p50, %p51
    %p53 = scmp.ne.s32.totalorder %s45, %s48
    %p54 = scmp.eq.s32.totalorder %s9, 0
    %p55 = por %p53, %p54
    %p56 = scmp.ne.s32.totalorder %s45, %s48
    %p57 = scmp.eq.s32.totalorder %s14, 1
    %p58 = por %p56, %p57
    %p59 = scmp.ne.s32.totalorder %s48, %s49
    %p60 = scmp.eq.s32.totalorder %s14, 0
    %p61 = por %p59, %p60
    %p62 = scmp.ne.s32.totalorder %s48, %s49
    %p63 = scmp.eq.s32.totalorder %s15, 1
    %p64 = por %p62, %p63
    %p66 = scmp.ne.s32.totalorder %s49, %s65
    %p67 = scmp.eq.s32.totalorder %s15, 0
    %p68 = por %p66, %p67
    %s69 = ssub.s32 %s9, %s16
    %p70 = scmp.eq.s32.totalorder %s69, 0
    %s72 = sadd.s32 %s71, 1
    %s73 = scalar_select %p70, %s71, %s72
    %p76 = pneg %p70
    %p77 = scmp.eq.s32.totalorder %s9, 1
    %p78 = por %p76, %p77
    %p79 = scmp.ne.s32.totalorder %s71, %s74
    %p80 = scmp.eq.s32.totalorder %s9, 0
    %p81 = por %p79, %p80
    %p82 = scmp.ne.s32.totalorder %s71, %s74
    %p83 = scmp.eq.s32.totalorder %s14, 1
    %p84 = por %p82, %p83
    %p85 = scmp.ne.s32.totalorder %s74, %s75
    %p86 = scmp.eq.s32.totalorder %s14, 0
    %p87 = por %p85, %p86
    %p88 = scmp.ne.s32.totalorder %s74, %s75
    %p89 = scmp.eq.s32.totalorder %s15, 1
    %p90 = por %p88, %p89
    %p92 = scmp.ne.s32.totalorder %s75, %s91
    %p93 = scmp.eq.s32.totalorder %s15, 0
    %p94 = por %p92, %p93
    %s95 = ssub.s32 %s9, %s16
    %p96 = scmp.eq.s32.totalorder %s95, 0
    %s98 = sadd.s32 %s97, 1
    %s99 = scalar_select %p96, %s97, %s98
    %p102 = pneg %p96
    %p103 = scmp.eq.s32.totalorder %s9, 1
    %p104 = por %p102, %p103
    %p105 = scmp.ne.s32.totalorder %s97, %s100
    %p106 = scmp.eq.s32.totalorder %s9, 0
    %p107 = por %p105, %p106
    %p108 = scmp.ne.s32.totalorder %s97, %s100
    %p109 = scmp.eq.s32.totalorder %s14, 1
    %p110 = por %p108, %p109
    %p111 = scmp.ne.s32.totalorder %s100, %s101
    %p112 = scmp.eq.s32.totalorder %s14, 0
    %p113 = por %p111, %p112
    %p114 = scmp.ne.s32.totalorder %s100, %s101
    %p115 = scmp.eq.s32.totalorder %s15, 1
    %p116 = por %p114, %p115
    %p118 = scmp.ne.s32.totalorder %s101, %s117
    %p119 = scmp.eq.s32.totalorder %s15, 0
    %p120 = por %p118, %p119
    %p121 = scmp.le.s32.totalorder 1, %s9
    %p122 = scmp.lt.s32.totalorder %s9, 3
    %p123 = pnand %p121, %p122
    %p124 = pneg %p123
    // Predicated region
    $region9: #{landtrans_forward.19} parent=5 // pred_check
      _
    $region10: #{landtrans_forward.19} parent=5 // pred_check_branch
      %126 = sbr.rel (%p123) target = $region12
    $region11: #{landtrans_forward.19} parent=5 // pred_region
      %s127 = ssub.s32 %s9, 1
    $region12: #{landtrans_forward.19} parent=5 // pred_fallthru
      _
    %p128 = scmp.lt.s32.totalorder %s9, 2
    // Predicated region
    $region13: #{landtrans_forward.19} parent=5 // pred_check
      %p129 = pneg %p128
    $region14: #{landtrans_forward.19} parent=5 // pred_check_branch
      %131 = sbr.rel (%p129) target = $region16
    $region15: #{landtrans_forward.19} parent=5 // pred_region
      // Predicated region
      $region17: #{landtrans_forward.19} parent=15 // pred_check
        %p132 = pneg %p29
      $region18: #{landtrans_forward.19} parent=15 // pred_check_branch
        %134 = sbr.rel (%p132) target = $region20
      $region19: #{landtrans_forward.19} parent=15 // pred_region
        %s135 = smul.u32 4, %s9
        %p136 = scmp.lt.s32.totalorder %s135, 7
        %s137 = scalar_select %p136, %s135, 7
        %s138 = smul.addr %s137, 2
        %s139 = scalar_lea.vmem %s0, %s138
        %s140 = smul.u32 4, %s9
      $region20: #{landtrans_forward.19} parent=15 // pred_fallthru
        _
      // Predicated region
      $region21: #{landtrans_forward.19} parent=15 // pred_check
        %p141 = pneg %p55
      $region22: #{landtrans_forward.19} parent=15 // pred_check_branch
        %143 = sbr.rel (%p141) target = $region24
      $region23: #{landtrans_forward.19} parent=15 // pred_region
        %s144 = smul.u32 4, %s9
        %p145 = scmp.lt.s32.totalorder %s144, 7
        %s146 = scalar_select %p145, %s144, 7
        %s147 = smul.addr %s146, 2
        %s148 = scalar_lea.vmem %s1, %s147
        %s149 = smul.u32 4, %s9
      $region24: #{landtrans_forward.19} parent=15 // pred_fallthru
        _
      // Predicated region
      $region25: #{landtrans_forward.19} parent=15 // pred_check
        %p150 = pneg %p81
      $region26: #{landtrans_forward.19} parent=15 // pred_check_branch
        %152 = sbr.rel (%p150) target = $region28
      $region27: #{landtrans_forward.19} parent=15 // pred_region
        %s153 = smul.u32 4, %s9
        %p154 = scmp.lt.s32.totalorder %s153, 7
        %s155 = scalar_select %p154, %s153, 7
        %s156 = smul.addr %s155, 2
        %s157 = scalar_lea.vmem %s2, %s156
        %s158 = smul.u32 4, %s9
      $region28: #{landtrans_forward.19} parent=15 // pred_fallthru
        _
    $region16: #{landtrans_forward.19} parent=5 // pred_fallthru
      _
    %p159 = scmp.le.s32.totalorder 1, %s9
    %p160 = scmp.lt.s32.totalorder %s9, 3
    %p161 = pnand %p159, %p160
    %p162 = pneg %p161
    // Predicated region
    $region29: #{landtrans_forward.19} parent=5 // pred_check
      _
    $region30: #{landtrans_forward.19} parent=5 // pred_check_branch
      %164 = sbr.rel (%p161) target = $region32
    $region31: #{landtrans_forward.19} parent=5 // pred_region
      %s165 = ssub.s32 %s9, 1
      %s166 = smul.u32 4, %s14
      %p167 = scmp.lt.s32.totalorder %s166, 7
      %s168 = scalar_select %p167, %s166, 7
      %s169 = smul.addr %s168, 2
      %s170 = scalar_lea.vmem %s0, %s169
      %p171 = pneg %p35
      %p172 = pneg %p32
      %s173 = smul.u32 4, %s14
      %p174 = scmp.lt.s32.totalorder %s173, 7
      %s175 = scalar_select %p174, %s173, 7
      %s176 = smul.addr %s175, 2
      %s177 = scalar_lea.vmem %s1, %s176
      %p178 = pneg %p61
      %p179 = pneg %p58
      %s180 = smul.u32 4, %s14
      %p181 = scmp.lt.s32.totalorder %s180, 7
      %s182 = scalar_select %p181, %s180, 7
      %s183 = smul.addr %s182, 2
      %s184 = scalar_lea.vmem %s2, %s183
      %p185 = pneg %p87
      %p186 = pneg %p84
      %p187 = pneg %p113
      %p188 = pneg %p110
      %s189 = smul.u32 4, %s14
      %p190 = scmp.lt.s32.totalorder %s189, 7
      %s191 = scalar_select %p190, %s189, 7
      %s192 = smul.addr %s191, 2
      %s193 = scalar_lea.vmem %s3, %s192
      %s194 = smul.u32 4, %s14
      %p195 = scmp.lt.s32.totalorder %s194, 7
      %s196 = scalar_select %p195, %s194, 7
      %s197 = smul.addr %s196, 2
      %s198 = scalar_lea.vmem %s0, %s197
      %s199 = smul.u32 4, %s14
      %s200 = smul.u32 4, %s14
      %p201 = scmp.lt.s32.totalorder %s200, 7
      %s202 = scalar_select %p201, %s200, 7
      %s203 = smul.addr %s202, 2
      %s204 = scalar_lea.vmem %s1, %s203
      %s205 = smul.u32 4, %s14
      %s206 = smul.u32 4, %s14
      %p207 = scmp.lt.s32.totalorder %s206, 7
      %s208 = scalar_select %p207, %s206, 7
      %s209 = smul.addr %s208, 2
      %s210 = scalar_lea.vmem %s2, %s209
      %s211 = smul.u32 4, %s14
      %s212 = smul.u32 4, %s14
      %p213 = scmp.lt.s32.totalorder %s212, 7
      %s214 = scalar_select %p213, %s212, 7
      %s215 = smul.addr %s214, 2
      %s216 = scalar_lea.vmem %s3, %s215
      %s217 = smul.u32 4, %s14
      %v219 = vld [vmem:[%s198] sm:$0x3]
      %v220 = vld [vmem:[%s198 + $0x2] sm:$0x3]
      %v221 = vld [vmem:[%s198 + $0x4] sm:$0x3]
      %v222 = vld [vmem:[%s198 + $0x6] sm:$0x3]
      %v223 = vld [vmem:[%s204] sm:$0x3]
      %v224 = vld [vmem:[%s204 + $0x2] sm:$0x3]
      %v225 = vld [vmem:[%s204 + $0x4] sm:$0x3]
      %v226 = vld [vmem:[%s204 + $0x6] sm:$0x3]
      %v227 = vld [vmem:[%s210] sm:$0x3]
      %v228 = vld [vmem:[%s210 + $0x2] sm:$0x3]
      %v229 = vld [vmem:[%s210 + $0x4] sm:$0x3]
      %v230 = vld [vmem:[%s210 + $0x6] sm:$0x3]
      %vm231 = vcmask 64512
      %v233 = vsel %vm231, %v219, 0
      %v236 = vsel %vm231, %v223, 0
      %238 = vmatprep.subr.bf16.mxu0 0
      %239 = vmatpush1.bf16.xpose.msra.mxu0 %v236
      %240 = vmatprep.subr.bf16.mxu0 0
      %241 = vmatpush1.bf16.xpose.msra.mxu0 0
      %242 = vmatprep.subr.bf16.mxu0 0
      %243 = vmatpush1.bf16.xpose.msra.mxu0 0
      %244 = vmatprep.subr.bf16.mxu0 0
      %245 = vmatpush1.bf16.xpose.msra.mxu0 0
      %246 = vmatprep.subr.bf16.mxu0 0
      %247 = vmatpush1.bf16.xpose.msra.mxu0 0
      %248 = vmatprep.subr.bf16.mxu0 0
      %249 = vmatpush1.bf16.xpose.msra.mxu0 0
      %250 = vmatprep.subr.bf16.mxu0 0
      %251 = vmatpush1.bf16.xpose.msra.mxu0 0
      %252 = vmatprep.subr.bf16.mxu0 0
      %253 = vmatpush1.bf16.xpose.msra.mxu0 0
      %254 = vmatprep.subr.bf16.mxu0 0
      %255 = vmatpush1.bf16.xpose.msra.mxu0 0
      %256 = vmatprep.subr.bf16.mxu0 0
      %257 = vmatpush1.bf16.xpose.msra.mxu0 0
      %258 = vmatprep.subr.bf16.mxu0 0
      %259 = vmatpush1.bf16.xpose.msra.mxu0 0
      %260 = vmatprep.subr.bf16.mxu0 0
      %261 = vmatpush1.bf16.xpose.msra.mxu0 0
      %262 = vmatprep.subr.bf16.mxu0 0
      %263 = vmatpush1.bf16.xpose.msra.mxu0 0
      %264 = vmatprep.subr.bf16.mxu0 0
      %265 = vmatpush1.bf16.xpose.msra.mxu0 0
      %266 = vmatprep.subr.bf16.mxu0 0
      %267 = vmatpush1.bf16.xpose.msra.mxu0 0
      %268 = vmatprep.subr.bf16.mxu0 0
      %269 = vmatpush1.bf16.xpose.msra.mxu0 0
      %270 = vmatprep.mubr.bf16.mxu0 0
      %271 = vmatmul.mubr.bf16.gmra.mrb[0].mxu0 %v233
      %v272 = vpop.f32.mrb[0].mxu0
      %v273 = vadd.f32 0.0, %v272
      %v274 = vpop.f32.mrb[0].mxu0
      %v275 = vpop.f32.mrb[0].mxu0
      %v276 = vpop.f32.mrb[0].mxu0
      %277 = vdwg.mxu0
      %v279 = vsel %vm231, %v220, 0
      %v282 = vsel %vm231, %v224, 0
      %284 = vmatprep.subr.bf16.mxu0 0
      %285 = vmatpush1.bf16.xpose.msra.mxu0 %v282
      %286 = vmatprep.subr.bf16.mxu0 0
      %287 = vmatpush1.bf16.xpose.msra.mxu0 0
      %288 = vmatprep.subr.bf16.mxu0 0
      %289 = vmatpush1.bf16.xpose.msra.mxu0 0
      %290 = vmatprep.subr.bf16.mxu0 0
      %291 = vmatpush1.bf16.xpose.msra.mxu0 0
      %292 = vmatprep.subr.bf16.mxu0 0
      %293 = vmatpush1.bf16.xpose.msra.mxu0 0
      %294 = vmatprep.subr.bf16.mxu0 0
      %295 = vmatpush1.bf16.xpose.msra.mxu0 0
      %296 = vmatprep.subr.bf16.mxu0 0
      %297 = vmatpush1.bf16.xpose.msra.mxu0 0
      %298 = vmatprep.subr.bf16.mxu0 0
      %299 = vmatpush1.bf16.xpose.msra.mxu0 0
      %300 = vmatprep.subr.bf16.mxu0 0
      %301 = vmatpush1.bf16.xpose.msra.mxu0 0
      %302 = vmatprep.subr.bf16.mxu0 0
      %303 = vmatpush1.bf16.xpose.msra.mxu0 0
      %304 = vmatprep.subr.bf16.mxu0 0
      %305 = vmatpush1.bf16.xpose.msra.mxu0 0
      %306 = vmatprep.subr.bf16.mxu0 0
      %307 = vmatpush1.bf16.xpose.msra.mxu0 0
      %308 = vmatprep.subr.bf16.mxu0 0
      %309 = vmatpush1.bf16.xpose.msra.mxu0 0
      %310 = vmatprep.subr.bf16.mxu0 0
      %311 = vmatpush1.bf16.xpose.msra.mxu0 0
      %312 = vmatprep.subr.bf16.mxu0 0
      %313 = vmatpush1.bf16.xpose.msra.mxu0 0
      %314 = vmatprep.subr.bf16.mxu0 0
      %315 = vmatpush1.bf16.xpose.msra.mxu0 0
      %316 = vmatprep.mubr.bf16.mxu0 0
      %317 = vmatmul.mubr.bf16.gmra.mrb[0].mxu0 %v279
      %v318 = vpop.f32.mrb[0].mxu0
      %v319 = vadd.f32 0.0, %v318
      %v320 = vpop.f32.mrb[0].mxu0
      %v321 = vpop.f32.mrb[0].mxu0
      %v322 = vpop.f32.mrb[0].mxu0
      %323 = vdwg.mxu0
      %v325 = vsel %vm231, %v221, 0
      %v328 = vsel %vm231, %v225, 0
      %330 = vmatprep.subr.bf16.mxu0 0
      %331 = vmatpush1.bf16.xpose.msra.mxu0 %v328
      %332 = vmatprep.subr.bf16.mxu0 0
      %333 = vmatpush1.bf16.xpose.msra.mxu0 0
      %334 = vmatprep.subr.bf16.mxu0 0
      %335 = vmatpush1.bf16.xpose.msra.mxu0 0
      %336 = vmatprep.subr.bf16.mxu0 0
      %337 = vmatpush1.bf16.xpose.msra.mxu0 0
      %338 = vmatprep.subr.bf16.mxu0 0
      %339 = vmatpush1.bf16.xpose.msra.mxu0 0
      %340 = vmatprep.subr.bf16.mxu0 0
      %341 = vmatpush1.bf16.xpose.msra.mxu0 0
      %342 = vmatprep.subr.bf16.mxu0 0
      %343 = vmatpush1.bf16.xpose.msra.mxu0 0
      %344 = vmatprep.subr.bf16.mxu0 0
      %345 = vmatpush1.bf16.xpose.msra.mxu0 0
      %346 = vmatprep.subr.bf16.mxu0 0
      %347 = vmatpush1.bf16.xpose.msra.mxu0 0
      %348 = vmatprep.subr.bf16.mxu0 0
      %349 = vmatpush1.bf16.xpose.msra.mxu0 0
      %350 = vmatprep.subr.bf16.mxu0 0
      %351 = vmatpush1.bf16.xpose.msra.mxu0 0
      %352 = vmatprep.subr.bf16.mxu0 0
      %353 = vmatpush1.bf16.xpose.msra.mxu0 0
      %354 = vmatprep.subr.bf16.mxu0 0
      %355 = vmatpush1.bf16.xpose.msra.mxu0 0
      %356 = vmatprep.subr.bf16.mxu0 0
      %357 = vmatpush1.bf16.xpose.msra.mxu0 0
      %358 = vmatprep.subr.bf16.mxu0 0
      %359 = vmatpush1.bf16.xpose.msra.mxu0 0
      %360 = vmatprep.subr.bf16.mxu0 0
      %361 = vmatpush1.bf16.xpose.msra.mxu0 0
      %362 = vmatprep.mubr.bf16.mxu0 0
      %363 = vmatmul.mubr.bf16.gmra.mrb[0].mxu0 %v325
      %v364 = vpop.f32.mrb[0].mxu0
      %v365 = vadd.f32 0.0, %v364
      %v366 = vpop.f32.mrb[0].mxu0
      %v367 = vpop.f32.mrb[0].mxu0
      %v368 = vpop.f32.mrb[0].mxu0
      %369 = vdwg.mxu0
      %v371 = vsel %vm231, %v222, 0
      %v374 = vsel %vm231, %v226, 0
      %376 = vmatprep.subr.bf16.mxu0 0
      %377 = vmatpush1.bf16.xpose.msra.mxu0 %v374
      %378 = vmatprep.subr.bf16.mxu0 0
      %379 = vmatpush1.bf16.xpose.msra.mxu0 0
      %380 = vmatprep.subr.bf16.mxu0 0
      %381 = vmatpush1.bf16.xpose.msra.mxu0 0
      %382 = vmatprep.subr.bf16.mxu0 0
      %383 = vmatpush1.bf16.xpose.msra.mxu0 0
      %384 = vmatprep.subr.bf16.mxu0 0
      %385 = vmatpush1.bf16.xpose.msra.mxu0 0
      %386 = vmatprep.subr.bf16.mxu0 0
      %387 = vmatpush1.bf16.xpose.msra.mxu0 0
      %388 = vmatprep.subr.bf16.mxu0 0
      %389 = vmatpush1.bf16.xpose.msra.mxu0 0
      %390 = vmatprep.subr.bf16.mxu0 0
      %391 = vmatpush1.bf16.xpose.msra.mxu0 0
      %392 = vmatprep.subr.bf16.mxu0 0
      %393 = vmatpush1.bf16.xpose.msra.mxu0 0
      %394 = vmatprep.subr.bf16.mxu0 0
      %395 = vmatpush1.bf16.xpose.msra.mxu0 0
      %396 = vmatprep.subr.bf16.mxu0 0
      %397 = vmatpush1.bf16.xpose.msra.mxu0 0
      %398 = vmatprep.subr.bf16.mxu0 0
      %399 = vmatpush1.bf16.xpose.msra.mxu0 0
      %400 = vmatprep.subr.bf16.mxu0 0
      %401 = vmatpush1.bf16.xpose.msra.mxu0 0
      %402 = vmatprep.subr.bf16.mxu0 0
      %403 = vmatpush1.bf16.xpose.msra.mxu0 0
      %404 = vmatprep.subr.bf16.mxu0 0
      %405 = vmatpush1.bf16.xpose.msra.mxu0 0
      %406 = vmatprep.subr.bf16.mxu0 0
      %407 = vmatpush1.bf16.xpose.msra.mxu0 0
      %408 = vmatprep.mubr.bf16.mxu0 0
      %409 = vmatmul.mubr.bf16.gmra.mrb[0].mxu0 %v371
      %v410 = vpop.f32.mrb[0].mxu0
      %v411 = vadd.f32 0.0, %v410
      %v412 = vpop.f32.mrb[0].mxu0
      %v413 = vpop.f32.mrb[0].mxu0
      %v414 = vpop.f32.mrb[0].mxu0
      %415 = vdwg.mxu0
      %v416 = vlaneseq
      %v417 = vshrl.u32 %v416, 7
      %v418 = vlaneseq
      %v419 = vand.u32 %v418, 127
      %vm420 = vcmp.gt.s32.totalorder %v419, %v417
      %v421 = vsel %vm420, 1, 0
      %vm422 = vcmp.eq.s32.totalorder %v421, 1
      %v423 = vsel %vm422, -1e+30, %v273
      %v424 = vsel %vm422, -1e+30, %v319
      %v425 = vsel %vm422, -1e+30, %v365
      %v426 = vsel %vm422, -1e+30, %v411
      %vm427 = vcmask 27648
      %v428 = vsel %vm427, %v423, -inf
      %429 = vmax.xlane.f32.xlu0 %v428
      %v430 = vpop.xlane.xlu0 %429
      %v431 = vsel %vm427, %v424, -inf
      %432 = vmax.xlane.f32.xlu0 %v431
      %v433 = vpop.xlane.xlu0 %432
      %v434 = vsel %vm427, %v425, -inf
      %435 = vmax.xlane.f32.xlu0 %v434
      %v436 = vpop.xlane.xlu0 %435
      %v437 = vsel %vm427, %v426, -inf
      %438 = vmax.xlane.f32.xlu0 %v437
      %v439 = vpop.xlane.xlu0 %438
      %v440 = vsub.f32 %v423, %v430
      %v441 = vsub.f32 %v424, %v433
      %v442 = vsub.f32 %v425, %v436
      %v443 = vsub.f32 %v426, %v439
      %v444 = vmul.f32 %v440, 1.442695
      %v445 = vpow.pop %v444
      %v446 = vmul.f32 %v441, 1.442695
      %v447 = vpow.pop %v446
      %v448 = vmul.f32 %v442, 1.442695
      %v449 = vpow.pop %v448
      %v450 = vmul.f32 %v443, 1.442695
      %v451 = vpow.pop %v450
      %v452 = vsel %vm427, %v445, 0.0
      %453 = vadd.xlane.f32.xlu0 %v452
      %v454 = vpop.xlane.xlu0 %453
      %v455 = vsel %vm427, %v447, 0.0
      %456 = vadd.xlane.f32.xlu0 %v455
      %v457 = vpop.xlane.xlu0 %456
      %v458 = vsel %vm427, %v449, 0.0
      %459 = vadd.xlane.f32.xlu0 %v458
      %v460 = vpop.xlane.xlu0 %459
      %v461 = vsel %vm427, %v451, 0.0
      %462 = vadd.xlane.f32.xlu0 %v461
      %v463 = vpop.xlane.xlu0 %462
      %v464 = vrcp.pop %v454
      %v465 = vrcp.pop %v457
      %v466 = vrcp.pop %v460
      %v467 = vrcp.pop %v463
      %v468 = vmul.f32 %v445, %v464
      %v469 = vmul.f32 %v447, %v465
      %v470 = vmul.f32 %v449, %v466
      %v471 = vmul.f32 %v451, %v467
      %v472 = vpack.c.bf16 %v468, %v468
      %v473 = vpack.c.bf16 %v469, %v469
      %v474 = vpack.c.bf16 %v470, %v470
      %v475 = vpack.c.bf16 %v471, %v471
      %vm476 = vcmask 31744
      %v478 = vsel %vm476, %v472, 0
      %vm480 = vcmask 1041408
      %v482 = vsel %vm480, %v227, 0
      %484 = vmatprep.subr.bf16.mxu0 0
      %485 = vmatpush1.bf16.msra.mxu0 %v482
      %486 = vmatprep.subr.bf16.mxu0 0
      %487 = vmatpush1.bf16.msra.mxu0 0
      %488 = vmatprep.subr.bf16.mxu0 0
      %489 = vmatpush1.bf16.msra.mxu0 0
      %490 = vmatprep.subr.bf16.mxu0 0
      %491 = vmatpush1.bf16.msra.mxu0 0
      %492 = vmatprep.subr.bf16.mxu0 0
      %493 = vmatpush1.bf16.msra.mxu0 0
      %494 = vmatprep.subr.bf16.mxu0 0
      %495 = vmatpush1.bf16.msra.mxu0 0
      %496 = vmatprep.subr.bf16.mxu0 0
      %497 = vmatpush1.bf16.msra.mxu0 0
      %498 = vmatprep.subr.bf16.mxu0 0
      %499 = vmatpush1.bf16.msra.mxu0 0
      %500 = vmatprep.subr.bf16.mxu0 0
      %501 = vmatpush1.bf16.msra.mxu0 0
      %502 = vmatprep.subr.bf16.mxu0 0
      %503 = vmatpush1.bf16.msra.mxu0 0
      %504 = vmatprep.subr.bf16.mxu0 0
      %505 = vmatpush1.bf16.msra.mxu0 0
      %506 = vmatprep.subr.bf16.mxu0 0
      %507 = vmatpush1.bf16.msra.mxu0 0
      %508 = vmatprep.subr.bf16.mxu0 0
      %509 = vmatpush1.bf16.msra.mxu0 0
      %510 = vmatprep.subr.bf16.mxu0 0
      %511 = vmatpush1.bf16.msra.mxu0 0
      %512 = vmatprep.subr.bf16.mxu0 0
      %513 = vmatpush1.bf16.msra.mxu0 0
      %514 = vmatprep.subr.bf16.mxu0 0
      %515 = vmatpush1.bf16.msra.mxu0 0
      %516 = vmatprep.mubr.bf16.mxu0 0
      %517 = vmatmul.mubr.bf16.gmra.mrb[0].mxu0 %v478
      %v518 = vpop.f32.mrb[0].mxu0
      %v519 = vadd.f32 0.0, %v518
      %v520 = vpop.f32.mrb[0].mxu0
      %v521 = vpop.f32.mrb[0].mxu0
      %v522 = vpop.f32.mrb[0].mxu0
      %523 = vdwg.mxu0
      %v525 = vsel %vm476, %v473, 0
      %v528 = vsel %vm480, %v228, 0
      %530 = vmatprep.subr.bf16.mxu0 0
      %531 = vmatpush1.bf16.msra.mxu0 %v528
      %532 = vmatprep.subr.bf16.mxu0 0
      %533 = vmatpush1.bf16.msra.mxu0 0
      %534 = vmatprep.subr.bf16.mxu0 0
      %535 = vmatpush1.bf16.msra.mxu0 0
      %536 = vmatprep.subr.bf16.mxu0 0
      %537 = vmatpush1.bf16.msra.mxu0 0
      %538 = vmatprep.subr.bf16.mxu0 0
      %539 = vmatpush1.bf16.msra.mxu0 0
      %540 = vmatprep.subr.bf16.mxu0 0
      %541 = vmatpush1.bf16.msra.mxu0 0
      %542 = vmatprep.subr.bf16.mxu0 0
      %543 = vmatpush1.bf16.msra.mxu0 0
      %544 = vmatprep.subr.bf16.mxu0 0
      %545 = vmatpush1.bf16.msra.mxu0 0
      %546 = vmatprep.subr.bf16.mxu0 0
      %547 = vmatpush1.bf16.msra.mxu0 0
      %548 = vmatprep.subr.bf16.mxu0 0
      %549 = vmatpush1.bf16.msra.mxu0 0
      %550 = vmatprep.subr.bf16.mxu0 0
      %551 = vmatpush1.bf16.msra.mxu0 0
      %552 = vmatprep.subr.bf16.mxu0 0
      %553 = vmatpush1.bf16.msra.mxu0 0
      %554 = vmatprep.subr.bf16.mxu0 0
      %555 = vmatpush1.bf16.msra.mxu0 0
      %556 = vmatprep.subr.bf16.mxu0 0
      %557 = vmatpush1.bf16.msra.mxu0 0
      %558 = vmatprep.subr.bf16.mxu0 0
      %559 = vmatpush1.bf16.msra.mxu0 0
      %560 = vmatprep.subr.bf16.mxu0 0
      %561 = vmatpush1.bf16.msra.mxu0 0
      %562 = vmatprep.mubr.bf16.mxu0 0
      %563 = vmatmul.mubr.bf16.gmra.mrb[0].mxu0 %v525
      %v564 = vpop.f32.mrb[0].mxu0
      %v565 = vadd.f32 0.0, %v564
      %v566 = vpop.f32.mrb[0].mxu0
      %v567 = vpop.f32.mrb[0].mxu0
      %v568 = vpop.f32.mrb[0].mxu0
      %569 = vdwg.mxu0
      %v571 = vsel %vm476, %v474, 0
      %v574 = vsel %vm480, %v229, 0
      %576 = vmatprep.subr.bf16.mxu0 0
      %577 = vmatpush1.bf16.msra.mxu0 %v574
      %578 = vmatprep.subr.bf16.mxu0 0
      %579 = vmatpush1.bf16.msra.mxu0 0
      %580 = vmatprep.subr.bf16.mxu0 0
      %581 = vmatpush1.bf16.msra.mxu0 0
      %582 = vmatprep.subr.bf16.mxu0 0
      %583 = vmatpush1.bf16.msra.mxu0 0
      %584 = vmatprep.subr.bf16.mxu0 0
      %585 = vmatpush1.bf16.msra.mxu0 0
      %586 = vmatprep.subr.bf16.mxu0 0
      %587 = vmatpush1.bf16.msra.mxu0 0
      %588 = vmatprep.subr.bf16.mxu0 0
      %589 = vmatpush1.bf16.msra.mxu0 0
      %590 = vmatprep.subr.bf16.mxu0 0
      %591 = vmatpush1.bf16.msra.mxu0 0
      %592 = vmatprep.subr.bf16.mxu0 0
      %593 = vmatpush1.bf16.msra.mxu0 0
      %594 = vmatprep.subr.bf16.mxu0 0
      %595 = vmatpush1.bf16.msra.mxu0 0
      %596 = vmatprep.subr.bf16.mxu0 0
      %597 = vmatpush1.bf16.msra.mxu0 0
      %598 = vmatprep.subr.bf16.mxu0 0
      %599 = vmatpush1.bf16.msra.mxu0 0
      %600 = vmatprep.subr.bf16.mxu0 0
      %601 = vmatpush1.bf16.msra.mxu0 0
      %602 = vmatprep.subr.bf16.mxu0 0
      %603 = vmatpush1.bf16.msra.mxu0 0
      %604 = vmatprep.subr.bf16.mxu0 0
      %605 = vmatpush1.bf16.msra.mxu0 0
      %606 = vmatprep.subr.bf16.mxu0 0
      %607 = vmatpush1.bf16.msra.mxu0 0
      %608 = vmatprep.mubr.bf16.mxu0 0
      %609 = vmatmul.mubr.bf16.gmra.mrb[0].mxu0 %v571
      %v610 = vpop.f32.mrb[0].mxu0
      %v611 = vadd.f32 0.0, %v610
      %v612 = vpop.f32.mrb[0].mxu0
      %v613 = vpop.f32.mrb[0].mxu0
      %v614 = vpop.f32.mrb[0].mxu0
      %615 = vdwg.mxu0
      %v617 = vsel %vm476, %v475, 0
      %v620 = vsel %vm480, %v230, 0
      %622 = vmatprep.subr.bf16.mxu0 0
      %623 = vmatpush1.bf16.msra.mxu0 %v620
      %624 = vmatprep.subr.bf16.mxu0 0
      %625 = vmatpush1.bf16.msra.mxu0 0
      %626 = vmatprep.subr.bf16.mxu0 0
      %627 = vmatpush1.bf16.msra.mxu0 0
      %628 = vmatprep.subr.bf16.mxu0 0
      %629 = vmatpush1.bf16.msra.mxu0 0
      %630 = vmatprep.subr.bf16.mxu0 0
      %631 = vmatpush1.bf16.msra.mxu0 0
      %632 = vmatprep.subr.bf16.mxu0 0
      %633 = vmatpush1.bf16.msra.mxu0 0
      %634 = vmatprep.subr.bf16.mxu0 0
      %635 = vmatpush1.bf16.msra.mxu0 0
      %636 = vmatprep.subr.bf16.mxu0 0
      %637 = vmatpush1.bf16.msra.mxu0 0
      %638 = vmatprep.subr.bf16.mxu0 0
      %639 = vmatpush1.bf16.msra.mxu0 0
      %640 = vmatprep.subr.bf16.mxu0 0
      %641 = vmatpush1.bf16.msra.mxu0 0
      %642 = vmatprep.subr.bf16.mxu0 0
      %643 = vmatpush1.bf16.msra.mxu0 0
      %644 = vmatprep.subr.bf16.mxu0 0
      %645 = vmatpush1.bf16.msra.mxu0 0
      %646 = vmatprep.subr.bf16.mxu0 0
      %647 = vmatpush1.bf16.msra.mxu0 0
      %648 = vmatprep.subr.bf16.mxu0 0
      %649 = vmatpush1.bf16.msra.mxu0 0
      %650 = vmatprep.subr.bf16.mxu0 0
      %651 = vmatpush1.bf16.msra.mxu0 0
      %652 = vmatprep.subr.bf16.mxu0 0
      %653 = vmatpush1.bf16.msra.mxu0 0
      %654 = vmatprep.mubr.bf16.mxu0 0
      %655 = vmatmul.mubr.bf16.gmra.mrb[0].mxu0 %v617
      %v656 = vpop.f32.mrb[0].mxu0
      %v657 = vadd.f32 0.0, %v656
      %v658 = vpop.f32.mrb[0].mxu0
      %v659 = vpop.f32.mrb[0].mxu0
      %v660 = vpop.f32.mrb[0].mxu0
      %661 = vdwg.mxu0
      %v662 = vpack.c.bf16 %v519, %v519
      %v663 = vpack.c.bf16 %v565, %v565
      %v664 = vpack.c.bf16 %v611, %v611
      %v665 = vpack.c.bf16 %v657, %v657
      %vm666 = vcmask 58368
      %667 = vst.msk [vmem:[%s216] sm:$0x3] %vm666, %v662
      %668 = vst.msk [vmem:[%s216 + $0x2] sm:$0x3] %vm666, %v663
      %669 = vst.msk [vmem:[%s216 + $0x4] sm:$0x3] %vm666, %v664
      %670 = vst.msk [vmem:[%s216 + $0x6] sm:$0x3] %vm666, %v665
      %s671 = smul.u32 4, %s14
      %p672 = scmp.lt.s32.totalorder %s671, 7
      %s673 = scalar_select %p672, %s671, 7
      %s674 = smul.addr %s673, 2
      %s675 = scalar_lea.vmem %s3, %s674
      // Predicated region
      $region33: #{landtrans_forward.19} parent=31 // pred_check
        %p676 = pneg %p110
      $region34: #{landtrans_forward.19} parent=31 // pred_check_branch
        %678 = sbr.rel (%p676) target = $region36
      $region35: #{landtrans_forward.19} parent=31 // pred_region
        %s679 = smul.u32 4, %s14
      $region36: #{landtrans_forward.19} parent=31 // pred_fallthru
        _
    $region32: #{landtrans_forward.19} parent=5 // pred_fallthru
      _
    %p680 = scmp.le.s32.totalorder 2, %s9
    // Predicated region
    $region37: #{landtrans_forward.19} parent=5 // pred_check
      %p681 = pneg %p680
    $region38: #{landtrans_forward.19} parent=5 // pred_check_branch
      %683 = sbr.rel (%p681) target = $region40
    $region39: #{landtrans_forward.19} parent=5 // pred_region
      %s684 = ssub.s32 %s9, 2
      // Predicated region
      $region41: #{landtrans_forward.19} parent=39 // pred_check
        %p685 = pneg %p116
      $region42: #{landtrans_forward.19} parent=39 // pred_check_branch
        %687 = sbr.rel (%p685) target = $region44
      $region43: #{landtrans_forward.19} parent=39 // pred_region
        %s688 = smul.u32 4, %s15
        %p689 = scmp.lt.s32.totalorder %s688, 7
        %s690 = scalar_select %p689, %s688, 7
        %s691 = smul.addr %s690, 2
        %s692 = scalar_lea.vmem %s3, %s691
      $region44: #{landtrans_forward.19} parent=39 // pred_fallthru
        _
    $region40: #{landtrans_forward.19} parent=5 // pred_fallthru
      _
  $region6: #{landtrans_forward.19} parent=0 // loop_footer
    %s13 = sadd.s32 1, %s9
  $region7: #{landtrans_forward.19} parent=0 // loop_footer_branch
    %8 = sbr.rel target = $region3
  $region8: #{landtrans_forward.19} parent=0 // loop_exit
    _

// kernel: landtrans_forward.20
$region0: #{landtrans_forward.20}
  #allocation0 [shape = 'u32[]', space=smem, size = 0x4, offset = 0x4, fixed_abs, tag = 'smem constant byte address 0x4 - core index']
  #allocation1 [shape = 'u32[144,128]{1,0:T(1,128)}', space=vmem, size = 0x12000, scoped, tag = 'internal scratch']
  %s0 = inlined_call_operand.vmem [shape: bf16[8,32], index: 0, kind: input, shape index: {}]
  %s1 = inlined_call_operand.vmem [shape: bf16[8,32], index: 1, kind: input, shape index: {}]
  %s2 = inlined_call_operand.vmem [shape: bf16[32,32], index: 2, kind: input, shape index: {}]
  %s3 = inlined_call_operand.vmem [shape: f32[1,32], index: 3, kind: input, shape index: {}]
  %s4 = inlined_call_operand.vmem [shape: f32[1,32], index: 4, kind: input, shape index: {}]
  %s5 = inlined_call_operand.vmem [shape: f32[1,32], index: 5, kind: input, shape index: {}]
  %s6 = inlined_call_operand.vmem [shape: bf16[32,32], index: 6, kind: input, shape index: {}]
  %s7 = inlined_call_operand.vmem [shape: f32[1,32], index: 7, kind: input, shape index: {}]
  %s8 = inlined_call_operand.vmem [shape: bf16[8,32], index: 8, kind: output, shape index: {0}]
  %s9 = inlined_call_operand.vmem [shape: bf16[8,32], index: 9, kind: output, shape index: {1}]
  %10 = xla_tuple %s8, %s9
  %s11 = sld [smem:[#allocation0]]
  $region50: #{landtrans_forward.20} parent=0
    _
  %s13 = ssub.s32 1, %s11
  %s14 = scalar_select 0, %s13, %s11
  // Predicated region
  $region2: #{landtrans_forward.20} parent=0 // pred_check
    _
  $region3: #{landtrans_forward.20} parent=0 // pred_check_branch
    %16 = sbr.rel (0) target = $region5
  $region4: #{landtrans_forward.20} parent=0 // pred_region
    _
  $region5: #{landtrans_forward.20} parent=0 // pred_fallthru
    _
  // Predicated region
  $region6: #{landtrans_forward.20} parent=0 // pred_check
    _
  $region7: #{landtrans_forward.20} parent=0 // pred_check_branch
    %18 = sbr.rel (0) target = $region9
  $region8: #{landtrans_forward.20} parent=0 // pred_region
    _
  $region9: #{landtrans_forward.20} parent=0 // pred_fallthru
    _
  // Predicated region
  $region10: #{landtrans_forward.20} parent=0 // pred_check
    _
  $region11: #{landtrans_forward.20} parent=0 // pred_check_branch
    %20 = sbr.rel (0) target = $region13
  $region12: #{landtrans_forward.20} parent=0 // pred_region
    _
  $region13: #{landtrans_forward.20} parent=0 // pred_fallthru
    _
  // Predicated region
  $region14: #{landtrans_forward.20} parent=0 // pred_check
    _
  $region15: #{landtrans_forward.20} parent=0 // pred_check_branch
    %22 = sbr.rel (0) target = $region17
  $region16: #{landtrans_forward.20} parent=0 // pred_region
    _
  $region17: #{landtrans_forward.20} parent=0 // pred_fallthru
    _
  // Predicated region
  $region18: #{landtrans_forward.20} parent=0 // pred_check
    _
  $region19: #{landtrans_forward.20} parent=0 // pred_check_branch
    %24 = sbr.rel (0) target = $region21
  $region20: #{landtrans_forward.20} parent=0 // pred_region
    _
  $region21: #{landtrans_forward.20} parent=0 // pred_fallthru
    _
  // Predicated region
  $region22: #{landtrans_forward.20} parent=0 // pred_check
    _
  $region23: #{landtrans_forward.20} parent=0 // pred_check_branch
    %26 = sbr.rel (0) target = $region25
  $region24: #{landtrans_forward.20} parent=0 // pred_region
    _
  $region25: #{landtrans_forward.20} parent=0 // pred_fallthru
    _
  // Predicated region
  $region26: #{landtrans_forward.20} parent=0 // pred_check
    _
  $region27: #{landtrans_forward.20} parent=0 // pred_check_branch
    %28 = sbr.rel (0) target = $region29
  $region28: #{landtrans_forward.20} parent=0 // pred_region
    _
  $region29: #{landtrans_forward.20} parent=0 // pred_fallthru
    _
  // Predicated region
  $region30: #{landtrans_forward.20} parent=0 // pred_check
    _
  $region31: #{landtrans_forward.20} parent=0 // pred_check_branch
    %30 = sbr.rel (0) target = $region33
  $region32: #{landtrans_forward.20} parent=0 // pred_region
    _
  $region33: #{landtrans_forward.20} parent=0 // pred_fallthru
    _
  %v32 = vld [vmem:[%s0] sm:$0xf]
  %v33 = vld [vmem:[%s2] sm:$0xf]
  %v34 = vld [vmem:[%s2 + $0x4] sm:$0xf]
  %v35 = vld [vmem:[%s2 + $0x8] sm:$0xf]
  %v36 = vld [vmem:[%s2 + $0xc] sm:$0xf]
  %v37 = vld [vmem:[%s3] sm:$0x1]
  %v39 = vlaneseq
  %v40 = vshrl.u32 %v39, 7
  %v41 = vsub.s32 0, %v40
  %v42 = vrot.slane %v37, %v41
  %v48 = vunpack.c.l.b16 %v33
  %v49 = vunpack.c.l.b16 %v34
  %v50 = vunpack.c.l.b16 %v35
  %v51 = vunpack.c.l.b16 %v36
  %v52 = vpack.c.b16 %v49, %v48
  %v53 = vpack.c.b16 %v51, %v50
  %vm56 = vcmask 261120
  %v58 = vsel %vm56, %v32, 0
  %60 = vmatprep.subr.bf16.mxu0 0
  %61 = vmatpush1.bf16.msra.mxu0 %v52
  %62 = vmatprep.subr.bf16.mxu0 0
  %63 = vmatpush1.bf16.msra.mxu0 %v53
  %64 = vmatprep.subr.bf16.mxu0 0
  %65 = vmatpush1.bf16.msra.mxu0 0
  %66 = vmatprep.subr.bf16.mxu0 0
  %67 = vmatpush1.bf16.msra.mxu0 0
  %68 = vmatprep.subr.bf16.mxu0 0
  %69 = vmatpush1.bf16.msra.mxu0 0
  %70 = vmatprep.subr.bf16.mxu0 0
  %71 = vmatpush1.bf16.msra.mxu0 0
  %72 = vmatprep.subr.bf16.mxu0 0
  %73 = vmatpush1.bf16.msra.mxu0 0
  %74 = vmatprep.subr.bf16.mxu0 0
  %75 = vmatpush1.bf16.msra.mxu0 0
  %76 = vmatprep.subr.bf16.mxu0 0
  %77 = vmatpush1.bf16.msra.mxu0 0
  %78 = vmatprep.subr.bf16.mxu0 0
  %79 = vmatpush1.bf16.msra.mxu0 0
  %80 = vmatprep.subr.bf16.mxu0 0
  %81 = vmatpush1.bf16.msra.mxu0 0
  %82 = vmatprep.subr.bf16.mxu0 0
  %83 = vmatpush1.bf16.msra.mxu0 0
  %84 = vmatprep.subr.bf16.mxu0 0
  %85 = vmatpush1.bf16.msra.mxu0 0
  %86 = vmatprep.subr.bf16.mxu0 0
  %87 = vmatpush1.bf16.msra.mxu0 0
  %88 = vmatprep.subr.bf16.mxu0 0
  %89 = vmatpush1.bf16.msra.mxu0 0
  %90 = vmatprep.subr.bf16.mxu0 0
  %91 = vmatpush1.bf16.msra.mxu0 0
  %92 = vmatprep.mubr.bf16.mxu0 0
  %93 = vmatmul.mubr.bf16.gmra.mrb[0].mxu0 %v58
  %v94 = vpop.f32.mrb[0].mxu0
  %v95 = vadd.f32 %v42, %v94
  %v96 = vpop.f32.mrb[0].mxu0
  %v97 = vpop.f32.mrb[0].mxu0
  %v98 = vpop.f32.mrb[0].mxu0
  %99 = vdwg.mxu0
  %v100 = vld [vmem:[%s1] sm:$0xf]
  %v101 = vunpack.c.l.bf16 %v100
  %v102 = vadd.f32 %v95, %v101
  %v103 = vsel %vm56, %v102, 0.0
  %104 = vadd.xlane.f32.xlu0 %v103
  %v105 = vpop.xlane.xlu0 %104
  %v106 = vrcp.pop 32.0
  %v107 = vmul.f32 %v105, %v106
  %v108 = vsub.f32 %v102, %v107
  %v109 = vmul.f32 %v108, %v108
  %v110 = vsel %vm56, %v109, 0.0
  %111 = vadd.xlane.f32.xlu0 %v110
  %v112 = vpop.xlane.xlu0 %111
  %v113 = vmul.f32 %v112, %v106
  %v114 = vadd.f32 %v113, 1e-05
  %v115 = vrsqrt.pop %v114
  %v116 = vmul.f32 %v108, %v115
  %v117 = vld [vmem:[%s4] sm:$0x1]
  %v119 = vlaneseq
  %v120 = vshrl.u32 %v119, 7
  %v121 = vsub.s32 0, %v120
  %v122 = vrot.slane %v117, %v121
  %v124 = vmul.f32 %v116, %v122
  %v125 = vld [vmem:[%s5] sm:$0x1]
  %v127 = vlaneseq
  %v128 = vshrl.u32 %v127, 7
  %v129 = vsub.s32 0, %v128
  %v130 = vrot.slane %v125, %v129
  %v132 = vadd.f32 %v124, %v130
  %v133 = vpack.c.bf16 %v132, %v132
  %vm134 = vcmask 257024
  %135 = vst.msk [vmem:[%s8] sm:$0xf] %vm134, %v133
  %v136 = vld [vmem:[%s6] sm:$0xf]
  %v137 = vld [vmem:[%s6 + $0x4] sm:$0xf]
  %v138 = vld [vmem:[%s6 + $0x8] sm:$0xf]
  %v139 = vld [vmem:[%s6 + $0xc] sm:$0xf]
  %v140 = vld [vmem:[%s7] sm:$0x1]
  %v142 = vlaneseq
  %v143 = vshrl.u32 %v142, 7
  %v144 = vsub.s32 0, %v143
  %v145 = vrot.slane %v140, %v144
  %v151 = vunpack.c.l.b16 %v136
  %v152 = vunpack.c.l.b16 %v137
  %v153 = vunpack.c.l.b16 %v138
  %v154 = vunpack.c.l.b16 %v139
  %v155 = vpack.c.b16 %v152, %v151
  %v156 = vpack.c.b16 %v154, %v153
  %v160 = vsel %vm56, %v133, 0
  %162 = vmatprep.subr.bf16.mxu0 0
  %163 = vmatpush1.bf16.msra.mxu0 %v155
  %164 = vmatprep.subr.bf16.mxu0 0
  %165 = vmatpush1.bf16.msra.mxu0 %v156
  %166 = vmatprep.subr.bf16.mxu0 0
  %167 = vmatpush1.bf16.msra.mxu0 0
  %168 = vmatprep.subr.bf16.mxu0 0
  %169 = vmatpush1.bf16.msra.mxu0 0
  %170 = vmatprep.subr.bf16.mxu0 0
  %171 = vmatpush1.bf16.msra.mxu0 0
  %172 = vmatprep.subr.bf16.mxu0 0
  %173 = vmatpush1.bf16.msra.mxu0 0
  %174 = vmatprep.subr.bf16.mxu0 0
  %175 = vmatpush1.bf16.msra.mxu0 0
  %176 = vmatprep.subr.bf16.mxu0 0
  %177 = vmatpush1.bf16.msra.mxu0 0
  %178 = vmatprep.subr.bf16.mxu0 0
  %179 = vmatpush1.bf16.msra.mxu0 0
  %180 = vmatprep.subr.bf16.mxu0 0
  %181 = vmatpush1.bf16.msra.mxu0 0
  %182 = vmatprep.subr.bf16.mxu0 0
  %183 = vmatpush1.bf16.msra.mxu0 0
  %184 = vmatprep.subr.bf16.mxu0 0
  %185 = vmatpush1.bf16.msra.mxu0 0
  %186 = vmatprep.subr.bf16.mxu0 0
  %187 = vmatpush1.bf16.msra.mxu0 0
  %188 = vmatprep.subr.bf16.mxu0 0
  %189 = vmatpush1.bf16.msra.mxu0 0
  %190 = vmatprep.subr.bf16.mxu0 0
  %191 = vmatpush1.bf16.msra.mxu0 0
  %192 = vmatprep.subr.bf16.mxu0 0
  %193 = vmatpush1.bf16.msra.mxu0 0
  %194 = vmatprep.mubr.bf16.mxu0 0
  %195 = vmatmul.mubr.bf16.gmra.mrb[0].mxu0 %v160
  %v196 = vpop.f32.mrb[0].mxu0
  %v197 = vadd.f32 %v145, %v196
  %v198 = vpop.f32.mrb[0].mxu0
  %v199 = vpop.f32.mrb[0].mxu0
  %v200 = vpop.f32.mrb[0].mxu0
  %201 = vdwg.mxu0
  %v202 = vpack.c.bf16 %v197, %v197
  %203 = vst.msk [vmem:[%s9] sm:$0xf] %vm134, %v202
  // Predicated region
  $region34: #{landtrans_forward.20} parent=0 // pred_check
    _
  $region35: #{landtrans_forward.20} parent=0 // pred_check_branch
    %205 = sbr.rel (0) target = $region37
  $region36: #{landtrans_forward.20} parent=0 // pred_region
    _
  $region37: #{landtrans_forward.20} parent=0 // pred_fallthru
    _
  // Predicated region
  $region38: #{landtrans_forward.20} parent=0 // pred_check
    _
  $region39: #{landtrans_forward.20} parent=0 // pred_check_branch
    %207 = sbr.rel (0) target = $region41
  $region40: #{landtrans_forward.20} parent=0 // pred_region
    _
  $region41: #{landtrans_forward.20} parent=0 // pred_fallthru
    _
  // Predicated region
  $region42: #{landtrans_forward.20} parent=0 // pred_check
    _
  $region43: #{landtrans_forward.20} parent=0 // pred_check_branch
    %209 = sbr.rel (0) target = $region45
  $region44: #{landtrans_forward.20} parent=0 // pred_region
    _
  $region45: #{landtrans_forward.20} parent=0 // pred_fallthru
    _
  // Predicated region
  $region46: #{landtrans_forward.20} parent=0 // pred_check
    _
  $region47: #{landtrans_forward.20} parent=0 // pred_check_branch
    %211 = sbr.rel (0) target = $region49
  $region48: #{landtrans_forward.20} parent=0 // pred_region
    _
  $region49: #{landtrans_forward.20} parent=0 // pred_fallthru
    _

// kernel: landtrans_forward.17
$region0: #{landtrans_forward.17}
  #allocation0 [shape = 'u32[]', space=smem, size = 0x4, offset = 0x4, fixed_abs, tag = 'smem constant byte address 0x4 - core index']
  #allocation1 [shape = 'u32[144,128]{1,0:T(1,128)}', space=vmem, size = 0x12000, scoped, tag = 'internal scratch']
  #allocation2 [shape = 'f32[8,128]{1,0:T(8,128)}', space=vmem, size = 0x1000, scoped, tag = 'scratch operand']
  %s0 = inlined_call_operand.vmem [shape: bf16[8,32], index: 0, kind: input, shape index: {}]
  %s1 = inlined_call_operand.vmem [shape: bf16[32,128], index: 1, kind: input, shape index: {}]
  %s2 = inlined_call_operand.vmem [shape: f32[1,128], index: 2, kind: input, shape index: {}]
  %s3 = inlined_call_operand.vmem [shape: bf16[8,128], index: 3, kind: output, shape index: {}]
  %s4 = sld [smem:[#allocation0]]
  $region30: #{landtrans_forward.17} parent=0
    _
  %s6 = ssub.s32 1, %s4
  %s7 = scalar_select 0, %s6, %s4
  // Predicated region
  $region2: #{landtrans_forward.17} parent=0 // pred_check
    _
  $region3: #{landtrans_forward.17} parent=0 // pred_check_branch
    %9 = sbr.rel (0) target = $region5
  $region4: #{landtrans_forward.17} parent=0 // pred_region
    _
  $region5: #{landtrans_forward.17} parent=0 // pred_fallthru
    _
  // Predicated region
  $region6: #{landtrans_forward.17} parent=0 // pred_check
    _
  $region7: #{landtrans_forward.17} parent=0 // pred_check_branch
    %11 = sbr.rel (0) target = $region9
  $region8: #{landtrans_forward.17} parent=0 // pred_region
    _
  $region9: #{landtrans_forward.17} parent=0 // pred_fallthru
    _
  // Predicated region
  $region10: #{landtrans_forward.17} parent=0 // pred_check
    _
  $region11: #{landtrans_forward.17} parent=0 // pred_check_branch
    %13 = sbr.rel (0) target = $region13
  $region12: #{landtrans_forward.17} parent=0 // pred_region
    _
  $region13: #{landtrans_forward.17} parent=0 // pred_fallthru
    _
  %p15 = scmp.eq.s32.totalorder 0, 0
  // Predicated region
  $region14: #{landtrans_forward.17} parent=0 // pred_check
    %p16 = pneg %p15
  $region15: #{landtrans_forward.17} parent=0 // pred_check_branch
    %18 = sbr.rel (%p16) target = $region17
  $region16: #{landtrans_forward.17} parent=0 // pred_region
    %19 = vst [vmem:[#allocation2] sm:$0xff] 0.0
  $region17: #{landtrans_forward.17} parent=0 // pred_fallthru
    _
  %v20 = vld [vmem:[#allocation2] sm:$0xff]
  %v21 = vld [vmem:[%s0] sm:$0xf]
  %v22 = vld [vmem:[%s1] sm:$0xf]
  %v23 = vld [vmem:[%s1 + $0x4] sm:$0xf]
  %v24 = vld [vmem:[%s1 + $0x8] sm:$0xf]
  %v25 = vld [vmem:[%s1 + $0xc] sm:$0xf]
  %v30 = vunpack.c.l.b16 %v22
  %v31 = vunpack.c.l.b16 %v23
  %v32 = vunpack.c.l.b16 %v24
  %v33 = vunpack.c.l.b16 %v25
  %v34 = vpack.c.b16 %v31, %v30
  %v35 = vpack.c.b16 %v33, %v32
  %vm38 = vcmask 261120
  %v40 = vsel %vm38, %v21, 0
  %42 = vmatprep.subr.bf16.mxu0 0
  %43 = vmatpush1.bf16.msra.mxu0 %v34
  %44 = vmatprep.subr.bf16.mxu0 0
  %45 = vmatpush1.bf16.msra.mxu0 %v35
  %46 = vmatprep.subr.bf16.mxu0 0
  %47 = vmatpush1.bf16.msra.mxu0 0
  %48 = vmatprep.subr.bf16.mxu0 0
  %49 = vmatpush1.bf16.msra.mxu0 0
  %50 = vmatprep.subr.bf16.mxu0 0
  %51 = vmatpush1.bf16.msra.mxu0 0
  %52 = vmatprep.subr.bf16.mxu0 0
  %53 = vmatpush1.bf16.msra.mxu0 0
  %54 = vmatprep.subr.bf16.mxu0 0
  %55 = vmatpush1.bf16.msra.mxu0 0
  %56 = vmatprep.subr.bf16.mxu0 0
  %57 = vmatpush1.bf16.msra.mxu0 0
  %58 = vmatprep.subr.bf16.mxu0 0
  %59 = vmatpush1.bf16.msra.mxu0 0
  %60 = vmatprep.subr.bf16.mxu0 0
  %61 = vmatpush1.bf16.msra.mxu0 0
  %62 = vmatprep.subr.bf16.mxu0 0
  %63 = vmatpush1.bf16.msra.mxu0 0
  %64 = vmatprep.subr.bf16.mxu0 0
  %65 = vmatpush1.bf16.msra.mxu0 0
  %66 = vmatprep.subr.bf16.mxu0 0
  %67 = vmatpush1.bf16.msra.mxu0 0
  %68 = vmatprep.subr.bf16.mxu0 0
  %69 = vmatpush1.bf16.msra.mxu0 0
  %70 = vmatprep.subr.bf16.mxu0 0
  %71 = vmatpush1.bf16.msra.mxu0 0
  %72 = vmatprep.subr.bf16.mxu0 0
  %73 = vmatpush1.bf16.msra.mxu0 0
  %74 = vmatprep.mubr.bf16.mxu0 0
  %75 = vmatmul.mubr.bf16.gmra.mrb[0].mxu0 %v40
  %v76 = vpop.f32.mrb[0].mxu0
  %v77 = vadd.f32 0.0, %v76
  %v78 = vpop.f32.mrb[0].mxu0
  %v79 = vpop.f32.mrb[0].mxu0
  %v80 = vpop.f32.mrb[0].mxu0
  %81 = vdwg.mxu0
  %v82 = vadd.f32 %v20, %v77
  %83 = vst [vmem:[#allocation2] sm:$0xff] %v82
  // Predicated region
  $region18: #{landtrans_forward.17} parent=0 // pred_check
    %p84 = pneg %p15
  $region19: #{landtrans_forward.17} parent=0 // pred_check_branch
    %86 = sbr.rel (%p84) target = $region21
  $region20: #{landtrans_forward.17} parent=0 // pred_region
    %v87 = vld [vmem:[#allocation2] sm:$0xff]
    %v88 = vld [vmem:[%s2] sm:$0x1]
    %v90 = vlaneseq
    %v91 = vshrl.u32 %v90, 7
    %v92 = vsub.s32 0, %v91
    %v93 = vrot.slane %v88, %v92
    %v95 = vadd.f32 %v87, %v93
    %v96 = vpack.c.bf16 %v95, %v95
    %97 = vst [vmem:[%s3] sm:$0xf] %v96
  $region21: #{landtrans_forward.17} parent=0 // pred_fallthru
    _
  // Predicated region
  $region22: #{landtrans_forward.17} parent=0 // pred_check
    _
  $region23: #{landtrans_forward.17} parent=0 // pred_check_branch
    %99 = sbr.rel (0) target = $region25
  $region24: #{landtrans_forward.17} parent=0 // pred_region
    _
  $region25: #{landtrans_forward.17} parent=0 // pred_fallthru
    _
  // Predicated region
  $region26: #{landtrans_forward.17} parent=0 // pred_check
    _
  $region27: #{landtrans_forward.17} parent=0 // pred_check_branch
    %101 = sbr.rel (0) target = $region29
  $region28: #{landtrans_forward.17} parent=0 // pred_region
    _
  $region29: #{landtrans_forward.17} parent=0 // pred_fallthru
    _

// kernel: squeeze.16
$region0: #{squeeze.16}
  %s0 = inlined_call_operand.vmem [shape: bf16[2,4,1,32], index: 0, kind: input, shape index: {}]
  %s1 = inlined_call_operand.vmem [shape: bf16[2,4,4,8], index: 1, kind: output, shape index: {}]
  $region1: #{squeeze.16} parent=0
    #allocation0 [shape = 'u8[32768]{0}', space=vmem, size = 0x8000, scoped, tag = 'scoped mem for output reshape']
    #allocation1 [shape = 'u8[8192]{0}', space=vmem, size = 0x2000, scoped, tag = 'scoped mem for input reshape']
    %s3 = smul.u32 2, 2
    %s4 = sshllo.u32 0, %s3
    %s5 = scalar_lea.vmem %s0, 2
    %s6 = sshrl.u32 %s4, 1
    %s7 = sor.u32 %s4, %s6
    %s8 = sand.u32 %s7, 85
    %s9 = sshrl.u32 %s8, 1
    %s10 = sor.u32 %s8, %s9
    %s11 = sand.u32 51, %s10
    %s12 = sshrl.u32 %s11, 2
    %s13 = sor.u32 %s11, %s12
    %s14 = sand.u32 15, %s13
    %v15 = vld [vmem:[%s5] sm:%s14]
    %v16 = vunpack.c.l.bf16 %v15
    %v17 = vunpack.c.h.bf16 %v15
    %s18 = scalar_lea.vmem [#allocation1], 8
    %19 = vst [vmem:[%s18] sm:%s4] %v16
    %s20 = sshrl.u32 %s4, 1
    %s21 = sor.u32 %s4, %s20
    %s22 = sand.u32 %s21, 85
    %s23 = sshrl.u32 %s22, 1
    %s24 = sor.u32 %s22, %s23
    %s25 = sand.u32 51, %s24
    %s26 = sshrl.u32 %s25, 2
    %s27 = sor.u32 %s25, %s26
    %s28 = sand.u32 15, %s27
    %v29 = vld [vmem:[%s0] sm:%s28]
    %v30 = vunpack.c.l.bf16 %v29
    %v31 = vunpack.c.h.bf16 %v29
    %32 = vst [vmem:[#allocation1] sm:%s4] %v30
    %v33 = vld [vmem:[#allocation1] sm:$0xf]
    %vm34 = vcmask 64512
    %35 = vst.msk [vmem:[#allocation0] ss:$8 sm:$0xf] %vm34, %v33
    %s36 = scalar_lea.vmem [#allocation1], 8
    %v37 = vld [vmem:[%s36] sm:$0xf]
    %vm38 = vcmask 64512
    %s39 = scalar_lea.vmem [#allocation0], 32
    %40 = vst.msk [vmem:[%s39] ss:$8 sm:$0xf] %vm38, %v37
    %v41 = vld.sshfl [vmem:[#allocation1] sm:$0xff pattern:$0xba983210]
    %42 = vrot.lane.b32.xlu0 %v41, 120
    %v43 = vpop.permute.xlu0 %42
    %vm44 = vcmask 64512
    %s45 = scalar_lea.vmem [#allocation0], 1
    %46 = vst.msk [vmem:[%s45] ss:$8 sm:$0xf] %vm44, %v43
    %s47 = scalar_lea.vmem [#allocation0], 1
    %48 = vst.msk [vmem:[%s47] ss:$8 sm:$0xf0] %vm44, %v43
    %v49 = vld.sshfl [vmem:[#allocation1] sm:$0xff pattern:$0xba983210]
    %50 = vrot.lane.b32.xlu0 %v49, 112
    %v51 = vpop.permute.xlu0 %50
    %vm52 = vcmask 64512
    %s53 = scalar_lea.vmem [#allocation0], 2
    %54 = vst.msk [vmem:[%s53] ss:$8 sm:$0xf] %vm52, %v51
    %s55 = scalar_lea.vmem [#allocation0], 2
    %56 = vst.msk [vmem:[%s55] ss:$8 sm:$0xf0] %vm52, %v51
    %v57 = vld.sshfl [vmem:[#allocation1] sm:$0xff pattern:$0xba983210]
    %58 = vrot.lane.b32.xlu0 %v57, 104
    %v59 = vpop.permute.xlu0 %58
    %vm60 = vcmask 64512
    %s61 = scalar_lea.vmem [#allocation0], 3
    %62 = vst.msk [vmem:[%s61] ss:$8 sm:$0xf] %vm60, %v59
    %s63 = scalar_lea.vmem [#allocation0], 3
    %64 = vst.msk [vmem:[%s63] ss:$8 sm:$0xf0] %vm60, %v59
    %s66 = smul.u32 2, 2
    %s67 = sshllo.u32 0, %s66
    %s68 = sshrl.u32 %s66, 1
    %v69 = vld [vmem:[#allocation0] sm:%s67]
    %v70 = vpack.c.bf16 0.0, %v69
    %s71 = sshllo.u32 0, %s68
    %72 = vst [vmem:[%s1] sm:%s71] %v70
    %s73 = scalar_lea.vmem [#allocation0], 8
    %v74 = vld [vmem:[%s73] sm:%s67]
    %v75 = vpack.c.bf16 0.0, %v74
    %s76 = sshllo.u32 0, %s68
    %s77 = scalar_lea.vmem %s1, 2
    %78 = vst [vmem:[%s77] sm:%s76] %v75
    %s79 = scalar_lea.vmem [#allocation0], 16
    %v80 = vld [vmem:[%s79] sm:%s67]
    %v81 = vpack.c.bf16 0.0, %v80
    %s82 = sshllo.u32 0, %s68
    %s83 = smul.addr 2, 2
    %s84 = scalar_lea.vmem %s1, %s83
    %85 = vst [vmem:[%s84] sm:%s82] %v81
    %s86 = scalar_lea.vmem [#allocation0], 24
    %v87 = vld [vmem:[%s86] sm:%s67]
    %v88 = vpack.c.bf16 0.0, %v87
    %s89 = sshllo.u32 0, %s68
    %s90 = smul.addr 2, 3
    %s91 = scalar_lea.vmem %s1, %s90
    %92 = vst [vmem:[%s91] sm:%s89] %v88
    %s93 = scalar_lea.vmem [#allocation0], 32
    %v94 = vld [vmem:[%s93] sm:%s67]
    %v95 = vpack.c.bf16 0.0, %v94
    %s96 = sshllo.u32 0, %s68
    %s97 = smul.addr 2, 4
    %s98 = scalar_lea.vmem %s1, %s97
    %99 = vst [vmem:[%s98] sm:%s96] %v95
    %s100 = scalar_lea.vmem [#allocation0], 40
    %v101 = vld [vmem:[%s100] sm:%s67]
    %v102 = vpack.c.bf16 0.0, %v101
    %s103 = sshllo.u32 0, %s68
    %s104 = smul.addr 2, 5
    %s105 = scalar_lea.vmem %s1, %s104
    %106 = vst [vmem:[%s105] sm:%s103] %v102
    %s107 = scalar_lea.vmem [#allocation0], 48
    %v108 = vld [vmem:[%s107] sm:%s67]
    %v109 = vpack.c.bf16 0.0, %v108
    %s110 = sshllo.u32 0, %s68
    %s111 = smul.addr 2, 6
    %s112 = scalar_lea.vmem %s1, %s111
    %113 = vst [vmem:[%s112] sm:%s110] %v109
    %s114 = scalar_lea.vmem [#allocation0], 56
    %v115 = vld [vmem:[%s114] sm:%s67]
    %v116 = vpack.c.bf16 0.0, %v115
    %s117 = sshllo.u32 0, %s68
    %s118 = smul.addr 2, 7
    %s119 = scalar_lea.vmem %s1, %s118
    %120 = vst [vmem:[%s119] sm:%s117] %v116

// kernel: landtrans_forward.16
$region0: #{landtrans_forward.16}
  #allocation0 [shape = 'u32[]', space=smem, size = 0x4, offset = 0x4, fixed_abs, tag = 'smem constant byte address 0x4 - core index']
  #allocation1 [shape = 'u32[144,128]{1,0:T(1,128)}', space=vmem, size = 0x12000, scoped, tag = 'internal scratch']
  #allocation2 [shape = 'f32[8,32]{1,0:T(8,128)}', space=vmem, size = 0x1000, scoped, tag = 'scratch operand']
  %s0 = inlined_call_operand.vmem [shape: bf16[8,4096], index: 0, kind: input, shape index: {}]
  %s1 = inlined_call_operand.vmem [shape: bf16[4096,32], index: 1, kind: input, shape index: {}]
  %s2 = inlined_call_operand.vmem [shape: f32[1,32], index: 2, kind: input, shape index: {}]
  %s3 = inlined_call_operand.vmem [shape: bf16[8,32], index: 3, kind: output, shape index: {}]
  %s4 = sld [smem:[#allocation0]]
  $region53: #{landtrans_forward.16} parent=0
    _
  %s6 = ssub.s32 1, %s4
  %s7 = scalar_select 0, %s6, %s4
  loop: start=0, step=1, limit=4
  $region2: #{landtrans_forward.16} parent=0 // loop_pre_header
    _
  $region3: #{landtrans_forward.16} parent=0 // loop_header
    %s9 = sphi 0, %s13
    %p10 = scmp.ge.s32.totalorder %s9, 4
    %s16 = sphi 0, %s28
    %s17 = sphi 0, %s24
    %s18 = sphi 0, %s16
    %s19 = sphi 0, %s17
    %s20 = sphi 0, %s18
    %s21 = sphi 0, %s19
    %s33 = sphi 0, %s35
    %s36 = sphi 0, %s33
    %s37 = sphi 0, %s36
    %s53 = sphi 0, %s37
    %s59 = sphi 0, %s61
    %s62 = sphi 0, %s59
    %s63 = sphi 0, %s62
    %s79 = sphi 0, %s63
    %s83 = sphi 0, %s83
    %s85 = sphi 0, %s83
    %s86 = sphi 0, %s85
    %s100 = sphi 0, %s86
    %s106 = sphi 0, %s108
    %s109 = sphi 0, %s106
    %s110 = sphi 0, %s109
    %s126 = sphi 0, %s110
  $region4: #{landtrans_forward.16} parent=0 // loop_header_branch
    %12 = sbr.rel (%p10) target = $region8
  $region5: #{landtrans_forward.16} parent=0 // loop_body
    %s14 = ssub.s32 %s9, 1
    %s15 = ssub.s32 %s9, 2
    %s22 = sadd.s32 1, %s17
    %p23 = scmp.ge.s32.totalorder %s22, 2
    %s24 = scalar_select %p23, 0, %s22
    %s25 = sadd.s32 1, %s16
    %s26 = scalar_select %p23, %s25, %s16
    %p27 = scmp.ge.s32.totalorder %s26, 1
    %s28 = scalar_select %p27, 0, %s26
    %s29 = ssub.s32 %s16, %s28
    %s30 = ssub.s32 %s17, %s24
    %s31 = sor.u32 %s29, %s30
    %p32 = scmp.eq.s32.totalorder %s31, 0
    %s34 = sadd.s32 %s33, 1
    %s35 = scalar_select %p32, %s33, %s34
    %p38 = pneg %p32
    %p39 = scmp.eq.s32.totalorder %s9, 1
    %p40 = por %p38, %p39
    %p41 = scmp.ne.s32.totalorder %s33, %s36
    %p42 = scmp.eq.s32.totalorder %s9, 0
    %p43 = por %p41, %p42
    %p44 = scmp.ne.s32.totalorder %s33, %s36
    %p45 = scmp.eq.s32.totalorder %s14, 1
    %p46 = por %p44, %p45
    %p47 = scmp.ne.s32.totalorder %s36, %s37
    %p48 = scmp.eq.s32.totalorder %s14, 0
    %p49 = por %p47, %p48
    %p50 = scmp.ne.s32.totalorder %s36, %s37
    %p51 = scmp.eq.s32.totalorder %s15, 1
    %p52 = por %p50, %p51
    %p54 = scmp.ne.s32.totalorder %s37, %s53
    %p55 = scmp.eq.s32.totalorder %s15, 0
    %p56 = por %p54, %p55
    %s57 = ssub.s32 %s17, %s24
    %p58 = scmp.eq.s32.totalorder %s57, 0
    %s60 = sadd.s32 %s59, 1
    %s61 = scalar_select %p58, %s59, %s60
    %p64 = pneg %p58
    %p65 = scmp.eq.s32.totalorder %s9, 1
    %p66 = por %p64, %p65
    %p67 = scmp.ne.s32.totalorder %s59, %s62
    %p68 = scmp.eq.s32.totalorder %s9, 0
    %p69 = por %p67, %p68
    %p70 = scmp.ne.s32.totalorder %s59, %s62
    %p71 = scmp.eq.s32.totalorder %s14, 1
    %p72 = por %p70, %p71
    %p73 = scmp.ne.s32.totalorder %s62, %s63
    %p74 = scmp.eq.s32.totalorder %s14, 0
    %p75 = por %p73, %p74
    %p76 = scmp.ne.s32.totalorder %s62, %s63
    %p77 = scmp.eq.s32.totalorder %s15, 1
    %p78 = por %p76, %p77
    %p80 = scmp.ne.s32.totalorder %s63, %s79
    %p81 = scmp.eq.s32.totalorder %s15, 0
    %p82 = por %p80, %p81
    %s84 = sadd.s32 %s83, 1
    %p87 = scmp.eq.s32.totalorder %s9, 1
    %p88 = scmp.ne.s32.totalorder %s83, %s85
    %p89 = scmp.eq.s32.totalorder %s9, 0
    %p90 = por %p88, %p89
    %p91 = scmp.ne.s32.totalorder %s83, %s85
    %p92 = scmp.eq.s32.totalorder %s14, 1
    %p93 = por %p91, %p92
    %p94 = scmp.ne.s32.totalorder %s85, %s86
    %p95 = scmp.eq.s32.totalorder %s14, 0
    %p96 = por %p94, %p95
    %p97 = scmp.ne.s32.totalorder %s85, %s86
    %p98 = scmp.eq.s32.totalorder %s15, 1
    %p99 = por %p97, %p98
    %p101 = scmp.ne.s32.totalorder %s86, %s100
    %p102 = scmp.eq.s32.totalorder %s15, 0
    %p103 = por %p101, %p102
    %s104 = ssub.s32 %s16, %s28
    %p105 = scmp.eq.s32.totalorder %s104, 0
    %s107 = sadd.s32 %s106, 1
    %s108 = scalar_select %p105, %s106, %s107
    %p111 = pneg %p105
    %p112 = scmp.eq.s32.totalorder %s9, 1
    %p113 = por %p111, %p112
    %p114 = scmp.ne.s32.totalorder %s106, %s109
    %p115 = scmp.eq.s32.totalorder %s9, 0
    %p116 = por %p114, %p115
    %p117 = scmp.ne.s32.totalorder %s106, %s109
    %p118 = scmp.eq.s32.totalorder %s14, 1
    %p119 = por %p117, %p118
    %p120 = scmp.ne.s32.totalorder %s109, %s110
    %p121 = scmp.eq.s32.totalorder %s14, 0
    %p122 = por %p120, %p121
    %p123 = scmp.ne.s32.totalorder %s109, %s110
    %p124 = scmp.eq.s32.totalorder %s15, 1
    %p125 = por %p123, %p124
    %p127 = scmp.ne.s32.totalorder %s110, %s126
    %p128 = scmp.eq.s32.totalorder %s15, 0
    %p129 = por %p127, %p128
    %p130 = scmp.le.s32.totalorder 1, %s9
    %p131 = scmp.lt.s32.totalorder %s9, 3
    %p132 = pnand %p130, %p131
    %p133 = pneg %p132
    // Predicated region
    $region9: #{landtrans_forward.16} parent=5 // pred_check
      _
    $region10: #{landtrans_forward.16} parent=5 // pred_check_branch
      %135 = sbr.rel (%p132) target = $region12
    $region11: #{landtrans_forward.16} parent=5 // pred_region
      %s136 = ssub.s32 %s9, 1
      // Predicated region
      $region13: #{landtrans_forward.16} parent=11 // pred_check
        %p137 = pneg %p96
      $region14: #{landtrans_forward.16} parent=11 // pred_check_branch
        %139 = sbr.rel (%p137) target = $region16
      $region15: #{landtrans_forward.16} parent=11 // pred_region
        _
      $region16: #{landtrans_forward.16} parent=11 // pred_fallthru
        _
    $region12: #{landtrans_forward.16} parent=5 // pred_fallthru
      _
    %p140 = scmp.lt.s32.totalorder %s9, 2
    // Predicated region
    $region17: #{landtrans_forward.16} parent=5 // pred_check
      %p141 = pneg %p140
    $region18: #{landtrans_forward.16} parent=5 // pred_check_branch
      %143 = sbr.rel (%p141) target = $region20
    $region19: #{landtrans_forward.16} parent=5 // pred_region
      // Predicated region
      $region21: #{landtrans_forward.16} parent=19 // pred_check
        %p144 = pneg %p43
      $region22: #{landtrans_forward.16} parent=19 // pred_check_branch
        %146 = sbr.rel (%p144) target = $region24
      $region23: #{landtrans_forward.16} parent=19 // pred_region
        %s147 = smul.u32 16, %s17
        %p148 = scmp.lt.s32.totalorder %s16, 0
        %s149 = scalar_select %p148, %s16, 0
        %p150 = scmp.lt.s32.totalorder %s147, 31
        %s151 = scalar_select %p150, %s147, 31
        %s152 = smul.addr %s149, 32
        %s153 = sadd.s32 %s151, %s152
        %s154 = smul.addr %s153, 4
        %s155 = scalar_lea.vmem %s0, %s154
        %s156 = smul.u32 16, %s17
      $region24: #{landtrans_forward.16} parent=19 // pred_fallthru
        _
      // Predicated region
      $region25: #{landtrans_forward.16} parent=19 // pred_check
        %p157 = pneg %p69
      $region26: #{landtrans_forward.16} parent=19 // pred_check_branch
        %159 = sbr.rel (%p157) target = $region28
      $region27: #{landtrans_forward.16} parent=19 // pred_region
        %s160 = smul.u32 256, %s17
        %p161 = scmp.lt.s32.totalorder %s160, 511
        %s162 = scalar_select %p161, %s160, 511
        %s163 = smul.addr %s162, 4
        %s164 = scalar_lea.vmem %s1, %s163
        %s165 = smul.u32 256, %s17
      $region28: #{landtrans_forward.16} parent=19 // pred_fallthru
        _
    $region20: #{landtrans_forward.16} parent=5 // pred_fallthru
      _
    %p166 = scmp.le.s32.totalorder 1, %s9
    %p167 = scmp.lt.s32.totalorder %s9, 3
    %p168 = pnand %p166, %p167
    %p169 = pneg %p168
    // Predicated region
    $region29: #{landtrans_forward.16} parent=5 // pred_check
      _
    $region30: #{landtrans_forward.16} parent=5 // pred_check_branch
      %171 = sbr.rel (%p168) target = $region32
    $region31: #{landtrans_forward.16} parent=5 // pred_region
      %s172 = ssub.s32 %s9, 1
      %s173 = smul.u32 16, %s19
      %p174 = scmp.lt.s32.totalorder %s18, 0
      %s175 = scalar_select %p174, %s18, 0
      %p176 = scmp.lt.s32.totalorder %s173, 31
      %s177 = scalar_select %p176, %s173, 31
      %s178 = smul.addr %s175, 32
      %s179 = sadd.s32 %s177, %s178
      %s180 = smul.addr %s179, 4
      %s181 = scalar_lea.vmem %s0, %s180
      %p182 = pneg %p49
      %p183 = pneg %p46
      %s184 = smul.u32 256, %s19
      %p185 = scmp.lt.s32.totalorder %s184, 511
      %s186 = scalar_select %p185, %s184, 511
      %s187 = smul.addr %s186, 4
      %s188 = scalar_lea.vmem %s1, %s187
      %p189 = pneg %p75
      %p190 = pneg %p72
      %p191 = pneg %p96
      %p192 = pneg %p93
      %p193 = pneg %p122
      %p194 = pneg %p119
      %p195 = scmp.lt.s32.totalorder %s18, 0
      %s196 = scalar_select %p195, %s18, 0
      %s197 = smul.addr %s196, 4
      %s198 = scalar_lea.vmem %s3, %s197
      %s199 = smul.u32 16, %s19
      %p200 = scmp.lt.s32.totalorder %s18, 0
      %s201 = scalar_select %p200, %s18, 0
      %p202 = scmp.lt.s32.totalorder %s199, 31
      %s203 = scalar_select %p202, %s199, 31
      %s204 = smul.addr %s201, 32
      %s205 = sadd.s32 %s203, %s204
      %s206 = smul.addr %s205, 4
      %s207 = scalar_lea.vmem %s0, %s206
      %s208 = smul.u32 16, %s19
      %s209 = smul.u32 256, %s19
      %p210 = scmp.lt.s32.totalorder %s209, 511
      %s211 = scalar_select %p210, %s209, 511
      %s212 = smul.addr %s211, 4
      %s213 = scalar_lea.vmem %s1, %s212
      %s214 = smul.u32 256, %s19
      %p215 = scmp.lt.s32.totalorder %s18, 0
      %s216 = scalar_select %p215, %s18, 0
      %s217 = smul.addr %s216, 4
      %s218 = scalar_lea.vmem %s3, %s217
      %p220 = scmp.eq.s32.totalorder %s19, 0
      // Predicated region
      $region33: #{landtrans_forward.16} parent=31 // pred_check
        %p221 = pneg %p220
      $region34: #{landtrans_forward.16} parent=31 // pred_check_branch
        %223 = sbr.rel (%p221) target = $region36
      $region35: #{landtrans_forward.16} parent=31 // pred_region
        %vm224 = vcmask 261120
        %225 = vst.msk [vmem:[#allocation2] sm:$0xff] %vm224, 0.0
      $region36: #{landtrans_forward.16} parent=31 // pred_fallthru
        _
      %v226 = vld [vmem:[#allocation2] sm:$0xff]
      %v227 = vld [vmem:[%s207] sm:$0xff]
      %v228 = vld [vmem:[%s207 + $0x8] sm:$0xff]
      %v229 = vld [vmem:[%s207 + $0x10] sm:$0xff]
      %v230 = vld [vmem:[%s207 + $0x18] sm:$0xff]
      %v231 = vld [vmem:[%s207 + $0x20] sm:$0xff]
      %v232 = vld [vmem:[%s207 + $0x28] sm:$0xff]
      %v233 = vld [vmem:[%s207 + $0x30] sm:$0xff]
      %v234 = vld [vmem:[%s207 + $0x38] sm:$0xff]
      %v235 = vld [vmem:[%s213] sm:$0xf]
      %v236 = vld [vmem:[%s213 + $0x4] sm:$0xf]
      %v237 = vld [vmem:[%s213 + $0x8] sm:$0xf]
      %v238 = vld [vmem:[%s213 + $0xc] sm:$0xf]
      %v239 = vld [vmem:[%s213 + $0x10] sm:$0xf]
      %v240 = vld [vmem:[%s213 + $0x14] sm:$0xf]
      %v241 = vld [vmem:[%s213 + $0x18] sm:$0xf]
      %v242 = vld [vmem:[%s213 + $0x1c] sm:$0xf]
      %v243 = vld [vmem:[%s213 + $0x20] sm:$0xf]
      %v244 = vld [vmem:[%s213 + $0x24] sm:$0xf]
      %v245 = vld [vmem:[%s213 + $0x28] sm:$0xf]
      %v246 = vld [vmem:[%s213 + $0x2c] sm:$0xf]
      %v247 = vld [vmem:[%s213 + $0x30] sm:$0xf]
      %v248 = vld [vmem:[%s213 + $0x34] sm:$0xf]
      %v249 = vld [vmem:[%s213 + $0x38] sm:$0xf]
      %v250 = vld [vmem:[%s213 + $0x3c] sm:$0xf]
      %v251 = vld [vmem:[%s213 + $0x40] sm:$0xf]
      %v252 = vld [vmem:[%s213 + $0x44] sm:$0xf]
      %v253 = vld [vmem:[%s213 + $0x48] sm:$0xf]
      %v254 = vld [vmem:[%s213 + $0x4c] sm:$0xf]
      %v255 = vld [vmem:[%s213 + $0x50] sm:$0xf]
      %v256 = vld [vmem:[%s213 + $0x54] sm:$0xf]
      %v257 = vld [vmem:[%s213 + $0x58] sm:$0xf]
      %v258 = vld [vmem:[%s213 + $0x5c] sm:$0xf]
      %v259 = vld [vmem:[%s213 + $0x60] sm:$0xf]
      %v260 = vld [vmem:[%s213 + $0x64] sm:$0xf]
      %v261 = vld [vmem:[%s213 + $0x68] sm:$0xf]
      %v262 = vld [vmem:[%s213 + $0x6c] sm:$0xf]
      %v263 = vld [vmem:[%s213 + $0x70] sm:$0xf]
      %v264 = vld [vmem:[%s213 + $0x74] sm:$0xf]
      %v265 = vld [vmem:[%s213 + $0x78] sm:$0xf]
      %v266 = vld [vmem:[%s213 + $0x7c] sm:$0xf]
      %v267 = vld [vmem:[%s213 + $0x80] sm:$0xf]
      %v268 = vld [vmem:[%s213 + $0x84] sm:$0xf]
      %v269 = vld [vmem:[%s213 + $0x88] sm:$0xf]
      %v270 = vld [vmem:[%s213 + $0x8c] sm:$0xf]
      %v271 = vld [vmem:[%s213 + $0x90] sm:$0xf]
      %v272 = vld [vmem:[%s213 + $0x94] sm:$0xf]
      %v273 = vld [vmem:[%s213 + $0x98] sm:$0xf]
      %v274 = vld [vmem:[%s213 + $0x9c] sm:$0xf]
      %v275 = vld [vmem:[%s213 + $0xa0] sm:$0xf]
      %v276 = vld [vmem:[%s213 + $0xa4] sm:$0xf]
      %v277 = vld [vmem:[%s213 + $0xa8] sm:$0xf]
      %v278 = vld [vmem:[%s213 + $0xac] sm:$0xf]
      %v279 = vld [vmem:[%s213 + $0xb0] sm:$0xf]
      %v280 = vld [vmem:[%s213 + $0xb4] sm:$0xf]
      %v281 = vld [vmem:[%s213 + $0xb8] sm:$0xf]
      %v282 = vld [vmem:[%s213 + $0xbc] sm:$0xf]
      %v283 = vld [vmem:[%s213 + $0xc0] sm:$0xf]
      %v284 = vld [vmem:[%s213 + $0xc4] sm:$0xf]
      %v285 = vld [vmem:[%s213 + $0xc8] sm:$0xf]
      %v286 = vld [vmem:[%s213 + $0xcc] sm:$0xf]
      %v287 = vld [vmem:[%s213 + $0xd0] sm:$0xf]
      %v288 = vld [vmem:[%s213 + $0xd4] sm:$0xf]
      %v289 = vld [vmem:[%s213 + $0xd8] sm:$0xf]
      %v290 = vld [vmem:[%s213 + $0xdc] sm:$0xf]
      %v291 = vld [vmem:[%s213 + $0xe0] sm:$0xf]
      %v292 = vld [vmem:[%s213 + $0xe4] sm:$0xf]
      %v293 = vld [vmem:[%s213 + $0xe8] sm:$0xf]
      %v294 = vld [vmem:[%s213 + $0xec] sm:$0xf]
      %v295 = vld [vmem:[%s213 + $0xf0] sm:$0xf]
      %v296 = vld [vmem:[%s213 + $0xf4] sm:$0xf]
      %v297 = vld [vmem:[%s213 + $0xf8] sm:$0xf]
      %v298 = vld [vmem:[%s213 + $0xfc] sm:$0xf]
      %v299 = vld [vmem:[%s213 + $0x100] sm:$0xf]
      %v300 = vld [vmem:[%s213 + $0x104] sm:$0xf]
      %v301 = vld [vmem:[%s213 + $0x108] sm:$0xf]
      %v302 = vld [vmem:[%s213 + $0x10c] sm:$0xf]
      %v303 = vld [vmem:[%s213 + $0x110] sm:$0xf]
      %v304 = vld [vmem:[%s213 + $0x114] sm:$0xf]
      %v305 = vld [vmem:[%s213 + $0x118] sm:$0xf]
      %v306 = vld [vmem:[%s213 + $0x11c] sm:$0xf]
      %v307 = vld [vmem:[%s213 + $0x120] sm:$0xf]
      %v308 = vld [vmem:[%s213 + $0x124] sm:$0xf]
      %v309 = vld [vmem:[%s213 + $0x128] sm:$0xf]
      %v310 = vld [vmem:[%s213 + $0x12c] sm:$0xf]
      %v311 = vld [vmem:[%s213 + $0x130] sm:$0xf]
      %v312 = vld [vmem:[%s213 + $0x134] sm:$0xf]
      %v313 = vld [vmem:[%s213 + $0x138] sm:$0xf]
      %v314 = vld [vmem:[%s213 + $0x13c] sm:$0xf]
      %v315 = vld [vmem:[%s213 + $0x140] sm:$0xf]
      %v316 = vld [vmem:[%s213 + $0x144] sm:$0xf]
      %v317 = vld [vmem:[%s213 + $0x148] sm:$0xf]
      %v318 = vld [vmem:[%s213 + $0x14c] sm:$0xf]
      %v319 = vld [vmem:[%s213 + $0x150] sm:$0xf]
      %v320 = vld [vmem:[%s213 + $0x154] sm:$0xf]
      %v321 = vld [vmem:[%s213 + $0x158] sm:$0xf]
      %v322 = vld [vmem:[%s213 + $0x15c] sm:$0xf]
      %v323 = vld [vmem:[%s213 + $0x160] sm:$0xf]
      %v324 = vld [vmem:[%s213 + $0x164] sm:$0xf]
      %v325 = vld [vmem:[%s213 + $0x168] sm:$0xf]
      %v326 = vld [vmem:[%s213 + $0x16c] sm:$0xf]
      %v327 = vld [vmem:[%s213 + $0x170] sm:$0xf]
      %v328 = vld [vmem:[%s213 + $0x174] sm:$0xf]
      %v329 = vld [vmem:[%s213 + $0x178] sm:$0xf]
      %v330 = vld [vmem:[%s213 + $0x17c] sm:$0xf]
      %v331 = vld [vmem:[%s213 + $0x180] sm:$0xf]
      %v332 = vld [vmem:[%s213 + $0x184] sm:$0xf]
      %v333 = vld [vmem:[%s213 + $0x188] sm:$0xf]
      %v334 = vld [vmem:[%s213 + $0x18c] sm:$0xf]
      %v335 = vld [vmem:[%s213 + $0x190] sm:$0xf]
      %v336 = vld [vmem:[%s213 + $0x194] sm:$0xf]
      %v337 = vld [vmem:[%s213 + $0x198] sm:$0xf]
      %v338 = vld [vmem:[%s213 + $0x19c] sm:$0xf]
      %v339 = vld [vmem:[%s213 + $0x1a0] sm:$0xf]
      %v340 = vld [vmem:[%s213 + $0x1a4] sm:$0xf]
      %v341 = vld [vmem:[%s213 + $0x1a8] sm:$0xf]
      %v342 = vld [vmem:[%s213 + $0x1ac] sm:$0xf]
      %v343 = vld [vmem:[%s213 + $0x1b0] sm:$0xf]
      %v344 = vld [vmem:[%s213 + $0x1b4] sm:$0xf]
      %v345 = vld [vmem:[%s213 + $0x1b8] sm:$0xf]
      %v346 = vld [vmem:[%s213 + $0x1bc] sm:$0xf]
      %v347 = vld [vmem:[%s213 + $0x1c0] sm:$0xf]
      %v348 = vld [vmem:[%s213 + $0x1c4] sm:$0xf]
      %v349 = vld [vmem:[%s213 + $0x1c8] sm:$0xf]
      %v350 = vld [vmem:[%s213 + $0x1cc] sm:$0xf]
      %v351 = vld [vmem:[%s213 + $0x1d0] sm:$0xf]
      %v352 = vld [vmem:[%s213 + $0x1d4] sm:$0xf]
      %v353 = vld [vmem:[%s213 + $0x1d8] sm:$0xf]
      %v354 = vld [vmem:[%s213 + $0x1dc] sm:$0xf]
      %v355 = vld [vmem:[%s213 + $0x1e0] sm:$0xf]
      %v356 = vld [vmem:[%s213 + $0x1e4] sm:$0xf]
      %v357 = vld [vmem:[%s213 + $0x1e8] sm:$0xf]
      %v358 = vld [vmem:[%s213 + $0x1ec] sm:$0xf]
      %v359 = vld [vmem:[%s213 + $0x1f0] sm:$0xf]
      %v360 = vld [vmem:[%s213 + $0x1f4] sm:$0xf]
      %v361 = vld [vmem:[%s213 + $0x1f8] sm:$0xf]
      %v362 = vld [vmem:[%s213 + $0x1fc] sm:$0xf]
      %v363 = vld [vmem:[%s213 + $0x200] sm:$0xf]
      %v364 = vld [vmem:[%s213 + $0x204] sm:$0xf]
      %v365 = vld [vmem:[%s213 + $0x208] sm:$0xf]
      %v366 = vld [vmem:[%s213 + $0x20c] sm:$0xf]
      %v367 = vld [vmem:[%s213 + $0x210] sm:$0xf]
      %v368 = vld [vmem:[%s213 + $0x214] sm:$0xf]
      %v369 = vld [vmem:[%s213 + $0x218] sm:$0xf]
      %v370 = vld [vmem:[%s213 + $0x21c] sm:$0xf]
      %v371 = vld [vmem:[%s213 + $0x220] sm:$0xf]
      %v372 = vld [vmem:[%s213 + $0x224] sm:$0xf]
      %v373 = vld [vmem:[%s213 + $0x228] sm:$0xf]
      %v374 = vld [vmem:[%s213 + $0x22c] sm:$0xf]
      %v375 = vld [vmem:[%s213 + $0x230] sm:$0xf]
      %v376 = vld [vmem:[%s213 + $0x234] sm:$0xf]
      %v377 = vld [vmem:[%s213 + $0x238] sm:$0xf]
      %v378 = vld [vmem:[%s213 + $0x23c] sm:$0xf]
      %v379 = vld [vmem:[%s213 + $0x240] sm:$0xf]
      %v380 = vld [vmem:[%s213 + $0x244] sm:$0xf]
      %v381 = vld [vmem:[%s213 + $0x248] sm:$0xf]
      %v382 = vld [vmem:[%s213 + $0x24c] sm:$0xf]
      %v383 = vld [vmem:[%s213 + $0x250] sm:$0xf]
      %v384 = vld [vmem:[%s213 + $0x254] sm:$0xf]
      %v385 = vld [vmem:[%s213 + $0x258] sm:$0xf]
      %v386 = vld [vmem:[%s213 + $0x25c] sm:$0xf]
      %v387 = vld [vmem:[%s213 + $0x260] sm:$0xf]
      %v388 = vld [vmem:[%s213 + $0x264] sm:$0xf]
      %v389 = vld [vmem:[%s213 + $0x268] sm:$0xf]
      %v390 = vld [vmem:[%s213 + $0x26c] sm:$0xf]
      %v391 = vld [vmem:[%s213 + $0x270] sm:$0xf]
      %v392 = vld [vmem:[%s213 + $0x274] sm:$0xf]
      %v393 = vld [vmem:[%s213 + $0x278] sm:$0xf]
      %v394 = vld [vmem:[%s213 + $0x27c] sm:$0xf]
      %v395 = vld [vmem:[%s213 + $0x280] sm:$0xf]
      %v396 = vld [vmem:[%s213 + $0x284] sm:$0xf]
      %v397 = vld [vmem:[%s213 + $0x288] sm:$0xf]
      %v398 = vld [vmem:[%s213 + $0x28c] sm:$0xf]
      %v399 = vld [vmem:[%s213 + $0x290] sm:$0xf]
      %v400 = vld [vmem:[%s213 + $0x294] sm:$0xf]
      %v401 = vld [vmem:[%s213 + $0x298] sm:$0xf]
      %v402 = vld [vmem:[%s213 + $0x29c] sm:$0xf]
      %v403 = vld [vmem:[%s213 + $0x2a0] sm:$0xf]
      %v404 = vld [vmem:[%s213 + $0x2a4] sm:$0xf]
      %v405 = vld [vmem:[%s213 + $0x2a8] sm:$0xf]
      %v406 = vld [vmem:[%s213 + $0x2ac] sm:$0xf]
      %v407 = vld [vmem:[%s213 + $0x2b0] sm:$0xf]
      %v408 = vld [vmem:[%s213 + $0x2b4] sm:$0xf]
      %v409 = vld [vmem:[%s213 + $0x2b8] sm:$0xf]
      %v410 = vld [vmem:[%s213 + $0x2bc] sm:$0xf]
      %v411 = vld [vmem:[%s213 + $0x2c0] sm:$0xf]
      %v412 = vld [vmem:[%s213 + $0x2c4] sm:$0xf]
      %v413 = vld [vmem:[%s213 + $0x2c8] sm:$0xf]
      %v414 = vld [vmem:[%s213 + $0x2cc] sm:$0xf]
      %v415 = vld [vmem:[%s213 + $0x2d0] sm:$0xf]
      %v416 = vld [vmem:[%s213 + $0x2d4] sm:$0xf]
      %v417 = vld [vmem:[%s213 + $0x2d8] sm:$0xf]
      %v418 = vld [vmem:[%s213 + $0x2dc] sm:$0xf]
      %v419 = vld [vmem:[%s213 + $0x2e0] sm:$0xf]
      %v420 = vld [vmem:[%s213 + $0x2e4] sm:$0xf]
      %v421 = vld [vmem:[%s213 + $0x2e8] sm:$0xf]
      %v422 = vld [vmem:[%s213 + $0x2ec] sm:$0xf]
      %v423 = vld [vmem:[%s213 + $0x2f0] sm:$0xf]
      %v424 = vld [vmem:[%s213 + $0x2f4] sm:$0xf]
      %v425 = vld [vmem:[%s213 + $0x2f8] sm:$0xf]
      %v426 = vld [vmem:[%s213 + $0x2fc] sm:$0xf]
      %v427 = vld [vmem:[%s213 + $0x300] sm:$0xf]
      %v428 = vld [vmem:[%s213 + $0x304] sm:$0xf]
      %v429 = vld [vmem:[%s213 + $0x308] sm:$0xf]
      %v430 = vld [vmem:[%s213 + $0x30c] sm:$0xf]
      %v431 = vld [vmem:[%s213 + $0x310] sm:$0xf]
      %v432 = vld [vmem:[%s213 + $0x314] sm:$0xf]
      %v433 = vld [vmem:[%s213 + $0x318] sm:$0xf]
      %v434 = vld [vmem:[%s213 + $0x31c] sm:$0xf]
      %v435 = vld [vmem:[%s213 + $0x320] sm:$0xf]
      %v436 = vld [vmem:[%s213 + $0x324] sm:$0xf]
      %v437 = vld [vmem:[%s213 + $0x328] sm:$0xf]
      %v438 = vld [vmem:[%s213 + $0x32c] sm:$0xf]
      %v439 = vld [vmem:[%s213 + $0x330] sm:$0xf]
      %v440 = vld [vmem:[%s213 + $0x334] sm:$0xf]
      %v441 = vld [vmem:[%s213 + $0x338] sm:$0xf]
      %v442 = vld [vmem:[%s213 + $0x33c] sm:$0xf]
      %v443 = vld [vmem:[%s213 + $0x340] sm:$0xf]
      %v444 = vld [vmem:[%s213 + $0x344] sm:$0xf]
      %v445 = vld [vmem:[%s213 + $0x348] sm:$0xf]
      %v446 = vld [vmem:[%s213 + $0x34c] sm:$0xf]
      %v447 = vld [vmem:[%s213 + $0x350] sm:$0xf]
      %v448 = vld [vmem:[%s213 + $0x354] sm:$0xf]
      %v449 = vld [vmem:[%s213 + $0x358] sm:$0xf]
      %v450 = vld [vmem:[%s213 + $0x35c] sm:$0xf]
      %v451 = vld [vmem:[%s213 + $0x360] sm:$0xf]
      %v452 = vld [vmem:[%s213 + $0x364] sm:$0xf]
      %v453 = vld [vmem:[%s213 + $0x368] sm:$0xf]
      %v454 = vld [vmem:[%s213 + $0x36c] sm:$0xf]
      %v455 = vld [vmem:[%s213 + $0x370] sm:$0xf]
      %v456 = vld [vmem:[%s213 + $0x374] sm:$0xf]
      %v457 = vld [vmem:[%s213 + $0x378] sm:$0xf]
      %v458 = vld [vmem:[%s213 + $0x37c] sm:$0xf]
      %v459 = vld [vmem:[%s213 + $0x380] sm:$0xf]
      %v460 = vld [vmem:[%s213 + $0x384] sm:$0xf]
      %v461 = vld [vmem:[%s213 + $0x388] sm:$0xf]
      %v462 = vld [vmem:[%s213 + $0x38c] sm:$0xf]
      %v463 = vld [vmem:[%s213 + $0x390] sm:$0xf]
      %v464 = vld [vmem:[%s213 + $0x394] sm:$0xf]
      %v465 = vld [vmem:[%s213 + $0x398] sm:$0xf]
      %v466 = vld [vmem:[%s213 + $0x39c] sm:$0xf]
      %v467 = vld [vmem:[%s213 + $0x3a0] sm:$0xf]
      %v468 = vld [vmem:[%s213 + $0x3a4] sm:$0xf]
      %v469 = vld [vmem:[%s213 + $0x3a8] sm:$0xf]
      %v470 = vld [vmem:[%s213 + $0x3ac] sm:$0xf]
      %v471 = vld [vmem:[%s213 + $0x3b0] sm:$0xf]
      %v472 = vld [vmem:[%s213 + $0x3b4] sm:$0xf]
      %v473 = vld [vmem:[%s213 + $0x3b8] sm:$0xf]
      %v474 = vld [vmem:[%s213 + $0x3bc] sm:$0xf]
      %v475 = vld [vmem:[%s213 + $0x3c0] sm:$0xf]
      %v476 = vld [vmem:[%s213 + $0x3c4] sm:$0xf]
      %v477 = vld [vmem:[%s213 + $0x3c8] sm:$0xf]
      %v478 = vld [vmem:[%s213 + $0x3cc] sm:$0xf]
      %v479 = vld [vmem:[%s213 + $0x3d0] sm:$0xf]
      %v480 = vld [vmem:[%s213 + $0x3d4] sm:$0xf]
      %v481 = vld [vmem:[%s213 + $0x3d8] sm:$0xf]
      %v482 = vld [vmem:[%s213 + $0x3dc] sm:$0xf]
      %v483 = vld [vmem:[%s213 + $0x3e0] sm:$0xf]
      %v484 = vld [vmem:[%s213 + $0x3e4] sm:$0xf]
      %v485 = vld [vmem:[%s213 + $0x3e8] sm:$0xf]
      %v486 = vld [vmem:[%s213 + $0x3ec] sm:$0xf]
      %v487 = vld [vmem:[%s213 + $0x3f0] sm:$0xf]
      %v488 = vld [vmem:[%s213 + $0x3f4] sm:$0xf]
      %v489 = vld [vmem:[%s213 + $0x3f8] sm:$0xf]
      %v490 = vld [vmem:[%s213 + $0x3fc] sm:$0xf]
      %v499 = vunpack.c.l.b16 %v227
      %v500 = vunpack.c.h.b16 %v227
      %v501 = vunpack.c.l.b16 %v228
      %v502 = vunpack.c.h.b16 %v228
      %v503 = vunpack.c.l.b16 %v229
      %v504 = vunpack.c.h.b16 %v229
      %v505 = vunpack.c.l.b16 %v230
      %v506 = vunpack.c.h.b16 %v230
      %v507 = vunpack.c.l.b16 %v231
      %v508 = vunpack.c.h.b16 %v231
      %v509 = vunpack.c.l.b16 %v232
      %v510 = vunpack.c.h.b16 %v232
      %v511 = vunpack.c.l.b16 %v233
      %v512 = vunpack.c.h.b16 %v233
      %v513 = vunpack.c.l.b16 %v234
      %v514 = vunpack.c.h.b16 %v234
      %v515 = vpack.c.b16 %v499, %v499
      %v516 = vpack.c.b16 %v500, %v500
      %v517 = vpack.c.b16 %v501, %v501
      %v518 = vpack.c.b16 %v502, %v502
      %v519 = vpack.c.b16 %v503, %v503
      %v520 = vpack.c.b16 %v504, %v504
      %v521 = vpack.c.b16 %v505, %v505
      %v522 = vpack.c.b16 %v506, %v506
      %v523 = vpack.c.b16 %v507, %v507
      %v524 = vpack.c.b16 %v508, %v508
      %v525 = vpack.c.b16 %v509, %v509
      %v526 = vpack.c.b16 %v510, %v510
      %v527 = vpack.c.b16 %v511, %v511
      %v528 = vpack.c.b16 %v512, %v512
      %v529 = vpack.c.b16 %v513, %v513
      %v530 = vpack.c.b16 %v514, %v514
      %v803 = vunpack.c.l.b16 %v235
      %v804 = vunpack.c.l.b16 %v236
      %v805 = vunpack.c.l.b16 %v237
      %v806 = vunpack.c.l.b16 %v238
      %v807 = vunpack.c.l.b16 %v239
      %v808 = vunpack.c.l.b16 %v240
      %v809 = vunpack.c.l.b16 %v241
      %v810 = vunpack.c.l.b16 %v242
      %v811 = vunpack.c.l.b16 %v243
      %v812 = vunpack.c.l.b16 %v244
      %v813 = vunpack.c.l.b16 %v245
      %v814 = vunpack.c.l.b16 %v246
      %v815 = vunpack.c.l.b16 %v247
      %v816 = vunpack.c.l.b16 %v248
      %v817 = vunpack.c.l.b16 %v249
      %v818 = vunpack.c.l.b16 %v250
      %v819 = vunpack.c.l.b16 %v251
      %v820 = vunpack.c.l.b16 %v252
      %v821 = vunpack.c.l.b16 %v253
      %v822 = vunpack.c.l.b16 %v254
      %v823 = vunpack.c.l.b16 %v255
      %v824 = vunpack.c.l.b16 %v256
      %v825 = vunpack.c.l.b16 %v257
      %v826 = vunpack.c.l.b16 %v258
      %v827 = vunpack.c.l.b16 %v259
      %v828 = vunpack.c.l.b16 %v260
      %v829 = vunpack.c.l.b16 %v261
      %v830 = vunpack.c.l.b16 %v262
      %v831 = vunpack.c.l.b16 %v263
      %v832 = vunpack.c.l.b16 %v264
      %v833 = vunpack.c.l.b16 %v265
      %v834 = vunpack.c.l.b16 %v266
      %v835 = vunpack.c.l.b16 %v267
      %v836 = vunpack.c.l.b16 %v268
      %v837 = vunpack.c.l.b16 %v269
      %v838 = vunpack.c.l.b16 %v270
      %v839 = vunpack.c.l.b16 %v271
      %v840 = vunpack.c.l.b16 %v272
      %v841 = vunpack.c.l.b16 %v273
      %v842 = vunpack.c.l.b16 %v274
      %v843 = vunpack.c.l.b16 %v275
      %v844 = vunpack.c.l.b16 %v276
      %v845 = vunpack.c.l.b16 %v277
      %v846 = vunpack.c.l.b16 %v278
      %v847 = vunpack.c.l.b16 %v279
      %v848 = vunpack.c.l.b16 %v280
      %v849 = vunpack.c.l.b16 %v281
      %v850 = vunpack.c.l.b16 %v282
      %v851 = vunpack.c.l.b16 %v283
      %v852 = vunpack.c.l.b16 %v284
      %v853 = vunpack.c.l.b16 %v285
      %v854 = vunpack.c.l.b16 %v286
      %v855 = vunpack.c.l.b16 %v287
      %v856 = vunpack.c.l.b16 %v288
      %v857 = vunpack.c.l.b16 %v289
      %v858 = vunpack.c.l.b16 %v290
      %v859 = vunpack.c.l.b16 %v291
      %v860 = vunpack.c.l.b16 %v292
      %v861 = vunpack.c.l.b16 %v293
      %v862 = vunpack.c.l.b16 %v294
      %v863 = vunpack.c.l.b16 %v295
      %v864 = vunpack.c.l.b16 %v296
      %v865 = vunpack.c.l.b16 %v297
      %v866 = vunpack.c.l.b16 %v298
      %v867 = vunpack.c.l.b16 %v299
      %v868 = vunpack.c.l.b16 %v300
      %v869 = vunpack.c.l.b16 %v301
      %v870 = vunpack.c.l.b16 %v302
      %v871 = vunpack.c.l.b16 %v303
      %v872 = vunpack.c.l.b16 %v304
      %v873 = vunpack.c.l.b16 %v305
      %v874 = vunpack.c.l.b16 %v306
      %v875 = vunpack.c.l.b16 %v307
      %v876 = vunpack.c.l.b16 %v308
      %v877 = vunpack.c.l.b16 %v309
      %v878 = vunpack.c.l.b16 %v310
      %v879 = vunpack.c.l.b16 %v311
      %v880 = vunpack.c.l.b16 %v312
      %v881 = vunpack.c.l.b16 %v313
      %v882 = vunpack.c.l.b16 %v314
      %v883 = vunpack.c.l.b16 %v315
      %v884 = vunpack.c.l.b16 %v316
      %v885 = vunpack.c.l.b16 %v317
      %v886 = vunpack.c.l.b16 %v318
      %v887 = vunpack.c.l.b16 %v319
      %v888 = vunpack.c.l.b16 %v320
      %v889 = vunpack.c.l.b16 %v321
      %v890 = vunpack.c.l.b16 %v322
      %v891 = vunpack.c.l.b16 %v323
      %v892 = vunpack.c.l.b16 %v324
      %v893 = vunpack.c.l.b16 %v325
      %v894 = vunpack.c.l.b16 %v326
      %v895 = vunpack.c.l.b16 %v327
      %v896 = vunpack.c.l.b16 %v328
      %v897 = vunpack.c.l.b16 %v329
      %v898 = vunpack.c.l.b16 %v330
      %v899 = vunpack.c.l.b16 %v331
      %v900 = vunpack.c.l.b16 %v332
      %v901 = vunpack.c.l.b16 %v333
      %v902 = vunpack.c.l.b16 %v334
      %v903 = vunpack.c.l.b16 %v335
      %v904 = vunpack.c.l.b16 %v336
      %v905 = vunpack.c.l.b16 %v337
      %v906 = vunpack.c.l.b16 %v338
      %v907 = vunpack.c.l.b16 %v339
      %v908 = vunpack.c.l.b16 %v340
      %v909 = vunpack.c.l.b16 %v341
      %v910 = vunpack.c.l.b16 %v342
      %v911 = vunpack.c.l.b16 %v343
      %v912 = vunpack.c.l.b16 %v344
      %v913 = vunpack.c.l.b16 %v345
      %v914 = vunpack.c.l.b16 %v346
      %v915 = vunpack.c.l.b16 %v347
      %v916 = vunpack.c.l.b16 %v348
      %v917 = vunpack.c.l.b16 %v349
      %v918 = vunpack.c.l.b16 %v350
      %v919 = vunpack.c.l.b16 %v351
      %v920 = vunpack.c.l.b16 %v352
      %v921 = vunpack.c.l.b16 %v353
      %v922 = vunpack.c.l.b16 %v354
      %v923 = vunpack.c.l.b16 %v355
      %v924 = vunpack.c.l.b16 %v356
      %v925 = vunpack.c.l.b16 %v357
      %v926 = vunpack.c.l.b16 %v358
      %v927 = vunpack.c.l.b16 %v359
      %v928 = vunpack.c.l.b16 %v360
      %v929 = vunpack.c.l.b16 %v361
      %v930 = vunpack.c.l.b16 %v362
      %v931 = vunpack.c.l.b16 %v363
      %v932 = vunpack.c.l.b16 %v364
      %v933 = vunpack.c.l.b16 %v365
      %v934 = vunpack.c.l.b16 %v366
      %v935 = vunpack.c.l.b16 %v367
      %v936 = vunpack.c.l.b16 %v368
      %v937 = vunpack.c.l.b16 %v369
      %v938 = vunpack.c.l.b16 %v370
      %v939 = vunpack.c.l.b16 %v371
      %v940 = vunpack.c.l.b16 %v372
      %v941 = vunpack.c.l.b16 %v373
      %v942 = vunpack.c.l.b16 %v374
      %v943 = vunpack.c.l.b16 %v375
      %v944 = vunpack.c.l.b16 %v376
      %v945 = vunpack.c.l.b16 %v377
      %v946 = vunpack.c.l.b16 %v378
      %v947 = vunpack.c.l.b16 %v379
      %v948 = vunpack.c.l.b16 %v380
      %v949 = vunpack.c.l.b16 %v381
      %v950 = vunpack.c.l.b16 %v382
      %v951 = vunpack.c.l.b16 %v383
      %v952 = vunpack.c.l.b16 %v384
      %v953 = vunpack.c.l.b16 %v385
      %v954 = vunpack.c.l.b16 %v386
      %v955 = vunpack.c.l.b16 %v387
      %v956 = vunpack.c.l.b16 %v388
      %v957 = vunpack.c.l.b16 %v389
      %v958 = vunpack.c.l.b16 %v390
      %v959 = vunpack.c.l.b16 %v391
      %v960 = vunpack.c.l.b16 %v392
      %v961 = vunpack.c.l.b16 %v393
      %v962 = vunpack.c.l.b16 %v394
      %v963 = vunpack.c.l.b16 %v395
      %v964 = vunpack.c.l.b16 %v396
      %v965 = vunpack.c.l.b16 %v397
      %v966 = vunpack.c.l.b16 %v398
      %v967 = vunpack.c.l.b16 %v399
      %v968 = vunpack.c.l.b16 %v400
      %v969 = vunpack.c.l.b16 %v401
      %v970 = vunpack.c.l.b16 %v402
      %v971 = vunpack.c.l.b16 %v403
      %v972 = vunpack.c.l.b16 %v404
      %v973 = vunpack.c.l.b16 %v405
      %v974 = vunpack.c.l.b16 %v406
      %v975 = vunpack.c.l.b16 %v407
      %v976 = vunpack.c.l.b16 %v408
      %v977 = vunpack.c.l.b16 %v409
      %v978 = vunpack.c.l.b16 %v410
      %v979 = vunpack.c.l.b16 %v411
      %v980 = vunpack.c.l.b16 %v412
      %v981 = vunpack.c.l.b16 %v413
      %v982 = vunpack.c.l.b16 %v414
      %v983 = vunpack.c.l.b16 %v415
      %v984 = vunpack.c.l.b16 %v416
      %v985 = vunpack.c.l.b16 %v417
      %v986 = vunpack.c.l.b16 %v418
      %v987 = vunpack.c.l.b16 %v419
      %v988 = vunpack.c.l.b16 %v420
      %v989 = vunpack.c.l.b16 %v421
      %v990 = vunpack.c.l.b16 %v422
      %v991 = vunpack.c.l.b16 %v423
      %v992 = vunpack.c.l.b16 %v424
      %v993 = vunpack.c.l.b16 %v425
      %v994 = vunpack.c.l.b16 %v426
      %v995 = vunpack.c.l.b16 %v427
      %v996 = vunpack.c.l.b16 %v428
      %v997 = vunpack.c.l.b16 %v429
      %v998 = vunpack.c.l.b16 %v430
      %v999 = vunpack.c.l.b16 %v431
      %v1000 = vunpack.c.l.b16 %v432
      %v1001 = vunpack.c.l.b16 %v433
      %v1002 = vunpack.c.l.b16 %v434
      %v1003 = vunpack.c.l.b16 %v435
      %v1004 = vunpack.c.l.b16 %v436
      %v1005 = vunpack.c.l.b16 %v437
      %v1006 = vunpack.c.l.b16 %v438
      %v1007 = vunpack.c.l.b16 %v439
      %v1008 = vunpack.c.l.b16 %v440
      %v1009 = vunpack.c.l.b16 %v441
      %v1010 = vunpack.c.l.b16 %v442
      %v1011 = vunpack.c.l.b16 %v443
      %v1012 = vunpack.c.l.b16 %v444
      %v1013 = vunpack.c.l.b16 %v445
      %v1014 = vunpack.c.l.b16 %v446
      %v1015 = vunpack.c.l.b16 %v447
      %v1016 = vunpack.c.l.b16 %v448
      %v1017 = vunpack.c.l.b16 %v449
      %v1018 = vunpack.c.l.b16 %v450
      %v1019 = vunpack.c.l.b16 %v451
      %v1020 = vunpack.c.l.b16 %v452
      %v1021 = vunpack.c.l.b16 %v453
      %v1022 = vunpack.c.l.b16 %v454
      %v1023 = vunpack.c.l.b16 %v455
      %v1024 = vunpack.c.l.b16 %v456
      %v1025 = vunpack.c.l.b16 %v457
      %v1026 = vunpack.c.l.b16 %v458
      %v1027 = vunpack.c.l.b16 %v459
      %v1028 = vunpack.c.l.b16 %v460
      %v1029 = vunpack.c.l.b16 %v461
      %v1030 = vunpack.c.l.b16 %v462
      %v1031 = vunpack.c.l.b16 %v463
      %v1032 = vunpack.c.l.b16 %v464
      %v1033 = vunpack.c.l.b16 %v465
      %v1034 = vunpack.c.l.b16 %v466
      %v1035 = vunpack.c.l.b16 %v467
      %v1036 = vunpack.c.l.b16 %v468
      %v1037 = vunpack.c.l.b16 %v469
      %v1038 = vunpack.c.l.b16 %v470
      %v1039 = vunpack.c.l.b16 %v471
      %v1040 = vunpack.c.l.b16 %v472
      %v1041 = vunpack.c.l.b16 %v473
      %v1042 = vunpack.c.l.b16 %v474
      %v1043 = vunpack.c.l.b16 %v475
      %v1044 = vunpack.c.l.b16 %v476
      %v1045 = vunpack.c.l.b16 %v477
      %v1046 = vunpack.c.l.b16 %v478
      %v1047 = vunpack.c.l.b16 %v479
      %v1048 = vunpack.c.l.b16 %v480
      %v1049 = vunpack.c.l.b16 %v481
      %v1050 = vunpack.c.l.b16 %v482
      %v1051 = vunpack.c.l.b16 %v483
      %v1052 = vunpack.c.l.b16 %v484
      %v1053 = vunpack.c.l.b16 %v485
      %v1054 = vunpack.c.l.b16 %v486
      %v1055 = vunpack.c.l.b16 %v487
      %v1056 = vunpack.c.l.b16 %v488
      %v1057 = vunpack.c.l.b16 %v489
      %v1058 = vunpack.c.l.b16 %v490
      %v1059 = vpack.c.b16 %v804, %v803
      %v1060 = vpack.c.b16 %v806, %v805
      %v1061 = vpack.c.b16 %v808, %v807
      %v1062 = vpack.c.b16 %v810, %v809
      %v1063 = vpack.c.b16 %v812, %v811
      %v1064 = vpack.c.b16 %v814, %v813
      %v1065 = vpack.c.b16 %v816, %v815
      %v1066 = vpack.c.b16 %v818, %v817
      %v1067 = vpack.c.b16 %v820, %v819
      %v1068 = vpack.c.b16 %v822, %v821
      %v1069 = vpack.c.b16 %v824, %v823
      %v1070 = vpack.c.b16 %v826, %v825
      %v1071 = vpack.c.b16 %v828, %v827
      %v1072 = vpack.c.b16 %v830, %v829
      %v1073 = vpack.c.b16 %v832, %v831
      %v1074 = vpack.c.b16 %v834, %v833
      %v1075 = vpack.c.b16 %v836, %v835
      %v1076 = vpack.c.b16 %v838, %v837
      %v1077 = vpack.c.b16 %v840, %v839
      %v1078 = vpack.c.b16 %v842, %v841
      %v1079 = vpack.c.b16 %v844, %v843
      %v1080 = vpack.c.b16 %v846, %v845
      %v1081 = vpack.c.b16 %v848, %v847
      %v1082 = vpack.c.b16 %v850, %v849
      %v1083 = vpack.c.b16 %v852, %v851
      %v1084 = vpack.c.b16 %v854, %v853
      %v1085 = vpack.c.b16 %v856, %v855
      %v1086 = vpack.c.b16 %v858, %v857
      %v1087 = vpack.c.b16 %v860, %v859
      %v1088 = vpack.c.b16 %v862, %v861
      %v1089 = vpack.c.b16 %v864, %v863
      %v1090 = vpack.c.b16 %v866, %v865
      %v1091 = vpack.c.b16 %v868, %v867
      %v1092 = vpack.c.b16 %v870, %v869
      %v1093 = vpack.c.b16 %v872, %v871
      %v1094 = vpack.c.b16 %v874, %v873
      %v1095 = vpack.c.b16 %v876, %v875
      %v1096 = vpack.c.b16 %v878, %v877
      %v1097 = vpack.c.b16 %v880, %v879
      %v1098 = vpack.c.b16 %v882, %v881
      %v1099 = vpack.c.b16 %v884, %v883
      %v1100 = vpack.c.b16 %v886, %v885
      %v1101 = vpack.c.b16 %v888, %v887
      %v1102 = vpack.c.b16 %v890, %v889
      %v1103 = vpack.c.b16 %v892, %v891
      %v1104 = vpack.c.b16 %v894, %v893
      %v1105 = vpack.c.b16 %v896, %v895
      %v1106 = vpack.c.b16 %v898, %v897
      %v1107 = vpack.c.b16 %v900, %v899
      %v1108 = vpack.c.b16 %v902, %v901
      %v1109 = vpack.c.b16 %v904, %v903
      %v1110 = vpack.c.b16 %v906, %v905
      %v1111 = vpack.c.b16 %v908, %v907
      %v1112 = vpack.c.b16 %v910, %v909
      %v1113 = vpack.c.b16 %v912, %v911
      %v1114 = vpack.c.b16 %v914, %v913
      %v1115 = vpack.c.b16 %v916, %v915
      %v1116 = vpack.c.b16 %v918, %v917
      %v1117 = vpack.c.b16 %v920, %v919
      %v1118 = vpack.c.b16 %v922, %v921
      %v1119 = vpack.c.b16 %v924, %v923
      %v1120 = vpack.c.b16 %v926, %v925
      %v1121 = vpack.c.b16 %v928, %v927
      %v1122 = vpack.c.b16 %v930, %v929
      %v1123 = vpack.c.b16 %v932, %v931
      %v1124 = vpack.c.b16 %v934, %v933
      %v1125 = vpack.c.b16 %v936, %v935
      %v1126 = vpack.c.b16 %v938, %v937
      %v1127 = vpack.c.b16 %v940, %v939
      %v1128 = vpack.c.b16 %v942, %v941
      %v1129 = vpack.c.b16 %v944, %v943
      %v1130 = vpack.c.b16 %v946, %v945
      %v1131 = vpack.c.b16 %v948, %v947
      %v1132 = vpack.c.b16 %v950, %v949
      %v1133 = vpack.c.b16 %v952, %v951
      %v1134 = vpack.c.b16 %v954, %v953
      %v1135 = vpack.c.b16 %v956, %v955
      %v1136 = vpack.c.b16 %v958, %v957
      %v1137 = vpack.c.b16 %v960, %v959
      %v1138 = vpack.c.b16 %v962, %v961
      %v1139 = vpack.c.b16 %v964, %v963
      %v1140 = vpack.c.b16 %v966, %v965
      %v1141 = vpack.c.b16 %v968, %v967
      %v1142 = vpack.c.b16 %v970, %v969
      %v1143 = vpack.c.b16 %v972, %v971
      %v1144 = vpack.c.b16 %v974, %v973
      %v1145 = vpack.c.b16 %v976, %v975
      %v1146 = vpack.c.b16 %v978, %v977
      %v1147 = vpack.c.b16 %v980, %v979
      %v1148 = vpack.c.b16 %v982, %v981
      %v1149 = vpack.c.b16 %v984, %v983
      %v1150 = vpack.c.b16 %v986, %v985
      %v1151 = vpack.c.b16 %v988, %v987
      %v1152 = vpack.c.b16 %v990, %v989
      %v1153 = vpack.c.b16 %v992, %v991
      %v1154 = vpack.c.b16 %v994, %v993
      %v1155 = vpack.c.b16 %v996, %v995
      %v1156 = vpack.c.b16 %v998, %v997
      %v1157 = vpack.c.b16 %v1000, %v999
      %v1158 = vpack.c.b16 %v1002, %v1001
      %v1159 = vpack.c.b16 %v1004, %v1003
      %v1160 = vpack.c.b16 %v1006, %v1005
      %v1161 = vpack.c.b16 %v1008, %v1007
      %v1162 = vpack.c.b16 %v1010, %v1009
      %v1163 = vpack.c.b16 %v1012, %v1011
      %v1164 = vpack.c.b16 %v1014, %v1013
      %v1165 = vpack.c.b16 %v1016, %v1015
      %v1166 = vpack.c.b16 %v1018, %v1017
      %v1167 = vpack.c.b16 %v1020, %v1019
      %v1168 = vpack.c.b16 %v1022, %v1021
      %v1169 = vpack.c.b16 %v1024, %v1023
      %v1170 = vpack.c.b16 %v1026, %v1025
      %v1171 = vpack.c.b16 %v1028, %v1027
      %v1172 = vpack.c.b16 %v1030, %v1029
      %v1173 = vpack.c.b16 %v1032, %v1031
      %v1174 = vpack.c.b16 %v1034, %v1033
      %v1175 = vpack.c.b16 %v1036, %v1035
      %v1176 = vpack.c.b16 %v1038, %v1037
      %v1177 = vpack.c.b16 %v1040, %v1039
      %v1178 = vpack.c.b16 %v1042, %v1041
      %v1179 = vpack.c.b16 %v1044, %v1043
      %v1180 = vpack.c.b16 %v1046, %v1045
      %v1181 = vpack.c.b16 %v1048, %v1047
      %v1182 = vpack.c.b16 %v1050, %v1049
      %v1183 = vpack.c.b16 %v1052, %v1051
      %v1184 = vpack.c.b16 %v1054, %v1053
      %v1185 = vpack.c.b16 %v1056, %v1055
      %v1186 = vpack.c.b16 %v1058, %v1057
      %1315 = vmatprep.subr.bf16.mxu0 0
      %1316 = vmatpush1.bf16.msra.mxu0 %v1059
      %1317 = vmatprep.subr.bf16.mxu0 0
      %1318 = vmatpush1.bf16.msra.mxu0 %v1060
      %1319 = vmatprep.subr.bf16.mxu0 0
      %1320 = vmatpush1.bf16.msra.mxu0 %v1061
      %1321 = vmatprep.subr.bf16.mxu0 0
      %1322 = vmatpush1.bf16.msra.mxu0 %v1062
      %1323 = vmatprep.subr.bf16.mxu0 0
      %1324 = vmatpush1.bf16.msra.mxu0 %v1063
      %1325 = vmatprep.subr.bf16.mxu0 0
      %1326 = vmatpush1.bf16.msra.mxu0 %v1064
      %1327 = vmatprep.subr.bf16.mxu0 0
      %1328 = vmatpush1.bf16.msra.mxu0 %v1065
      %1329 = vmatprep.subr.bf16.mxu0 0
      %1330 = vmatpush1.bf16.msra.mxu0 %v1066
      %1331 = vmatprep.subr.bf16.mxu0 0
      %1332 = vmatpush1.bf16.msra.mxu0 %v1067
      %1333 = vmatprep.subr.bf16.mxu0 0
      %1334 = vmatpush1.bf16.msra.mxu0 %v1068
      %1335 = vmatprep.subr.bf16.mxu0 0
      %1336 = vmatpush1.bf16.msra.mxu0 %v1069
      %1337 = vmatprep.subr.bf16.mxu0 0
      %1338 = vmatpush1.bf16.msra.mxu0 %v1070
      %1339 = vmatprep.subr.bf16.mxu0 0
      %1340 = vmatpush1.bf16.msra.mxu0 %v1071
      %1341 = vmatprep.subr.bf16.mxu0 0
      %1342 = vmatpush1.bf16.msra.mxu0 %v1072
      %1343 = vmatprep.subr.bf16.mxu0 0
      %1344 = vmatpush1.bf16.msra.mxu0 %v1073
      %1345 = vmatprep.subr.bf16.mxu0 0
      %1346 = vmatpush1.bf16.msra.mxu0 %v1074
      %1347 = vmatprep.mubr.bf16.mxu0 %v516
      %1348 = vmatmul.mubr.bf16.gmra.mrb[0].mxu0 %v515
      %v1349 = vpop.f32.mrb[0].mxu0
      %v1350 = vadd.f32 0.0, %v1349
      %v1351 = vpop.f32.mrb[0].mxu0
      %v1352 = vpop.f32.mrb[0].mxu0
      %v1353 = vpop.f32.mrb[0].mxu0
      %1354 = vdwg.mxu0
      %1355 = vmatprep.subr.bf16.mxu0 0
      %1356 = vmatpush1.bf16.msra.mxu0 %v1075
      %1357 = vmatprep.subr.bf16.mxu0 0
      %1358 = vmatpush1.bf16.msra.mxu0 %v1076
      %1359 = vmatprep.subr.bf16.mxu0 0
      %1360 = vmatpush1.bf16.msra.mxu0 %v1077
      %1361 = vmatprep.subr.bf16.mxu0 0
      %1362 = vmatpush1.bf16.msra.mxu0 %v1078
      %1363 = vmatprep.subr.bf16.mxu0 0
      %1364 = vmatpush1.bf16.msra.mxu0 %v1079
      %1365 = vmatprep.subr.bf16.mxu0 0
      %1366 = vmatpush1.bf16.msra.mxu0 %v1080
      %1367 = vmatprep.subr.bf16.mxu0 0
      %1368 = vmatpush1.bf16.msra.mxu0 %v1081
      %1369 = vmatprep.subr.bf16.mxu0 0
      %1370 = vmatpush1.bf16.msra.mxu0 %v1082
      %1371 = vmatprep.subr.bf16.mxu0 0
      %1372 = vmatpush1.bf16.msra.mxu0 %v1083
      %1373 = vmatprep.subr.bf16.mxu0 0
      %1374 = vmatpush1.bf16.msra.mxu0 %v1084
      %1375 = vmatprep.subr.bf16.mxu0 0
      %1376 = vmatpush1.bf16.msra.mxu0 %v1085
      %1377 = vmatprep.subr.bf16.mxu0 0
      %1378 = vmatpush1.bf16.msra.mxu0 %v1086
      %1379 = vmatprep.subr.bf16.mxu0 0
      %1380 = vmatpush1.bf16.msra.mxu0 %v1087
      %1381 = vmatprep.subr.bf16.mxu0 0
      %1382 = vmatpush1.bf16.msra.mxu0 %v1088
      %1383 = vmatprep.subr.bf16.mxu0 0
      %1384 = vmatpush1.bf16.msra.mxu0 %v1089
      %1385 = vmatprep.subr.bf16.mxu0 0
      %1386 = vmatpush1.bf16.msra.mxu0 %v1090
      %1387 = vmatprep.mubr.bf16.mxu0 %v518
      %1388 = vmatmul.mubr.bf16.gmra.mrb[0].mxu0 %v517
      %v1389 = vpop.f32.mrb[0].mxu0
      %v1390 = vadd.f32 %v1350, %v1389
      %v1391 = vpop.f32.mrb[0].mxu0
      %v1392 = vpop.f32.mrb[0].mxu0
      %v1393 = vpop.f32.mrb[0].mxu0
      %1394 = vdwg.mxu0
      %1395 = vmatprep.subr.bf16.mxu0 0
      %1396 = vmatpush1.bf16.msra.mxu0 %v1091
      %1397 = vmatprep.subr.bf16.mxu0 0
      %1398 = vmatpush1.bf16.msra.mxu0 %v1092
      %1399 = vmatprep.subr.bf16.mxu0 0
      %1400 = vmatpush1.bf16.msra.mxu0 %v1093
      %1401 = vmatprep.subr.bf16.mxu0 0
      %1402 = vmatpush1.bf16.msra.mxu0 %v1094
      %1403 = vmatprep.subr.bf16.mxu0 0
      %1404 = vmatpush1.bf16.msra.mxu0 %v1095
      %1405 = vmatprep.subr.bf16.mxu0 0
      %1406 = vmatpush1.bf16.msra.mxu0 %v1096
      %1407 = vmatprep.subr.bf16.mxu0 0
      %1408 = vmatpush1.bf16.msra.mxu0 %v1097
      %1409 = vmatprep.subr.bf16.mxu0 0
      %1410 = vmatpush1.bf16.msra.mxu0 %v1098
      %1411 = vmatprep.subr.bf16.mxu0 0
      %1412 = vmatpush1.bf16.msra.mxu0 %v1099
      %1413 = vmatprep.subr.bf16.mxu0 0
      %1414 = vmatpush1.bf16.msra.mxu0 %v1100
      %1415 = vmatprep.subr.bf16.mxu0 0
      %1416 = vmatpush1.bf16.msra.mxu0 %v1101
      %1417 = vmatprep.subr.bf16.mxu0 0
      %1418 = vmatpush1.bf16.msra.mxu0 %v1102
      %1419 = vmatprep.subr.bf16.mxu0 0
      %1420 = vmatpush1.bf16.msra.mxu0 %v1103
      %1421 = vmatprep.subr.bf16.mxu0 0
      %1422 = vmatpush1.bf16.msra.mxu0 %v1104
      %1423 = vmatprep.subr.bf16.mxu0 0
      %1424 = vmatpush1.bf16.msra.mxu0 %v1105
      %1425 = vmatprep.subr.bf16.mxu0 0
      %1426 = vmatpush1.bf16.msra.mxu0 %v1106
      %1427 = vmatprep.mubr.bf16.mxu0 %v520
      %1428 = vmatmul.mubr.bf16.gmra.mrb[0].mxu0 %v519
      %v1429 = vpop.f32.mrb[0].mxu0
      %v1430 = vadd.f32 %v1390, %v1429
      %v1431 = vpop.f32.mrb[0].mxu0
      %v1432 = vpop.f32.mrb[0].mxu0
      %v1433 = vpop.f32.mrb[0].mxu0
      %1434 = vdwg.mxu0
      %1435 = vmatprep.subr.bf16.mxu0 0
      %1436 = vmatpush1.bf16.msra.mxu0 %v1107
      %1437 = vmatprep.subr.bf16.mxu0 0
      %1438 = vmatpush1.bf16.msra.mxu0 %v1108
      %1439 = vmatprep.subr.bf16.mxu0 0
      %1440 = vmatpush1.bf16.msra.mxu0 %v1109
      %1441 = vmatprep.subr.bf16.mxu0 0
      %1442 = vmatpush1.bf16.msra.mxu0 %v1110
      %1443 = vmatprep.subr.bf16.mxu0 0
      %1444 = vmatpush1.bf16.msra.mxu0 %v1111
      %1445 = vmatprep.subr.bf16.mxu0 0
      %1446 = vmatpush1.bf16.msra.mxu0 %v1112
      %1447 = vmatprep.subr.bf16.mxu0 0
      %1448 = vmatpush1.bf16.msra.mxu0 %v1113
      %1449 = vmatprep.subr.bf16.mxu0 0
      %1450 = vmatpush1.bf16.msra.mxu0 %v1114
      %1451 = vmatprep.subr.bf16.mxu0 0
      %1452 = vmatpush1.bf16.msra.mxu0 %v1115
      %1453 = vmatprep.subr.bf16.mxu0 0
      %1454 = vmatpush1.bf16.msra.mxu0 %v1116
      %1455 = vmatprep.subr.bf16.mxu0 0
      %1456 = vmatpush1.bf16.msra.mxu0 %v1117
      %1457 = vmatprep.subr.bf16.mxu0 0
      %1458 = vmatpush1.bf16.msra.mxu0 %v1118
      %1459 = vmatprep.subr.bf16.mxu0 0
      %1460 = vmatpush1.bf16.msra.mxu0 %v1119
      %1461 = vmatprep.subr.bf16.mxu0 0
      %1462 = vmatpush1.bf16.msra.mxu0 %v1120
      %1463 = vmatprep.subr.bf16.mxu0 0
      %1464 = vmatpush1.bf16.msra.mxu0 %v1121
      %1465 = vmatprep.subr.bf16.mxu0 0
      %1466 = vmatpush1.bf16.msra.mxu0 %v1122
      %1467 = vmatprep.mubr.bf16.mxu0 %v522
      %1468 = vmatmul.mubr.bf16.gmra.mrb[0].mxu0 %v521
      %v1469 = vpop.f32.mrb[0].mxu0
      %v1470 = vadd.f32 %v1430, %v1469
      %v1471 = vpop.f32.mrb[0].mxu0
      %v1472 = vpop.f32.mrb[0].mxu0
      %v1473 = vpop.f32.mrb[0].mxu0
      %1474 = vdwg.mxu0
      %1475 = vmatprep.subr.bf16.mxu0 0
      %1476 = vmatpush1.bf16.msra.mxu0 %v1123
      %1477 = vmatprep.subr.bf16.mxu0 0
      %1478 = vmatpush1.bf16.msra.mxu0 %v1124
      %1479 = vmatprep.subr.bf16.mxu0 0
      %1480 = vmatpush1.bf16.msra.mxu0 %v1125
      %1481 = vmatprep.subr.bf16.mxu0 0
      %1482 = vmatpush1.bf16.msra.mxu0 %v1126
      %1483 = vmatprep.subr.bf16.mxu0 0
      %1484 = vmatpush1.bf16.msra.mxu0 %v1127
      %1485 = vmatprep.subr.bf16.mxu0 0
      %1486 = vmatpush1.bf16.msra.mxu0 %v1128
      %1487 = vmatprep.subr.bf16.mxu0 0
      %1488 = vmatpush1.bf16.msra.mxu0 %v1129
      %1489 = vmatprep.subr.bf16.mxu0 0
      %1490 = vmatpush1.bf16.msra.mxu0 %v1130
      %1491 = vmatprep.subr.bf16.mxu0 0
      %1492 = vmatpush1.bf16.msra.mxu0 %v1131
      %1493 = vmatprep.subr.bf16.mxu0 0
      %1494 = vmatpush1.bf16.msra.mxu0 %v1132
      %1495 = vmatprep.subr.bf16.mxu0 0
      %1496 = vmatpush1.bf16.msra.mxu0 %v1133
      %1497 = vmatprep.subr.bf16.mxu0 0
      %1498 = vmatpush1.bf16.msra.mxu0 %v1134
      %1499 = vmatprep.subr.bf16.mxu0 0
      %1500 = vmatpush1.bf16.msra.mxu0 %v1135
      %1501 = vmatprep.subr.bf16.mxu0 0
      %1502 = vmatpush1.bf16.msra.mxu0 %v1136
      %1503 = vmatprep.subr.bf16.mxu0 0
      %1504 = vmatpush1.bf16.msra.mxu0 %v1137
      %1505 = vmatprep.subr.bf16.mxu0 0
      %1506 = vmatpush1.bf16.msra.mxu0 %v1138
      %1507 = vmatprep.mubr.bf16.mxu0 %v524
      %1508 = vmatmul.mubr.bf16.gmra.mrb[0].mxu0 %v523
      %v1509 = vpop.f32.mrb[0].mxu0
      %v1510 = vadd.f32 %v1470, %v1509
      %v1511 = vpop.f32.mrb[0].mxu0
      %v1512 = vpop.f32.mrb[0].mxu0
      %v1513 = vpop.f32.mrb[0].mxu0
      %1514 = vdwg.mxu0
      %1515 = vmatprep.subr.bf16.mxu0 0
      %1516 = vmatpush1.bf16.msra.mxu0 %v1139
      %1517 = vmatprep.subr.bf16.mxu0 0
      %1518 = vmatpush1.bf16.msra.mxu0 %v1140
      %1519 = vmatprep.subr.bf16.mxu0 0
      %1520 = vmatpush1.bf16.msra.mxu0 %v1141
      %1521 = vmatprep.subr.bf16.mxu0 0
      %1522 = vmatpush1.bf16.msra.mxu0 %v1142
      %1523 = vmatprep.subr.bf16.mxu0 0
      %1524 = vmatpush1.bf16.msra.mxu0 %v1143
      %1525 = vmatprep.subr.bf16.mxu0 0
      %1526 = vmatpush1.bf16.msra.mxu0 %v1144
      %1527 = vmatprep.subr.bf16.mxu0 0
      %1528 = vmatpush1.bf16.msra.mxu0 %v1145
      %1529 = vmatprep.subr.bf16.mxu0 0
      %1530 = vmatpush1.bf16.msra.mxu0 %v1146
      %1531 = vmatprep.subr.bf16.mxu0 0
      %1532 = vmatpush1.bf16.msra.mxu0 %v1147
      %1533 = vmatprep.subr.bf16.mxu0 0
      %1534 = vmatpush1.bf16.msra.mxu0 %v1148
      %1535 = vmatprep.subr.bf16.mxu0 0
      %1536 = vmatpush1.bf16.msra.mxu0 %v1149
      %1537 = vmatprep.subr.bf16.mxu0 0
      %1538 = vmatpush1.bf16.msra.mxu0 %v1150
      %1539 = vmatprep.subr.bf16.mxu0 0
      %1540 = vmatpush1.bf16.msra.mxu0 %v1151
      %1541 = vmatprep.subr.bf16.mxu0 0
      %1542 = vmatpush1.bf16.msra.mxu0 %v1152
      %1543 = vmatprep.subr.bf16.mxu0 0
      %1544 = vmatpush1.bf16.msra.mxu0 %v1153
      %1545 = vmatprep.subr.bf16.mxu0 0
      %1546 = vmatpush1.bf16.msra.mxu0 %v1154
      %1547 = vmatprep.mubr.bf16.mxu0 %v526
      %1548 = vmatmul.mubr.bf16.gmra.mrb[0].mxu0 %v525
      %v1549 = vpop.f32.mrb[0].mxu0
      %v1550 = vadd.f32 %v1510, %v1549
      %v1551 = vpop.f32.mrb[0].mxu0
      %v1552 = vpop.f32.mrb[0].mxu0
      %v1553 = vpop.f32.mrb[0].mxu0
      %1554 = vdwg.mxu0
      %1555 = vmatprep.subr.bf16.mxu0 0
      %1556 = vmatpush1.bf16.msra.mxu0 %v1155
      %1557 = vmatprep.subr.bf16.mxu0 0
      %1558 = vmatpush1.bf16.msra.mxu0 %v1156
      %1559 = vmatprep.subr.bf16.mxu0 0
      %1560 = vmatpush1.bf16.msra.mxu0 %v1157
      %1561 = vmatprep.subr.bf16.mxu0 0
      %1562 = vmatpush1.bf16.msra.mxu0 %v1158
      %1563 = vmatprep.subr.bf16.mxu0 0
      %1564 = vmatpush1.bf16.msra.mxu0 %v1159
      %1565 = vmatprep.subr.bf16.mxu0 0
      %1566 = vmatpush1.bf16.msra.mxu0 %v1160
      %1567 = vmatprep.subr.bf16.mxu0 0
      %1568 = vmatpush1.bf16.msra.mxu0 %v1161
      %1569 = vmatprep.subr.bf16.mxu0 0
      %1570 = vmatpush1.bf16.msra.mxu0 %v1162
      %1571 = vmatprep.subr.bf16.mxu0 0
      %1572 = vmatpush1.bf16.msra.mxu0 %v1163
      %1573 = vmatprep.subr.bf16.mxu0 0
      %1574 = vmatpush1.bf16.msra.mxu0 %v1164
      %1575 = vmatprep.subr.bf16.mxu0 0
      %1576 = vmatpush1.bf16.msra.mxu0 %v1165
      %1577 = vmatprep.subr.bf16.mxu0 0
      %1578 = vmatpush1.bf16.msra.mxu0 %v1166
      %1579 = vmatprep.subr.bf16.mxu0 0
      %1580 = vmatpush1.bf16.msra.mxu0 %v1167
      %1581 = vmatprep.subr.bf16.mxu0 0
      %1582 = vmatpush1.bf16.msra.mxu0 %v1168
      %1583 = vmatprep.subr.bf16.mxu0 0
      %1584 = vmatpush1.bf16.msra.mxu0 %v1169
      %1585 = vmatprep.subr.bf16.mxu0 0
      %1586 = vmatpush1.bf16.msra.mxu0 %v1170
      %1587 = vmatprep.mubr.bf16.mxu0 %v528
      %1588 = vmatmul.mubr.bf16.gmra.mrb[0].mxu0 %v527
      %v1589 = vpop.f32.mrb[0].mxu0
      %v1590 = vadd.f32 %v1550, %v1589
      %v1591 = vpop.f32.mrb[0].mxu0
      %v1592 = vpop.f32.mrb[0].mxu0
      %v1593 = vpop.f32.mrb[0].mxu0
      %1594 = vdwg.mxu0
      %1595 = vmatprep.subr.bf16.mxu0 0
      %1596 = vmatpush1.bf16.msra.mxu0 %v1171
      %1597 = vmatprep.subr.bf16.mxu0 0
      %1598 = vmatpush1.bf16.msra.mxu0 %v1172
      %1599 = vmatprep.subr.bf16.mxu0 0
      %1600 = vmatpush1.bf16.msra.mxu0 %v1173
      %1601 = vmatprep.subr.bf16.mxu0 0
      %1602 = vmatpush1.bf16.msra.mxu0 %v1174
      %1603 = vmatprep.subr.bf16.mxu0 0
      %1604 = vmatpush1.bf16.msra.mxu0 %v1175
      %1605 = vmatprep.subr.bf16.mxu0 0
      %1606 = vmatpush1.bf16.msra.mxu0 %v1176
      %1607 = vmatprep.subr.bf16.mxu0 0
      %1608 = vmatpush1.bf16.msra.mxu0 %v1177
      %1609 = vmatprep.subr.bf16.mxu0 0
      %1610 = vmatpush1.bf16.msra.mxu0 %v1178
      %1611 = vmatprep.subr.bf16.mxu0 0
      %1612 = vmatpush1.bf16.msra.mxu0 %v1179
      %1613 = vmatprep.subr.bf16.mxu0 0
      %1614 = vmatpush1.bf16.msra.mxu0 %v1180
      %1615 = vmatprep.subr.bf16.mxu0 0
      %1616 = vmatpush1.bf16.msra.mxu0 %v1181
      %1617 = vmatprep.subr.bf16.mxu0 0
      %1618 = vmatpush1.bf16.msra.mxu0 %v1182
      %1619 = vmatprep.subr.bf16.mxu0 0
      %1620 = vmatpush1.bf16.msra.mxu0 %v1183
      %1621 = vmatprep.subr.bf16.mxu0 0
      %1622 = vmatpush1.bf16.msra.mxu0 %v1184
      %1623 = vmatprep.subr.bf16.mxu0 0
      %1624 = vmatpush1.bf16.msra.mxu0 %v1185
      %1625 = vmatprep.subr.bf16.mxu0 0
      %1626 = vmatpush1.bf16.msra.mxu0 %v1186
      %1627 = vmatprep.mubr.bf16.mxu0 %v530
      %1628 = vmatmul.mubr.bf16.gmra.mrb[0].mxu0 %v529
      %v1629 = vpop.f32.mrb[0].mxu0
      %v1630 = vadd.f32 %v1590, %v1629
      %v1631 = vpop.f32.mrb[0].mxu0
      %v1632 = vpop.f32.mrb[0].mxu0
      %v1633 = vpop.f32.mrb[0].mxu0
      %1634 = vdwg.mxu0
      %v1635 = vadd.f32 %v226, %v1630
      %vm1636 = vcmask 261120
      %1637 = vst.msk [vmem:[#allocation2] sm:$0xff] %vm1636, %v1635
      %p1638 = scmp.eq.s32.totalorder %s19, 1
      // Predicated region
      $region37: #{landtrans_forward.16} parent=31 // pred_check
        %p1639 = pneg %p1638
      $region38: #{landtrans_forward.16} parent=31 // pred_check_branch
        %1641 = sbr.rel (%p1639) target = $region40
      $region39: #{landtrans_forward.16} parent=31 // pred_region
        %v1642 = vld [vmem:[#allocation2] sm:$0xff]
        %v1643 = vld [vmem:[%s2] sm:$0x1]
        %v1645 = vlaneseq
        %v1646 = vshrl.u32 %v1645, 7
        %v1647 = vsub.s32 0, %v1646
        %v1648 = vrot.slane %v1643, %v1647
        %v1650 = vadd.f32 %v1642, %v1648
        %v1651 = vpack.c.bf16 %v1650, %v1650
        %vm1652 = vcmask 257024
        %1653 = vst.msk [vmem:[%s218] sm:$0xf] %vm1652, %v1651
      $region40: #{landtrans_forward.16} parent=31 // pred_fallthru
        _
      %p1654 = scmp.lt.s32.totalorder %s18, 0
      %s1655 = scalar_select %p1654, %s18, 0
      %s1656 = smul.addr %s1655, 4
      %s1657 = scalar_lea.vmem %s3, %s1656
      // Predicated region
      $region41: #{landtrans_forward.16} parent=31 // pred_check
        %p1658 = pneg %p119
      $region42: #{landtrans_forward.16} parent=31 // pred_check_branch
        %1660 = sbr.rel (%p1658) target = $region44
      $region43: #{landtrans_forward.16} parent=31 // pred_region
        _
      $region44: #{landtrans_forward.16} parent=31 // pred_fallthru
        _
      // Predicated region
      $region45: #{landtrans_forward.16} parent=31 // pred_check
        %p1661 = pneg %p119
      $region46: #{landtrans_forward.16} parent=31 // pred_check_branch
        %1663 = sbr.rel (%p1661) target = $region48
      $region47: #{landtrans_forward.16} parent=31 // pred_region
        %p1664 = scmp.lt.s32.totalorder %s18, 0
        %s1665 = scalar_select %p1664, %s18, 0
        %s1666 = smul.addr %s1665, 4
        %s1667 = scalar_lea.vmem %s3, %s1666
      $region48: #{landtrans_forward.16} parent=31 // pred_fallthru
        _
    $region32: #{landtrans_forward.16} parent=5 // pred_fallthru
      _
    %p1668 = scmp.le.s32.totalorder 2, %s9
    // Predicated region
    $region49: #{landtrans_forward.16} parent=5 // pred_check
      %p1669 = pneg %p1668
    $region50: #{landtrans_forward.16} parent=5 // pred_check_branch
      %1671 = sbr.rel (%p1669) target = $region52
    $region51: #{landtrans_forward.16} parent=5 // pred_region
      %s1672 = ssub.s32 %s9, 2
    $region52: #{landtrans_forward.16} parent=5 // pred_fallthru
      _
  $region6: #{landtrans_forward.16} parent=0 // loop_footer
    %s13 = sadd.s32 1, %s9
  $region7: #{landtrans_forward.16} parent=0 // loop_footer_branch
    %8 = sbr.rel target = $region3
  $region8: #{landtrans_forward.16} parent=0 // loop_exit
    _

// kernel: landtrans_forward.21
$region0: #{landtrans_forward.21}
  #allocation0 [shape = 'u32[]', space=smem, size = 0x4, offset = 0x4, fixed_abs, tag = 'smem constant byte address 0x4 - core index']
  #allocation1 [shape = 'u32[144,128]{1,0:T(1,128)}', space=vmem, size = 0x12000, scoped, tag = 'internal scratch']
  %s0 = inlined_call_operand.vmem [shape: bf16[8,4,8], index: 0, kind: input, shape index: {}]
  %s1 = inlined_call_operand.vmem [shape: bf16[8,4,8], index: 1, kind: input, shape index: {}]
  %s2 = inlined_call_operand.vmem [shape: bf16[8,4,8], index: 2, kind: input, shape index: {}]
  %s3 = inlined_call_operand.vmem [shape: bf16[8,4,8], index: 3, kind: output, shape index: {}]
  %s4 = sld [smem:[#allocation0]]
  $region45: #{landtrans_forward.21} parent=0
    _
  %s6 = ssub.s32 1, %s4
  %s7 = scalar_select 0, %s6, %s4
  loop: start=0, step=1, limit=4
  $region2: #{landtrans_forward.21} parent=0 // loop_pre_header
    _
  $region3: #{landtrans_forward.21} parent=0 // loop_header
    %s9 = sphi 0, %s13
    %p10 = scmp.ge.s32.totalorder %s9, 4
    %s19 = sphi 0, %s21
    %s22 = sphi 0, %s19
    %s23 = sphi 0, %s22
    %s39 = sphi 0, %s23
    %s45 = sphi 0, %s47
    %s48 = sphi 0, %s45
    %s49 = sphi 0, %s48
    %s65 = sphi 0, %s49
    %s71 = sphi 0, %s73
    %s74 = sphi 0, %s71
    %s75 = sphi 0, %s74
    %s91 = sphi 0, %s75
    %s97 = sphi 0, %s99
    %s100 = sphi 0, %s97
    %s101 = sphi 0, %s100
    %s117 = sphi 0, %s101
  $region4: #{landtrans_forward.21} parent=0 // loop_header_branch
    %12 = sbr.rel (%p10) target = $region8
  $region5: #{landtrans_forward.21} parent=0 // loop_body
    %s14 = ssub.s32 %s9, 1
    %s15 = ssub.s32 %s9, 2
    %s16 = sadd.s32 %s9, 1
    %s17 = ssub.s32 %s9, %s16
    %p18 = scmp.eq.s32.totalorder %s17, 0
    %s20 = sadd.s32 %s19, 1
    %s21 = scalar_select %p18, %s19, %s20
    %p24 = pneg %p18
    %p25 = scmp.eq.s32.totalorder %s9, 1
    %p26 = por %p24, %p25
    %p27 = scmp.ne.s32.totalorder %s19, %s22
    %p28 = scmp.eq.s32.totalorder %s9, 0
    %p29 = por %p27, %p28
    %p30 = scmp.ne.s32.totalorder %s19, %s22
    %p31 = scmp.eq.s32.totalorder %s14, 1
    %p32 = por %p30, %p31
    %p33 = scmp.ne.s32.totalorder %s22, %s23
    %p34 = scmp.eq.s32.totalorder %s14, 0
    %p35 = por %p33, %p34
    %p36 = scmp.ne.s32.totalorder %s22, %s23
    %p37 = scmp.eq.s32.totalorder %s15, 1
    %p38 = por %p36, %p37
    %p40 = scmp.ne.s32.totalorder %s23, %s39
    %p41 = scmp.eq.s32.totalorder %s15, 0
    %p42 = por %p40, %p41
    %s43 = ssub.s32 %s9, %s16
    %p44 = scmp.eq.s32.totalorder %s43, 0
    %s46 = sadd.s32 %s45, 1
    %s47 = scalar_select %p44, %s45, %s46
    %p50 = pneg %p44
    %p51 = scmp.eq.s32.totalorder %s9, 1
    %p52 = por %p50, %p51
    %p53 = scmp.ne.s32.totalorder %s45, %s48
    %p54 = scmp.eq.s32.totalorder %s9, 0
    %p55 = por %p53, %p54
    %p56 = scmp.ne.s32.totalorder %s45, %s48
    %p57 = scmp.eq.s32.totalorder %s14, 1
    %p58 = por %p56, %p57
    %p59 = scmp.ne.s32.totalorder %s48, %s49
    %p60 = scmp.eq.s32.totalorder %s14, 0
    %p61 = por %p59, %p60
    %p62 = scmp.ne.s32.totalorder %s48, %s49
    %p63 = scmp.eq.s32.totalorder %s15, 1
    %p64 = por %p62, %p63
    %p66 = scmp.ne.s32.totalorder %s49, %s65
    %p67 = scmp.eq.s32.totalorder %s15, 0
    %p68 = por %p66, %p67
    %s69 = ssub.s32 %s9, %s16
    %p70 = scmp.eq.s32.totalorder %s69, 0
    %s72 = sadd.s32 %s71, 1
    %s73 = scalar_select %p70, %s71, %s72
    %p76 = pneg %p70
    %p77 = scmp.eq.s32.totalorder %s9, 1
    %p78 = por %p76, %p77
    %p79 = scmp.ne.s32.totalorder %s71, %s74
    %p80 = scmp.eq.s32.totalorder %s9, 0
    %p81 = por %p79, %p80
    %p82 = scmp.ne.s32.totalorder %s71, %s74
    %p83 = scmp.eq.s32.totalorder %s14, 1
    %p84 = por %p82, %p83
    %p85 = scmp.ne.s32.totalorder %s74, %s75
    %p86 = scmp.eq.s32.totalorder %s14, 0
    %p87 = por %p85, %p86
    %p88 = scmp.ne.s32.totalorder %s74, %s75
    %p89 = scmp.eq.s32.totalorder %s15, 1
    %p90 = por %p88, %p89
    %p92 = scmp.ne.s32.totalorder %s75, %s91
    %p93 = scmp.eq.s32.totalorder %s15, 0
    %p94 = por %p92, %p93
    %s95 = ssub.s32 %s9, %s16
    %p96 = scmp.eq.s32.totalorder %s95, 0
    %s98 = sadd.s32 %s97, 1
    %s99 = scalar_select %p96, %s97, %s98
    %p102 = pneg %p96
    %p103 = scmp.eq.s32.totalorder %s9, 1
    %p104 = por %p102, %p103
    %p105 = scmp.ne.s32.totalorder %s97, %s100
    %p106 = scmp.eq.s32.totalorder %s9, 0
    %p107 = por %p105, %p106
    %p108 = scmp.ne.s32.totalorder %s97, %s100
    %p109 = scmp.eq.s32.totalorder %s14, 1
    %p110 = por %p108, %p109
    %p111 = scmp.ne.s32.totalorder %s100, %s101
    %p112 = scmp.eq.s32.totalorder %s14, 0
    %p113 = por %p111, %p112
    %p114 = scmp.ne.s32.totalorder %s100, %s101
    %p115 = scmp.eq.s32.totalorder %s15, 1
    %p116 = por %p114, %p115
    %p118 = scmp.ne.s32.totalorder %s101, %s117
    %p119 = scmp.eq.s32.totalorder %s15, 0
    %p120 = por %p118, %p119
    %p121 = scmp.le.s32.totalorder 1, %s9
    %p122 = scmp.lt.s32.totalorder %s9, 3
    %p123 = pnand %p121, %p122
    %p124 = pneg %p123
    // Predicated region
    $region9: #{landtrans_forward.21} parent=5 // pred_check
      _
    $region10: #{landtrans_forward.21} parent=5 // pred_check_branch
      %126 = sbr.rel (%p123) target = $region12
    $region11: #{landtrans_forward.21} parent=5 // pred_region
      %s127 = ssub.s32 %s9, 1
    $region12: #{landtrans_forward.21} parent=5 // pred_fallthru
      _
    %p128 = scmp.lt.s32.totalorder %s9, 2
    // Predicated region
    $region13: #{landtrans_forward.21} parent=5 // pred_check
      %p129 = pneg %p128
    $region14: #{landtrans_forward.21} parent=5 // pred_check_branch
      %131 = sbr.rel (%p129) target = $region16
    $region15: #{landtrans_forward.21} parent=5 // pred_region
      // Predicated region
      $region17: #{landtrans_forward.21} parent=15 // pred_check
        %p132 = pneg %p29
      $region18: #{landtrans_forward.21} parent=15 // pred_check_branch
        %134 = sbr.rel (%p132) target = $region20
      $region19: #{landtrans_forward.21} parent=15 // pred_region
        %s135 = smul.u32 4, %s9
        %p136 = scmp.lt.s32.totalorder %s135, 7
        %s137 = scalar_select %p136, %s135, 7
        %s138 = smul.addr %s137, 2
        %s139 = scalar_lea.vmem %s0, %s138
        %s140 = smul.u32 4, %s9
      $region20: #{landtrans_forward.21} parent=15 // pred_fallthru
        _
      // Predicated region
      $region21: #{landtrans_forward.21} parent=15 // pred_check
        %p141 = pneg %p55
      $region22: #{landtrans_forward.21} parent=15 // pred_check_branch
        %143 = sbr.rel (%p141) target = $region24
      $region23: #{landtrans_forward.21} parent=15 // pred_region
        %s144 = smul.u32 4, %s9
        %p145 = scmp.lt.s32.totalorder %s144, 7
        %s146 = scalar_select %p145, %s144, 7
        %s147 = smul.addr %s146, 2
        %s148 = scalar_lea.vmem %s1, %s147
        %s149 = smul.u32 4, %s9
      $region24: #{landtrans_forward.21} parent=15 // pred_fallthru
        _
      // Predicated region
      $region25: #{landtrans_forward.21} parent=15 // pred_check
        %p150 = pneg %p81
      $region26: #{landtrans_forward.21} parent=15 // pred_check_branch
        %152 = sbr.rel (%p150) target = $region28
      $region27: #{landtrans_forward.21} parent=15 // pred_region
        %s153 = smul.u32 4, %s9
        %p154 = scmp.lt.s32.totalorder %s153, 7
        %s155 = scalar_select %p154, %s153, 7
        %s156 = smul.addr %s155, 2
        %s157 = scalar_lea.vmem %s2, %s156
        %s158 = smul.u32 4, %s9
      $region28: #{landtrans_forward.21} parent=15 // pred_fallthru
        _
    $region16: #{landtrans_forward.21} parent=5 // pred_fallthru
      _
    %p159 = scmp.le.s32.totalorder 1, %s9
    %p160 = scmp.lt.s32.totalorder %s9, 3
    %p161 = pnand %p159, %p160
    %p162 = pneg %p161
    // Predicated region
    $region29: #{landtrans_forward.21} parent=5 // pred_check
      _
    $region30: #{landtrans_forward.21} parent=5 // pred_check_branch
      %164 = sbr.rel (%p161) target = $region32
    $region31: #{landtrans_forward.21} parent=5 // pred_region
      %s165 = ssub.s32 %s9, 1
      %s166 = smul.u32 4, %s14
      %p167 = scmp.lt.s32.totalorder %s166, 7
      %s168 = scalar_select %p167, %s166, 7
      %s169 = smul.addr %s168, 2
      %s170 = scalar_lea.vmem %s0, %s169
      %p171 = pneg %p35
      %p172 = pneg %p32
      %s173 = smul.u32 4, %s14
      %p174 = scmp.lt.s32.totalorder %s173, 7
      %s175 = scalar_select %p174, %s173, 7
      %s176 = smul.addr %s175, 2
      %s177 = scalar_lea.vmem %s1, %s176
      %p178 = pneg %p61
      %p179 = pneg %p58
      %s180 = smul.u32 4, %s14
      %p181 = scmp.lt.s32.totalorder %s180, 7
      %s182 = scalar_select %p181, %s180, 7
      %s183 = smul.addr %s182, 2
      %s184 = scalar_lea.vmem %s2, %s183
      %p185 = pneg %p87
      %p186 = pneg %p84
      %p187 = pneg %p113
      %p188 = pneg %p110
      %s189 = smul.u32 4, %s14
      %p190 = scmp.lt.s32.totalorder %s189, 7
      %s191 = scalar_select %p190, %s189, 7
      %s192 = smul.addr %s191, 2
      %s193 = scalar_lea.vmem %s3, %s192
      %s194 = smul.u32 4, %s14
      %p195 = scmp.lt.s32.totalorder %s194, 7
      %s196 = scalar_select %p195, %s194, 7
      %s197 = smul.addr %s196, 2
      %s198 = scalar_lea.vmem %s0, %s197
      %s199 = smul.u32 4, %s14
      %s200 = smul.u32 4, %s14
      %p201 = scmp.lt.s32.totalorder %s200, 7
      %s202 = scalar_select %p201, %s200, 7
      %s203 = smul.addr %s202, 2
      %s204 = scalar_lea.vmem %s1, %s203
      %s205 = smul.u32 4, %s14
      %s206 = smul.u32 4, %s14
      %p207 = scmp.lt.s32.totalorder %s206, 7
      %s208 = scalar_select %p207, %s206, 7
      %s209 = smul.addr %s208, 2
      %s210 = scalar_lea.vmem %s2, %s209
      %s211 = smul.u32 4, %s14
      %s212 = smul.u32 4, %s14
      %p213 = scmp.lt.s32.totalorder %s212, 7
      %s214 = scalar_select %p213, %s212, 7
      %s215 = smul.addr %s214, 2
      %s216 = scalar_lea.vmem %s3, %s215
      %s217 = smul.u32 4, %s14
      %v219 = vld [vmem:[%s198] sm:$0x3]
      %v220 = vld [vmem:[%s198 + $0x2] sm:$0x3]
      %v221 = vld [vmem:[%s198 + $0x4] sm:$0x3]
      %v222 = vld [vmem:[%s198 + $0x6] sm:$0x3]
      %v223 = vld [vmem:[%s204] sm:$0x3]
      %v224 = vld [vmem:[%s204 + $0x2] sm:$0x3]
      %v225 = vld [vmem:[%s204 + $0x4] sm:$0x3]
      %v226 = vld [vmem:[%s204 + $0x6] sm:$0x3]
      %v227 = vld [vmem:[%s210] sm:$0x3]
      %v228 = vld [vmem:[%s210 + $0x2] sm:$0x3]
      %v229 = vld [vmem:[%s210 + $0x4] sm:$0x3]
      %v230 = vld [vmem:[%s210 + $0x6] sm:$0x3]
      %vm231 = vcmask 64512
      %v233 = vsel %vm231, %v219, 0
      %v236 = vsel %vm231, %v223, 0
      %238 = vmatprep.subr.bf16.mxu0 0
      %239 = vmatpush1.bf16.xpose.msra.mxu0 %v236
      %240 = vmatprep.subr.bf16.mxu0 0
      %241 = vmatpush1.bf16.xpose.msra.mxu0 0
      %242 = vmatprep.subr.bf16.mxu0 0
      %243 = vmatpush1.bf16.xpose.msra.mxu0 0
      %244 = vmatprep.subr.bf16.mxu0 0
      %245 = vmatpush1.bf16.xpose.msra.mxu0 0
      %246 = vmatprep.subr.bf16.mxu0 0
      %247 = vmatpush1.bf16.xpose.msra.mxu0 0
      %248 = vmatprep.subr.bf16.mxu0 0
      %249 = vmatpush1.bf16.xpose.msra.mxu0 0
      %250 = vmatprep.subr.bf16.mxu0 0
      %251 = vmatpush1.bf16.xpose.msra.mxu0 0
      %252 = vmatprep.subr.bf16.mxu0 0
      %253 = vmatpush1.bf16.xpose.msra.mxu0 0
      %254 = vmatprep.subr.bf16.mxu0 0
      %255 = vmatpush1.bf16.xpose.msra.mxu0 0
      %256 = vmatprep.subr.bf16.mxu0 0
      %257 = vmatpush1.bf16.xpose.msra.mxu0 0
      %258 = vmatprep.subr.bf16.mxu0 0
      %259 = vmatpush1.bf16.xpose.msra.mxu0 0
      %260 = vmatprep.subr.bf16.mxu0 0
      %261 = vmatpush1.bf16.xpose.msra.mxu0 0
      %262 = vmatprep.subr.bf16.mxu0 0
      %263 = vmatpush1.bf16.xpose.msra.mxu0 0
      %264 = vmatprep.subr.bf16.mxu0 0
      %265 = vmatpush1.bf16.xpose.msra.mxu0 0
      %266 = vmatprep.subr.bf16.mxu0 0
      %267 = vmatpush1.bf16.xpose.msra.mxu0 0
      %268 = vmatprep.subr.bf16.mxu0 0
      %269 = vmatpush1.bf16.xpose.msra.mxu0 0
      %270 = vmatprep.mubr.bf16.mxu0 0
      %271 = vmatmul.mubr.bf16.gmra.mrb[0].mxu0 %v233
      %v272 = vpop.f32.mrb[0].mxu0
      %v273 = vadd.f32 0.0, %v272
      %v274 = vpop.f32.mrb[0].mxu0
      %v275 = vpop.f32.mrb[0].mxu0
      %v276 = vpop.f32.mrb[0].mxu0
      %277 = vdwg.mxu0
      %v279 = vsel %vm231, %v220, 0
      %v282 = vsel %vm231, %v224, 0
      %284 = vmatprep.subr.bf16.mxu0 0
      %285 = vmatpush1.bf16.xpose.msra.mxu0 %v282
      %286 = vmatprep.subr.bf16.mxu0 0
      %287 = vmatpush1.bf16.xpose.msra.mxu0 0
      %288 = vmatprep.subr.bf16.mxu0 0
      %289 = vmatpush1.bf16.xpose.msra.mxu0 0
      %290 = vmatprep.subr.bf16.mxu0 0
      %291 = vmatpush1.bf16.xpose.msra.mxu0 0
      %292 = vmatprep.subr.bf16.mxu0 0
      %293 = vmatpush1.bf16.xpose.msra.mxu0 0
      %294 = vmatprep.subr.bf16.mxu0 0
      %295 = vmatpush1.bf16.xpose.msra.mxu0 0
      %296 = vmatprep.subr.bf16.mxu0 0
      %297 = vmatpush1.bf16.xpose.msra.mxu0 0
      %298 = vmatprep.subr.bf16.mxu0 0
      %299 = vmatpush1.bf16.xpose.msra.mxu0 0
      %300 = vmatprep.subr.bf16.mxu0 0
      %301 = vmatpush1.bf16.xpose.msra.mxu0 0
      %302 = vmatprep.subr.bf16.mxu0 0
      %303 = vmatpush1.bf16.xpose.msra.mxu0 0
      %304 = vmatprep.subr.bf16.mxu0 0
      %305 = vmatpush1.bf16.xpose.msra.mxu0 0
      %306 = vmatprep.subr.bf16.mxu0 0
      %307 = vmatpush1.bf16.xpose.msra.mxu0 0
      %308 = vmatprep.subr.bf16.mxu0 0
      %309 = vmatpush1.bf16.xpose.msra.mxu0 0
      %310 = vmatprep.subr.bf16.mxu0 0
      %311 = vmatpush1.bf16.xpose.msra.mxu0 0
      %312 = vmatprep.subr.bf16.mxu0 0
      %313 = vmatpush1.bf16.xpose.msra.mxu0 0
      %314 = vmatprep.subr.bf16.mxu0 0
      %315 = vmatpush1.bf16.xpose.msra.mxu0 0
      %316 = vmatprep.mubr.bf16.mxu0 0
      %317 = vmatmul.mubr.bf16.gmra.mrb[0].mxu0 %v279
      %v318 = vpop.f32.mrb[0].mxu0
      %v319 = vadd.f32 0.0, %v318
      %v320 = vpop.f32.mrb[0].mxu0
      %v321 = vpop.f32.mrb[0].mxu0
      %v322 = vpop.f32.mrb[0].mxu0
      %323 = vdwg.mxu0
      %v325 = vsel %vm231, %v221, 0
      %v328 = vsel %vm231, %v225, 0
      %330 = vmatprep.subr.bf16.mxu0 0
      %331 = vmatpush1.bf16.xpose.msra.mxu0 %v328
      %332 = vmatprep.subr.bf16.mxu0 0
      %333 = vmatpush1.bf16.xpose.msra.mxu0 0
      %334 = vmatprep.subr.bf16.mxu0 0
      %335 = vmatpush1.bf16.xpose.msra.mxu0 0
      %336 = vmatprep.subr.bf16.mxu0 0
      %337 = vmatpush1.bf16.xpose.msra.mxu0 0
      %338 = vmatprep.subr.bf16.mxu0 0
      %339 = vmatpush1.bf16.xpose.msra.mxu0 0
      %340 = vmatprep.subr.bf16.mxu0 0
      %341 = vmatpush1.bf16.xpose.msra.mxu0 0
      %342 = vmatprep.subr.bf16.mxu0 0
      %343 = vmatpush1.bf16.xpose.msra.mxu0 0
      %344 = vmatprep.subr.bf16.mxu0 0
      %345 = vmatpush1.bf16.xpose.msra.mxu0 0
      %346 = vmatprep.subr.bf16.mxu0 0
      %347 = vmatpush1.bf16.xpose.msra.mxu0 0
      %348 = vmatprep.subr.bf16.mxu0 0
      %349 = vmatpush1.bf16.xpose.msra.mxu0 0
      %350 = vmatprep.subr.bf16.mxu0 0
      %351 = vmatpush1.bf16.xpose.msra.mxu0 0
      %352 = vmatprep.subr.bf16.mxu0 0
      %353 = vmatpush1.bf16.xpose.msra.mxu0 0
      %354 = vmatprep.subr.bf16.mxu0 0
      %355 = vmatpush1.bf16.xpose.msra.mxu0 0
      %356 = vmatprep.subr.bf16.mxu0 0
      %357 = vmatpush1.bf16.xpose.msra.mxu0 0
      %358 = vmatprep.subr.bf16.mxu0 0
      %359 = vmatpush1.bf16.xpose.msra.mxu0 0
      %360 = vmatprep.subr.bf16.mxu0 0
      %361 = vmatpush1.bf16.xpose.msra.mxu0 0
      %362 = vmatprep.mubr.bf16.mxu0 0
      %363 = vmatmul.mubr.bf16.gmra.mrb[0].mxu0 %v325
      %v364 = vpop.f32.mrb[0].mxu0
      %v365 = vadd.f32 0.0, %v364
      %v366 = vpop.f32.mrb[0].mxu0
      %v367 = vpop.f32.mrb[0].mxu0
      %v368 = vpop.f32.mrb[0].mxu0
      %369 = vdwg.mxu0
      %v371 = vsel %vm231, %v222, 0
      %v374 = vsel %vm231, %v226, 0
      %376 = vmatprep.subr.bf16.mxu0 0
      %377 = vmatpush1.bf16.xpose.msra.mxu0 %v374
      %378 = vmatprep.subr.bf16.mxu0 0
      %379 = vmatpush1.bf16.xpose.msra.mxu0 0
      %380 = vmatprep.subr.bf16.mxu0 0
      %381 = vmatpush1.bf16.xpose.msra.mxu0 0
      %382 = vmatprep.subr.bf16.mxu0 0
      %383 = vmatpush1.bf16.xpose.msra.mxu0 0
      %384 = vmatprep.subr.bf16.mxu0 0
      %385 = vmatpush1.bf16.xpose.msra.mxu0 0
      %386 = vmatprep.subr.bf16.mxu0 0
      %387 = vmatpush1.bf16.xpose.msra.mxu0 0
      %388 = vmatprep.subr.bf16.mxu0 0
      %389 = vmatpush1.bf16.xpose.msra.mxu0 0
      %390 = vmatprep.subr.bf16.mxu0 0
      %391 = vmatpush1.bf16.xpose.msra.mxu0 0
      %392 = vmatprep.subr.bf16.mxu0 0
      %393 = vmatpush1.bf16.xpose.msra.mxu0 0
      %394 = vmatprep.subr.bf16.mxu0 0
      %395 = vmatpush1.bf16.xpose.msra.mxu0 0
      %396 = vmatprep.subr.bf16.mxu0 0
      %397 = vmatpush1.bf16.xpose.msra.mxu0 0
      %398 = vmatprep.subr.bf16.mxu0 0
      %399 = vmatpush1.bf16.xpose.msra.mxu0 0
      %400 = vmatprep.subr.bf16.mxu0 0
      %401 = vmatpush1.bf16.xpose.msra.mxu0 0
      %402 = vmatprep.subr.bf16.mxu0 0
      %403 = vmatpush1.bf16.xpose.msra.mxu0 0
      %404 = vmatprep.subr.bf16.mxu0 0
      %405 = vmatpush1.bf16.xpose.msra.mxu0 0
      %406 = vmatprep.subr.bf16.mxu0 0
      %407 = vmatpush1.bf16.xpose.msra.mxu0 0
      %408 = vmatprep.mubr.bf16.mxu0 0
      %409 = vmatmul.mubr.bf16.gmra.mrb[0].mxu0 %v371
      %v410 = vpop.f32.mrb[0].mxu0
      %v411 = vadd.f32 0.0, %v410
      %v412 = vpop.f32.mrb[0].mxu0
      %v413 = vpop.f32.mrb[0].mxu0
      %v414 = vpop.f32.mrb[0].mxu0
      %415 = vdwg.mxu0
      %vm416 = vcmask 27648
      %v417 = vsel %vm416, %v273, -inf
      %418 = vmax.xlane.f32.xlu0 %v417
      %v419 = vpop.xlane.xlu0 %418
      %v420 = vsel %vm416, %v319, -inf
      %421 = vmax.xlane.f32.xlu0 %v420
      %v422 = vpop.xlane.xlu0 %421
      %v423 = vsel %vm416, %v365, -inf
      %424 = vmax.xlane.f32.xlu0 %v423
      %v425 = vpop.xlane.xlu0 %424
      %v426 = vsel %vm416, %v411, -inf
      %427 = vmax.xlane.f32.xlu0 %v426
      %v428 = vpop.xlane.xlu0 %427
      %v429 = vsub.f32 %v273, %v419
      %v430 = vsub.f32 %v319, %v422
      %v431 = vsub.f32 %v365, %v425
      %v432 = vsub.f32 %v411, %v428
      %v433 = vmul.f32 %v429, 1.442695
      %v434 = vpow.pop %v433
      %v435 = vmul.f32 %v430, 1.442695
      %v436 = vpow.pop %v435
      %v437 = vmul.f32 %v431, 1.442695
      %v438 = vpow.pop %v437
      %v439 = vmul.f32 %v432, 1.442695
      %v440 = vpow.pop %v439
      %v441 = vsel %vm416, %v434, 0.0
      %442 = vadd.xlane.f32.xlu0 %v441
      %v443 = vpop.xlane.xlu0 %442
      %v444 = vsel %vm416, %v436, 0.0
      %445 = vadd.xlane.f32.xlu0 %v444
      %v446 = vpop.xlane.xlu0 %445
      %v447 = vsel %vm416, %v438, 0.0
      %448 = vadd.xlane.f32.xlu0 %v447
      %v449 = vpop.xlane.xlu0 %448
      %v450 = vsel %vm416, %v440, 0.0
      %451 = vadd.xlane.f32.xlu0 %v450
      %v452 = vpop.xlane.xlu0 %451
      %v453 = vrcp.pop %v443
      %v454 = vrcp.pop %v446
      %v455 = vrcp.pop %v449
      %v456 = vrcp.pop %v452
      %v457 = vmul.f32 %v434, %v453
      %v458 = vmul.f32 %v436, %v454
      %v459 = vmul.f32 %v438, %v455
      %v460 = vmul.f32 %v440, %v456
      %v461 = vpack.c.bf16 %v457, %v457
      %v462 = vpack.c.bf16 %v458, %v458
      %v463 = vpack.c.bf16 %v459, %v459
      %v464 = vpack.c.bf16 %v460, %v460
      %vm465 = vcmask 31744
      %v467 = vsel %vm465, %v461, 0
      %vm469 = vcmask 1041408
      %v471 = vsel %vm469, %v227, 0
      %473 = vmatprep.subr.bf16.mxu0 0
      %474 = vmatpush1.bf16.msra.mxu0 %v471
      %475 = vmatprep.subr.bf16.mxu0 0
      %476 = vmatpush1.bf16.msra.mxu0 0
      %477 = vmatprep.subr.bf16.mxu0 0
      %478 = vmatpush1.bf16.msra.mxu0 0
      %479 = vmatprep.subr.bf16.mxu0 0
      %480 = vmatpush1.bf16.msra.mxu0 0
      %481 = vmatprep.subr.bf16.mxu0 0
      %482 = vmatpush1.bf16.msra.mxu0 0
      %483 = vmatprep.subr.bf16.mxu0 0
      %484 = vmatpush1.bf16.msra.mxu0 0
      %485 = vmatprep.subr.bf16.mxu0 0
      %486 = vmatpush1.bf16.msra.mxu0 0
      %487 = vmatprep.subr.bf16.mxu0 0
      %488 = vmatpush1.bf16.msra.mxu0 0
      %489 = vmatprep.subr.bf16.mxu0 0
      %490 = vmatpush1.bf16.msra.mxu0 0
      %491 = vmatprep.subr.bf16.mxu0 0
      %492 = vmatpush1.bf16.msra.mxu0 0
      %493 = vmatprep.subr.bf16.mxu0 0
      %494 = vmatpush1.bf16.msra.mxu0 0
      %495 = vmatprep.subr.bf16.mxu0 0
      %496 = vmatpush1.bf16.msra.mxu0 0
      %497 = vmatprep.subr.bf16.mxu0 0
      %498 = vmatpush1.bf16.msra.mxu0 0
      %499 = vmatprep.subr.bf16.mxu0 0
      %500 = vmatpush1.bf16.msra.mxu0 0
      %501 = vmatprep.subr.bf16.mxu0 0
      %502 = vmatpush1.bf16.msra.mxu0 0
      %503 = vmatprep.subr.bf16.mxu0 0
      %504 = vmatpush1.bf16.msra.mxu0 0
      %505 = vmatprep.mubr.bf16.mxu0 0
      %506 = vmatmul.mubr.bf16.gmra.mrb[0].mxu0 %v467
      %v507 = vpop.f32.mrb[0].mxu0
      %v508 = vadd.f32 0.0, %v507
      %v509 = vpop.f32.mrb[0].mxu0
      %v510 = vpop.f32.mrb[0].mxu0
      %v511 = vpop.f32.mrb[0].mxu0
      %512 = vdwg.mxu0
      %v514 = vsel %vm465, %v462, 0
      %v517 = vsel %vm469, %v228, 0
      %519 = vmatprep.subr.bf16.mxu0 0
      %520 = vmatpush1.bf16.msra.mxu0 %v517
      %521 = vmatprep.subr.bf16.mxu0 0
      %522 = vmatpush1.bf16.msra.mxu0 0
      %523 = vmatprep.subr.bf16.mxu0 0
      %524 = vmatpush1.bf16.msra.mxu0 0
      %525 = vmatprep.subr.bf16.mxu0 0
      %526 = vmatpush1.bf16.msra.mxu0 0
      %527 = vmatprep.subr.bf16.mxu0 0
      %528 = vmatpush1.bf16.msra.mxu0 0
      %529 = vmatprep.subr.bf16.mxu0 0
      %530 = vmatpush1.bf16.msra.mxu0 0
      %531 = vmatprep.subr.bf16.mxu0 0
      %532 = vmatpush1.bf16.msra.mxu0 0
      %533 = vmatprep.subr.bf16.mxu0 0
      %534 = vmatpush1.bf16.msra.mxu0 0
      %535 = vmatprep.subr.bf16.mxu0 0
      %536 = vmatpush1.bf16.msra.mxu0 0
      %537 = vmatprep.subr.bf16.mxu0 0
      %538 = vmatpush1.bf16.msra.mxu0 0
      %539 = vmatprep.subr.bf16.mxu0 0
      %540 = vmatpush1.bf16.msra.mxu0 0
      %541 = vmatprep.subr.bf16.mxu0 0
      %542 = vmatpush1.bf16.msra.mxu0 0
      %543 = vmatprep.subr.bf16.mxu0 0
      %544 = vmatpush1.bf16.msra.mxu0 0
      %545 = vmatprep.subr.bf16.mxu0 0
      %546 = vmatpush1.bf16.msra.mxu0 0
      %547 = vmatprep.subr.bf16.mxu0 0
      %548 = vmatpush1.bf16.msra.mxu0 0
      %549 = vmatprep.subr.bf16.mxu0 0
      %550 = vmatpush1.bf16.msra.mxu0 0
      %551 = vmatprep.mubr.bf16.mxu0 0
      %552 = vmatmul.mubr.bf16.gmra.mrb[0].mxu0 %v514
      %v553 = vpop.f32.mrb[0].mxu0
      %v554 = vadd.f32 0.0, %v553
      %v555 = vpop.f32.mrb[0].mxu0
      %v556 = vpop.f32.mrb[0].mxu0
      %v557 = vpop.f32.mrb[0].mxu0
      %558 = vdwg.mxu0
      %v560 = vsel %vm465, %v463, 0
      %v563 = vsel %vm469, %v229, 0
      %565 = vmatprep.subr.bf16.mxu0 0
      %566 = vmatpush1.bf16.msra.mxu0 %v563
      %567 = vmatprep.subr.bf16.mxu0 0
      %568 = vmatpush1.bf16.msra.mxu0 0
      %569 = vmatprep.subr.bf16.mxu0 0
      %570 = vmatpush1.bf16.msra.mxu0 0
      %571 = vmatprep.subr.bf16.mxu0 0
      %572 = vmatpush1.bf16.msra.mxu0 0
      %573 = vmatprep.subr.bf16.mxu0 0
      %574 = vmatpush1.bf16.msra.mxu0 0
      %575 = vmatprep.subr.bf16.mxu0 0
      %576 = vmatpush1.bf16.msra.mxu0 0
      %577 = vmatprep.subr.bf16.mxu0 0
      %578 = vmatpush1.bf16.msra.mxu0 0
      %579 = vmatprep.subr.bf16.mxu0 0
      %580 = vmatpush1.bf16.msra.mxu0 0
      %581 = vmatprep.subr.bf16.mxu0 0
      %582 = vmatpush1.bf16.msra.mxu0 0
      %583 = vmatprep.subr.bf16.mxu0 0
      %584 = vmatpush1.bf16.msra.mxu0 0
      %585 = vmatprep.subr.bf16.mxu0 0
      %586 = vmatpush1.bf16.msra.mxu0 0
      %587 = vmatprep.subr.bf16.mxu0 0
      %588 = vmatpush1.bf16.msra.mxu0 0
      %589 = vmatprep.subr.bf16.mxu0 0
      %590 = vmatpush1.bf16.msra.mxu0 0
      %591 = vmatprep.subr.bf16.mxu0 0
      %592 = vmatpush1.bf16.msra.mxu0 0
      %593 = vmatprep.subr.bf16.mxu0 0
      %594 = vmatpush1.bf16.msra.mxu0 0
      %595 = vmatprep.subr.bf16.mxu0 0
      %596 = vmatpush1.bf16.msra.mxu0 0
      %597 = vmatprep.mubr.bf16.mxu0 0
      %598 = vmatmul.mubr.bf16.gmra.mrb[0].mxu0 %v560
      %v599 = vpop.f32.mrb[0].mxu0
      %v600 = vadd.f32 0.0, %v599
      %v601 = vpop.f32.mrb[0].mxu0
      %v602 = vpop.f32.mrb[0].mxu0
      %v603 = vpop.f32.mrb[0].mxu0
      %604 = vdwg.mxu0
      %v606 = vsel %vm465, %v464, 0
      %v609 = vsel %vm469, %v230, 0
      %611 = vmatprep.subr.bf16.mxu0 0
      %612 = vmatpush1.bf16.msra.mxu0 %v609
      %613 = vmatprep.subr.bf16.mxu0 0
      %614 = vmatpush1.bf16.msra.mxu0 0
      %615 = vmatprep.subr.bf16.mxu0 0
      %616 = vmatpush1.bf16.msra.mxu0 0
      %617 = vmatprep.subr.bf16.mxu0 0
      %618 = vmatpush1.bf16.msra.mxu0 0
      %619 = vmatprep.subr.bf16.mxu0 0
      %620 = vmatpush1.bf16.msra.mxu0 0
      %621 = vmatprep.subr.bf16.mxu0 0
      %622 = vmatpush1.bf16.msra.mxu0 0
      %623 = vmatprep.subr.bf16.mxu0 0
      %624 = vmatpush1.bf16.msra.mxu0 0
      %625 = vmatprep.subr.bf16.mxu0 0
      %626 = vmatpush1.bf16.msra.mxu0 0
      %627 = vmatprep.subr.bf16.mxu0 0
      %628 = vmatpush1.bf16.msra.mxu0 0
      %629 = vmatprep.subr.bf16.mxu0 0
      %630 = vmatpush1.bf16.msra.mxu0 0
      %631 = vmatprep.subr.bf16.mxu0 0
      %632 = vmatpush1.bf16.msra.mxu0 0
      %633 = vmatprep.subr.bf16.mxu0 0
      %634 = vmatpush1.bf16.msra.mxu0 0
      %635 = vmatprep.subr.bf16.mxu0 0
      %636 = vmatpush1.bf16.msra.mxu0 0
      %637 = vmatprep.subr.bf16.mxu0 0
      %638 = vmatpush1.bf16.msra.mxu0 0
      %639 = vmatprep.subr.bf16.mxu0 0
      %640 = vmatpush1.bf16.msra.mxu0 0
      %641 = vmatprep.subr.bf16.mxu0 0
      %642 = vmatpush1.bf16.msra.mxu0 0
      %643 = vmatprep.mubr.bf16.mxu0 0
      %644 = vmatmul.mubr.bf16.gmra.mrb[0].mxu0 %v606
      %v645 = vpop.f32.mrb[0].mxu0
      %v646 = vadd.f32 0.0, %v645
      %v647 = vpop.f32.mrb[0].mxu0
      %v648 = vpop.f32.mrb[0].mxu0
      %v649 = vpop.f32.mrb[0].mxu0
      %650 = vdwg.mxu0
      %v651 = vpack.c.bf16 %v508, %v508
      %v652 = vpack.c.bf16 %v554, %v554
      %v653 = vpack.c.bf16 %v600, %v600
      %v654 = vpack.c.bf16 %v646, %v646
      %vm655 = vcmask 58368
      %656 = vst.msk [vmem:[%s216] sm:$0x3] %vm655, %v651
      %657 = vst.msk [vmem:[%s216 + $0x2] sm:$0x3] %vm655, %v652
      %658 = vst.msk [vmem:[%s216 + $0x4] sm:$0x3] %vm655, %v653
      %659 = vst.msk [vmem:[%s216 + $0x6] sm:$0x3] %vm655, %v654
      %s660 = smul.u32 4, %s14
      %p661 = scmp.lt.s32.totalorder %s660, 7
      %s662 = scalar_select %p661, %s660, 7
      %s663 = smul.addr %s662, 2
      %s664 = scalar_lea.vmem %s3, %s663
      // Predicated region
      $region33: #{landtrans_forward.21} parent=31 // pred_check
        %p665 = pneg %p110
      $region34: #{landtrans_forward.21} parent=31 // pred_check_branch
        %667 = sbr.rel (%p665) target = $region36
      $region35: #{landtrans_forward.21} parent=31 // pred_region
        %s668 = smul.u32 4, %s14
      $region36: #{landtrans_forward.21} parent=31 // pred_fallthru
        _
    $region32: #{landtrans_forward.21} parent=5 // pred_fallthru
      _
    %p669 = scmp.le.s32.totalorder 2, %s9
    // Predicated region
    $region37: #{landtrans_forward.21} parent=5 // pred_check
      %p670 = pneg %p669
    $region38: #{landtrans_forward.21} parent=5 // pred_check_branch
      %672 = sbr.rel (%p670) target = $region40
    $region39: #{landtrans_forward.21} parent=5 // pred_region
      %s673 = ssub.s32 %s9, 2
      // Predicated region
      $region41: #{landtrans_forward.21} parent=39 // pred_check
        %p674 = pneg %p116
      $region42: #{landtrans_forward.21} parent=39 // pred_check_branch
        %676 = sbr.rel (%p674) target = $region44
      $region43: #{landtrans_forward.21} parent=39 // pred_region
        %s677 = smul.u32 4, %s15
        %p678 = scmp.lt.s32.totalorder %s677, 7
        %s679 = scalar_select %p678, %s677, 7
        %s680 = smul.addr %s679, 2
        %s681 = scalar_lea.vmem %s3, %s680
      $region44: #{landtrans_forward.21} parent=39 // pred_fallthru
        _
    $region40: #{landtrans_forward.21} parent=5 // pred_fallthru
      _
  $region6: #{landtrans_forward.21} parent=0 // loop_footer
    %s13 = sadd.s32 1, %s9
  $region7: #{landtrans_forward.21} parent=0 // loop_footer_branch
    %8 = sbr.rel target = $region3
  $region8: #{landtrans_forward.21} parent=0 // loop_exit
    _

// kernel: landtrans_forward.22
$region0: #{landtrans_forward.22}
  #allocation0 [shape = 'u32[]', space=smem, size = 0x4, offset = 0x4, fixed_abs, tag = 'smem constant byte address 0x4 - core index']
  #allocation1 [shape = 'u32[144,128]{1,0:T(1,128)}', space=vmem, size = 0x12000, scoped, tag = 'internal scratch']
  %s0 = inlined_call_operand.vmem [shape: bf16[8,32], index: 0, kind: input, shape index: {}]
  %s1 = inlined_call_operand.vmem [shape: bf16[8,32], index: 1, kind: input, shape index: {}]
  %s2 = inlined_call_operand.vmem [shape: bf16[32,32], index: 2, kind: input, shape index: {}]
  %s3 = inlined_call_operand.vmem [shape: f32[1,32], index: 3, kind: input, shape index: {}]
  %s4 = inlined_call_operand.vmem [shape: f32[1,32], index: 4, kind: input, shape index: {}]
  %s5 = inlined_call_operand.vmem [shape: f32[1,32], index: 5, kind: input, shape index: {}]
  %s6 = inlined_call_operand.vmem [shape: bf16[8,32], index: 6, kind: output, shape index: {}]
  %s7 = sld [smem:[#allocation0]]
  $region34: #{landtrans_forward.22} parent=0
    _
  %s9 = ssub.s32 1, %s7
  %s10 = scalar_select 0, %s9, %s7
  // Predicated region
  $region2: #{landtrans_forward.22} parent=0 // pred_check
    _
  $region3: #{landtrans_forward.22} parent=0 // pred_check_branch
    %12 = sbr.rel (0) target = $region5
  $region4: #{landtrans_forward.22} parent=0 // pred_region
    _
  $region5: #{landtrans_forward.22} parent=0 // pred_fallthru
    _
  // Predicated region
  $region6: #{landtrans_forward.22} parent=0 // pred_check
    _
  $region7: #{landtrans_forward.22} parent=0 // pred_check_branch
    %14 = sbr.rel (0) target = $region9
  $region8: #{landtrans_forward.22} parent=0 // pred_region
    _
  $region9: #{landtrans_forward.22} parent=0 // pred_fallthru
    _
  // Predicated region
  $region10: #{landtrans_forward.22} parent=0 // pred_check
    _
  $region11: #{landtrans_forward.22} parent=0 // pred_check_branch
    %16 = sbr.rel (0) target = $region13
  $region12: #{landtrans_forward.22} parent=0 // pred_region
    _
  $region13: #{landtrans_forward.22} parent=0 // pred_fallthru
    _
  // Predicated region
  $region14: #{landtrans_forward.22} parent=0 // pred_check
    _
  $region15: #{landtrans_forward.22} parent=0 // pred_check_branch
    %18 = sbr.rel (0) target = $region17
  $region16: #{landtrans_forward.22} parent=0 // pred_region
    _
  $region17: #{landtrans_forward.22} parent=0 // pred_fallthru
    _
  // Predicated region
  $region18: #{landtrans_forward.22} parent=0 // pred_check
    _
  $region19: #{landtrans_forward.22} parent=0 // pred_check_branch
    %20 = sbr.rel (0) target = $region21
  $region20: #{landtrans_forward.22} parent=0 // pred_region
    _
  $region21: #{landtrans_forward.22} parent=0 // pred_fallthru
    _
  // Predicated region
  $region22: #{landtrans_forward.22} parent=0 // pred_check
    _
  $region23: #{landtrans_forward.22} parent=0 // pred_check_branch
    %22 = sbr.rel (0) target = $region25
  $region24: #{landtrans_forward.22} parent=0 // pred_region
    _
  $region25: #{landtrans_forward.22} parent=0 // pred_fallthru
    _
  %v24 = vld [vmem:[%s0] sm:$0xf]
  %v25 = vld [vmem:[%s2] sm:$0xf]
  %v26 = vld [vmem:[%s2 + $0x4] sm:$0xf]
  %v27 = vld [vmem:[%s2 + $0x8] sm:$0xf]
  %v28 = vld [vmem:[%s2 + $0xc] sm:$0xf]
  %v29 = vld [vmem:[%s3] sm:$0x1]
  %v31 = vlaneseq
  %v32 = vshrl.u32 %v31, 7
  %v33 = vsub.s32 0, %v32
  %v34 = vrot.slane %v29, %v33
  %v40 = vunpack.c.l.b16 %v25
  %v41 = vunpack.c.l.b16 %v26
  %v42 = vunpack.c.l.b16 %v27
  %v43 = vunpack.c.l.b16 %v28
  %v44 = vpack.c.b16 %v41, %v40
  %v45 = vpack.c.b16 %v43, %v42
  %vm48 = vcmask 261120
  %v50 = vsel %vm48, %v24, 0
  %52 = vmatprep.subr.bf16.mxu0 0
  %53 = vmatpush1.bf16.msra.mxu0 %v44
  %54 = vmatprep.subr.bf16.mxu0 0
  %55 = vmatpush1.bf16.msra.mxu0 %v45
  %56 = vmatprep.subr.bf16.mxu0 0
  %57 = vmatpush1.bf16.msra.mxu0 0
  %58 = vmatprep.subr.bf16.mxu0 0
  %59 = vmatpush1.bf16.msra.mxu0 0
  %60 = vmatprep.subr.bf16.mxu0 0
  %61 = vmatpush1.bf16.msra.mxu0 0
  %62 = vmatprep.subr.bf16.mxu0 0
  %63 = vmatpush1.bf16.msra.mxu0 0
  %64 = vmatprep.subr.bf16.mxu0 0
  %65 = vmatpush1.bf16.msra.mxu0 0
  %66 = vmatprep.subr.bf16.mxu0 0
  %67 = vmatpush1.bf16.msra.mxu0 0
  %68 = vmatprep.subr.bf16.mxu0 0
  %69 = vmatpush1.bf16.msra.mxu0 0
  %70 = vmatprep.subr.bf16.mxu0 0
  %71 = vmatpush1.bf16.msra.mxu0 0
  %72 = vmatprep.subr.bf16.mxu0 0
  %73 = vmatpush1.bf16.msra.mxu0 0
  %74 = vmatprep.subr.bf16.mxu0 0
  %75 = vmatpush1.bf16.msra.mxu0 0
  %76 = vmatprep.subr.bf16.mxu0 0
  %77 = vmatpush1.bf16.msra.mxu0 0
  %78 = vmatprep.subr.bf16.mxu0 0
  %79 = vmatpush1.bf16.msra.mxu0 0
  %80 = vmatprep.subr.bf16.mxu0 0
  %81 = vmatpush1.bf16.msra.mxu0 0
  %82 = vmatprep.subr.bf16.mxu0 0
  %83 = vmatpush1.bf16.msra.mxu0 0
  %84 = vmatprep.mubr.bf16.mxu0 0
  %85 = vmatmul.mubr.bf16.gmra.mrb[0].mxu0 %v50
  %v86 = vpop.f32.mrb[0].mxu0
  %v87 = vadd.f32 %v34, %v86
  %v88 = vpop.f32.mrb[0].mxu0
  %v89 = vpop.f32.mrb[0].mxu0
  %v90 = vpop.f32.mrb[0].mxu0
  %91 = vdwg.mxu0
  %v92 = vld [vmem:[%s1] sm:$0xf]
  %v93 = vunpack.c.l.bf16 %v92
  %v94 = vadd.f32 %v87, %v93
  %v95 = vsel %vm48, %v94, 0.0
  %96 = vadd.xlane.f32.xlu0 %v95
  %v97 = vpop.xlane.xlu0 %96
  %v98 = vrcp.pop 32.0
  %v99 = vmul.f32 %v97, %v98
  %v100 = vsub.f32 %v94, %v99
  %v101 = vmul.f32 %v100, %v100
  %v102 = vsel %vm48, %v101, 0.0
  %103 = vadd.xlane.f32.xlu0 %v102
  %v104 = vpop.xlane.xlu0 %103
  %v105 = vmul.f32 %v104, %v98
  %v106 = vadd.f32 %v105, 1e-05
  %v107 = vrsqrt.pop %v106
  %v108 = vmul.f32 %v100, %v107
  %v109 = vld [vmem:[%s4] sm:$0x1]
  %v111 = vlaneseq
  %v112 = vshrl.u32 %v111, 7
  %v113 = vsub.s32 0, %v112
  %v114 = vrot.slane %v109, %v113
  %v116 = vmul.f32 %v108, %v114
  %v117 = vld [vmem:[%s5] sm:$0x1]
  %v119 = vlaneseq
  %v120 = vshrl.u32 %v119, 7
  %v121 = vsub.s32 0, %v120
  %v122 = vrot.slane %v117, %v121
  %v124 = vadd.f32 %v116, %v122
  %v125 = vpack.c.bf16 %v124, %v124
  %vm126 = vcmask 257024
  %127 = vst.msk [vmem:[%s6] sm:$0xf] %vm126, %v125
  // Predicated region
  $region26: #{landtrans_forward.22} parent=0 // pred_check
    _
  $region27: #{landtrans_forward.22} parent=0 // pred_check_branch
    %129 = sbr.rel (0) target = $region29
  $region28: #{landtrans_forward.22} parent=0 // pred_region
    _
  $region29: #{landtrans_forward.22} parent=0 // pred_fallthru
    _
  // Predicated region
  $region30: #{landtrans_forward.22} parent=0 // pred_check
    _
  $region31: #{landtrans_forward.22} parent=0 // pred_check_branch
    %131 = sbr.rel (0) target = $region33
  $region32: #{landtrans_forward.22} parent=0 // pred_region
    _
  $region33: #{landtrans_forward.22} parent=0 // pred_fallthru
    _

// kernel: landtrans_forward.23
$region0: #{landtrans_forward.23}
  #allocation0 [shape = 'u32[]', space=smem, size = 0x4, offset = 0x4, fixed_abs, tag = 'smem constant byte address 0x4 - core index']
  #allocation1 [shape = 'u32[144,128]{1,0:T(1,128)}', space=vmem, size = 0x12000, scoped, tag = 'internal scratch']
  %s0 = inlined_call_operand.vmem [shape: bf16[8,32], index: 0, kind: input, shape index: {}]
  %s1 = inlined_call_operand.vmem [shape: bf16[32,64], index: 1, kind: input, shape index: {}]
  %s2 = inlined_call_operand.vmem [shape: f32[1,64], index: 2, kind: input, shape index: {}]
  %s3 = inlined_call_operand.vmem [shape: bf16[64,32], index: 3, kind: input, shape index: {}]
  %s4 = inlined_call_operand.vmem [shape: f32[1,32], index: 4, kind: input, shape index: {}]
  %s5 = inlined_call_operand.vmem [shape: f32[1,32], index: 5, kind: input, shape index: {}]
  %s6 = inlined_call_operand.vmem [shape: f32[1,32], index: 6, kind: input, shape index: {}]
  %s7 = inlined_call_operand.vmem [shape: bf16[8,32], index: 7, kind: output, shape index: {}]
  %s8 = sld [smem:[#allocation0]]
  $region38: #{landtrans_forward.23} parent=0
    _
  %s10 = ssub.s32 1, %s8
  %s11 = scalar_select 0, %s10, %s8
  // Predicated region
  $region2: #{landtrans_forward.23} parent=0 // pred_check
    _
  $region3: #{landtrans_forward.23} parent=0 // pred_check_branch
    %13 = sbr.rel (0) target = $region5
  $region4: #{landtrans_forward.23} parent=0 // pred_region
    _
  $region5: #{landtrans_forward.23} parent=0 // pred_fallthru
    _
  // Predicated region
  $region6: #{landtrans_forward.23} parent=0 // pred_check
    _
  $region7: #{landtrans_forward.23} parent=0 // pred_check_branch
    %15 = sbr.rel (0) target = $region9
  $region8: #{landtrans_forward.23} parent=0 // pred_region
    _
  $region9: #{landtrans_forward.23} parent=0 // pred_fallthru
    _
  // Predicated region
  $region10: #{landtrans_forward.23} parent=0 // pred_check
    _
  $region11: #{landtrans_forward.23} parent=0 // pred_check_branch
    %17 = sbr.rel (0) target = $region13
  $region12: #{landtrans_forward.23} parent=0 // pred_region
    _
  $region13: #{landtrans_forward.23} parent=0 // pred_fallthru
    _
  // Predicated region
  $region14: #{landtrans_forward.23} parent=0 // pred_check
    _
  $region15: #{landtrans_forward.23} parent=0 // pred_check_branch
    %19 = sbr.rel (0) target = $region17
  $region16: #{landtrans_forward.23} parent=0 // pred_region
    _
  $region17: #{landtrans_forward.23} parent=0 // pred_fallthru
    _
  // Predicated region
  $region18: #{landtrans_forward.23} parent=0 // pred_check
    _
  $region19: #{landtrans_forward.23} parent=0 // pred_check_branch
    %21 = sbr.rel (0) target = $region21
  $region20: #{landtrans_forward.23} parent=0 // pred_region
    _
  $region21: #{landtrans_forward.23} parent=0 // pred_fallthru
    _
  // Predicated region
  $region22: #{landtrans_forward.23} parent=0 // pred_check
    _
  $region23: #{landtrans_forward.23} parent=0 // pred_check_branch
    %23 = sbr.rel (0) target = $region25
  $region24: #{landtrans_forward.23} parent=0 // pred_region
    _
  $region25: #{landtrans_forward.23} parent=0 // pred_fallthru
    _
  // Predicated region
  $region26: #{landtrans_forward.23} parent=0 // pred_check
    _
  $region27: #{landtrans_forward.23} parent=0 // pred_check_branch
    %25 = sbr.rel (0) target = $region29
  $region28: #{landtrans_forward.23} parent=0 // pred_region
    _
  $region29: #{landtrans_forward.23} parent=0 // pred_fallthru
    _
  %v27 = vld [vmem:[%s0] sm:$0xf]
  %v28 = vld [vmem:[%s1] sm:$0xf]
  %v29 = vld [vmem:[%s1 + $0x4] sm:$0xf]
  %v30 = vld [vmem:[%s1 + $0x8] sm:$0xf]
  %v31 = vld [vmem:[%s1 + $0xc] sm:$0xf]
  %v32 = vld [vmem:[%s2] sm:$0x1]
  %v34 = vlaneseq
  %v35 = vshrl.u32 %v34, 7
  %v36 = vsub.s32 0, %v35
  %v37 = vrot.slane %v32, %v36
  %v43 = vunpack.c.l.b16 %v28
  %v44 = vunpack.c.l.b16 %v29
  %v45 = vunpack.c.l.b16 %v30
  %v46 = vunpack.c.l.b16 %v31
  %v47 = vpack.c.b16 %v44, %v43
  %v48 = vpack.c.b16 %v46, %v45
  %vm51 = vcmask 261120
  %v53 = vsel %vm51, %v27, 0
  %55 = vmatprep.subr.bf16.mxu0 0
  %56 = vmatpush1.bf16.msra.mxu0 %v47
  %57 = vmatprep.subr.bf16.mxu0 0
  %58 = vmatpush1.bf16.msra.mxu0 %v48
  %59 = vmatprep.subr.bf16.mxu0 0
  %60 = vmatpush1.bf16.msra.mxu0 0
  %61 = vmatprep.subr.bf16.mxu0 0
  %62 = vmatpush1.bf16.msra.mxu0 0
  %63 = vmatprep.subr.bf16.mxu0 0
  %64 = vmatpush1.bf16.msra.mxu0 0
  %65 = vmatprep.subr.bf16.mxu0 0
  %66 = vmatpush1.bf16.msra.mxu0 0
  %67 = vmatprep.subr.bf16.mxu0 0
  %68 = vmatpush1.bf16.msra.mxu0 0
  %69 = vmatprep.subr.bf16.mxu0 0
  %70 = vmatpush1.bf16.msra.mxu0 0
  %71 = vmatprep.subr.bf16.mxu0 0
  %72 = vmatpush1.bf16.msra.mxu0 0
  %73 = vmatprep.subr.bf16.mxu0 0
  %74 = vmatpush1.bf16.msra.mxu0 0
  %75 = vmatprep.subr.bf16.mxu0 0
  %76 = vmatpush1.bf16.msra.mxu0 0
  %77 = vmatprep.subr.bf16.mxu0 0
  %78 = vmatpush1.bf16.msra.mxu0 0
  %79 = vmatprep.subr.bf16.mxu0 0
  %80 = vmatpush1.bf16.msra.mxu0 0
  %81 = vmatprep.subr.bf16.mxu0 0
  %82 = vmatpush1.bf16.msra.mxu0 0
  %83 = vmatprep.subr.bf16.mxu0 0
  %84 = vmatpush1.bf16.msra.mxu0 0
  %85 = vmatprep.subr.bf16.mxu0 0
  %86 = vmatpush1.bf16.msra.mxu0 0
  %87 = vmatprep.mubr.bf16.mxu0 0
  %88 = vmatmul.mubr.bf16.gmra.mrb[0].mxu0 %v53
  %v89 = vpop.f32.mrb[0].mxu0
  %v90 = vadd.f32 %v37, %v89
  %v91 = vpop.f32.mrb[0].mxu0
  %v92 = vpop.f32.mrb[0].mxu0
  %v93 = vpop.f32.mrb[0].mxu0
  %94 = vdwg.mxu0
  %v95 = vmax.f32 %v90, 0.0
  %v96 = vpack.c.bf16 %v95, %v95
  %v97 = vld [vmem:[%s3] sm:$0xf]
  %v98 = vld [vmem:[%s3 + $0x4] sm:$0xf]
  %v99 = vld [vmem:[%s3 + $0x8] sm:$0xf]
  %v100 = vld [vmem:[%s3 + $0xc] sm:$0xf]
  %v101 = vld [vmem:[%s3 + $0x10] sm:$0xf]
  %v102 = vld [vmem:[%s3 + $0x14] sm:$0xf]
  %v103 = vld [vmem:[%s3 + $0x18] sm:$0xf]
  %v104 = vld [vmem:[%s3 + $0x1c] sm:$0xf]
  %v105 = vld [vmem:[%s4] sm:$0x1]
  %v107 = vlaneseq
  %v108 = vshrl.u32 %v107, 7
  %v109 = vsub.s32 0, %v108
  %v110 = vrot.slane %v105, %v109
  %v120 = vunpack.c.l.b16 %v97
  %v121 = vunpack.c.l.b16 %v98
  %v122 = vunpack.c.l.b16 %v99
  %v123 = vunpack.c.l.b16 %v100
  %v124 = vunpack.c.l.b16 %v101
  %v125 = vunpack.c.l.b16 %v102
  %v126 = vunpack.c.l.b16 %v103
  %v127 = vunpack.c.l.b16 %v104
  %v128 = vpack.c.b16 %v121, %v120
  %v129 = vpack.c.b16 %v123, %v122
  %v130 = vpack.c.b16 %v125, %v124
  %v131 = vpack.c.b16 %v127, %v126
  %vm136 = vcmask 523264
  %v138 = vsel %vm136, %v96, 0
  %140 = vmatprep.subr.bf16.mxu0 0
  %141 = vmatpush1.bf16.msra.mxu0 %v128
  %142 = vmatprep.subr.bf16.mxu0 0
  %143 = vmatpush1.bf16.msra.mxu0 %v129
  %144 = vmatprep.subr.bf16.mxu0 0
  %145 = vmatpush1.bf16.msra.mxu0 %v130
  %146 = vmatprep.subr.bf16.mxu0 0
  %147 = vmatpush1.bf16.msra.mxu0 %v131
  %148 = vmatprep.subr.bf16.mxu0 0
  %149 = vmatpush1.bf16.msra.mxu0 0
  %150 = vmatprep.subr.bf16.mxu0 0
  %151 = vmatpush1.bf16.msra.mxu0 0
  %152 = vmatprep.subr.bf16.mxu0 0
  %153 = vmatpush1.bf16.msra.mxu0 0
  %154 = vmatprep.subr.bf16.mxu0 0
  %155 = vmatpush1.bf16.msra.mxu0 0
  %156 = vmatprep.subr.bf16.mxu0 0
  %157 = vmatpush1.bf16.msra.mxu0 0
  %158 = vmatprep.subr.bf16.mxu0 0
  %159 = vmatpush1.bf16.msra.mxu0 0
  %160 = vmatprep.subr.bf16.mxu0 0
  %161 = vmatpush1.bf16.msra.mxu0 0
  %162 = vmatprep.subr.bf16.mxu0 0
  %163 = vmatpush1.bf16.msra.mxu0 0
  %164 = vmatprep.subr.bf16.mxu0 0
  %165 = vmatpush1.bf16.msra.mxu0 0
  %166 = vmatprep.subr.bf16.mxu0 0
  %167 = vmatpush1.bf16.msra.mxu0 0
  %168 = vmatprep.subr.bf16.mxu0 0
  %169 = vmatpush1.bf16.msra.mxu0 0
  %170 = vmatprep.subr.bf16.mxu0 0
  %171 = vmatpush1.bf16.msra.mxu0 0
  %172 = vmatprep.mubr.bf16.mxu0 0
  %173 = vmatmul.mubr.bf16.gmra.mrb[0].mxu0 %v138
  %v174 = vpop.f32.mrb[0].mxu0
  %v175 = vadd.f32 %v110, %v174
  %v176 = vpop.f32.mrb[0].mxu0
  %v177 = vpop.f32.mrb[0].mxu0
  %v178 = vpop.f32.mrb[0].mxu0
  %179 = vdwg.mxu0
  %v180 = vunpack.c.l.bf16 %v27
  %v181 = vadd.f32 %v175, %v180
  %v182 = vsel %vm51, %v181, 0.0
  %183 = vadd.xlane.f32.xlu0 %v182
  %v184 = vpop.xlane.xlu0 %183
  %v185 = vrcp.pop 32.0
  %v186 = vmul.f32 %v184, %v185
  %v187 = vsub.f32 %v181, %v186
  %v188 = vmul.f32 %v187, %v187
  %v189 = vsel %vm51, %v188, 0.0
  %190 = vadd.xlane.f32.xlu0 %v189
  %v191 = vpop.xlane.xlu0 %190
  %v192 = vmul.f32 %v191, %v185
  %v193 = vadd.f32 %v192, 1e-05
  %v194 = vrsqrt.pop %v193
  %v195 = vmul.f32 %v187, %v194
  %v196 = vld [vmem:[%s5] sm:$0x1]
  %v198 = vlaneseq
  %v199 = vshrl.u32 %v198, 7
  %v200 = vsub.s32 0, %v199
  %v201 = vrot.slane %v196, %v200
  %v203 = vmul.f32 %v195, %v201
  %v204 = vld [vmem:[%s6] sm:$0x1]
  %v206 = vlaneseq
  %v207 = vshrl.u32 %v206, 7
  %v208 = vsub.s32 0, %v207
  %v209 = vrot.slane %v204, %v208
  %v211 = vadd.f32 %v203, %v209
  %v212 = vpack.c.bf16 %v211, %v211
  %vm213 = vcmask 257024
  %214 = vst.msk [vmem:[%s7] sm:$0xf] %vm213, %v212
  // Predicated region
  $region30: #{landtrans_forward.23} parent=0 // pred_check
    _
  $region31: #{landtrans_forward.23} parent=0 // pred_check_branch
    %216 = sbr.rel (0) target = $region33
  $region32: #{landtrans_forward.23} parent=0 // pred_region
    _
  $region33: #{landtrans_forward.23} parent=0 // pred_fallthru
    _
  // Predicated region
  $region34: #{landtrans_forward.23} parent=0 // pred_check
    _
  $region35: #{landtrans_forward.23} parent=0 // pred_check_branch
    %218 = sbr.rel (0) target = $region37
  $region36: #{landtrans_forward.23} parent=0 // pred_region
    _
  $region37: #{landtrans_forward.23} parent=0 // pred_fallthru
    _

// kernel: landtrans_forward.29
$region0: #{landtrans_forward.29}
  #allocation0 [shape = 'u32[]', space=smem, size = 0x4, offset = 0x4, fixed_abs, tag = 'smem constant byte address 0x4 - core index']
  #allocation1 [shape = 'u32[144,128]{1,0:T(1,128)}', space=vmem, size = 0x12000, scoped, tag = 'internal scratch']
  %s0 = inlined_call_operand.vmem [shape: bf16[8,32], index: 0, kind: input, shape index: {}]
  %s1 = inlined_call_operand.vmem [shape: bf16[32,64], index: 1, kind: input, shape index: {}]
  %s2 = inlined_call_operand.vmem [shape: f32[1,64], index: 2, kind: input, shape index: {}]
  %s3 = inlined_call_operand.vmem [shape: bf16[64,32], index: 3, kind: input, shape index: {}]
  %s4 = inlined_call_operand.vmem [shape: f32[1,32], index: 4, kind: input, shape index: {}]
  %s5 = inlined_call_operand.vmem [shape: f32[1,32], index: 5, kind: input, shape index: {}]
  %s6 = inlined_call_operand.vmem [shape: f32[1,32], index: 6, kind: input, shape index: {}]
  %s7 = inlined_call_operand.vmem [shape: bf16[32,640], index: 7, kind: input, shape index: {}]
  %s8 = inlined_call_operand.vmem [shape: f32[1,640], index: 8, kind: input, shape index: {}]
  %s9 = inlined_call_operand.hbm [shape: bf16[8,32], index: 9, kind: output, shape index: {0}]
  %s10 = inlined_call_operand.vmem [shape: f32[8,640], index: 10, kind: output, shape index: {1}]
  %11 = xla_tuple %s9, %s10
  %s12 = sld [smem:[#allocation0]]
  $region54: #{landtrans_forward.29} parent=0
    _
  %s14 = ssub.s32 1, %s12
  %s15 = scalar_select 0, %s14, %s12
  $region1: #{landtrans_forward.29} parent=0
    #allocation2 [shape = 'u8[2048]{0}', space=vmem, size = 0x800, scoped, tag = 'output window, operand 0, single buffered']
    #allocation3 [shape = 's32[1]{0}', space=sflag, size = 0x4, scoped, tag = 'scoped memory for landtrans_forward.29']
    %16 = vsyncpa [#allocation3], 0
    // Predicated region
    $region2: #{landtrans_forward.29} parent=1 // pred_check
      _
    $region3: #{landtrans_forward.29} parent=1 // pred_check_branch
      %18 = sbr.rel (0) target = $region5
    $region4: #{landtrans_forward.29} parent=1 // pred_region
      _
    $region5: #{landtrans_forward.29} parent=1 // pred_fallthru
      _
    // Predicated region
    $region6: #{landtrans_forward.29} parent=1 // pred_check
      _
    $region7: #{landtrans_forward.29} parent=1 // pred_check_branch
      %20 = sbr.rel (0) target = $region9
    $region8: #{landtrans_forward.29} parent=1 // pred_region
      _
    $region9: #{landtrans_forward.29} parent=1 // pred_fallthru
      _
    // Predicated region
    $region10: #{landtrans_forward.29} parent=1 // pred_check
      _
    $region11: #{landtrans_forward.29} parent=1 // pred_check_branch
      %22 = sbr.rel (0) target = $region13
    $region12: #{landtrans_forward.29} parent=1 // pred_region
      _
    $region13: #{landtrans_forward.29} parent=1 // pred_fallthru
      _
    // Predicated region
    $region14: #{landtrans_forward.29} parent=1 // pred_check
      _
    $region15: #{landtrans_forward.29} parent=1 // pred_check_branch
      %24 = sbr.rel (0) target = $region17
    $region16: #{landtrans_forward.29} parent=1 // pred_region
      _
    $region17: #{landtrans_forward.29} parent=1 // pred_fallthru
      _
    // Predicated region
    $region18: #{landtrans_forward.29} parent=1 // pred_check
      _
    $region19: #{landtrans_forward.29} parent=1 // pred_check_branch
      %26 = sbr.rel (0) target = $region21
    $region20: #{landtrans_forward.29} parent=1 // pred_region
      _
    $region21: #{landtrans_forward.29} parent=1 // pred_fallthru
      _
    // Predicated region
    $region22: #{landtrans_forward.29} parent=1 // pred_check
      _
    $region23: #{landtrans_forward.29} parent=1 // pred_check_branch
      %28 = sbr.rel (0) target = $region25
    $region24: #{landtrans_forward.29} parent=1 // pred_region
      _
    $region25: #{landtrans_forward.29} parent=1 // pred_fallthru
      _
    // Predicated region
    $region26: #{landtrans_forward.29} parent=1 // pred_check
      _
    $region27: #{landtrans_forward.29} parent=1 // pred_check_branch
      %30 = sbr.rel (0) target = $region29
    $region28: #{landtrans_forward.29} parent=1 // pred_region
      _
    $region29: #{landtrans_forward.29} parent=1 // pred_fallthru
      _
    // Predicated region
    $region30: #{landtrans_forward.29} parent=1 // pred_check
      _
    $region31: #{landtrans_forward.29} parent=1 // pred_check_branch
      %32 = sbr.rel (0) target = $region33
    $region32: #{landtrans_forward.29} parent=1 // pred_region
      _
    $region33: #{landtrans_forward.29} parent=1 // pred_fallthru
      _
    // Predicated region
    $region34: #{landtrans_forward.29} parent=1 // pred_check
      _
    $region35: #{landtrans_forward.29} parent=1 // pred_check_branch
      %34 = sbr.rel (0) target = $region37
    $region36: #{landtrans_forward.29} parent=1 // pred_region
      _
    $region37: #{landtrans_forward.29} parent=1 // pred_fallthru
      _
    %v36 = vld [vmem:[%s0] sm:$0xf]
    %v37 = vld [vmem:[%s1] sm:$0xf]
    %v38 = vld [vmem:[%s1 + $0x4] sm:$0xf]
    %v39 = vld [vmem:[%s1 + $0x8] sm:$0xf]
    %v40 = vld [vmem:[%s1 + $0xc] sm:$0xf]
    %v41 = vld [vmem:[%s2] sm:$0x1]
    %v43 = vlaneseq
    %v44 = vshrl.u32 %v43, 7
    %v45 = vsub.s32 0, %v44
    %v46 = vrot.slane %v41, %v45
    %v52 = vunpack.c.l.b16 %v37
    %v53 = vunpack.c.l.b16 %v38
    %v54 = vunpack.c.l.b16 %v39
    %v55 = vunpack.c.l.b16 %v40
    %v56 = vpack.c.b16 %v53, %v52
    %v57 = vpack.c.b16 %v55, %v54
    %vm60 = vcmask 261120
    %v62 = vsel %vm60, %v36, 0
    %64 = vmatprep.subr.bf16.mxu0 0
    %65 = vmatpush1.bf16.msra.mxu0 %v56
    %66 = vmatprep.subr.bf16.mxu0 0
    %67 = vmatpush1.bf16.msra.mxu0 %v57
    %68 = vmatprep.subr.bf16.mxu0 0
    %69 = vmatpush1.bf16.msra.mxu0 0
    %70 = vmatprep.subr.bf16.mxu0 0
    %71 = vmatpush1.bf16.msra.mxu0 0
    %72 = vmatprep.subr.bf16.mxu0 0
    %73 = vmatpush1.bf16.msra.mxu0 0
    %74 = vmatprep.subr.bf16.mxu0 0
    %75 = vmatpush1.bf16.msra.mxu0 0
    %76 = vmatprep.subr.bf16.mxu0 0
    %77 = vmatpush1.bf16.msra.mxu0 0
    %78 = vmatprep.subr.bf16.mxu0 0
    %79 = vmatpush1.bf16.msra.mxu0 0
    %80 = vmatprep.subr.bf16.mxu0 0
    %81 = vmatpush1.bf16.msra.mxu0 0
    %82 = vmatprep.subr.bf16.mxu0 0
    %83 = vmatpush1.bf16.msra.mxu0 0
    %84 = vmatprep.subr.bf16.mxu0 0
    %85 = vmatpush1.bf16.msra.mxu0 0
    %86 = vmatprep.subr.bf16.mxu0 0
    %87 = vmatpush1.bf16.msra.mxu0 0
    %88 = vmatprep.subr.bf16.mxu0 0
    %89 = vmatpush1.bf16.msra.mxu0 0
    %90 = vmatprep.subr.bf16.mxu0 0
    %91 = vmatpush1.bf16.msra.mxu0 0
    %92 = vmatprep.subr.bf16.mxu0 0
    %93 = vmatpush1.bf16.msra.mxu0 0
    %94 = vmatprep.subr.bf16.mxu0 0
    %95 = vmatpush1.bf16.msra.mxu0 0
    %96 = vmatprep.mubr.bf16.mxu0 0
    %97 = vmatmul.mubr.bf16.gmra.mrb[0].mxu0 %v62
    %v98 = vpop.f32.mrb[0].mxu0
    %v99 = vadd.f32 %v46, %v98
    %v100 = vpop.f32.mrb[0].mxu0
    %v101 = vpop.f32.mrb[0].mxu0
    %v102 = vpop.f32.mrb[0].mxu0
    %103 = vdwg.mxu0
    %v104 = vmax.f32 %v99, 0.0
    %v105 = vpack.c.bf16 %v104, %v104
    %v106 = vld [vmem:[%s3] sm:$0xf]
    %v107 = vld [vmem:[%s3 + $0x4] sm:$0xf]
    %v108 = vld [vmem:[%s3 + $0x8] sm:$0xf]
    %v109 = vld [vmem:[%s3 + $0xc] sm:$0xf]
    %v110 = vld [vmem:[%s3 + $0x10] sm:$0xf]
    %v111 = vld [vmem:[%s3 + $0x14] sm:$0xf]
    %v112 = vld [vmem:[%s3 + $0x18] sm:$0xf]
    %v113 = vld [vmem:[%s3 + $0x1c] sm:$0xf]
    %v114 = vld [vmem:[%s4] sm:$0x1]
    %v116 = vlaneseq
    %v117 = vshrl.u32 %v116, 7
    %v118 = vsub.s32 0, %v117
    %v119 = vrot.slane %v114, %v118
    %v129 = vunpack.c.l.b16 %v106
    %v130 = vunpack.c.l.b16 %v107
    %v131 = vunpack.c.l.b16 %v108
    %v132 = vunpack.c.l.b16 %v109
    %v133 = vunpack.c.l.b16 %v110
    %v134 = vunpack.c.l.b16 %v111
    %v135 = vunpack.c.l.b16 %v112
    %v136 = vunpack.c.l.b16 %v113
    %v137 = vpack.c.b16 %v130, %v129
    %v138 = vpack.c.b16 %v132, %v131
    %v139 = vpack.c.b16 %v134, %v133
    %v140 = vpack.c.b16 %v136, %v135
    %vm145 = vcmask 523264
    %v147 = vsel %vm145, %v105, 0
    %149 = vmatprep.subr.bf16.mxu0 0
    %150 = vmatpush1.bf16.msra.mxu0 %v137
    %151 = vmatprep.subr.bf16.mxu0 0
    %152 = vmatpush1.bf16.msra.mxu0 %v138
    %153 = vmatprep.subr.bf16.mxu0 0
    %154 = vmatpush1.bf16.msra.mxu0 %v139
    %155 = vmatprep.subr.bf16.mxu0 0
    %156 = vmatpush1.bf16.msra.mxu0 %v140
    %157 = vmatprep.subr.bf16.mxu0 0
    %158 = vmatpush1.bf16.msra.mxu0 0
    %159 = vmatprep.subr.bf16.mxu0 0
    %160 = vmatpush1.bf16.msra.mxu0 0
    %161 = vmatprep.subr.bf16.mxu0 0
    %162 = vmatpush1.bf16.msra.mxu0 0
    %163 = vmatprep.subr.bf16.mxu0 0
    %164 = vmatpush1.bf16.msra.mxu0 0
    %165 = vmatprep.subr.bf16.mxu0 0
    %166 = vmatpush1.bf16.msra.mxu0 0
    %167 = vmatprep.subr.bf16.mxu0 0
    %168 = vmatpush1.bf16.msra.mxu0 0
    %169 = vmatprep.subr.bf16.mxu0 0
    %170 = vmatpush1.bf16.msra.mxu0 0
    %171 = vmatprep.subr.bf16.mxu0 0
    %172 = vmatpush1.bf16.msra.mxu0 0
    %173 = vmatprep.subr.bf16.mxu0 0
    %174 = vmatpush1.bf16.msra.mxu0 0
    %175 = vmatprep.subr.bf16.mxu0 0
    %176 = vmatpush1.bf16.msra.mxu0 0
    %177 = vmatprep.subr.bf16.mxu0 0
    %178 = vmatpush1.bf16.msra.mxu0 0
    %179 = vmatprep.subr.bf16.mxu0 0
    %180 = vmatpush1.bf16.msra.mxu0 0
    %181 = vmatprep.mubr.bf16.mxu0 0
    %182 = vmatmul.mubr.bf16.gmra.mrb[0].mxu0 %v147
    %v183 = vpop.f32.mrb[0].mxu0
    %v184 = vadd.f32 %v119, %v183
    %v185 = vpop.f32.mrb[0].mxu0
    %v186 = vpop.f32.mrb[0].mxu0
    %v187 = vpop.f32.mrb[0].mxu0
    %188 = vdwg.mxu0
    %v189 = vunpack.c.l.bf16 %v36
    %v190 = vadd.f32 %v184, %v189
    %v191 = vsel %vm60, %v190, 0.0
    %192 = vadd.xlane.f32.xlu0 %v191
    %v193 = vpop.xlane.xlu0 %192
    %v194 = vrcp.pop 32.0
    %v195 = vmul.f32 %v193, %v194
    %v196 = vsub.f32 %v190, %v195
    %v197 = vmul.f32 %v196, %v196
    %v198 = vsel %vm60, %v197, 0.0
    %199 = vadd.xlane.f32.xlu0 %v198
    %v200 = vpop.xlane.xlu0 %199
    %v201 = vmul.f32 %v200, %v194
    %v202 = vadd.f32 %v201, 1e-05
    %v203 = vrsqrt.pop %v202
    %v204 = vmul.f32 %v196, %v203
    %v205 = vld [vmem:[%s5] sm:$0x1]
    %v207 = vlaneseq
    %v208 = vshrl.u32 %v207, 7
    %v209 = vsub.s32 0, %v208
    %v210 = vrot.slane %v205, %v209
    %v212 = vmul.f32 %v204, %v210
    %v213 = vld [vmem:[%s6] sm:$0x1]
    %v215 = vlaneseq
    %v216 = vshrl.u32 %v215, 7
    %v217 = vsub.s32 0, %v216
    %v218 = vrot.slane %v213, %v217
    %v220 = vadd.f32 %v212, %v218
    %v221 = vpack.c.bf16 %v220, %v220
    %vm222 = vcmask 257024
    %223 = vst.msk [vmem:[#allocation2] sm:$0xf] %vm222, %v221
    %v224 = vld [vmem:[%s7] sm:$0xff]
    %v225 = vld [vmem:[%s7 + $0x8] sm:$0xff]
    %v226 = vld [vmem:[%s7 + $0x10] sm:$0xf]
    %v227 = vld [vmem:[%s7 + $0x14] sm:$0xff]
    %v228 = vld [vmem:[%s7 + $0x1c] sm:$0xff]
    %v229 = vld [vmem:[%s7 + $0x24] sm:$0xf]
    %v230 = vld [vmem:[%s7 + $0x28] sm:$0xff]
    %v231 = vld [vmem:[%s7 + $0x30] sm:$0xff]
    %v232 = vld [vmem:[%s7 + $0x38] sm:$0xf]
    %v233 = vld [vmem:[%s7 + $0x3c] sm:$0xff]
    %v234 = vld [vmem:[%s7 + $0x44] sm:$0xff]
    %v235 = vld [vmem:[%s7 + $0x4c] sm:$0xf]
    %v236 = vld [vmem:[%s8] sm:$0x1f]
    %v238 = vlaneseq
    %v239 = vshrl.u32 %v238, 7
    %v240 = vsub.s32 0, %v239
    %v241 = vrot.slane %v236, %v240
    %v242 = vlaneseq
    %v243 = vshrl.u32 %v242, 7
    %v244 = vsub.s32 1, %v243
    %v245 = vrot.slane %v236, %v244
    %v246 = vlaneseq
    %v247 = vshrl.u32 %v246, 7
    %v248 = vsub.s32 2, %v247
    %v249 = vrot.slane %v236, %v248
    %v250 = vlaneseq
    %v251 = vshrl.u32 %v250, 7
    %v252 = vsub.s32 3, %v251
    %v253 = vrot.slane %v236, %v252
    %v254 = vlaneseq
    %v255 = vshrl.u32 %v254, 7
    %v256 = vsub.s32 4, %v255
    %v257 = vrot.slane %v236, %v256
    %v275 = vunpack.c.l.b16 %v224
    %v276 = vunpack.c.h.b16 %v224
    %v277 = vunpack.c.l.b16 %v225
    %v278 = vunpack.c.h.b16 %v225
    %v279 = vunpack.c.l.b16 %v226
    %v280 = vunpack.c.l.b16 %v227
    %v281 = vunpack.c.h.b16 %v227
    %v282 = vunpack.c.l.b16 %v228
    %v283 = vunpack.c.h.b16 %v228
    %v284 = vunpack.c.l.b16 %v229
    %v285 = vunpack.c.l.b16 %v230
    %v286 = vunpack.c.h.b16 %v230
    %v287 = vunpack.c.l.b16 %v231
    %v288 = vunpack.c.h.b16 %v231
    %v289 = vunpack.c.l.b16 %v232
    %v290 = vunpack.c.l.b16 %v233
    %v291 = vunpack.c.h.b16 %v233
    %v292 = vunpack.c.l.b16 %v234
    %v293 = vunpack.c.h.b16 %v234
    %v294 = vunpack.c.l.b16 %v235
    %v295 = vpack.c.b16 %v280, %v275
    %v296 = vpack.c.b16 %v281, %v276
    %v297 = vpack.c.b16 %v282, %v277
    %v298 = vpack.c.b16 %v283, %v278
    %v299 = vpack.c.b16 %v284, %v279
    %v300 = vpack.c.b16 %v290, %v285
    %v301 = vpack.c.b16 %v291, %v286
    %v302 = vpack.c.b16 %v292, %v287
    %v303 = vpack.c.b16 %v293, %v288
    %v304 = vpack.c.b16 %v294, %v289
    %v316 = vsel %vm60, %v221, 0
    %318 = vmatprep.subr.bf16.mxu0 %v296
    %319 = vmatpush1.bf16.msra.mxu0 %v295
    %320 = vmatprep.subr.bf16.mxu0 %v301
    %321 = vmatpush1.bf16.msra.mxu0 %v300
    %322 = vmatprep.subr.bf16.mxu0 0
    %323 = vmatpush1.bf16.msra.mxu0 0
    %324 = vmatprep.subr.bf16.mxu0 0
    %325 = vmatpush1.bf16.msra.mxu0 0
    %326 = vmatprep.subr.bf16.mxu0 0
    %327 = vmatpush1.bf16.msra.mxu0 0
    %328 = vmatprep.subr.bf16.mxu0 0
    %329 = vmatpush1.bf16.msra.mxu0 0
    %330 = vmatprep.subr.bf16.mxu0 0
    %331 = vmatpush1.bf16.msra.mxu0 0
    %332 = vmatprep.subr.bf16.mxu0 0
    %333 = vmatpush1.bf16.msra.mxu0 0
    %334 = vmatprep.subr.bf16.mxu0 0
    %335 = vmatpush1.bf16.msra.mxu0 0
    %336 = vmatprep.subr.bf16.mxu0 0
    %337 = vmatpush1.bf16.msra.mxu0 0
    %338 = vmatprep.subr.bf16.mxu0 0
    %339 = vmatpush1.bf16.msra.mxu0 0
    %340 = vmatprep.subr.bf16.mxu0 0
    %341 = vmatpush1.bf16.msra.mxu0 0
    %342 = vmatprep.subr.bf16.mxu0 0
    %343 = vmatpush1.bf16.msra.mxu0 0
    %344 = vmatprep.subr.bf16.mxu0 0
    %345 = vmatpush1.bf16.msra.mxu0 0
    %346 = vmatprep.subr.bf16.mxu0 0
    %347 = vmatpush1.bf16.msra.mxu0 0
    %348 = vmatprep.subr.bf16.mxu0 0
    %349 = vmatpush1.bf16.msra.mxu0 0
    %350 = vmatprep.mubr.bf16.mxu0 0
    %351 = vmatmul.mubr.bf16.gmra.mrb[0].mxu0 %v316
    %v352 = vpop.f32.mrb[0].mxu0
    %v353 = vadd.f32 %v241, %v352
    %v354 = vpop.f32.mrb[0].mxu0
    %v355 = vadd.f32 %v245, %v354
    %v356 = vpop.f32.mrb[0].mxu0
    %v357 = vpop.f32.mrb[0].mxu0
    %358 = vdwg.mxu0
    %359 = vmatprep.subr.bf16.mxu0 %v298
    %360 = vmatpush1.bf16.msra.mxu0 %v297
    %361 = vmatprep.subr.bf16.mxu0 %v303
    %362 = vmatpush1.bf16.msra.mxu0 %v302
    %363 = vmatprep.subr.bf16.mxu0 0
    %364 = vmatpush1.bf16.msra.mxu0 0
    %365 = vmatprep.subr.bf16.mxu0 0
    %366 = vmatpush1.bf16.msra.mxu0 0
    %367 = vmatprep.subr.bf16.mxu0 0
    %368 = vmatpush1.bf16.msra.mxu0 0
    %369 = vmatprep.subr.bf16.mxu0 0
    %370 = vmatpush1.bf16.msra.mxu0 0
    %371 = vmatprep.subr.bf16.mxu0 0
    %372 = vmatpush1.bf16.msra.mxu0 0
    %373 = vmatprep.subr.bf16.mxu0 0
    %374 = vmatpush1.bf16.msra.mxu0 0
    %375 = vmatprep.subr.bf16.mxu0 0
    %376 = vmatpush1.bf16.msra.mxu0 0
    %377 = vmatprep.subr.bf16.mxu0 0
    %378 = vmatpush1.bf16.msra.mxu0 0
    %379 = vmatprep.subr.bf16.mxu0 0
    %380 = vmatpush1.bf16.msra.mxu0 0
    %381 = vmatprep.subr.bf16.mxu0 0
    %382 = vmatpush1.bf16.msra.mxu0 0
    %383 = vmatprep.subr.bf16.mxu0 0
    %384 = vmatpush1.bf16.msra.mxu0 0
    %385 = vmatprep.subr.bf16.mxu0 0
    %386 = vmatpush1.bf16.msra.mxu0 0
    %387 = vmatprep.subr.bf16.mxu0 0
    %388 = vmatpush1.bf16.msra.mxu0 0
    %389 = vmatprep.subr.bf16.mxu0 0
    %390 = vmatpush1.bf16.msra.mxu0 0
    %391 = vmatprep.mubr.bf16.mxu0 0
    %392 = vmatmul.mubr.bf16.gmra.mrb[0].mxu0 %v316
    %v393 = vpop.f32.mrb[0].mxu0
    %v394 = vadd.f32 %v249, %v393
    %v395 = vpop.f32.mrb[0].mxu0
    %v396 = vadd.f32 %v253, %v395
    %v397 = vpop.f32.mrb[0].mxu0
    %v398 = vpop.f32.mrb[0].mxu0
    %399 = vdwg.mxu0
    %400 = vmatprep.subr.bf16.mxu0 0
    %401 = vmatpush1.bf16.msra.mxu0 %v299
    %402 = vmatprep.subr.bf16.mxu0 0
    %403 = vmatpush1.bf16.msra.mxu0 %v304
    %404 = vmatprep.subr.bf16.mxu0 0
    %405 = vmatpush1.bf16.msra.mxu0 0
    %406 = vmatprep.subr.bf16.mxu0 0
    %407 = vmatpush1.bf16.msra.mxu0 0
    %408 = vmatprep.subr.bf16.mxu0 0
    %409 = vmatpush1.bf16.msra.mxu0 0
    %410 = vmatprep.subr.bf16.mxu0 0
    %411 = vmatpush1.bf16.msra.mxu0 0
    %412 = vmatprep.subr.bf16.mxu0 0
    %413 = vmatpush1.bf16.msra.mxu0 0
    %414 = vmatprep.subr.bf16.mxu0 0
    %415 = vmatpush1.bf16.msra.mxu0 0
    %416 = vmatprep.subr.bf16.mxu0 0
    %417 = vmatpush1.bf16.msra.mxu0 0
    %418 = vmatprep.subr.bf16.mxu0 0
    %419 = vmatpush1.bf16.msra.mxu0 0
    %420 = vmatprep.subr.bf16.mxu0 0
    %421 = vmatpush1.bf16.msra.mxu0 0
    %422 = vmatprep.subr.bf16.mxu0 0
    %423 = vmatpush1.bf16.msra.mxu0 0
    %424 = vmatprep.subr.bf16.mxu0 0
    %425 = vmatpush1.bf16.msra.mxu0 0
    %426 = vmatprep.subr.bf16.mxu0 0
    %427 = vmatpush1.bf16.msra.mxu0 0
    %428 = vmatprep.subr.bf16.mxu0 0
    %429 = vmatpush1.bf16.msra.mxu0 0
    %430 = vmatprep.subr.bf16.mxu0 0
    %431 = vmatpush1.bf16.msra.mxu0 0
    %432 = vmatprep.mubr.bf16.mxu0 0
    %433 = vmatmul.mubr.bf16.gmra.mrb[0].mxu0 %v316
    %v434 = vpop.f32.mrb[0].mxu0
    %v435 = vadd.f32 %v257, %v434
    %v436 = vpop.f32.mrb[0].mxu0
    %v437 = vpop.f32.mrb[0].mxu0
    %v438 = vpop.f32.mrb[0].mxu0
    %439 = vdwg.mxu0
    %440 = vst [vmem:[%s10] sm:$0xff] %v353
    %441 = vst [vmem:[%s10 + $0x8] sm:$0xff] %v355
    %442 = vst [vmem:[%s10 + $0x10] sm:$0xff] %v394
    %443 = vst [vmem:[%s10 + $0x18] sm:$0xff] %v396
    %444 = vst [vmem:[%s10 + $0x20] sm:$0xff] %v435
    // Predicated region
    $region38: #{landtrans_forward.29} parent=1 // pred_check
      _
    $region39: #{landtrans_forward.29} parent=1 // pred_check_branch
      %446 = sbr.rel (0) target = $region41
    $region40: #{landtrans_forward.29} parent=1 // pred_region
      %s448 = ssub.s32 64, 64
      %449 = vsyncadd [#allocation3], %s448
      %s451 = sshll.u32 [#allocation2], 4
      %s452 = int_to_ptr.vmem [resolvable:$true] %s451
      %454 = dma.vmem_to_hbm [thread:$0]  %s452, 64, %s9, [#allocation3]
    $region41: #{landtrans_forward.29} parent=1 // pred_fallthru
      _
    // Predicated region
    $region42: #{landtrans_forward.29} parent=1 // pred_check
      _
    $region43: #{landtrans_forward.29} parent=1 // pred_check_branch
      %456 = sbr.rel (0) target = $region45
    $region44: #{landtrans_forward.29} parent=1 // pred_region
      _
    $region45: #{landtrans_forward.29} parent=1 // pred_fallthru
      _
    // Predicated region
    $region46: #{landtrans_forward.29} parent=1 // pred_check
      _
    $region47: #{landtrans_forward.29} parent=1 // pred_check_branch
      %458 = sbr.rel (0) target = $region49
    $region48: #{landtrans_forward.29} parent=1 // pred_region
      %459 = dma.done [#allocation3], 64
    $region49: #{landtrans_forward.29} parent=1 // pred_fallthru
      _
    // Predicated region
    $region50: #{landtrans_forward.29} parent=1 // pred_check
      _
    $region51: #{landtrans_forward.29} parent=1 // pred_check_branch
      %461 = sbr.rel (0) target = $region53
    $region52: #{landtrans_forward.29} parent=1 // pred_region
      _
    $region53: #{landtrans_forward.29} parent=1 // pred_fallthru
      _
    %462 = vsyncpa [#allocation3], 1

</llo_original>
